<compile_context>
chip_gen: v6e
topology: v6e:2x2x1
jax: 0.10.0
libtpu: 0.0.40
codegen_flags: <defaults>
</compile_context>

<pallas_src>
import functools
import math

import jax
import jax.numpy as jnp
from jax import lax
from jax.experimental import pallas as pl
from jax.experimental.pallas import tpu as pltpu

LEAKY_SLOPE = 0.2
SINC_K = 52
SINC_C = 128
KP = 64                       # sinc tap dim padded to 64 (im2col matmul contraction)
PH0 = 16                      # total time downsampling = phase count of y0
H1, H2, H3 = 1, 1, 2          # per-stage halo rows (stage 1 / 2 / 3)
HALO_Y0 = H1 + H2 + H3        # = 4 y0 rows of halo per side per time tile
DEFAULT_TILE_ROWS = 256       # default Tc = final-output rows per grid step


def _leaky(x):
    # 2 VALU ops (mul + max) instead of cmp + mul + select
    return jnp.maximum(x, LEAKY_SLOPE * x)


# -------------------- one DSConvBlock + MaxPool(2,2) stage --------------------

def _ds_stage(in_phases, wdw, wpw_bf16, bpw_eff, *, stride, out_phases, halo,
              valid_rows=None):
    """Depthwise conv(K, stride, pad=(K-1)//2) + pointwise 1x1 (+ folded biases),
    MaxPool(2,2), LeakyReLU -- on halo-extended polyphase inputs.

    in_phases : M arrays (Te_in, C_in) f32; in_phases[p][q] = stage input at
                global row (g_in0 + q) of phase p.  Rows outside the true
                sequence are already zero (== the conv's zero padding).
    Returns   : `out_phases` arrays (Te_out, C_out), Te_out = Te_in - 2*halo,
                already in the polyphase layout the next stage consumes, so
                only contiguous slices are ever needed in-kernel.
    """
    M = len(in_phases)
    W = out_phases
    assert M == 2 * stride * W, (M, stride, W)
    Te_in, _ = in_phases[0].shape
    Te_out = Te_in - 2 * halo
    K = wdw.shape[0]
    pad = (K - 1) // 2

    wrows = [wdw[k:k + 1, :] for k in range(K)]            # hoisted tap rows

    # Hoist the distinct (phase, row-offset) windows: stage 1 touches 200
    # (w, r, k) combinations but only ~39 distinct windows.
    win = {}

    def window(p, jj):
        if (p, jj) not in win:
            win[(p, jj)] = in_phases[p][jj:jj + Te_out, :]
        return win[(p, jj)]

    outs = []
    for w in range(W):                                     # output phase
        branches = []
        for r in range(2):                                 # MaxPool branch
            acc = None
            for k in range(K):                             # unrolled, contiguous slices
                o = 2 * stride * w + stride * r + k - pad
                p, j = o % M, o // M
                assert 0 <= halo + j <= 2 * halo, (halo, j)
                term = window(p, halo + j) * wrows[k]
                acc = term if acc is None else acc + term
            branches.append(acc.astype(jnp.bfloat16))      # bf16 before the matmul:
        ua = jnp.dot(branches[0], wpw_bf16,                # half the bytes, no f32
                     preferred_element_type=jnp.float32)   # concat pass; one MXU
        ub = jnp.dot(branches[1], wpw_bf16,                # matmul per pool branch
                     preferred_element_type=jnp.float32)
        # MaxPool(2,2) commutes with +bias and LeakyReLU -> bias added once.
        z = _leaky(jnp.maximum(ua, ub) + bpw_eff)
        if valid_rows is not None:                         # zero rows outside the
            z = jnp.where(valid_rows, z, 0.0)              # sequence (= next conv's pad)
        outs.append(z)
    return outs


# ------------------------------ fused encoder kernel --------------------------

def _encoder_kernel(patches_ref, w0_ref, b0_ref,
                    wdw1_ref, wpw1_ref, bpw1_ref,
                    wdw2_ref, wpw2_ref, bpw2_ref,
                    wdw3_ref, wpw3_ref, bpw3_ref,
                    out_ref, *skip_refs, Tc, Tq_total):
    Te1 = Tc + 2 * HALO_Y0
    q0 = pl.program_id(1) * Tc                             # first output row of this tile

    # SincBlock: im2col bf16 matmul on the MXU.  Patch rows are phase-permuted
    # in the wrapper (row p*Te1+q <-> sinc-output time 16*(q0-4+q)+p) so y0 is
    # already the 16-phase decomposition, halo-extended by 4 rows per side.
    y0 = jnp.dot(patches_ref[0, 0], w0_ref[...],
                 preferred_element_type=jnp.float32) + b0_ref[...]
    y0 = _leaky(y0)                                        # (16*Te1, 128) f32

    # Halo rows outside the real sequence must be zero (they stand in for the
    # zero padding of d_conv_1's depthwise conv).
    li = lax.broadcasted_iota(jnp.int32, (Te1, 1), 0)
    gy = q0 - HALO_Y0 + li
    y0_valid = jnp.logical_and(gy >= 0, gy < Tq_total)
    ph = [jnp.where(y0_valid, y0[p * Te1:(p + 1) * Te1, :], 0.0)
          for p in range(PH0)]

    def valid(off, n):
        i = lax.broadcasted_iota(jnp.int32, (n, 1), 0)
        g = q0 + off + i
        return jnp.logical_and(g >= 0, g < Tq_total)

    # d_conv_1 (K=25, stride=2) + MaxPool(2,2)   [Dropout1d(0.1): eval identity]
    z1 = _ds_stage(ph, wdw1_ref[...], wpw1_ref[...], bpw1_ref[...],
                   stride=2, out_phases=4, halo=H1,
                   valid_rows=valid(-(H2 + H3), Tc + 2 * (H2 + H3)))
    # d_conv_2 (K=9, stride=1) + MaxPool(2,2)
    z2 = _ds_stage(z1, wdw2_ref[...], wpw2_ref[...], bpw2_ref[...],
                   stride=1, out_phases=2, halo=H2,
                   valid_rows=valid(-H3, Tc + 2 * H3))
    # d_conv_3 (K=9, stride=1) + MaxPool(2,2) -> exactly this tile's Tc center rows
    z3 = _ds_stage(z2, wdw3_ref[...], wpw3_ref[...], bpw3_ref[...],
                   stride=1, out_phases=1, halo=H3, valid_rows=None)

    out_ref[0, 0, :, :] = z3[0]                            # (Tc, 256), natural time order

    if skip_refs:                                          # skips: bf16, phase-blocked
        y0_ref, z1_ref, z2_ref = skip_refs                 # per tile (de-phased in wrapper)
        y0_ref[0, 0, :, :] = jnp.concatenate(
            [ph[p][HALO_Y0:HALO_Y0 + Tc, :].astype(jnp.bfloat16) for p in range(PH0)],
            axis=0)
        z1_ref[0, 0, :, :] = jnp.concatenate(
            [z1[w][H2 + H3:H2 + H3 + Tc, :].astype(jnp.bfloat16) for w in range(4)],
            axis=0)
        z2_ref[0, 0, :, :] = jnp.concatenate(
            [z2[w][H3:H3 + Tc, :].astype(jnp.bfloat16) for w in range(2)],
            axis=0)


# ------------------------------ wrapper ---------------------------------------

def _pick_vmem_limit():
    """~3/4 of physical VMEM: ~96 MiB on v5e/v6e (128 MiB), ~48 MiB on v7x (64 MiB)."""
    try:
        cap = getattr(pltpu.get_tpu_info(), "vmem_capacity_bytes", None)
        if cap:
            return int(max(min(cap * 3 // 4, 96 * 1024 * 1024), 32 * 1024 * 1024))
    except Exception:
        pass
    return 48 * 1024 * 1024


def _phase_im2col(x_wave, K, Tc, n_t, T0):
    """(B, T_in) waveform -> (B, n_t, PH0*(Tc+8), KP) bf16 overlapping patch tiles.

    Row p*(Tc+8)+q of tile t is the length-K patch for sinc-output time
    16*(t*Tc - 4 + q) + p (clamped; out-of-sequence rows are zeroed in-kernel)."""
    B = x_wave.shape[0]
    Te1 = Tc + 2 * HALO_Y0
    g = jnp.arange(n_t)[:, None] * Tc - HALO_Y0 + jnp.arange(Te1)[None, :]   # (n_t, Te1)
    t0 = PH0 * g[:, None, :] + jnp.arange(PH0)[None, :, None]                # (n_t, PH0, Te1)
    t0 = jnp.clip(t0, 0, T0 - 1)
    idx = t0[..., None] + jnp.arange(K)                                      # (n_t, PH0, Te1, K)
    patches = x_wave[:, idx]                                                 # (B, n_t, PH0, Te1, K)
    patches = patches.reshape(B, n_t, PH0 * Te1, K)
    patches = jnp.pad(patches, ((0, 0), (0, 0), (0, 0), (0, KP - K)))
    return patches.astype(jnp.bfloat16)


def encoder_forward(params, x_nct, return_skip_connections=False, tile_rows=None):
    """x_nct: (B, 1, T) -- PyTorch (N, C, T) conv1d convention."""
    B, c_in, T_in = x_nct.shape
    assert c_in == 1
    K0 = params["sinc_w"].shape[0]
    T0 = T_in - K0 + 1
    assert T0 > 0 and T0 % PH0 == 0, T0   # TODO(synk): pad+trim for general lengths
    Tq_total = T0 // PH0

    if tile_rows is None:
        tile_rows = DEFAULT_TILE_ROWS     # keep a multiple of 16 for tile alignment
    Tc = min(tile_rows, Tq_total)
    n_t = pl.cdiv(Tq_total, Tc)
    Te1 = Tc + 2 * HALO_Y0

    patches = _phase_im2col(x_nct[:, 0, :], K0, Tc, n_t, T0)
    w0 = jnp.pad(params["sinc_w"], ((0, KP - K0), (0, 0))).astype(jnp.bfloat16)
    d1, d2, d3 = params["d1"], params["d2"], params["d3"]

    def fold_bias(d):
        # (x + b_dw) @ W_pw + b_pw == x @ W_pw + (b_pw + b_dw @ W_pw): exact, f32,
        # removes a full elementwise pass over the depthwise output per stage.
        return d["bpw"] + jnp.dot(d["bdw"], d["wpw"], precision=lax.Precision.HIGHEST)

    args = (patches, w0, params["sinc_b"],
            d1["wdw"], d1["wpw"].astype(jnp.bfloat16), fold_bias(d1),
            d2["wdw"], d2["wpw"].astype(jnp.bfloat16), fold_bias(d2),
            d3["wdw"], d3["wpw"].astype(jnp.bfloat16), fold_bias(d3))

    def _rep(b, t):                                        # weights: replicated blocks
        return (0, 0)

    def _tile4(b, t):                                      # per (batch, time-tile) blocks
        return (b, t, 0, 0)

    in_specs = [pl.BlockSpec((1, 1, PH0 * Te1, KP), _tile4)]
    in_specs += [pl.BlockSpec(a.shape, _rep) for a in args[1:]]

    out_shapes = [jax.ShapeDtypeStruct((B, n_t, Tc, 256), jnp.float32)]
    out_specs = [pl.BlockSpec((1, 1, Tc, 256), _tile4)]
    if return_skip_connections:
        out_shapes += [jax.ShapeDtypeStruct((B, n_t, PH0 * Tc, 128), jnp.bfloat16),
                       jax.ShapeDtypeStruct((B, n_t, 4 * Tc, 128), jnp.bfloat16),
                       jax.ShapeDtypeStruct((B, n_t, 2 * Tc, 256), jnp.bfloat16)]
        out_specs += [pl.BlockSpec((1, 1, PH0 * Tc, 128), _tile4),
                      pl.BlockSpec((1, 1, 4 * Tc, 128), _tile4),
                      pl.BlockSpec((1, 1, 2 * Tc, 256), _tile4)]

    # advisory cost estimate so XLA schedules the wrapper gather/transposes around us
    per_step_flops = 2 * ((PH0 * Te1) * KP * 128
                          + 8 * (Tc + 6) * (25 * 128 + 128 * 128)
                          + 4 * (Tc + 4) * (9 * 128 + 128 * 256)
                          + 2 * Tc * (9 * 256 + 256 * 256))
    in_bytes = sum(int(a.size) * a.dtype.itemsize for a in args)
    out_bytes = sum(math.prod(s.shape) * jnp.dtype(s.dtype).itemsize for s in out_shapes)
    ce = pl.CostEstimate(flops=int(B * n_t * per_step_flops), transcendentals=0,
                         bytes_accessed=int(in_bytes + out_bytes))

    outs = pl.pallas_call(
        functools.partial(_encoder_kernel, Tc=Tc, Tq_total=Tq_total),
        out_shape=tuple(out_shapes),
        grid=(B, n_t),
        in_specs=in_specs,
        out_specs=tuple(out_specs),
        compiler_params=pltpu.CompilerParams(
            dimension_semantics=("parallel", "parallel"),
            vmem_limit_bytes=_pick_vmem_limit()),
        cost_estimate=ce,
    )(*args)

    out_main = outs[0].reshape(B, n_t * Tc, 256)[:, :Tq_total, :]
    out_nct = jnp.transpose(out_main, (0, 2, 1))           # NWC -> NCW
    if not return_skip_connections:
        return out_nct

    def dephase(a, P, C):
        # row w*Tc+q of tile t <-> time P*(t*Tc+q)+w; cast back to f32 fused here
        a = a.reshape(B, n_t, P, Tc, C).transpose(0, 1, 3, 2, 4)
        a = a.reshape(B, n_t * Tc * P, C)[:, :P * Tq_total, :]
        return jnp.transpose(a, (0, 2, 1)).astype(jnp.float32)

    y0 = dephase(outs[1], PH0, 128)
    z1 = dephase(outs[2], 4, 128)
    z2 = dephase(outs[3], 2, 256)
    return out_nct, [x_nct, y0, z1, z2, out_nct]


# ------------------------------ parameters -------------------------------------

def make_sinc_filters(C, K, fs=16000.0):
    """Deterministic mel-spaced sinc band-pass filter bank, shape (K, C)."""
    def hz2mel(f):
        return 2595.0 * jnp.log10(1.0 + f / 700.0)

    def mel2hz(m):
        return 700.0 * (10.0 ** (m / 2595.0) - 1.0)

    edges = mel2hz(jnp.linspace(hz2mel(30.0), hz2mel(fs / 2.0 - 100.0), C + 1))
    lo, hi = edges[:-1], edges[1:]
    n = (jnp.arange(K) - (K - 1) / 2.0) / fs
    win = 0.54 - 0.46 * jnp.cos(2.0 * jnp.pi * jnp.arange(K) / (K - 1))

    def bandpass(l, h):
        return (2.0 * h * jnp.sinc(2.0 * h * n) - 2.0 * l * jnp.sinc(2.0 * l * n)) * win

    filt = jax.vmap(bandpass)(lo, hi)                                   # (C, K)
    filt = filt / (jnp.max(jnp.abs(filt), axis=1, keepdims=True) + 1e-8)
    return filt.T.astype(jnp.float32)                                   # (K, C)


def init_encoder_params(key):
    ks = jax.random.split(key, 13)

    def dsconv(kw, kb, kpw, kpb, c_in, c_out, K):
        return {
            "wdw": jax.random.normal(kw, (K, c_in), jnp.float32) / jnp.sqrt(1.0 * K),
            "bdw": 0.01 * jax.random.normal(kb, (1, c_in), jnp.float32),
            "wpw": jax.random.normal(kpw, (c_in, c_out), jnp.float32) / jnp.sqrt(1.0 * c_in),
            "bpw": 0.01 * jax.random.normal(kpb, (1, c_out), jnp.float32),
        }

    return {
        "sinc_w": make_sinc_filters(SINC_C, SINC_K),
        "sinc_b": 0.01 * jax.random.normal(ks[0], (1, SINC_C), jnp.float32),
        "d1": dsconv(ks[1], ks[2], ks[3], ks[4], 128, 128, 25),
        "d2": dsconv(ks[5], ks[6], ks[7], ks[8], 128, 256, 9),
        "d3": dsconv(ks[9], ks[10], ks[11], ks[12], 256, 256, 9),
    }


# ------------------------------ pure-JAX reference -----------------------------

def _reference_forward(params, x_nct):
    def conv1d(x, w, stride, pad, groups=1):
        return lax.conv_general_dilated(
            x, w, window_strides=(stride,), padding=[(pad, pad)],
            dimension_numbers=("NCH", "OIH", "NCH"), feature_group_count=groups)

    def maxpool2(x):
        b, c, t = x.shape
        return jnp.max(x.reshape(b, c, t // 2, 2), axis=-1)

    def ds_block(x, p, stride):
        c_in = x.shape[1]
        K = p["wdw"].shape[0]
        dw = conv1d(x, p["wdw"].T[:, None, :], stride, (K - 1) // 2, groups=c_in)
        dw = dw + p["bdw"].reshape(1, -1, 1)
        pw = jnp.einsum("bct,co->bot", dw, p["wpw"]) + p["bpw"].reshape(1, -1, 1)
        return jnp.where(pw > 0, pw, LEAKY_SLOPE * pw)

    y = conv1d(x_nct, params["sinc_w"].T[:, None, :], 1, 0)            # valid conv
    y = y + params["sinc_b"].reshape(1, -1, 1)
    y = jnp.where(y > 0, y, LEAKY_SLOPE * y)
    y = maxpool2(ds_block(y, params["d1"], 2))                         # dropout = id
    y = maxpool2(ds_block(y, params["d2"], 1))
    y = maxpool2(ds_block(y, params["d3"], 1))
    return y


# ------------------------------ demo -------------------------------------------

if __name__ == "__main__":
    key = jax.random.PRNGKey(0)
    pkey, xkey, xkey2 = jax.random.split(key, 3)
    params = init_encoder_params(pkey)

    # --- single-tile case: T chosen so the sinc "valid" output (307-51 = 256)
    #     is a multiple of the 16x total downsampling ---
    x = jax.random.normal(xkey, (2, 1, 307), jnp.float32)
    fwd = jax.jit(functools.partial(encoder_forward, return_skip_connections=False))
    out = jax.block_until_ready(fwd(params, x))
    assert out.shape == (2, 256, 16), out.shape
    assert bool(jnp.all(jnp.isfinite(out)))

    ref = _reference_forward(params, x)
    err = float(jnp.max(jnp.abs(out - ref)))
    tol = 0.05 * float(jnp.max(jnp.abs(ref))) + 0.05
    assert err <= tol, (err, tol)

    # --- skip-connection path ---
    fwd_s = jax.jit(functools.partial(encoder_forward, return_skip_connections=True))
    out2, skips = jax.block_until_ready(fwd_s(params, x))
    assert out2.shape == (2, 256, 16) and len(skips) == 5
    assert skips[1].shape == (2, 128, 256) and skips[2].shape == (2, 128, 64)
    assert skips[3].shape == (2, 256, 32) and skips[4].shape == (2, 256, 16)
    assert float(jnp.max(jnp.abs(out2 - out))) < 1e-5

    # --- multi-tile case: haloed time tiling with a ragged last tile (40 = 16+16+8) ---
    x2 = jax.random.normal(xkey2, (2, 1, 51 + 16 * 40), jnp.float32)
    fwd_t = jax.jit(functools.partial(encoder_forward, return_skip_connections=False,
                                      tile_rows=16))
    out3 = jax.block_until_ready(fwd_t(params, x2))
    assert out3.shape == (2, 256, 40)
    ref3 = _reference_forward(params, x2)
    err3 = float(jnp.max(jnp.abs(out3 - ref3)))
    tol3 = 0.05 * float(jnp.max(jnp.abs(ref3))) + 0.05
    assert err3 <= tol3, (err3, tol3)

    fwd_ts = jax.jit(functools.partial(encoder_forward, return_skip_connections=True,
                                       tile_rows=16))
    out4, skips2 = jax.block_until_ready(fwd_ts(params, x2))
    assert skips2[1].shape == (2, 128, 640) and skips2[3].shape == (2, 256, 80)
    assert float(jnp.max(jnp.abs(out4 - out3))) < 1e-5

    print("KERNEL_OK")
</pallas_src>

<mosaic_0001>
module attributes {stable_mosaic.version = 11 : i64} {
  func.func @_encoder_kernel(%arg0: i32, %arg1: i32, %arg2: memref<1x1x384x64xbf16, #tpu.memory_space<vmem>>, %arg3: memref<64x128xbf16, #tpu.memory_space<vmem>>, %arg4: memref<1x128xf32, #tpu.memory_space<vmem>>, %arg5: memref<25x128xf32, #tpu.memory_space<vmem>>, %arg6: memref<128x128xbf16, #tpu.memory_space<vmem>>, %arg7: memref<1x128xf32, #tpu.memory_space<vmem>>, %arg8: memref<9x128xf32, #tpu.memory_space<vmem>>, %arg9: memref<128x256xbf16, #tpu.memory_space<vmem>>, %arg10: memref<1x256xf32, #tpu.memory_space<vmem>>, %arg11: memref<9x256xf32, #tpu.memory_space<vmem>>, %arg12: memref<256x256xbf16, #tpu.memory_space<vmem>>, %arg13: memref<1x256xf32, #tpu.memory_space<vmem>>, %arg14: memref<1x1x16x256xf32, #tpu.memory_space<vmem>>) attributes {dimension_semantics = [#tpu.dimension_semantics<parallel>, #tpu.dimension_semantics<parallel>], iteration_bounds = array<i64: 2, 1>, scalar_prefetch = 0 : i64, scratch_operands = 0 : i64, tpu.core_type = #tpu.core_type<tc>, window_params = [{transform_indices = @transform_0, window_bounds = array<i64: 1, 1, 384, 64>}, {pipeline_mode = #tpu.pipeline_mode<synchronous>, transform_indices = @transform_1, window_bounds = array<i64: 64, 128>}, {pipeline_mode = #tpu.pipeline_mode<synchronous>, transform_indices = @transform_2, window_bounds = array<i64: 1, 128>}, {pipeline_mode = #tpu.pipeline_mode<synchronous>, transform_indices = @transform_3, window_bounds = array<i64: 25, 128>}, {pipeline_mode = #tpu.pipeline_mode<synchronous>, transform_indices = @transform_4, window_bounds = array<i64: 128, 128>}, {pipeline_mode = #tpu.pipeline_mode<synchronous>, transform_indices = @transform_5, window_bounds = array<i64: 1, 128>}, {pipeline_mode = #tpu.pipeline_mode<synchronous>, transform_indices = @transform_6, window_bounds = array<i64: 9, 128>}, {pipeline_mode = #tpu.pipeline_mode<synchronous>, transform_indices = @transform_7, window_bounds = array<i64: 128, 256>}, {pipeline_mode = #tpu.pipeline_mode<synchronous>, transform_indices = @transform_8, window_bounds = array<i64: 1, 256>}, {pipeline_mode = #tpu.pipeline_mode<synchronous>, transform_indices = @transform_9, window_bounds = array<i64: 9, 256>}, {pipeline_mode = #tpu.pipeline_mode<synchronous>, transform_indices = @transform_10, window_bounds = array<i64: 256, 256>}, {pipeline_mode = #tpu.pipeline_mode<synchronous>, transform_indices = @transform_11, window_bounds = array<i64: 1, 256>}, {transform_indices = @transform_12, window_bounds = array<i64: 1, 1, 16, 256>}]} {
    %c16_i32 = arith.constant 16 : i32
    %0 = arith.muli %arg1, %c16_i32 : i32
    %c0 = arith.constant 0 : index
    %c0_0 = arith.constant 0 : index
    %c0_1 = arith.constant 0 : index
    %c0_2 = arith.constant 0 : index
    %1 = vector.load %arg2[%c0, %c0_0, %c0_1, %c0_2] : memref<1x1x384x64xbf16, #tpu.memory_space<vmem>>, vector<1x1x384x64xbf16>
    %2 = vector.shape_cast %1 : vector<1x1x384x64xbf16> to vector<384x64xbf16>
    %c0_3 = arith.constant 0 : index
    %c0_4 = arith.constant 0 : index
    %3 = vector.load %arg3[%c0_3, %c0_4] : memref<64x128xbf16, #tpu.memory_space<vmem>>, vector<64x128xbf16>
    %cst = arith.constant dense<0.000000e+00> : vector<384x128xf32>
    %4 = tpu.matmul %2, %3, %cst {dimension_numbers = #tpu.dot_dimension_numbers<[1], [0], [0], [1], [0, 0, 1, 1], [], []>} : vector<384x64xbf16>, vector<64x128xbf16>, vector<384x128xf32> -> vector<384x128xf32>
    %c0_5 = arith.constant 0 : index
    %c0_6 = arith.constant 0 : index
    %5 = vector.load %arg4[%c0_5, %c0_6] : memref<1x128xf32, #tpu.memory_space<vmem>>, vector<1x128xf32>
    %6 = vector.broadcast %5 : vector<1x128xf32> to vector<384x128xf32>
    %7 = arith.addf %4, %6 : vector<384x128xf32>
    %cst_7 = arith.constant 2.000000e-01 : f32
    %8 = vector.broadcast %cst_7 : f32 to vector<384x128xf32>
    %9 = arith.mulf %8, %7 : vector<384x128xf32>
    %10 = arith.maximumf %7, %9 : vector<384x128xf32>
    %11 = tpu.iota {dimensions = array<i32: 0>} : vector<24x1xi32>
    %c4_i32 = arith.constant 4 : i32
    %12 = arith.subi %0, %c4_i32 : i32
    %13 = vector.broadcast %12 : i32 to vector<24x1xi32>
    %14 = arith.addi %13, %11 : vector<24x1xi32>
    %c0_i32 = arith.constant 0 : i32
    %15 = vector.broadcast %c0_i32 : i32 to vector<24x1xi32>
    %16 = arith.cmpi sge, %14, %15 : vector<24x1xi32>
    %c16_i32_8 = arith.constant 16 : i32
    %17 = vector.broadcast %c16_i32_8 : i32 to vector<24x1xi32>
    %18 = arith.cmpi slt, %14, %17 : vector<24x1xi32>
    %19 = arith.andi %16, %18 : vector<24x1xi1>
    %20 = vector.extract_strided_slice %10 {offsets = [0, 0], sizes = [24, 128], strides = [1, 1]} : vector<384x128xf32> to vector<24x128xf32>
    %cst_9 = arith.constant 0.000000e+00 : f32
    %21 = vector.shape_cast %19 : vector<24x1xi1> to vector<24x1xi1>
    %22 = vector.broadcast %21 : vector<24x1xi1> to vector<24x128xi1>
    %23 = vector.broadcast %cst_9 : f32 to vector<24x128xf32>
    %24 = arith.select %22, %20, %23 : vector<24x128xi1>, vector<24x128xf32>
    %25 = vector.extract_strided_slice %10 {offsets = [24, 0], sizes = [24, 128], strides = [1, 1]} : vector<384x128xf32> to vector<24x128xf32>
    %cst_10 = arith.constant 0.000000e+00 : f32
    %26 = vector.shape_cast %19 : vector<24x1xi1> to vector<24x1xi1>
    %27 = vector.broadcast %26 : vector<24x1xi1> to vector<24x128xi1>
    %28 = vector.broadcast %cst_10 : f32 to vector<24x128xf32>
    %29 = arith.select %27, %25, %28 : vector<24x128xi1>, vector<24x128xf32>
    %30 = vector.extract_strided_slice %10 {offsets = [48, 0], sizes = [24, 128], strides = [1, 1]} : vector<384x128xf32> to vector<24x128xf32>
    %cst_11 = arith.constant 0.000000e+00 : f32
    %31 = vector.shape_cast %19 : vector<24x1xi1> to vector<24x1xi1>
    %32 = vector.broadcast %31 : vector<24x1xi1> to vector<24x128xi1>
    %33 = vector.broadcast %cst_11 : f32 to vector<24x128xf32>
    %34 = arith.select %32, %30, %33 : vector<24x128xi1>, vector<24x128xf32>
    %35 = vector.extract_strided_slice %10 {offsets = [72, 0], sizes = [24, 128], strides = [1, 1]} : vector<384x128xf32> to vector<24x128xf32>
    %cst_12 = arith.constant 0.000000e+00 : f32
    %36 = vector.shape_cast %19 : vector<24x1xi1> to vector<24x1xi1>
    %37 = vector.broadcast %36 : vector<24x1xi1> to vector<24x128xi1>
    %38 = vector.broadcast %cst_12 : f32 to vector<24x128xf32>
    %39 = arith.select %37, %35, %38 : vector<24x128xi1>, vector<24x128xf32>
    %40 = vector.extract_strided_slice %10 {offsets = [96, 0], sizes = [24, 128], strides = [1, 1]} : vector<384x128xf32> to vector<24x128xf32>
    %cst_13 = arith.constant 0.000000e+00 : f32
    %41 = vector.shape_cast %19 : vector<24x1xi1> to vector<24x1xi1>
    %42 = vector.broadcast %41 : vector<24x1xi1> to vector<24x128xi1>
    %43 = vector.broadcast %cst_13 : f32 to vector<24x128xf32>
    %44 = arith.select %42, %40, %43 : vector<24x128xi1>, vector<24x128xf32>
    %45 = vector.extract_strided_slice %10 {offsets = [120, 0], sizes = [24, 128], strides = [1, 1]} : vector<384x128xf32> to vector<24x128xf32>
    %cst_14 = arith.constant 0.000000e+00 : f32
    %46 = vector.shape_cast %19 : vector<24x1xi1> to vector<24x1xi1>
    %47 = vector.broadcast %46 : vector<24x1xi1> to vector<24x128xi1>
    %48 = vector.broadcast %cst_14 : f32 to vector<24x128xf32>
    %49 = arith.select %47, %45, %48 : vector<24x128xi1>, vector<24x128xf32>
    %50 = vector.extract_strided_slice %10 {offsets = [144, 0], sizes = [24, 128], strides = [1, 1]} : vector<384x128xf32> to vector<24x128xf32>
    %cst_15 = arith.constant 0.000000e+00 : f32
    %51 = vector.shape_cast %19 : vector<24x1xi1> to vector<24x1xi1>
    %52 = vector.broadcast %51 : vector<24x1xi1> to vector<24x128xi1>
    %53 = vector.broadcast %cst_15 : f32 to vector<24x128xf32>
    %54 = arith.select %52, %50, %53 : vector<24x128xi1>, vector<24x128xf32>
    %55 = vector.extract_strided_slice %10 {offsets = [168, 0], sizes = [24, 128], strides = [1, 1]} : vector<384x128xf32> to vector<24x128xf32>
    %cst_16 = arith.constant 0.000000e+00 : f32
    %56 = vector.shape_cast %19 : vector<24x1xi1> to vector<24x1xi1>
    %57 = vector.broadcast %56 : vector<24x1xi1> to vector<24x128xi1>
    %58 = vector.broadcast %cst_16 : f32 to vector<24x128xf32>
    %59 = arith.select %57, %55, %58 : vector<24x128xi1>, vector<24x128xf32>
    %60 = vector.extract_strided_slice %10 {offsets = [192, 0], sizes = [24, 128], strides = [1, 1]} : vector<384x128xf32> to vector<24x128xf32>
    %cst_17 = arith.constant 0.000000e+00 : f32
    %61 = vector.shape_cast %19 : vector<24x1xi1> to vector<24x1xi1>
    %62 = vector.broadcast %61 : vector<24x1xi1> to vector<24x128xi1>
    %63 = vector.broadcast %cst_17 : f32 to vector<24x128xf32>
    %64 = arith.select %62, %60, %63 : vector<24x128xi1>, vector<24x128xf32>
    %65 = vector.extract_strided_slice %10 {offsets = [216, 0], sizes = [24, 128], strides = [1, 1]} : vector<384x128xf32> to vector<24x128xf32>
    %cst_18 = arith.constant 0.000000e+00 : f32
    %66 = vector.shape_cast %19 : vector<24x1xi1> to vector<24x1xi1>
    %67 = vector.broadcast %66 : vector<24x1xi1> to vector<24x128xi1>
    %68 = vector.broadcast %cst_18 : f32 to vector<24x128xf32>
    %69 = arith.select %67, %65, %68 : vector<24x128xi1>, vector<24x128xf32>
    %70 = vector.extract_strided_slice %10 {offsets = [240, 0], sizes = [24, 128], strides = [1, 1]} : vector<384x128xf32> to vector<24x128xf32>
    %cst_19 = arith.constant 0.000000e+00 : f32
    %71 = vector.shape_cast %19 : vector<24x1xi1> to vector<24x1xi1>
    %72 = vector.broadcast %71 : vector<24x1xi1> to vector<24x128xi1>
    %73 = vector.broadcast %cst_19 : f32 to vector<24x128xf32>
    %74 = arith.select %72, %70, %73 : vector<24x128xi1>, vector<24x128xf32>
    %75 = vector.extract_strided_slice %10 {offsets = [264, 0], sizes = [24, 128], strides = [1, 1]} : vector<384x128xf32> to vector<24x128xf32>
    %cst_20 = arith.constant 0.000000e+00 : f32
    %76 = vector.shape_cast %19 : vector<24x1xi1> to vector<24x1xi1>
    %77 = vector.broadcast %76 : vector<24x1xi1> to vector<24x128xi1>
    %78 = vector.broadcast %cst_20 : f32 to vector<24x128xf32>
    %79 = arith.select %77, %75, %78 : vector<24x128xi1>, vector<24x128xf32>
    %80 = vector.extract_strided_slice %10 {offsets = [288, 0], sizes = [24, 128], strides = [1, 1]} : vector<384x128xf32> to vector<24x128xf32>
    %cst_21 = arith.constant 0.000000e+00 : f32
    %81 = vector.shape_cast %19 : vector<24x1xi1> to vector<24x1xi1>
    %82 = vector.broadcast %81 : vector<24x1xi1> to vector<24x128xi1>
    %83 = vector.broadcast %cst_21 : f32 to vector<24x128xf32>
    %84 = arith.select %82, %80, %83 : vector<24x128xi1>, vector<24x128xf32>
    %85 = vector.extract_strided_slice %10 {offsets = [312, 0], sizes = [24, 128], strides = [1, 1]} : vector<384x128xf32> to vector<24x128xf32>
    %cst_22 = arith.constant 0.000000e+00 : f32
    %86 = vector.shape_cast %19 : vector<24x1xi1> to vector<24x1xi1>
    %87 = vector.broadcast %86 : vector<24x1xi1> to vector<24x128xi1>
    %88 = vector.broadcast %cst_22 : f32 to vector<24x128xf32>
    %89 = arith.select %87, %85, %88 : vector<24x128xi1>, vector<24x128xf32>
    %90 = vector.extract_strided_slice %10 {offsets = [336, 0], sizes = [24, 128], strides = [1, 1]} : vector<384x128xf32> to vector<24x128xf32>
    %cst_23 = arith.constant 0.000000e+00 : f32
    %91 = vector.shape_cast %19 : vector<24x1xi1> to vector<24x1xi1>
    %92 = vector.broadcast %91 : vector<24x1xi1> to vector<24x128xi1>
    %93 = vector.broadcast %cst_23 : f32 to vector<24x128xf32>
    %94 = arith.select %92, %90, %93 : vector<24x128xi1>, vector<24x128xf32>
    %95 = vector.extract_strided_slice %10 {offsets = [360, 0], sizes = [24, 128], strides = [1, 1]} : vector<384x128xf32> to vector<24x128xf32>
    %cst_24 = arith.constant 0.000000e+00 : f32
    %96 = vector.shape_cast %19 : vector<24x1xi1> to vector<24x1xi1>
    %97 = vector.broadcast %96 : vector<24x1xi1> to vector<24x128xi1>
    %98 = vector.broadcast %cst_24 : f32 to vector<24x128xf32>
    %99 = arith.select %97, %95, %98 : vector<24x128xi1>, vector<24x128xf32>
    %c0_25 = arith.constant 0 : index
    %c0_26 = arith.constant 0 : index
    %100 = vector.load %arg5[%c0_25, %c0_26] : memref<25x128xf32, #tpu.memory_space<vmem>>, vector<25x128xf32>
    %c0_27 = arith.constant 0 : index
    %c0_28 = arith.constant 0 : index
    %101 = vector.load %arg6[%c0_27, %c0_28] : memref<128x128xbf16, #tpu.memory_space<vmem>>, vector<128x128xbf16>
    %c0_29 = arith.constant 0 : index
    %c0_30 = arith.constant 0 : index
    %102 = vector.load %arg7[%c0_29, %c0_30] : memref<1x128xf32, #tpu.memory_space<vmem>>, vector<1x128xf32>
    %103 = tpu.iota {dimensions = array<i32: 0>} : vector<22x1xi32>
    %c-3_i32 = arith.constant -3 : i32
    %104 = arith.addi %0, %c-3_i32 : i32
    %105 = vector.broadcast %104 : i32 to vector<22x1xi32>
    %106 = arith.addi %105, %103 : vector<22x1xi32>
    %c0_i32_31 = arith.constant 0 : i32
    %107 = vector.broadcast %c0_i32_31 : i32 to vector<22x1xi32>
    %108 = arith.cmpi sge, %106, %107 : vector<22x1xi32>
    %c16_i32_32 = arith.constant 16 : i32
    %109 = vector.broadcast %c16_i32_32 : i32 to vector<22x1xi32>
    %110 = arith.cmpi slt, %106, %109 : vector<22x1xi32>
    %111 = arith.andi %108, %110 : vector<22x1xi1>
    %112 = vector.extract_strided_slice %100 {offsets = [0, 0], sizes = [1, 128], strides = [1, 1]} : vector<25x128xf32> to vector<1x128xf32>
    %113 = vector.extract_strided_slice %100 {offsets = [1, 0], sizes = [1, 128], strides = [1, 1]} : vector<25x128xf32> to vector<1x128xf32>
    %114 = vector.extract_strided_slice %100 {offsets = [2, 0], sizes = [1, 128], strides = [1, 1]} : vector<25x128xf32> to vector<1x128xf32>
    %115 = vector.extract_strided_slice %100 {offsets = [3, 0], sizes = [1, 128], strides = [1, 1]} : vector<25x128xf32> to vector<1x128xf32>
    %116 = vector.extract_strided_slice %100 {offsets = [4, 0], sizes = [1, 128], strides = [1, 1]} : vector<25x128xf32> to vector<1x128xf32>
    %117 = vector.extract_strided_slice %100 {offsets = [5, 0], sizes = [1, 128], strides = [1, 1]} : vector<25x128xf32> to vector<1x128xf32>
    %118 = vector.extract_strided_slice %100 {offsets = [6, 0], sizes = [1, 128], strides = [1, 1]} : vector<25x128xf32> to vector<1x128xf32>
    %119 = vector.extract_strided_slice %100 {offsets = [7, 0], sizes = [1, 128], strides = [1, 1]} : vector<25x128xf32> to vector<1x128xf32>
    %120 = vector.extract_strided_slice %100 {offsets = [8, 0], sizes = [1, 128], strides = [1, 1]} : vector<25x128xf32> to vector<1x128xf32>
    %121 = vector.extract_strided_slice %100 {offsets = [9, 0], sizes = [1, 128], strides = [1, 1]} : vector<25x128xf32> to vector<1x128xf32>
    %122 = vector.extract_strided_slice %100 {offsets = [10, 0], sizes = [1, 128], strides = [1, 1]} : vector<25x128xf32> to vector<1x128xf32>
    %123 = vector.extract_strided_slice %100 {offsets = [11, 0], sizes = [1, 128], strides = [1, 1]} : vector<25x128xf32> to vector<1x128xf32>
    %124 = vector.extract_strided_slice %100 {offsets = [12, 0], sizes = [1, 128], strides = [1, 1]} : vector<25x128xf32> to vector<1x128xf32>
    %125 = vector.extract_strided_slice %100 {offsets = [13, 0], sizes = [1, 128], strides = [1, 1]} : vector<25x128xf32> to vector<1x128xf32>
    %126 = vector.extract_strided_slice %100 {offsets = [14, 0], sizes = [1, 128], strides = [1, 1]} : vector<25x128xf32> to vector<1x128xf32>
    %127 = vector.extract_strided_slice %100 {offsets = [15, 0], sizes = [1, 128], strides = [1, 1]} : vector<25x128xf32> to vector<1x128xf32>
    %128 = vector.extract_strided_slice %100 {offsets = [16, 0], sizes = [1, 128], strides = [1, 1]} : vector<25x128xf32> to vector<1x128xf32>
    %129 = vector.extract_strided_slice %100 {offsets = [17, 0], sizes = [1, 128], strides = [1, 1]} : vector<25x128xf32> to vector<1x128xf32>
    %130 = vector.extract_strided_slice %100 {offsets = [18, 0], sizes = [1, 128], strides = [1, 1]} : vector<25x128xf32> to vector<1x128xf32>
    %131 = vector.extract_strided_slice %100 {offsets = [19, 0], sizes = [1, 128], strides = [1, 1]} : vector<25x128xf32> to vector<1x128xf32>
    %132 = vector.extract_strided_slice %100 {offsets = [20, 0], sizes = [1, 128], strides = [1, 1]} : vector<25x128xf32> to vector<1x128xf32>
    %133 = vector.extract_strided_slice %100 {offsets = [21, 0], sizes = [1, 128], strides = [1, 1]} : vector<25x128xf32> to vector<1x128xf32>
    %134 = vector.extract_strided_slice %100 {offsets = [22, 0], sizes = [1, 128], strides = [1, 1]} : vector<25x128xf32> to vector<1x128xf32>
    %135 = vector.extract_strided_slice %100 {offsets = [23, 0], sizes = [1, 128], strides = [1, 1]} : vector<25x128xf32> to vector<1x128xf32>
    %136 = vector.extract_strided_slice %100 {offsets = [24, 0], sizes = [1, 128], strides = [1, 1]} : vector<25x128xf32> to vector<1x128xf32>
    %137 = vector.extract_strided_slice %44 {offsets = [0, 0], sizes = [22, 128], strides = [1, 1]} : vector<24x128xf32> to vector<22x128xf32>
    %138 = vector.broadcast %112 : vector<1x128xf32> to vector<22x128xf32>
    %139 = arith.mulf %137, %138 : vector<22x128xf32>
    %140 = vector.extract_strided_slice %49 {offsets = [0, 0], sizes = [22, 128], strides = [1, 1]} : vector<24x128xf32> to vector<22x128xf32>
    %141 = vector.broadcast %113 : vector<1x128xf32> to vector<22x128xf32>
    %142 = arith.mulf %140, %141 : vector<22x128xf32>
    %143 = arith.addf %139, %142 : vector<22x128xf32>
    %144 = vector.extract_strided_slice %54 {offsets = [0, 0], sizes = [22, 128], strides = [1, 1]} : vector<24x128xf32> to vector<22x128xf32>
    %145 = vector.broadcast %114 : vector<1x128xf32> to vector<22x128xf32>
    %146 = arith.mulf %144, %145 : vector<22x128xf32>
    %147 = arith.addf %143, %146 : vector<22x128xf32>
    %148 = vector.extract_strided_slice %59 {offsets = [0, 0], sizes = [22, 128], strides = [1, 1]} : vector<24x128xf32> to vector<22x128xf32>
    %149 = vector.broadcast %115 : vector<1x128xf32> to vector<22x128xf32>
    %150 = arith.mulf %148, %149 : vector<22x128xf32>
    %151 = arith.addf %147, %150 : vector<22x128xf32>
    %152 = vector.extract_strided_slice %64 {offsets = [0, 0], sizes = [22, 128], strides = [1, 1]} : vector<24x128xf32> to vector<22x128xf32>
    %153 = vector.broadcast %116 : vector<1x128xf32> to vector<22x128xf32>
    %154 = arith.mulf %152, %153 : vector<22x128xf32>
    %155 = arith.addf %151, %154 : vector<22x128xf32>
    %156 = vector.extract_strided_slice %69 {offsets = [0, 0], sizes = [22, 128], strides = [1, 1]} : vector<24x128xf32> to vector<22x128xf32>
    %157 = vector.broadcast %117 : vector<1x128xf32> to vector<22x128xf32>
    %158 = arith.mulf %156, %157 : vector<22x128xf32>
    %159 = arith.addf %155, %158 : vector<22x128xf32>
    %160 = vector.extract_strided_slice %74 {offsets = [0, 0], sizes = [22, 128], strides = [1, 1]} : vector<24x128xf32> to vector<22x128xf32>
    %161 = vector.broadcast %118 : vector<1x128xf32> to vector<22x128xf32>
    %162 = arith.mulf %160, %161 : vector<22x128xf32>
    %163 = arith.addf %159, %162 : vector<22x128xf32>
    %164 = vector.extract_strided_slice %79 {offsets = [0, 0], sizes = [22, 128], strides = [1, 1]} : vector<24x128xf32> to vector<22x128xf32>
    %165 = vector.broadcast %119 : vector<1x128xf32> to vector<22x128xf32>
    %166 = arith.mulf %164, %165 : vector<22x128xf32>
    %167 = arith.addf %163, %166 : vector<22x128xf32>
    %168 = vector.extract_strided_slice %84 {offsets = [0, 0], sizes = [22, 128], strides = [1, 1]} : vector<24x128xf32> to vector<22x128xf32>
    %169 = vector.broadcast %120 : vector<1x128xf32> to vector<22x128xf32>
    %170 = arith.mulf %168, %169 : vector<22x128xf32>
    %171 = arith.addf %167, %170 : vector<22x128xf32>
    %172 = vector.extract_strided_slice %89 {offsets = [0, 0], sizes = [22, 128], strides = [1, 1]} : vector<24x128xf32> to vector<22x128xf32>
    %173 = vector.broadcast %121 : vector<1x128xf32> to vector<22x128xf32>
    %174 = arith.mulf %172, %173 : vector<22x128xf32>
    %175 = arith.addf %171, %174 : vector<22x128xf32>
    %176 = vector.extract_strided_slice %94 {offsets = [0, 0], sizes = [22, 128], strides = [1, 1]} : vector<24x128xf32> to vector<22x128xf32>
    %177 = vector.broadcast %122 : vector<1x128xf32> to vector<22x128xf32>
    %178 = arith.mulf %176, %177 : vector<22x128xf32>
    %179 = arith.addf %175, %178 : vector<22x128xf32>
    %180 = vector.extract_strided_slice %99 {offsets = [0, 0], sizes = [22, 128], strides = [1, 1]} : vector<24x128xf32> to vector<22x128xf32>
    %181 = vector.broadcast %123 : vector<1x128xf32> to vector<22x128xf32>
    %182 = arith.mulf %180, %181 : vector<22x128xf32>
    %183 = arith.addf %179, %182 : vector<22x128xf32>
    %184 = vector.extract_strided_slice %24 {offsets = [1, 0], sizes = [22, 128], strides = [1, 1]} : vector<24x128xf32> to vector<22x128xf32>
    %185 = vector.broadcast %124 : vector<1x128xf32> to vector<22x128xf32>
    %186 = arith.mulf %184, %185 : vector<22x128xf32>
    %187 = arith.addf %183, %186 : vector<22x128xf32>
    %188 = vector.extract_strided_slice %29 {offsets = [1, 0], sizes = [22, 128], strides = [1, 1]} : vector<24x128xf32> to vector<22x128xf32>
    %189 = vector.broadcast %125 : vector<1x128xf32> to vector<22x128xf32>
    %190 = arith.mulf %188, %189 : vector<22x128xf32>
    %191 = arith.addf %187, %190 : vector<22x128xf32>
    %192 = vector.extract_strided_slice %34 {offsets = [1, 0], sizes = [22, 128], strides = [1, 1]} : vector<24x128xf32> to vector<22x128xf32>
    %193 = vector.broadcast %126 : vector<1x128xf32> to vector<22x128xf32>
    %194 = arith.mulf %192, %193 : vector<22x128xf32>
    %195 = arith.addf %191, %194 : vector<22x128xf32>
    %196 = vector.extract_strided_slice %39 {offsets = [1, 0], sizes = [22, 128], strides = [1, 1]} : vector<24x128xf32> to vector<22x128xf32>
    %197 = vector.broadcast %127 : vector<1x128xf32> to vector<22x128xf32>
    %198 = arith.mulf %196, %197 : vector<22x128xf32>
    %199 = arith.addf %195, %198 : vector<22x128xf32>
    %200 = vector.extract_strided_slice %44 {offsets = [1, 0], sizes = [22, 128], strides = [1, 1]} : vector<24x128xf32> to vector<22x128xf32>
    %201 = vector.broadcast %128 : vector<1x128xf32> to vector<22x128xf32>
    %202 = arith.mulf %200, %201 : vector<22x128xf32>
    %203 = arith.addf %199, %202 : vector<22x128xf32>
    %204 = vector.extract_strided_slice %49 {offsets = [1, 0], sizes = [22, 128], strides = [1, 1]} : vector<24x128xf32> to vector<22x128xf32>
    %205 = vector.broadcast %129 : vector<1x128xf32> to vector<22x128xf32>
    %206 = arith.mulf %204, %205 : vector<22x128xf32>
    %207 = arith.addf %203, %206 : vector<22x128xf32>
    %208 = vector.extract_strided_slice %54 {offsets = [1, 0], sizes = [22, 128], strides = [1, 1]} : vector<24x128xf32> to vector<22x128xf32>
    %209 = vector.broadcast %130 : vector<1x128xf32> to vector<22x128xf32>
    %210 = arith.mulf %208, %209 : vector<22x128xf32>
    %211 = arith.addf %207, %210 : vector<22x128xf32>
    %212 = vector.extract_strided_slice %59 {offsets = [1, 0], sizes = [22, 128], strides = [1, 1]} : vector<24x128xf32> to vector<22x128xf32>
    %213 = vector.broadcast %131 : vector<1x128xf32> to vector<22x128xf32>
    %214 = arith.mulf %212, %213 : vector<22x128xf32>
    %215 = arith.addf %211, %214 : vector<22x128xf32>
    %216 = vector.extract_strided_slice %64 {offsets = [1, 0], sizes = [22, 128], strides = [1, 1]} : vector<24x128xf32> to vector<22x128xf32>
    %217 = vector.broadcast %132 : vector<1x128xf32> to vector<22x128xf32>
    %218 = arith.mulf %216, %217 : vector<22x128xf32>
    %219 = arith.addf %215, %218 : vector<22x128xf32>
    %220 = vector.extract_strided_slice %69 {offsets = [1, 0], sizes = [22, 128], strides = [1, 1]} : vector<24x128xf32> to vector<22x128xf32>
    %221 = vector.broadcast %133 : vector<1x128xf32> to vector<22x128xf32>
    %222 = arith.mulf %220, %221 : vector<22x128xf32>
    %223 = arith.addf %219, %222 : vector<22x128xf32>
    %224 = vector.extract_strided_slice %74 {offsets = [1, 0], sizes = [22, 128], strides = [1, 1]} : vector<24x128xf32> to vector<22x128xf32>
    %225 = vector.broadcast %134 : vector<1x128xf32> to vector<22x128xf32>
    %226 = arith.mulf %224, %225 : vector<22x128xf32>
    %227 = arith.addf %223, %226 : vector<22x128xf32>
    %228 = vector.extract_strided_slice %79 {offsets = [1, 0], sizes = [22, 128], strides = [1, 1]} : vector<24x128xf32> to vector<22x128xf32>
    %229 = vector.broadcast %135 : vector<1x128xf32> to vector<22x128xf32>
    %230 = arith.mulf %228, %229 : vector<22x128xf32>
    %231 = arith.addf %227, %230 : vector<22x128xf32>
    %232 = vector.extract_strided_slice %84 {offsets = [1, 0], sizes = [22, 128], strides = [1, 1]} : vector<24x128xf32> to vector<22x128xf32>
    %233 = vector.broadcast %136 : vector<1x128xf32> to vector<22x128xf32>
    %234 = arith.mulf %232, %233 : vector<22x128xf32>
    %235 = arith.addf %231, %234 : vector<22x128xf32>
    %236 = arith.truncf %235 : vector<22x128xf32> to vector<22x128xbf16>
    %237 = vector.broadcast %112 : vector<1x128xf32> to vector<22x128xf32>
    %238 = arith.mulf %144, %237 : vector<22x128xf32>
    %239 = vector.broadcast %113 : vector<1x128xf32> to vector<22x128xf32>
    %240 = arith.mulf %148, %239 : vector<22x128xf32>
    %241 = arith.addf %238, %240 : vector<22x128xf32>
    %242 = vector.broadcast %114 : vector<1x128xf32> to vector<22x128xf32>
    %243 = arith.mulf %152, %242 : vector<22x128xf32>
    %244 = arith.addf %241, %243 : vector<22x128xf32>
    %245 = vector.broadcast %115 : vector<1x128xf32> to vector<22x128xf32>
    %246 = arith.mulf %156, %245 : vector<22x128xf32>
    %247 = arith.addf %244, %246 : vector<22x128xf32>
    %248 = vector.broadcast %116 : vector<1x128xf32> to vector<22x128xf32>
    %249 = arith.mulf %160, %248 : vector<22x128xf32>
    %250 = arith.addf %247, %249 : vector<22x128xf32>
    %251 = vector.broadcast %117 : vector<1x128xf32> to vector<22x128xf32>
    %252 = arith.mulf %164, %251 : vector<22x128xf32>
    %253 = arith.addf %250, %252 : vector<22x128xf32>
    %254 = vector.broadcast %118 : vector<1x128xf32> to vector<22x128xf32>
    %255 = arith.mulf %168, %254 : vector<22x128xf32>
    %256 = arith.addf %253, %255 : vector<22x128xf32>
    %257 = vector.broadcast %119 : vector<1x128xf32> to vector<22x128xf32>
    %258 = arith.mulf %172, %257 : vector<22x128xf32>
    %259 = arith.addf %256, %258 : vector<22x128xf32>
    %260 = vector.broadcast %120 : vector<1x128xf32> to vector<22x128xf32>
    %261 = arith.mulf %176, %260 : vector<22x128xf32>
    %262 = arith.addf %259, %261 : vector<22x128xf32>
    %263 = vector.broadcast %121 : vector<1x128xf32> to vector<22x128xf32>
    %264 = arith.mulf %180, %263 : vector<22x128xf32>
    %265 = arith.addf %262, %264 : vector<22x128xf32>
    %266 = vector.broadcast %122 : vector<1x128xf32> to vector<22x128xf32>
    %267 = arith.mulf %184, %266 : vector<22x128xf32>
    %268 = arith.addf %265, %267 : vector<22x128xf32>
    %269 = vector.broadcast %123 : vector<1x128xf32> to vector<22x128xf32>
    %270 = arith.mulf %188, %269 : vector<22x128xf32>
    %271 = arith.addf %268, %270 : vector<22x128xf32>
    %272 = vector.broadcast %124 : vector<1x128xf32> to vector<22x128xf32>
    %273 = arith.mulf %192, %272 : vector<22x128xf32>
    %274 = arith.addf %271, %273 : vector<22x128xf32>
    %275 = vector.broadcast %125 : vector<1x128xf32> to vector<22x128xf32>
    %276 = arith.mulf %196, %275 : vector<22x128xf32>
    %277 = arith.addf %274, %276 : vector<22x128xf32>
    %278 = vector.broadcast %126 : vector<1x128xf32> to vector<22x128xf32>
    %279 = arith.mulf %200, %278 : vector<22x128xf32>
    %280 = arith.addf %277, %279 : vector<22x128xf32>
    %281 = vector.broadcast %127 : vector<1x128xf32> to vector<22x128xf32>
    %282 = arith.mulf %204, %281 : vector<22x128xf32>
    %283 = arith.addf %280, %282 : vector<22x128xf32>
    %284 = vector.broadcast %128 : vector<1x128xf32> to vector<22x128xf32>
    %285 = arith.mulf %208, %284 : vector<22x128xf32>
    %286 = arith.addf %283, %285 : vector<22x128xf32>
    %287 = vector.broadcast %129 : vector<1x128xf32> to vector<22x128xf32>
    %288 = arith.mulf %212, %287 : vector<22x128xf32>
    %289 = arith.addf %286, %288 : vector<22x128xf32>
    %290 = vector.broadcast %130 : vector<1x128xf32> to vector<22x128xf32>
    %291 = arith.mulf %216, %290 : vector<22x128xf32>
    %292 = arith.addf %289, %291 : vector<22x128xf32>
    %293 = vector.broadcast %131 : vector<1x128xf32> to vector<22x128xf32>
    %294 = arith.mulf %220, %293 : vector<22x128xf32>
    %295 = arith.addf %292, %294 : vector<22x128xf32>
    %296 = vector.broadcast %132 : vector<1x128xf32> to vector<22x128xf32>
    %297 = arith.mulf %224, %296 : vector<22x128xf32>
    %298 = arith.addf %295, %297 : vector<22x128xf32>
    %299 = vector.broadcast %133 : vector<1x128xf32> to vector<22x128xf32>
    %300 = arith.mulf %228, %299 : vector<22x128xf32>
    %301 = arith.addf %298, %300 : vector<22x128xf32>
    %302 = vector.broadcast %134 : vector<1x128xf32> to vector<22x128xf32>
    %303 = arith.mulf %232, %302 : vector<22x128xf32>
    %304 = arith.addf %301, %303 : vector<22x128xf32>
    %305 = vector.extract_strided_slice %89 {offsets = [1, 0], sizes = [22, 128], strides = [1, 1]} : vector<24x128xf32> to vector<22x128xf32>
    %306 = vector.broadcast %135 : vector<1x128xf32> to vector<22x128xf32>
    %307 = arith.mulf %305, %306 : vector<22x128xf32>
    %308 = arith.addf %304, %307 : vector<22x128xf32>
    %309 = vector.extract_strided_slice %94 {offsets = [1, 0], sizes = [22, 128], strides = [1, 1]} : vector<24x128xf32> to vector<22x128xf32>
    %310 = vector.broadcast %136 : vector<1x128xf32> to vector<22x128xf32>
    %311 = arith.mulf %309, %310 : vector<22x128xf32>
    %312 = arith.addf %308, %311 : vector<22x128xf32>
    %313 = arith.truncf %312 : vector<22x128xf32> to vector<22x128xbf16>
    %cst_33 = arith.constant dense<0.000000e+00> : vector<22x128xf32>
    %314 = tpu.matmul %236, %101, %cst_33 {dimension_numbers = #tpu.dot_dimension_numbers<[1], [0], [0], [1], [0, 0, 1, 1], [], []>} : vector<22x128xbf16>, vector<128x128xbf16>, vector<22x128xf32> -> vector<22x128xf32>
    %cst_34 = arith.constant dense<0.000000e+00> : vector<22x128xf32>
    %315 = tpu.matmul %313, %101, %cst_34 {dimension_numbers = #tpu.dot_dimension_numbers<[1], [0], [0], [1], [0, 0, 1, 1], [], []>} : vector<22x128xbf16>, vector<128x128xbf16>, vector<22x128xf32> -> vector<22x128xf32>
    %316 = arith.maximumf %314, %315 : vector<22x128xf32>
    %317 = vector.broadcast %102 : vector<1x128xf32> to vector<22x128xf32>
    %318 = arith.addf %316, %317 : vector<22x128xf32>
    %cst_35 = arith.constant 2.000000e-01 : f32
    %319 = vector.broadcast %cst_35 : f32 to vector<22x128xf32>
    %320 = arith.mulf %319, %318 : vector<22x128xf32>
    %321 = arith.maximumf %318, %320 : vector<22x128xf32>
    %cst_36 = arith.constant 0.000000e+00 : f32
    %322 = vector.shape_cast %111 : vector<22x1xi1> to vector<22x1xi1>
    %323 = vector.broadcast %322 : vector<22x1xi1> to vector<22x128xi1>
    %324 = vector.broadcast %cst_36 : f32 to vector<22x128xf32>
    %325 = arith.select %323, %321, %324 : vector<22x128xi1>, vector<22x128xf32>
    %326 = vector.broadcast %112 : vector<1x128xf32> to vector<22x128xf32>
    %327 = arith.mulf %152, %326 : vector<22x128xf32>
    %328 = vector.broadcast %113 : vector<1x128xf32> to vector<22x128xf32>
    %329 = arith.mulf %156, %328 : vector<22x128xf32>
    %330 = arith.addf %327, %329 : vector<22x128xf32>
    %331 = vector.broadcast %114 : vector<1x128xf32> to vector<22x128xf32>
    %332 = arith.mulf %160, %331 : vector<22x128xf32>
    %333 = arith.addf %330, %332 : vector<22x128xf32>
    %334 = vector.broadcast %115 : vector<1x128xf32> to vector<22x128xf32>
    %335 = arith.mulf %164, %334 : vector<22x128xf32>
    %336 = arith.addf %333, %335 : vector<22x128xf32>
    %337 = vector.broadcast %116 : vector<1x128xf32> to vector<22x128xf32>
    %338 = arith.mulf %168, %337 : vector<22x128xf32>
    %339 = arith.addf %336, %338 : vector<22x128xf32>
    %340 = vector.broadcast %117 : vector<1x128xf32> to vector<22x128xf32>
    %341 = arith.mulf %172, %340 : vector<22x128xf32>
    %342 = arith.addf %339, %341 : vector<22x128xf32>
    %343 = vector.broadcast %118 : vector<1x128xf32> to vector<22x128xf32>
    %344 = arith.mulf %176, %343 : vector<22x128xf32>
    %345 = arith.addf %342, %344 : vector<22x128xf32>
    %346 = vector.broadcast %119 : vector<1x128xf32> to vector<22x128xf32>
    %347 = arith.mulf %180, %346 : vector<22x128xf32>
    %348 = arith.addf %345, %347 : vector<22x128xf32>
    %349 = vector.broadcast %120 : vector<1x128xf32> to vector<22x128xf32>
    %350 = arith.mulf %184, %349 : vector<22x128xf32>
    %351 = arith.addf %348, %350 : vector<22x128xf32>
    %352 = vector.broadcast %121 : vector<1x128xf32> to vector<22x128xf32>
    %353 = arith.mulf %188, %352 : vector<22x128xf32>
    %354 = arith.addf %351, %353 : vector<22x128xf32>
    %355 = vector.broadcast %122 : vector<1x128xf32> to vector<22x128xf32>
    %356 = arith.mulf %192, %355 : vector<22x128xf32>
    %357 = arith.addf %354, %356 : vector<22x128xf32>
    %358 = vector.broadcast %123 : vector<1x128xf32> to vector<22x128xf32>
    %359 = arith.mulf %196, %358 : vector<22x128xf32>
    %360 = arith.addf %357, %359 : vector<22x128xf32>
    %361 = vector.broadcast %124 : vector<1x128xf32> to vector<22x128xf32>
    %362 = arith.mulf %200, %361 : vector<22x128xf32>
    %363 = arith.addf %360, %362 : vector<22x128xf32>
    %364 = vector.broadcast %125 : vector<1x128xf32> to vector<22x128xf32>
    %365 = arith.mulf %204, %364 : vector<22x128xf32>
    %366 = arith.addf %363, %365 : vector<22x128xf32>
    %367 = vector.broadcast %126 : vector<1x128xf32> to vector<22x128xf32>
    %368 = arith.mulf %208, %367 : vector<22x128xf32>
    %369 = arith.addf %366, %368 : vector<22x128xf32>
    %370 = vector.broadcast %127 : vector<1x128xf32> to vector<22x128xf32>
    %371 = arith.mulf %212, %370 : vector<22x128xf32>
    %372 = arith.addf %369, %371 : vector<22x128xf32>
    %373 = vector.broadcast %128 : vector<1x128xf32> to vector<22x128xf32>
    %374 = arith.mulf %216, %373 : vector<22x128xf32>
    %375 = arith.addf %372, %374 : vector<22x128xf32>
    %376 = vector.broadcast %129 : vector<1x128xf32> to vector<22x128xf32>
    %377 = arith.mulf %220, %376 : vector<22x128xf32>
    %378 = arith.addf %375, %377 : vector<22x128xf32>
    %379 = vector.broadcast %130 : vector<1x128xf32> to vector<22x128xf32>
    %380 = arith.mulf %224, %379 : vector<22x128xf32>
    %381 = arith.addf %378, %380 : vector<22x128xf32>
    %382 = vector.broadcast %131 : vector<1x128xf32> to vector<22x128xf32>
    %383 = arith.mulf %228, %382 : vector<22x128xf32>
    %384 = arith.addf %381, %383 : vector<22x128xf32>
    %385 = vector.broadcast %132 : vector<1x128xf32> to vector<22x128xf32>
    %386 = arith.mulf %232, %385 : vector<22x128xf32>
    %387 = arith.addf %384, %386 : vector<22x128xf32>
    %388 = vector.broadcast %133 : vector<1x128xf32> to vector<22x128xf32>
    %389 = arith.mulf %305, %388 : vector<22x128xf32>
    %390 = arith.addf %387, %389 : vector<22x128xf32>
    %391 = vector.broadcast %134 : vector<1x128xf32> to vector<22x128xf32>
    %392 = arith.mulf %309, %391 : vector<22x128xf32>
    %393 = arith.addf %390, %392 : vector<22x128xf32>
    %394 = vector.extract_strided_slice %99 {offsets = [1, 0], sizes = [22, 128], strides = [1, 1]} : vector<24x128xf32> to vector<22x128xf32>
    %395 = vector.broadcast %135 : vector<1x128xf32> to vector<22x128xf32>
    %396 = arith.mulf %394, %395 : vector<22x128xf32>
    %397 = arith.addf %393, %396 : vector<22x128xf32>
    %398 = vector.extract_strided_slice %24 {offsets = [2, 0], sizes = [22, 128], strides = [1, 1]} : vector<24x128xf32> to vector<22x128xf32>
    %399 = vector.broadcast %136 : vector<1x128xf32> to vector<22x128xf32>
    %400 = arith.mulf %398, %399 : vector<22x128xf32>
    %401 = arith.addf %397, %400 : vector<22x128xf32>
    %402 = arith.truncf %401 : vector<22x128xf32> to vector<22x128xbf16>
    %403 = vector.broadcast %112 : vector<1x128xf32> to vector<22x128xf32>
    %404 = arith.mulf %160, %403 : vector<22x128xf32>
    %405 = vector.broadcast %113 : vector<1x128xf32> to vector<22x128xf32>
    %406 = arith.mulf %164, %405 : vector<22x128xf32>
    %407 = arith.addf %404, %406 : vector<22x128xf32>
    %408 = vector.broadcast %114 : vector<1x128xf32> to vector<22x128xf32>
    %409 = arith.mulf %168, %408 : vector<22x128xf32>
    %410 = arith.addf %407, %409 : vector<22x128xf32>
    %411 = vector.broadcast %115 : vector<1x128xf32> to vector<22x128xf32>
    %412 = arith.mulf %172, %411 : vector<22x128xf32>
    %413 = arith.addf %410, %412 : vector<22x128xf32>
    %414 = vector.broadcast %116 : vector<1x128xf32> to vector<22x128xf32>
    %415 = arith.mulf %176, %414 : vector<22x128xf32>
    %416 = arith.addf %413, %415 : vector<22x128xf32>
    %417 = vector.broadcast %117 : vector<1x128xf32> to vector<22x128xf32>
    %418 = arith.mulf %180, %417 : vector<22x128xf32>
    %419 = arith.addf %416, %418 : vector<22x128xf32>
    %420 = vector.broadcast %118 : vector<1x128xf32> to vector<22x128xf32>
    %421 = arith.mulf %184, %420 : vector<22x128xf32>
    %422 = arith.addf %419, %421 : vector<22x128xf32>
    %423 = vector.broadcast %119 : vector<1x128xf32> to vector<22x128xf32>
    %424 = arith.mulf %188, %423 : vector<22x128xf32>
    %425 = arith.addf %422, %424 : vector<22x128xf32>
    %426 = vector.broadcast %120 : vector<1x128xf32> to vector<22x128xf32>
    %427 = arith.mulf %192, %426 : vector<22x128xf32>
    %428 = arith.addf %425, %427 : vector<22x128xf32>
    %429 = vector.broadcast %121 : vector<1x128xf32> to vector<22x128xf32>
    %430 = arith.mulf %196, %429 : vector<22x128xf32>
    %431 = arith.addf %428, %430 : vector<22x128xf32>
    %432 = vector.broadcast %122 : vector<1x128xf32> to vector<22x128xf32>
    %433 = arith.mulf %200, %432 : vector<22x128xf32>
    %434 = arith.addf %431, %433 : vector<22x128xf32>
    %435 = vector.broadcast %123 : vector<1x128xf32> to vector<22x128xf32>
    %436 = arith.mulf %204, %435 : vector<22x128xf32>
    %437 = arith.addf %434, %436 : vector<22x128xf32>
    %438 = vector.broadcast %124 : vector<1x128xf32> to vector<22x128xf32>
    %439 = arith.mulf %208, %438 : vector<22x128xf32>
    %440 = arith.addf %437, %439 : vector<22x128xf32>
    %441 = vector.broadcast %125 : vector<1x128xf32> to vector<22x128xf32>
    %442 = arith.mulf %212, %441 : vector<22x128xf32>
    %443 = arith.addf %440, %442 : vector<22x128xf32>
    %444 = vector.broadcast %126 : vector<1x128xf32> to vector<22x128xf32>
    %445 = arith.mulf %216, %444 : vector<22x128xf32>
    %446 = arith.addf %443, %445 : vector<22x128xf32>
    %447 = vector.broadcast %127 : vector<1x128xf32> to vector<22x128xf32>
    %448 = arith.mulf %220, %447 : vector<22x128xf32>
    %449 = arith.addf %446, %448 : vector<22x128xf32>
    %450 = vector.broadcast %128 : vector<1x128xf32> to vector<22x128xf32>
    %451 = arith.mulf %224, %450 : vector<22x128xf32>
    %452 = arith.addf %449, %451 : vector<22x128xf32>
    %453 = vector.broadcast %129 : vector<1x128xf32> to vector<22x128xf32>
    %454 = arith.mulf %228, %453 : vector<22x128xf32>
    %455 = arith.addf %452, %454 : vector<22x128xf32>
    %456 = vector.broadcast %130 : vector<1x128xf32> to vector<22x128xf32>
    %457 = arith.mulf %232, %456 : vector<22x128xf32>
    %458 = arith.addf %455, %457 : vector<22x128xf32>
    %459 = vector.broadcast %131 : vector<1x128xf32> to vector<22x128xf32>
    %460 = arith.mulf %305, %459 : vector<22x128xf32>
    %461 = arith.addf %458, %460 : vector<22x128xf32>
    %462 = vector.broadcast %132 : vector<1x128xf32> to vector<22x128xf32>
    %463 = arith.mulf %309, %462 : vector<22x128xf32>
    %464 = arith.addf %461, %463 : vector<22x128xf32>
    %465 = vector.broadcast %133 : vector<1x128xf32> to vector<22x128xf32>
    %466 = arith.mulf %394, %465 : vector<22x128xf32>
    %467 = arith.addf %464, %466 : vector<22x128xf32>
    %468 = vector.broadcast %134 : vector<1x128xf32> to vector<22x128xf32>
    %469 = arith.mulf %398, %468 : vector<22x128xf32>
    %470 = arith.addf %467, %469 : vector<22x128xf32>
    %471 = vector.extract_strided_slice %29 {offsets = [2, 0], sizes = [22, 128], strides = [1, 1]} : vector<24x128xf32> to vector<22x128xf32>
    %472 = vector.broadcast %135 : vector<1x128xf32> to vector<22x128xf32>
    %473 = arith.mulf %471, %472 : vector<22x128xf32>
    %474 = arith.addf %470, %473 : vector<22x128xf32>
    %475 = vector.extract_strided_slice %34 {offsets = [2, 0], sizes = [22, 128], strides = [1, 1]} : vector<24x128xf32> to vector<22x128xf32>
    %476 = vector.broadcast %136 : vector<1x128xf32> to vector<22x128xf32>
    %477 = arith.mulf %475, %476 : vector<22x128xf32>
    %478 = arith.addf %474, %477 : vector<22x128xf32>
    %479 = arith.truncf %478 : vector<22x128xf32> to vector<22x128xbf16>
    %cst_37 = arith.constant dense<0.000000e+00> : vector<22x128xf32>
    %480 = tpu.matmul %402, %101, %cst_37 {dimension_numbers = #tpu.dot_dimension_numbers<[1], [0], [0], [1], [0, 0, 1, 1], [], []>} : vector<22x128xbf16>, vector<128x128xbf16>, vector<22x128xf32> -> vector<22x128xf32>
    %cst_38 = arith.constant dense<0.000000e+00> : vector<22x128xf32>
    %481 = tpu.matmul %479, %101, %cst_38 {dimension_numbers = #tpu.dot_dimension_numbers<[1], [0], [0], [1], [0, 0, 1, 1], [], []>} : vector<22x128xbf16>, vector<128x128xbf16>, vector<22x128xf32> -> vector<22x128xf32>
    %482 = arith.maximumf %480, %481 : vector<22x128xf32>
    %483 = vector.broadcast %102 : vector<1x128xf32> to vector<22x128xf32>
    %484 = arith.addf %482, %483 : vector<22x128xf32>
    %cst_39 = arith.constant 2.000000e-01 : f32
    %485 = vector.broadcast %cst_39 : f32 to vector<22x128xf32>
    %486 = arith.mulf %485, %484 : vector<22x128xf32>
    %487 = arith.maximumf %484, %486 : vector<22x128xf32>
    %cst_40 = arith.constant 0.000000e+00 : f32
    %488 = vector.shape_cast %111 : vector<22x1xi1> to vector<22x1xi1>
    %489 = vector.broadcast %488 : vector<22x1xi1> to vector<22x128xi1>
    %490 = vector.broadcast %cst_40 : f32 to vector<22x128xf32>
    %491 = arith.select %489, %487, %490 : vector<22x128xi1>, vector<22x128xf32>
    %492 = vector.broadcast %112 : vector<1x128xf32> to vector<22x128xf32>
    %493 = arith.mulf %168, %492 : vector<22x128xf32>
    %494 = vector.broadcast %113 : vector<1x128xf32> to vector<22x128xf32>
    %495 = arith.mulf %172, %494 : vector<22x128xf32>
    %496 = arith.addf %493, %495 : vector<22x128xf32>
    %497 = vector.broadcast %114 : vector<1x128xf32> to vector<22x128xf32>
    %498 = arith.mulf %176, %497 : vector<22x128xf32>
    %499 = arith.addf %496, %498 : vector<22x128xf32>
    %500 = vector.broadcast %115 : vector<1x128xf32> to vector<22x128xf32>
    %501 = arith.mulf %180, %500 : vector<22x128xf32>
    %502 = arith.addf %499, %501 : vector<22x128xf32>
    %503 = vector.broadcast %116 : vector<1x128xf32> to vector<22x128xf32>
    %504 = arith.mulf %184, %503 : vector<22x128xf32>
    %505 = arith.addf %502, %504 : vector<22x128xf32>
    %506 = vector.broadcast %117 : vector<1x128xf32> to vector<22x128xf32>
    %507 = arith.mulf %188, %506 : vector<22x128xf32>
    %508 = arith.addf %505, %507 : vector<22x128xf32>
    %509 = vector.broadcast %118 : vector<1x128xf32> to vector<22x128xf32>
    %510 = arith.mulf %192, %509 : vector<22x128xf32>
    %511 = arith.addf %508, %510 : vector<22x128xf32>
    %512 = vector.broadcast %119 : vector<1x128xf32> to vector<22x128xf32>
    %513 = arith.mulf %196, %512 : vector<22x128xf32>
    %514 = arith.addf %511, %513 : vector<22x128xf32>
    %515 = vector.broadcast %120 : vector<1x128xf32> to vector<22x128xf32>
    %516 = arith.mulf %200, %515 : vector<22x128xf32>
    %517 = arith.addf %514, %516 : vector<22x128xf32>
    %518 = vector.broadcast %121 : vector<1x128xf32> to vector<22x128xf32>
    %519 = arith.mulf %204, %518 : vector<22x128xf32>
    %520 = arith.addf %517, %519 : vector<22x128xf32>
    %521 = vector.broadcast %122 : vector<1x128xf32> to vector<22x128xf32>
    %522 = arith.mulf %208, %521 : vector<22x128xf32>
    %523 = arith.addf %520, %522 : vector<22x128xf32>
    %524 = vector.broadcast %123 : vector<1x128xf32> to vector<22x128xf32>
    %525 = arith.mulf %212, %524 : vector<22x128xf32>
    %526 = arith.addf %523, %525 : vector<22x128xf32>
    %527 = vector.broadcast %124 : vector<1x128xf32> to vector<22x128xf32>
    %528 = arith.mulf %216, %527 : vector<22x128xf32>
    %529 = arith.addf %526, %528 : vector<22x128xf32>
    %530 = vector.broadcast %125 : vector<1x128xf32> to vector<22x128xf32>
    %531 = arith.mulf %220, %530 : vector<22x128xf32>
    %532 = arith.addf %529, %531 : vector<22x128xf32>
    %533 = vector.broadcast %126 : vector<1x128xf32> to vector<22x128xf32>
    %534 = arith.mulf %224, %533 : vector<22x128xf32>
    %535 = arith.addf %532, %534 : vector<22x128xf32>
    %536 = vector.broadcast %127 : vector<1x128xf32> to vector<22x128xf32>
    %537 = arith.mulf %228, %536 : vector<22x128xf32>
    %538 = arith.addf %535, %537 : vector<22x128xf32>
    %539 = vector.broadcast %128 : vector<1x128xf32> to vector<22x128xf32>
    %540 = arith.mulf %232, %539 : vector<22x128xf32>
    %541 = arith.addf %538, %540 : vector<22x128xf32>
    %542 = vector.broadcast %129 : vector<1x128xf32> to vector<22x128xf32>
    %543 = arith.mulf %305, %542 : vector<22x128xf32>
    %544 = arith.addf %541, %543 : vector<22x128xf32>
    %545 = vector.broadcast %130 : vector<1x128xf32> to vector<22x128xf32>
    %546 = arith.mulf %309, %545 : vector<22x128xf32>
    %547 = arith.addf %544, %546 : vector<22x128xf32>
    %548 = vector.broadcast %131 : vector<1x128xf32> to vector<22x128xf32>
    %549 = arith.mulf %394, %548 : vector<22x128xf32>
    %550 = arith.addf %547, %549 : vector<22x128xf32>
    %551 = vector.broadcast %132 : vector<1x128xf32> to vector<22x128xf32>
    %552 = arith.mulf %398, %551 : vector<22x128xf32>
    %553 = arith.addf %550, %552 : vector<22x128xf32>
    %554 = vector.broadcast %133 : vector<1x128xf32> to vector<22x128xf32>
    %555 = arith.mulf %471, %554 : vector<22x128xf32>
    %556 = arith.addf %553, %555 : vector<22x128xf32>
    %557 = vector.broadcast %134 : vector<1x128xf32> to vector<22x128xf32>
    %558 = arith.mulf %475, %557 : vector<22x128xf32>
    %559 = arith.addf %556, %558 : vector<22x128xf32>
    %560 = vector.extract_strided_slice %39 {offsets = [2, 0], sizes = [22, 128], strides = [1, 1]} : vector<24x128xf32> to vector<22x128xf32>
    %561 = vector.broadcast %135 : vector<1x128xf32> to vector<22x128xf32>
    %562 = arith.mulf %560, %561 : vector<22x128xf32>
    %563 = arith.addf %559, %562 : vector<22x128xf32>
    %564 = vector.extract_strided_slice %44 {offsets = [2, 0], sizes = [22, 128], strides = [1, 1]} : vector<24x128xf32> to vector<22x128xf32>
    %565 = vector.broadcast %136 : vector<1x128xf32> to vector<22x128xf32>
    %566 = arith.mulf %564, %565 : vector<22x128xf32>
    %567 = arith.addf %563, %566 : vector<22x128xf32>
    %568 = arith.truncf %567 : vector<22x128xf32> to vector<22x128xbf16>
    %569 = vector.broadcast %112 : vector<1x128xf32> to vector<22x128xf32>
    %570 = arith.mulf %176, %569 : vector<22x128xf32>
    %571 = vector.broadcast %113 : vector<1x128xf32> to vector<22x128xf32>
    %572 = arith.mulf %180, %571 : vector<22x128xf32>
    %573 = arith.addf %570, %572 : vector<22x128xf32>
    %574 = vector.broadcast %114 : vector<1x128xf32> to vector<22x128xf32>
    %575 = arith.mulf %184, %574 : vector<22x128xf32>
    %576 = arith.addf %573, %575 : vector<22x128xf32>
    %577 = vector.broadcast %115 : vector<1x128xf32> to vector<22x128xf32>
    %578 = arith.mulf %188, %577 : vector<22x128xf32>
    %579 = arith.addf %576, %578 : vector<22x128xf32>
    %580 = vector.broadcast %116 : vector<1x128xf32> to vector<22x128xf32>
    %581 = arith.mulf %192, %580 : vector<22x128xf32>
    %582 = arith.addf %579, %581 : vector<22x128xf32>
    %583 = vector.broadcast %117 : vector<1x128xf32> to vector<22x128xf32>
    %584 = arith.mulf %196, %583 : vector<22x128xf32>
    %585 = arith.addf %582, %584 : vector<22x128xf32>
    %586 = vector.broadcast %118 : vector<1x128xf32> to vector<22x128xf32>
    %587 = arith.mulf %200, %586 : vector<22x128xf32>
    %588 = arith.addf %585, %587 : vector<22x128xf32>
    %589 = vector.broadcast %119 : vector<1x128xf32> to vector<22x128xf32>
    %590 = arith.mulf %204, %589 : vector<22x128xf32>
    %591 = arith.addf %588, %590 : vector<22x128xf32>
    %592 = vector.broadcast %120 : vector<1x128xf32> to vector<22x128xf32>
    %593 = arith.mulf %208, %592 : vector<22x128xf32>
    %594 = arith.addf %591, %593 : vector<22x128xf32>
    %595 = vector.broadcast %121 : vector<1x128xf32> to vector<22x128xf32>
    %596 = arith.mulf %212, %595 : vector<22x128xf32>
    %597 = arith.addf %594, %596 : vector<22x128xf32>
    %598 = vector.broadcast %122 : vector<1x128xf32> to vector<22x128xf32>
    %599 = arith.mulf %216, %598 : vector<22x128xf32>
    %600 = arith.addf %597, %599 : vector<22x128xf32>
    %601 = vector.broadcast %123 : vector<1x128xf32> to vector<22x128xf32>
    %602 = arith.mulf %220, %601 : vector<22x128xf32>
    %603 = arith.addf %600, %602 : vector<22x128xf32>
    %604 = vector.broadcast %124 : vector<1x128xf32> to vector<22x128xf32>
    %605 = arith.mulf %224, %604 : vector<22x128xf32>
    %606 = arith.addf %603, %605 : vector<22x128xf32>
    %607 = vector.broadcast %125 : vector<1x128xf32> to vector<22x128xf32>
    %608 = arith.mulf %228, %607 : vector<22x128xf32>
    %609 = arith.addf %606, %608 : vector<22x128xf32>
    %610 = vector.broadcast %126 : vector<1x128xf32> to vector<22x128xf32>
    %611 = arith.mulf %232, %610 : vector<22x128xf32>
    %612 = arith.addf %609, %611 : vector<22x128xf32>
    %613 = vector.broadcast %127 : vector<1x128xf32> to vector<22x128xf32>
    %614 = arith.mulf %305, %613 : vector<22x128xf32>
    %615 = arith.addf %612, %614 : vector<22x128xf32>
    %616 = vector.broadcast %128 : vector<1x128xf32> to vector<22x128xf32>
    %617 = arith.mulf %309, %616 : vector<22x128xf32>
    %618 = arith.addf %615, %617 : vector<22x128xf32>
    %619 = vector.broadcast %129 : vector<1x128xf32> to vector<22x128xf32>
    %620 = arith.mulf %394, %619 : vector<22x128xf32>
    %621 = arith.addf %618, %620 : vector<22x128xf32>
    %622 = vector.broadcast %130 : vector<1x128xf32> to vector<22x128xf32>
    %623 = arith.mulf %398, %622 : vector<22x128xf32>
    %624 = arith.addf %621, %623 : vector<22x128xf32>
    %625 = vector.broadcast %131 : vector<1x128xf32> to vector<22x128xf32>
    %626 = arith.mulf %471, %625 : vector<22x128xf32>
    %627 = arith.addf %624, %626 : vector<22x128xf32>
    %628 = vector.broadcast %132 : vector<1x128xf32> to vector<22x128xf32>
    %629 = arith.mulf %475, %628 : vector<22x128xf32>
    %630 = arith.addf %627, %629 : vector<22x128xf32>
    %631 = vector.broadcast %133 : vector<1x128xf32> to vector<22x128xf32>
    %632 = arith.mulf %560, %631 : vector<22x128xf32>
    %633 = arith.addf %630, %632 : vector<22x128xf32>
    %634 = vector.broadcast %134 : vector<1x128xf32> to vector<22x128xf32>
    %635 = arith.mulf %564, %634 : vector<22x128xf32>
    %636 = arith.addf %633, %635 : vector<22x128xf32>
    %637 = vector.extract_strided_slice %49 {offsets = [2, 0], sizes = [22, 128], strides = [1, 1]} : vector<24x128xf32> to vector<22x128xf32>
    %638 = vector.broadcast %135 : vector<1x128xf32> to vector<22x128xf32>
    %639 = arith.mulf %637, %638 : vector<22x128xf32>
    %640 = arith.addf %636, %639 : vector<22x128xf32>
    %641 = vector.extract_strided_slice %54 {offsets = [2, 0], sizes = [22, 128], strides = [1, 1]} : vector<24x128xf32> to vector<22x128xf32>
    %642 = vector.broadcast %136 : vector<1x128xf32> to vector<22x128xf32>
    %643 = arith.mulf %641, %642 : vector<22x128xf32>
    %644 = arith.addf %640, %643 : vector<22x128xf32>
    %645 = arith.truncf %644 : vector<22x128xf32> to vector<22x128xbf16>
    %cst_41 = arith.constant dense<0.000000e+00> : vector<22x128xf32>
    %646 = tpu.matmul %568, %101, %cst_41 {dimension_numbers = #tpu.dot_dimension_numbers<[1], [0], [0], [1], [0, 0, 1, 1], [], []>} : vector<22x128xbf16>, vector<128x128xbf16>, vector<22x128xf32> -> vector<22x128xf32>
    %cst_42 = arith.constant dense<0.000000e+00> : vector<22x128xf32>
    %647 = tpu.matmul %645, %101, %cst_42 {dimension_numbers = #tpu.dot_dimension_numbers<[1], [0], [0], [1], [0, 0, 1, 1], [], []>} : vector<22x128xbf16>, vector<128x128xbf16>, vector<22x128xf32> -> vector<22x128xf32>
    %648 = arith.maximumf %646, %647 : vector<22x128xf32>
    %649 = vector.broadcast %102 : vector<1x128xf32> to vector<22x128xf32>
    %650 = arith.addf %648, %649 : vector<22x128xf32>
    %cst_43 = arith.constant 2.000000e-01 : f32
    %651 = vector.broadcast %cst_43 : f32 to vector<22x128xf32>
    %652 = arith.mulf %651, %650 : vector<22x128xf32>
    %653 = arith.maximumf %650, %652 : vector<22x128xf32>
    %cst_44 = arith.constant 0.000000e+00 : f32
    %654 = vector.shape_cast %111 : vector<22x1xi1> to vector<22x1xi1>
    %655 = vector.broadcast %654 : vector<22x1xi1> to vector<22x128xi1>
    %656 = vector.broadcast %cst_44 : f32 to vector<22x128xf32>
    %657 = arith.select %655, %653, %656 : vector<22x128xi1>, vector<22x128xf32>
    %658 = vector.broadcast %112 : vector<1x128xf32> to vector<22x128xf32>
    %659 = arith.mulf %184, %658 : vector<22x128xf32>
    %660 = vector.broadcast %113 : vector<1x128xf32> to vector<22x128xf32>
    %661 = arith.mulf %188, %660 : vector<22x128xf32>
    %662 = arith.addf %659, %661 : vector<22x128xf32>
    %663 = vector.broadcast %114 : vector<1x128xf32> to vector<22x128xf32>
    %664 = arith.mulf %192, %663 : vector<22x128xf32>
    %665 = arith.addf %662, %664 : vector<22x128xf32>
    %666 = vector.broadcast %115 : vector<1x128xf32> to vector<22x128xf32>
    %667 = arith.mulf %196, %666 : vector<22x128xf32>
    %668 = arith.addf %665, %667 : vector<22x128xf32>
    %669 = vector.broadcast %116 : vector<1x128xf32> to vector<22x128xf32>
    %670 = arith.mulf %200, %669 : vector<22x128xf32>
    %671 = arith.addf %668, %670 : vector<22x128xf32>
    %672 = vector.broadcast %117 : vector<1x128xf32> to vector<22x128xf32>
    %673 = arith.mulf %204, %672 : vector<22x128xf32>
    %674 = arith.addf %671, %673 : vector<22x128xf32>
    %675 = vector.broadcast %118 : vector<1x128xf32> to vector<22x128xf32>
    %676 = arith.mulf %208, %675 : vector<22x128xf32>
    %677 = arith.addf %674, %676 : vector<22x128xf32>
    %678 = vector.broadcast %119 : vector<1x128xf32> to vector<22x128xf32>
    %679 = arith.mulf %212, %678 : vector<22x128xf32>
    %680 = arith.addf %677, %679 : vector<22x128xf32>
    %681 = vector.broadcast %120 : vector<1x128xf32> to vector<22x128xf32>
    %682 = arith.mulf %216, %681 : vector<22x128xf32>
    %683 = arith.addf %680, %682 : vector<22x128xf32>
    %684 = vector.broadcast %121 : vector<1x128xf32> to vector<22x128xf32>
    %685 = arith.mulf %220, %684 : vector<22x128xf32>
    %686 = arith.addf %683, %685 : vector<22x128xf32>
    %687 = vector.broadcast %122 : vector<1x128xf32> to vector<22x128xf32>
    %688 = arith.mulf %224, %687 : vector<22x128xf32>
    %689 = arith.addf %686, %688 : vector<22x128xf32>
    %690 = vector.broadcast %123 : vector<1x128xf32> to vector<22x128xf32>
    %691 = arith.mulf %228, %690 : vector<22x128xf32>
    %692 = arith.addf %689, %691 : vector<22x128xf32>
    %693 = vector.broadcast %124 : vector<1x128xf32> to vector<22x128xf32>
    %694 = arith.mulf %232, %693 : vector<22x128xf32>
    %695 = arith.addf %692, %694 : vector<22x128xf32>
    %696 = vector.broadcast %125 : vector<1x128xf32> to vector<22x128xf32>
    %697 = arith.mulf %305, %696 : vector<22x128xf32>
    %698 = arith.addf %695, %697 : vector<22x128xf32>
    %699 = vector.broadcast %126 : vector<1x128xf32> to vector<22x128xf32>
    %700 = arith.mulf %309, %699 : vector<22x128xf32>
    %701 = arith.addf %698, %700 : vector<22x128xf32>
    %702 = vector.broadcast %127 : vector<1x128xf32> to vector<22x128xf32>
    %703 = arith.mulf %394, %702 : vector<22x128xf32>
    %704 = arith.addf %701, %703 : vector<22x128xf32>
    %705 = vector.broadcast %128 : vector<1x128xf32> to vector<22x128xf32>
    %706 = arith.mulf %398, %705 : vector<22x128xf32>
    %707 = arith.addf %704, %706 : vector<22x128xf32>
    %708 = vector.broadcast %129 : vector<1x128xf32> to vector<22x128xf32>
    %709 = arith.mulf %471, %708 : vector<22x128xf32>
    %710 = arith.addf %707, %709 : vector<22x128xf32>
    %711 = vector.broadcast %130 : vector<1x128xf32> to vector<22x128xf32>
    %712 = arith.mulf %475, %711 : vector<22x128xf32>
    %713 = arith.addf %710, %712 : vector<22x128xf32>
    %714 = vector.broadcast %131 : vector<1x128xf32> to vector<22x128xf32>
    %715 = arith.mulf %560, %714 : vector<22x128xf32>
    %716 = arith.addf %713, %715 : vector<22x128xf32>
    %717 = vector.broadcast %132 : vector<1x128xf32> to vector<22x128xf32>
    %718 = arith.mulf %564, %717 : vector<22x128xf32>
    %719 = arith.addf %716, %718 : vector<22x128xf32>
    %720 = vector.broadcast %133 : vector<1x128xf32> to vector<22x128xf32>
    %721 = arith.mulf %637, %720 : vector<22x128xf32>
    %722 = arith.addf %719, %721 : vector<22x128xf32>
    %723 = vector.broadcast %134 : vector<1x128xf32> to vector<22x128xf32>
    %724 = arith.mulf %641, %723 : vector<22x128xf32>
    %725 = arith.addf %722, %724 : vector<22x128xf32>
    %726 = vector.extract_strided_slice %59 {offsets = [2, 0], sizes = [22, 128], strides = [1, 1]} : vector<24x128xf32> to vector<22x128xf32>
    %727 = vector.broadcast %135 : vector<1x128xf32> to vector<22x128xf32>
    %728 = arith.mulf %726, %727 : vector<22x128xf32>
    %729 = arith.addf %725, %728 : vector<22x128xf32>
    %730 = vector.extract_strided_slice %64 {offsets = [2, 0], sizes = [22, 128], strides = [1, 1]} : vector<24x128xf32> to vector<22x128xf32>
    %731 = vector.broadcast %136 : vector<1x128xf32> to vector<22x128xf32>
    %732 = arith.mulf %730, %731 : vector<22x128xf32>
    %733 = arith.addf %729, %732 : vector<22x128xf32>
    %734 = arith.truncf %733 : vector<22x128xf32> to vector<22x128xbf16>
    %735 = vector.broadcast %112 : vector<1x128xf32> to vector<22x128xf32>
    %736 = arith.mulf %192, %735 : vector<22x128xf32>
    %737 = vector.broadcast %113 : vector<1x128xf32> to vector<22x128xf32>
    %738 = arith.mulf %196, %737 : vector<22x128xf32>
    %739 = arith.addf %736, %738 : vector<22x128xf32>
    %740 = vector.broadcast %114 : vector<1x128xf32> to vector<22x128xf32>
    %741 = arith.mulf %200, %740 : vector<22x128xf32>
    %742 = arith.addf %739, %741 : vector<22x128xf32>
    %743 = vector.broadcast %115 : vector<1x128xf32> to vector<22x128xf32>
    %744 = arith.mulf %204, %743 : vector<22x128xf32>
    %745 = arith.addf %742, %744 : vector<22x128xf32>
    %746 = vector.broadcast %116 : vector<1x128xf32> to vector<22x128xf32>
    %747 = arith.mulf %208, %746 : vector<22x128xf32>
    %748 = arith.addf %745, %747 : vector<22x128xf32>
    %749 = vector.broadcast %117 : vector<1x128xf32> to vector<22x128xf32>
    %750 = arith.mulf %212, %749 : vector<22x128xf32>
    %751 = arith.addf %748, %750 : vector<22x128xf32>
    %752 = vector.broadcast %118 : vector<1x128xf32> to vector<22x128xf32>
    %753 = arith.mulf %216, %752 : vector<22x128xf32>
    %754 = arith.addf %751, %753 : vector<22x128xf32>
    %755 = vector.broadcast %119 : vector<1x128xf32> to vector<22x128xf32>
    %756 = arith.mulf %220, %755 : vector<22x128xf32>
    %757 = arith.addf %754, %756 : vector<22x128xf32>
    %758 = vector.broadcast %120 : vector<1x128xf32> to vector<22x128xf32>
    %759 = arith.mulf %224, %758 : vector<22x128xf32>
    %760 = arith.addf %757, %759 : vector<22x128xf32>
    %761 = vector.broadcast %121 : vector<1x128xf32> to vector<22x128xf32>
    %762 = arith.mulf %228, %761 : vector<22x128xf32>
    %763 = arith.addf %760, %762 : vector<22x128xf32>
    %764 = vector.broadcast %122 : vector<1x128xf32> to vector<22x128xf32>
    %765 = arith.mulf %232, %764 : vector<22x128xf32>
    %766 = arith.addf %763, %765 : vector<22x128xf32>
    %767 = vector.broadcast %123 : vector<1x128xf32> to vector<22x128xf32>
    %768 = arith.mulf %305, %767 : vector<22x128xf32>
    %769 = arith.addf %766, %768 : vector<22x128xf32>
    %770 = vector.broadcast %124 : vector<1x128xf32> to vector<22x128xf32>
    %771 = arith.mulf %309, %770 : vector<22x128xf32>
    %772 = arith.addf %769, %771 : vector<22x128xf32>
    %773 = vector.broadcast %125 : vector<1x128xf32> to vector<22x128xf32>
    %774 = arith.mulf %394, %773 : vector<22x128xf32>
    %775 = arith.addf %772, %774 : vector<22x128xf32>
    %776 = vector.broadcast %126 : vector<1x128xf32> to vector<22x128xf32>
    %777 = arith.mulf %398, %776 : vector<22x128xf32>
    %778 = arith.addf %775, %777 : vector<22x128xf32>
    %779 = vector.broadcast %127 : vector<1x128xf32> to vector<22x128xf32>
    %780 = arith.mulf %471, %779 : vector<22x128xf32>
    %781 = arith.addf %778, %780 : vector<22x128xf32>
    %782 = vector.broadcast %128 : vector<1x128xf32> to vector<22x128xf32>
    %783 = arith.mulf %475, %782 : vector<22x128xf32>
    %784 = arith.addf %781, %783 : vector<22x128xf32>
    %785 = vector.broadcast %129 : vector<1x128xf32> to vector<22x128xf32>
    %786 = arith.mulf %560, %785 : vector<22x128xf32>
    %787 = arith.addf %784, %786 : vector<22x128xf32>
    %788 = vector.broadcast %130 : vector<1x128xf32> to vector<22x128xf32>
    %789 = arith.mulf %564, %788 : vector<22x128xf32>
    %790 = arith.addf %787, %789 : vector<22x128xf32>
    %791 = vector.broadcast %131 : vector<1x128xf32> to vector<22x128xf32>
    %792 = arith.mulf %637, %791 : vector<22x128xf32>
    %793 = arith.addf %790, %792 : vector<22x128xf32>
    %794 = vector.broadcast %132 : vector<1x128xf32> to vector<22x128xf32>
    %795 = arith.mulf %641, %794 : vector<22x128xf32>
    %796 = arith.addf %793, %795 : vector<22x128xf32>
    %797 = vector.broadcast %133 : vector<1x128xf32> to vector<22x128xf32>
    %798 = arith.mulf %726, %797 : vector<22x128xf32>
    %799 = arith.addf %796, %798 : vector<22x128xf32>
    %800 = vector.broadcast %134 : vector<1x128xf32> to vector<22x128xf32>
    %801 = arith.mulf %730, %800 : vector<22x128xf32>
    %802 = arith.addf %799, %801 : vector<22x128xf32>
    %803 = vector.extract_strided_slice %69 {offsets = [2, 0], sizes = [22, 128], strides = [1, 1]} : vector<24x128xf32> to vector<22x128xf32>
    %804 = vector.broadcast %135 : vector<1x128xf32> to vector<22x128xf32>
    %805 = arith.mulf %803, %804 : vector<22x128xf32>
    %806 = arith.addf %802, %805 : vector<22x128xf32>
    %807 = vector.extract_strided_slice %74 {offsets = [2, 0], sizes = [22, 128], strides = [1, 1]} : vector<24x128xf32> to vector<22x128xf32>
    %808 = vector.broadcast %136 : vector<1x128xf32> to vector<22x128xf32>
    %809 = arith.mulf %807, %808 : vector<22x128xf32>
    %810 = arith.addf %806, %809 : vector<22x128xf32>
    %811 = arith.truncf %810 : vector<22x128xf32> to vector<22x128xbf16>
    %cst_45 = arith.constant dense<0.000000e+00> : vector<22x128xf32>
    %812 = tpu.matmul %734, %101, %cst_45 {dimension_numbers = #tpu.dot_dimension_numbers<[1], [0], [0], [1], [0, 0, 1, 1], [], []>} : vector<22x128xbf16>, vector<128x128xbf16>, vector<22x128xf32> -> vector<22x128xf32>
    %cst_46 = arith.constant dense<0.000000e+00> : vector<22x128xf32>
    %813 = tpu.matmul %811, %101, %cst_46 {dimension_numbers = #tpu.dot_dimension_numbers<[1], [0], [0], [1], [0, 0, 1, 1], [], []>} : vector<22x128xbf16>, vector<128x128xbf16>, vector<22x128xf32> -> vector<22x128xf32>
    %814 = arith.maximumf %812, %813 : vector<22x128xf32>
    %815 = vector.broadcast %102 : vector<1x128xf32> to vector<22x128xf32>
    %816 = arith.addf %814, %815 : vector<22x128xf32>
    %cst_47 = arith.constant 2.000000e-01 : f32
    %817 = vector.broadcast %cst_47 : f32 to vector<22x128xf32>
    %818 = arith.mulf %817, %816 : vector<22x128xf32>
    %819 = arith.maximumf %816, %818 : vector<22x128xf32>
    %cst_48 = arith.constant 0.000000e+00 : f32
    %820 = vector.shape_cast %111 : vector<22x1xi1> to vector<22x1xi1>
    %821 = vector.broadcast %820 : vector<22x1xi1> to vector<22x128xi1>
    %822 = vector.broadcast %cst_48 : f32 to vector<22x128xf32>
    %823 = arith.select %821, %819, %822 : vector<22x128xi1>, vector<22x128xf32>
    %c0_49 = arith.constant 0 : index
    %c0_50 = arith.constant 0 : index
    %824 = vector.load %arg8[%c0_49, %c0_50] : memref<9x128xf32, #tpu.memory_space<vmem>>, vector<9x128xf32>
    %c0_51 = arith.constant 0 : index
    %c0_52 = arith.constant 0 : index
    %825 = vector.load %arg9[%c0_51, %c0_52] : memref<128x256xbf16, #tpu.memory_space<vmem>>, vector<128x256xbf16>
    %c0_53 = arith.constant 0 : index
    %c0_54 = arith.constant 0 : index
    %826 = vector.load %arg10[%c0_53, %c0_54] : memref<1x256xf32, #tpu.memory_space<vmem>>, vector<1x256xf32>
    %827 = tpu.iota {dimensions = array<i32: 0>} : vector<20x1xi32>
    %c-2_i32 = arith.constant -2 : i32
    %828 = arith.addi %0, %c-2_i32 : i32
    %829 = vector.broadcast %828 : i32 to vector<20x1xi32>
    %830 = arith.addi %829, %827 : vector<20x1xi32>
    %c0_i32_55 = arith.constant 0 : i32
    %831 = vector.broadcast %c0_i32_55 : i32 to vector<20x1xi32>
    %832 = arith.cmpi sge, %830, %831 : vector<20x1xi32>
    %c16_i32_56 = arith.constant 16 : i32
    %833 = vector.broadcast %c16_i32_56 : i32 to vector<20x1xi32>
    %834 = arith.cmpi slt, %830, %833 : vector<20x1xi32>
    %835 = arith.andi %832, %834 : vector<20x1xi1>
    %836 = vector.extract_strided_slice %824 {offsets = [0, 0], sizes = [1, 128], strides = [1, 1]} : vector<9x128xf32> to vector<1x128xf32>
    %837 = vector.extract_strided_slice %824 {offsets = [1, 0], sizes = [1, 128], strides = [1, 1]} : vector<9x128xf32> to vector<1x128xf32>
    %838 = vector.extract_strided_slice %824 {offsets = [2, 0], sizes = [1, 128], strides = [1, 1]} : vector<9x128xf32> to vector<1x128xf32>
    %839 = vector.extract_strided_slice %824 {offsets = [3, 0], sizes = [1, 128], strides = [1, 1]} : vector<9x128xf32> to vector<1x128xf32>
    %840 = vector.extract_strided_slice %824 {offsets = [4, 0], sizes = [1, 128], strides = [1, 1]} : vector<9x128xf32> to vector<1x128xf32>
    %841 = vector.extract_strided_slice %824 {offsets = [5, 0], sizes = [1, 128], strides = [1, 1]} : vector<9x128xf32> to vector<1x128xf32>
    %842 = vector.extract_strided_slice %824 {offsets = [6, 0], sizes = [1, 128], strides = [1, 1]} : vector<9x128xf32> to vector<1x128xf32>
    %843 = vector.extract_strided_slice %824 {offsets = [7, 0], sizes = [1, 128], strides = [1, 1]} : vector<9x128xf32> to vector<1x128xf32>
    %844 = vector.extract_strided_slice %824 {offsets = [8, 0], sizes = [1, 128], strides = [1, 1]} : vector<9x128xf32> to vector<1x128xf32>
    %845 = vector.extract_strided_slice %325 {offsets = [0, 0], sizes = [20, 128], strides = [1, 1]} : vector<22x128xf32> to vector<20x128xf32>
    %846 = vector.broadcast %836 : vector<1x128xf32> to vector<20x128xf32>
    %847 = arith.mulf %845, %846 : vector<20x128xf32>
    %848 = vector.extract_strided_slice %491 {offsets = [0, 0], sizes = [20, 128], strides = [1, 1]} : vector<22x128xf32> to vector<20x128xf32>
    %849 = vector.broadcast %837 : vector<1x128xf32> to vector<20x128xf32>
    %850 = arith.mulf %848, %849 : vector<20x128xf32>
    %851 = arith.addf %847, %850 : vector<20x128xf32>
    %852 = vector.extract_strided_slice %657 {offsets = [0, 0], sizes = [20, 128], strides = [1, 1]} : vector<22x128xf32> to vector<20x128xf32>
    %853 = vector.broadcast %838 : vector<1x128xf32> to vector<20x128xf32>
    %854 = arith.mulf %852, %853 : vector<20x128xf32>
    %855 = arith.addf %851, %854 : vector<20x128xf32>
    %856 = vector.extract_strided_slice %823 {offsets = [0, 0], sizes = [20, 128], strides = [1, 1]} : vector<22x128xf32> to vector<20x128xf32>
    %857 = vector.broadcast %839 : vector<1x128xf32> to vector<20x128xf32>
    %858 = arith.mulf %856, %857 : vector<20x128xf32>
    %859 = arith.addf %855, %858 : vector<20x128xf32>
    %860 = vector.extract_strided_slice %325 {offsets = [1, 0], sizes = [20, 128], strides = [1, 1]} : vector<22x128xf32> to vector<20x128xf32>
    %861 = vector.broadcast %840 : vector<1x128xf32> to vector<20x128xf32>
    %862 = arith.mulf %860, %861 : vector<20x128xf32>
    %863 = arith.addf %859, %862 : vector<20x128xf32>
    %864 = vector.extract_strided_slice %491 {offsets = [1, 0], sizes = [20, 128], strides = [1, 1]} : vector<22x128xf32> to vector<20x128xf32>
    %865 = vector.broadcast %841 : vector<1x128xf32> to vector<20x128xf32>
    %866 = arith.mulf %864, %865 : vector<20x128xf32>
    %867 = arith.addf %863, %866 : vector<20x128xf32>
    %868 = vector.extract_strided_slice %657 {offsets = [1, 0], sizes = [20, 128], strides = [1, 1]} : vector<22x128xf32> to vector<20x128xf32>
    %869 = vector.broadcast %842 : vector<1x128xf32> to vector<20x128xf32>
    %870 = arith.mulf %868, %869 : vector<20x128xf32>
    %871 = arith.addf %867, %870 : vector<20x128xf32>
    %872 = vector.extract_strided_slice %823 {offsets = [1, 0], sizes = [20, 128], strides = [1, 1]} : vector<22x128xf32> to vector<20x128xf32>
    %873 = vector.broadcast %843 : vector<1x128xf32> to vector<20x128xf32>
    %874 = arith.mulf %872, %873 : vector<20x128xf32>
    %875 = arith.addf %871, %874 : vector<20x128xf32>
    %876 = vector.extract_strided_slice %325 {offsets = [2, 0], sizes = [20, 128], strides = [1, 1]} : vector<22x128xf32> to vector<20x128xf32>
    %877 = vector.broadcast %844 : vector<1x128xf32> to vector<20x128xf32>
    %878 = arith.mulf %876, %877 : vector<20x128xf32>
    %879 = arith.addf %875, %878 : vector<20x128xf32>
    %880 = arith.truncf %879 : vector<20x128xf32> to vector<20x128xbf16>
    %881 = vector.broadcast %836 : vector<1x128xf32> to vector<20x128xf32>
    %882 = arith.mulf %848, %881 : vector<20x128xf32>
    %883 = vector.broadcast %837 : vector<1x128xf32> to vector<20x128xf32>
    %884 = arith.mulf %852, %883 : vector<20x128xf32>
    %885 = arith.addf %882, %884 : vector<20x128xf32>
    %886 = vector.broadcast %838 : vector<1x128xf32> to vector<20x128xf32>
    %887 = arith.mulf %856, %886 : vector<20x128xf32>
    %888 = arith.addf %885, %887 : vector<20x128xf32>
    %889 = vector.broadcast %839 : vector<1x128xf32> to vector<20x128xf32>
    %890 = arith.mulf %860, %889 : vector<20x128xf32>
    %891 = arith.addf %888, %890 : vector<20x128xf32>
    %892 = vector.broadcast %840 : vector<1x128xf32> to vector<20x128xf32>
    %893 = arith.mulf %864, %892 : vector<20x128xf32>
    %894 = arith.addf %891, %893 : vector<20x128xf32>
    %895 = vector.broadcast %841 : vector<1x128xf32> to vector<20x128xf32>
    %896 = arith.mulf %868, %895 : vector<20x128xf32>
    %897 = arith.addf %894, %896 : vector<20x128xf32>
    %898 = vector.broadcast %842 : vector<1x128xf32> to vector<20x128xf32>
    %899 = arith.mulf %872, %898 : vector<20x128xf32>
    %900 = arith.addf %897, %899 : vector<20x128xf32>
    %901 = vector.broadcast %843 : vector<1x128xf32> to vector<20x128xf32>
    %902 = arith.mulf %876, %901 : vector<20x128xf32>
    %903 = arith.addf %900, %902 : vector<20x128xf32>
    %904 = vector.extract_strided_slice %491 {offsets = [2, 0], sizes = [20, 128], strides = [1, 1]} : vector<22x128xf32> to vector<20x128xf32>
    %905 = vector.broadcast %844 : vector<1x128xf32> to vector<20x128xf32>
    %906 = arith.mulf %904, %905 : vector<20x128xf32>
    %907 = arith.addf %903, %906 : vector<20x128xf32>
    %908 = arith.truncf %907 : vector<20x128xf32> to vector<20x128xbf16>
    %cst_57 = arith.constant dense<0.000000e+00> : vector<20x256xf32>
    %909 = tpu.matmul %880, %825, %cst_57 {dimension_numbers = #tpu.dot_dimension_numbers<[1], [0], [0], [1], [0, 0, 1, 1], [], []>} : vector<20x128xbf16>, vector<128x256xbf16>, vector<20x256xf32> -> vector<20x256xf32>
    %cst_58 = arith.constant dense<0.000000e+00> : vector<20x256xf32>
    %910 = tpu.matmul %908, %825, %cst_58 {dimension_numbers = #tpu.dot_dimension_numbers<[1], [0], [0], [1], [0, 0, 1, 1], [], []>} : vector<20x128xbf16>, vector<128x256xbf16>, vector<20x256xf32> -> vector<20x256xf32>
    %911 = arith.maximumf %909, %910 : vector<20x256xf32>
    %912 = vector.broadcast %826 : vector<1x256xf32> to vector<20x256xf32>
    %913 = arith.addf %911, %912 : vector<20x256xf32>
    %cst_59 = arith.constant 2.000000e-01 : f32
    %914 = vector.broadcast %cst_59 : f32 to vector<20x256xf32>
    %915 = arith.mulf %914, %913 : vector<20x256xf32>
    %916 = arith.maximumf %913, %915 : vector<20x256xf32>
    %cst_60 = arith.constant 0.000000e+00 : f32
    %917 = vector.shape_cast %835 : vector<20x1xi1> to vector<20x1xi1>
    %918 = vector.broadcast %917 : vector<20x1xi1> to vector<20x256xi1>
    %919 = vector.broadcast %cst_60 : f32 to vector<20x256xf32>
    %920 = arith.select %918, %916, %919 : vector<20x256xi1>, vector<20x256xf32>
    %921 = vector.broadcast %836 : vector<1x128xf32> to vector<20x128xf32>
    %922 = arith.mulf %852, %921 : vector<20x128xf32>
    %923 = vector.broadcast %837 : vector<1x128xf32> to vector<20x128xf32>
    %924 = arith.mulf %856, %923 : vector<20x128xf32>
    %925 = arith.addf %922, %924 : vector<20x128xf32>
    %926 = vector.broadcast %838 : vector<1x128xf32> to vector<20x128xf32>
    %927 = arith.mulf %860, %926 : vector<20x128xf32>
    %928 = arith.addf %925, %927 : vector<20x128xf32>
    %929 = vector.broadcast %839 : vector<1x128xf32> to vector<20x128xf32>
    %930 = arith.mulf %864, %929 : vector<20x128xf32>
    %931 = arith.addf %928, %930 : vector<20x128xf32>
    %932 = vector.broadcast %840 : vector<1x128xf32> to vector<20x128xf32>
    %933 = arith.mulf %868, %932 : vector<20x128xf32>
    %934 = arith.addf %931, %933 : vector<20x128xf32>
    %935 = vector.broadcast %841 : vector<1x128xf32> to vector<20x128xf32>
    %936 = arith.mulf %872, %935 : vector<20x128xf32>
    %937 = arith.addf %934, %936 : vector<20x128xf32>
    %938 = vector.broadcast %842 : vector<1x128xf32> to vector<20x128xf32>
    %939 = arith.mulf %876, %938 : vector<20x128xf32>
    %940 = arith.addf %937, %939 : vector<20x128xf32>
    %941 = vector.broadcast %843 : vector<1x128xf32> to vector<20x128xf32>
    %942 = arith.mulf %904, %941 : vector<20x128xf32>
    %943 = arith.addf %940, %942 : vector<20x128xf32>
    %944 = vector.extract_strided_slice %657 {offsets = [2, 0], sizes = [20, 128], strides = [1, 1]} : vector<22x128xf32> to vector<20x128xf32>
    %945 = vector.broadcast %844 : vector<1x128xf32> to vector<20x128xf32>
    %946 = arith.mulf %944, %945 : vector<20x128xf32>
    %947 = arith.addf %943, %946 : vector<20x128xf32>
    %948 = arith.truncf %947 : vector<20x128xf32> to vector<20x128xbf16>
    %949 = vector.broadcast %836 : vector<1x128xf32> to vector<20x128xf32>
    %950 = arith.mulf %856, %949 : vector<20x128xf32>
    %951 = vector.broadcast %837 : vector<1x128xf32> to vector<20x128xf32>
    %952 = arith.mulf %860, %951 : vector<20x128xf32>
    %953 = arith.addf %950, %952 : vector<20x128xf32>
    %954 = vector.broadcast %838 : vector<1x128xf32> to vector<20x128xf32>
    %955 = arith.mulf %864, %954 : vector<20x128xf32>
    %956 = arith.addf %953, %955 : vector<20x128xf32>
    %957 = vector.broadcast %839 : vector<1x128xf32> to vector<20x128xf32>
    %958 = arith.mulf %868, %957 : vector<20x128xf32>
    %959 = arith.addf %956, %958 : vector<20x128xf32>
    %960 = vector.broadcast %840 : vector<1x128xf32> to vector<20x128xf32>
    %961 = arith.mulf %872, %960 : vector<20x128xf32>
    %962 = arith.addf %959, %961 : vector<20x128xf32>
    %963 = vector.broadcast %841 : vector<1x128xf32> to vector<20x128xf32>
    %964 = arith.mulf %876, %963 : vector<20x128xf32>
    %965 = arith.addf %962, %964 : vector<20x128xf32>
    %966 = vector.broadcast %842 : vector<1x128xf32> to vector<20x128xf32>
    %967 = arith.mulf %904, %966 : vector<20x128xf32>
    %968 = arith.addf %965, %967 : vector<20x128xf32>
    %969 = vector.broadcast %843 : vector<1x128xf32> to vector<20x128xf32>
    %970 = arith.mulf %944, %969 : vector<20x128xf32>
    %971 = arith.addf %968, %970 : vector<20x128xf32>
    %972 = vector.extract_strided_slice %823 {offsets = [2, 0], sizes = [20, 128], strides = [1, 1]} : vector<22x128xf32> to vector<20x128xf32>
    %973 = vector.broadcast %844 : vector<1x128xf32> to vector<20x128xf32>
    %974 = arith.mulf %972, %973 : vector<20x128xf32>
    %975 = arith.addf %971, %974 : vector<20x128xf32>
    %976 = arith.truncf %975 : vector<20x128xf32> to vector<20x128xbf16>
    %cst_61 = arith.constant dense<0.000000e+00> : vector<20x256xf32>
    %977 = tpu.matmul %948, %825, %cst_61 {dimension_numbers = #tpu.dot_dimension_numbers<[1], [0], [0], [1], [0, 0, 1, 1], [], []>} : vector<20x128xbf16>, vector<128x256xbf16>, vector<20x256xf32> -> vector<20x256xf32>
    %cst_62 = arith.constant dense<0.000000e+00> : vector<20x256xf32>
    %978 = tpu.matmul %976, %825, %cst_62 {dimension_numbers = #tpu.dot_dimension_numbers<[1], [0], [0], [1], [0, 0, 1, 1], [], []>} : vector<20x128xbf16>, vector<128x256xbf16>, vector<20x256xf32> -> vector<20x256xf32>
    %979 = arith.maximumf %977, %978 : vector<20x256xf32>
    %980 = vector.broadcast %826 : vector<1x256xf32> to vector<20x256xf32>
    %981 = arith.addf %979, %980 : vector<20x256xf32>
    %cst_63 = arith.constant 2.000000e-01 : f32
    %982 = vector.broadcast %cst_63 : f32 to vector<20x256xf32>
    %983 = arith.mulf %982, %981 : vector<20x256xf32>
    %984 = arith.maximumf %981, %983 : vector<20x256xf32>
    %cst_64 = arith.constant 0.000000e+00 : f32
    %985 = vector.shape_cast %835 : vector<20x1xi1> to vector<20x1xi1>
    %986 = vector.broadcast %985 : vector<20x1xi1> to vector<20x256xi1>
    %987 = vector.broadcast %cst_64 : f32 to vector<20x256xf32>
    %988 = arith.select %986, %984, %987 : vector<20x256xi1>, vector<20x256xf32>
    %c0_65 = arith.constant 0 : index
    %c0_66 = arith.constant 0 : index
    %989 = vector.load %arg11[%c0_65, %c0_66] : memref<9x256xf32, #tpu.memory_space<vmem>>, vector<9x256xf32>
    %c0_67 = arith.constant 0 : index
    %c0_68 = arith.constant 0 : index
    %990 = vector.load %arg12[%c0_67, %c0_68] : memref<256x256xbf16, #tpu.memory_space<vmem>>, vector<256x256xbf16>
    %c0_69 = arith.constant 0 : index
    %c0_70 = arith.constant 0 : index
    %991 = vector.load %arg13[%c0_69, %c0_70] : memref<1x256xf32, #tpu.memory_space<vmem>>, vector<1x256xf32>
    %992 = vector.extract_strided_slice %989 {offsets = [0, 0], sizes = [1, 256], strides = [1, 1]} : vector<9x256xf32> to vector<1x256xf32>
    %993 = vector.extract_strided_slice %989 {offsets = [1, 0], sizes = [1, 256], strides = [1, 1]} : vector<9x256xf32> to vector<1x256xf32>
    %994 = vector.extract_strided_slice %989 {offsets = [2, 0], sizes = [1, 256], strides = [1, 1]} : vector<9x256xf32> to vector<1x256xf32>
    %995 = vector.extract_strided_slice %989 {offsets = [3, 0], sizes = [1, 256], strides = [1, 1]} : vector<9x256xf32> to vector<1x256xf32>
    %996 = vector.extract_strided_slice %989 {offsets = [4, 0], sizes = [1, 256], strides = [1, 1]} : vector<9x256xf32> to vector<1x256xf32>
    %997 = vector.extract_strided_slice %989 {offsets = [5, 0], sizes = [1, 256], strides = [1, 1]} : vector<9x256xf32> to vector<1x256xf32>
    %998 = vector.extract_strided_slice %989 {offsets = [6, 0], sizes = [1, 256], strides = [1, 1]} : vector<9x256xf32> to vector<1x256xf32>
    %999 = vector.extract_strided_slice %989 {offsets = [7, 0], sizes = [1, 256], strides = [1, 1]} : vector<9x256xf32> to vector<1x256xf32>
    %1000 = vector.extract_strided_slice %989 {offsets = [8, 0], sizes = [1, 256], strides = [1, 1]} : vector<9x256xf32> to vector<1x256xf32>
    %1001 = vector.extract_strided_slice %920 {offsets = [0, 0], sizes = [16, 256], strides = [1, 1]} : vector<20x256xf32> to vector<16x256xf32>
    %1002 = vector.broadcast %992 : vector<1x256xf32> to vector<16x256xf32>
    %1003 = arith.mulf %1001, %1002 : vector<16x256xf32>
    %1004 = vector.extract_strided_slice %988 {offsets = [0, 0], sizes = [16, 256], strides = [1, 1]} : vector<20x256xf32> to vector<16x256xf32>
    %1005 = vector.broadcast %993 : vector<1x256xf32> to vector<16x256xf32>
    %1006 = arith.mulf %1004, %1005 : vector<16x256xf32>
    %1007 = arith.addf %1003, %1006 : vector<16x256xf32>
    %1008 = vector.extract_strided_slice %920 {offsets = [1, 0], sizes = [16, 256], strides = [1, 1]} : vector<20x256xf32> to vector<16x256xf32>
    %1009 = vector.broadcast %994 : vector<1x256xf32> to vector<16x256xf32>
    %1010 = arith.mulf %1008, %1009 : vector<16x256xf32>
    %1011 = arith.addf %1007, %1010 : vector<16x256xf32>
    %1012 = vector.extract_strided_slice %988 {offsets = [1, 0], sizes = [16, 256], strides = [1, 1]} : vector<20x256xf32> to vector<16x256xf32>
    %1013 = vector.broadcast %995 : vector<1x256xf32> to vector<16x256xf32>
    %1014 = arith.mulf %1012, %1013 : vector<16x256xf32>
    %1015 = arith.addf %1011, %1014 : vector<16x256xf32>
    %1016 = vector.extract_strided_slice %920 {offsets = [2, 0], sizes = [16, 256], strides = [1, 1]} : vector<20x256xf32> to vector<16x256xf32>
    %1017 = vector.broadcast %996 : vector<1x256xf32> to vector<16x256xf32>
    %1018 = arith.mulf %1016, %1017 : vector<16x256xf32>
    %1019 = arith.addf %1015, %1018 : vector<16x256xf32>
    %1020 = vector.extract_strided_slice %988 {offsets = [2, 0], sizes = [16, 256], strides = [1, 1]} : vector<20x256xf32> to vector<16x256xf32>
    %1021 = vector.broadcast %997 : vector<1x256xf32> to vector<16x256xf32>
    %1022 = arith.mulf %1020, %1021 : vector<16x256xf32>
    %1023 = arith.addf %1019, %1022 : vector<16x256xf32>
    %1024 = vector.extract_strided_slice %920 {offsets = [3, 0], sizes = [16, 256], strides = [1, 1]} : vector<20x256xf32> to vector<16x256xf32>
    %1025 = vector.broadcast %998 : vector<1x256xf32> to vector<16x256xf32>
    %1026 = arith.mulf %1024, %1025 : vector<16x256xf32>
    %1027 = arith.addf %1023, %1026 : vector<16x256xf32>
    %1028 = vector.extract_strided_slice %988 {offsets = [3, 0], sizes = [16, 256], strides = [1, 1]} : vector<20x256xf32> to vector<16x256xf32>
    %1029 = vector.broadcast %999 : vector<1x256xf32> to vector<16x256xf32>
    %1030 = arith.mulf %1028, %1029 : vector<16x256xf32>
    %1031 = arith.addf %1027, %1030 : vector<16x256xf32>
    %1032 = vector.extract_strided_slice %920 {offsets = [4, 0], sizes = [16, 256], strides = [1, 1]} : vector<20x256xf32> to vector<16x256xf32>
    %1033 = vector.broadcast %1000 : vector<1x256xf32> to vector<16x256xf32>
    %1034 = arith.mulf %1032, %1033 : vector<16x256xf32>
    %1035 = arith.addf %1031, %1034 : vector<16x256xf32>
    %1036 = arith.truncf %1035 : vector<16x256xf32> to vector<16x256xbf16>
    %1037 = vector.broadcast %992 : vector<1x256xf32> to vector<16x256xf32>
    %1038 = arith.mulf %1004, %1037 : vector<16x256xf32>
    %1039 = vector.broadcast %993 : vector<1x256xf32> to vector<16x256xf32>
    %1040 = arith.mulf %1008, %1039 : vector<16x256xf32>
    %1041 = arith.addf %1038, %1040 : vector<16x256xf32>
    %1042 = vector.broadcast %994 : vector<1x256xf32> to vector<16x256xf32>
    %1043 = arith.mulf %1012, %1042 : vector<16x256xf32>
    %1044 = arith.addf %1041, %1043 : vector<16x256xf32>
    %1045 = vector.broadcast %995 : vector<1x256xf32> to vector<16x256xf32>
    %1046 = arith.mulf %1016, %1045 : vector<16x256xf32>
    %1047 = arith.addf %1044, %1046 : vector<16x256xf32>
    %1048 = vector.broadcast %996 : vector<1x256xf32> to vector<16x256xf32>
    %1049 = arith.mulf %1020, %1048 : vector<16x256xf32>
    %1050 = arith.addf %1047, %1049 : vector<16x256xf32>
    %1051 = vector.broadcast %997 : vector<1x256xf32> to vector<16x256xf32>
    %1052 = arith.mulf %1024, %1051 : vector<16x256xf32>
    %1053 = arith.addf %1050, %1052 : vector<16x256xf32>
    %1054 = vector.broadcast %998 : vector<1x256xf32> to vector<16x256xf32>
    %1055 = arith.mulf %1028, %1054 : vector<16x256xf32>
    %1056 = arith.addf %1053, %1055 : vector<16x256xf32>
    %1057 = vector.broadcast %999 : vector<1x256xf32> to vector<16x256xf32>
    %1058 = arith.mulf %1032, %1057 : vector<16x256xf32>
    %1059 = arith.addf %1056, %1058 : vector<16x256xf32>
    %1060 = vector.extract_strided_slice %988 {offsets = [4, 0], sizes = [16, 256], strides = [1, 1]} : vector<20x256xf32> to vector<16x256xf32>
    %1061 = vector.broadcast %1000 : vector<1x256xf32> to vector<16x256xf32>
    %1062 = arith.mulf %1060, %1061 : vector<16x256xf32>
    %1063 = arith.addf %1059, %1062 : vector<16x256xf32>
    %1064 = arith.truncf %1063 : vector<16x256xf32> to vector<16x256xbf16>
    %cst_71 = arith.constant dense<0.000000e+00> : vector<16x256xf32>
    %1065 = tpu.matmul %1036, %990, %cst_71 {dimension_numbers = #tpu.dot_dimension_numbers<[1], [0], [0], [1], [0, 0, 1, 1], [], []>} : vector<16x256xbf16>, vector<256x256xbf16>, vector<16x256xf32> -> vector<16x256xf32>
    %cst_72 = arith.constant dense<0.000000e+00> : vector<16x256xf32>
    %1066 = tpu.matmul %1064, %990, %cst_72 {dimension_numbers = #tpu.dot_dimension_numbers<[1], [0], [0], [1], [0, 0, 1, 1], [], []>} : vector<16x256xbf16>, vector<256x256xbf16>, vector<16x256xf32> -> vector<16x256xf32>
    %1067 = arith.maximumf %1065, %1066 : vector<16x256xf32>
    %1068 = vector.broadcast %991 : vector<1x256xf32> to vector<16x256xf32>
    %1069 = arith.addf %1067, %1068 : vector<16x256xf32>
    %cst_73 = arith.constant 2.000000e-01 : f32
    %1070 = vector.broadcast %cst_73 : f32 to vector<16x256xf32>
    %1071 = arith.mulf %1070, %1069 : vector<16x256xf32>
    %1072 = arith.maximumf %1069, %1071 : vector<16x256xf32>
    %c0_74 = arith.constant 0 : index
    %c0_75 = arith.constant 0 : index
    %c0_76 = arith.constant 0 : index
    %c0_77 = arith.constant 0 : index
    %1073 = vector.load %arg14[%c0_74, %c0_75, %c0_76, %c0_77] : memref<1x1x16x256xf32, #tpu.memory_space<vmem>>, vector<1x1x16x256xf32>
    %1074 = vector.shape_cast %1073 : vector<1x1x16x256xf32> to vector<16x256xf32>
    %1075 = vector.shape_cast %1072 : vector<16x256xf32> to vector<1x1x16x256xf32>
    tpu.vector_store %arg14[%c0_74, %c0_75, %c0_76, %c0_77], %1075 {strides = array<i32>} : memref<1x1x16x256xf32, #tpu.memory_space<vmem>>, vector<1x1x16x256xf32>,
    return
  }
  func.func @transform_0(%arg0: i32, %arg1: i32) -> (i32, i32, i32, i32) {
    %c0_i32 = arith.constant 0 : i32
    %c0_i32_0 = arith.constant 0 : i32
    %c0_i32_1 = arith.constant 0 : i32
    return %arg0, %arg1, %c0_i32, %c0_i32_0 : i32, i32, i32, i32
  }
  func.func @transform_1(%arg0: i32, %arg1: i32) -> (i32, i32) {
    %c0_i32 = arith.constant 0 : i32
    %c0_i32_0 = arith.constant 0 : i32
    %c0_i32_1 = arith.constant 0 : i32
    return %c0_i32, %c0_i32_0 : i32, i32
  }
  func.func @transform_2(%arg0: i32, %arg1: i32) -> (i32, i32) {
    %c0_i32 = arith.constant 0 : i32
    %c0_i32_0 = arith.constant 0 : i32
    %c0_i32_1 = arith.constant 0 : i32
    return %c0_i32, %c0_i32_0 : i32, i32
  }
  func.func @transform_3(%arg0: i32, %arg1: i32) -> (i32, i32) {
    %c0_i32 = arith.constant 0 : i32
    %c0_i32_0 = arith.constant 0 : i32
    %c0_i32_1 = arith.constant 0 : i32
    return %c0_i32, %c0_i32_0 : i32, i32
  }
  func.func @transform_4(%arg0: i32, %arg1: i32) -> (i32, i32) {
    %c0_i32 = arith.constant 0 : i32
    %c0_i32_0 = arith.constant 0 : i32
    %c0_i32_1 = arith.constant 0 : i32
    return %c0_i32, %c0_i32_0 : i32, i32
  }
  func.func @transform_5(%arg0: i32, %arg1: i32) -> (i32, i32) {
    %c0_i32 = arith.constant 0 : i32
    %c0_i32_0 = arith.constant 0 : i32
    %c0_i32_1 = arith.constant 0 : i32
    return %c0_i32, %c0_i32_0 : i32, i32
  }
  func.func @transform_6(%arg0: i32, %arg1: i32) -> (i32, i32) {
    %c0_i32 = arith.constant 0 : i32
    %c0_i32_0 = arith.constant 0 : i32
    %c0_i32_1 = arith.constant 0 : i32
    return %c0_i32, %c0_i32_0 : i32, i32
  }
  func.func @transform_7(%arg0: i32, %arg1: i32) -> (i32, i32) {
    %c0_i32 = arith.constant 0 : i32
    %c0_i32_0 = arith.constant 0 : i32
    %c0_i32_1 = arith.constant 0 : i32
    return %c0_i32, %c0_i32_0 : i32, i32
  }
  func.func @transform_8(%arg0: i32, %arg1: i32) -> (i32, i32) {
    %c0_i32 = arith.constant 0 : i32
    %c0_i32_0 = arith.constant 0 : i32
    %c0_i32_1 = arith.constant 0 : i32
    return %c0_i32, %c0_i32_0 : i32, i32
  }
  func.func @transform_9(%arg0: i32, %arg1: i32) -> (i32, i32) {
    %c0_i32 = arith.constant 0 : i32
    %c0_i32_0 = arith.constant 0 : i32
    %c0_i32_1 = arith.constant 0 : i32
    return %c0_i32, %c0_i32_0 : i32, i32
  }
  func.func @transform_10(%arg0: i32, %arg1: i32) -> (i32, i32) {
    %c0_i32 = arith.constant 0 : i32
    %c0_i32_0 = arith.constant 0 : i32
    %c0_i32_1 = arith.constant 0 : i32
    return %c0_i32, %c0_i32_0 : i32, i32
  }
  func.func @transform_11(%arg0: i32, %arg1: i32) -> (i32, i32) {
    %c0_i32 = arith.constant 0 : i32
    %c0_i32_0 = arith.constant 0 : i32
    %c0_i32_1 = arith.constant 0 : i32
    return %c0_i32, %c0_i32_0 : i32, i32
  }
  func.func @transform_12(%arg0: i32, %arg1: i32) -> (i32, i32, i32, i32) {
    %c0_i32 = arith.constant 0 : i32
    %c0_i32_0 = arith.constant 0 : i32
    %c0_i32_1 = arith.constant 0 : i32
    return %arg0, %arg1, %c0_i32, %c0_i32_0 : i32, i32, i32, i32
  }
}

</mosaic_0001>

<llo_original>
// kernel: encoder_forward.1
$region0: #{encoder_forward.1}
  #allocation0 [shape = 'u32[]', space=smem, size = 0x4, offset = 0x4, fixed_abs, tag = 'smem constant byte address 0x4 - core index']
  #allocation1 [shape = 'u32[144,128]{1,0:T(1,128)}', space=vmem, size = 0x12000, scoped, tag = 'internal scratch']
  %s0 = inlined_call_operand.vmem [shape: bf16[2,1,384,64], index: 0, kind: input, shape index: {}]
  %s1 = inlined_call_operand.vmem [shape: bf16[64,128], index: 1, kind: input, shape index: {}]
  %s2 = inlined_call_operand.vmem [shape: f32[1,128], index: 2, kind: input, shape index: {}]
  %s3 = inlined_call_operand.vmem [shape: f32[25,128], index: 3, kind: input, shape index: {}]
  %s4 = inlined_call_operand.vmem [shape: bf16[128,128], index: 4, kind: input, shape index: {}]
  %s5 = inlined_call_operand.vmem [shape: f32[1,128], index: 5, kind: input, shape index: {}]
  %s6 = inlined_call_operand.vmem [shape: f32[9,128], index: 6, kind: input, shape index: {}]
  %s7 = inlined_call_operand.vmem [shape: bf16[128,256], index: 7, kind: input, shape index: {}]
  %s8 = inlined_call_operand.vmem [shape: f32[1,256], index: 8, kind: input, shape index: {}]
  %s9 = inlined_call_operand.vmem [shape: f32[9,256], index: 9, kind: input, shape index: {}]
  %s10 = inlined_call_operand.vmem [shape: bf16[256,256], index: 10, kind: input, shape index: {}]
  %s11 = inlined_call_operand.vmem [shape: f32[1,256], index: 11, kind: input, shape index: {}]
  %s12 = inlined_call_operand.hbm [shape: f32[2,1,16,256], index: 12, kind: output, shape index: {}]
  %s13 = sld [smem:[#allocation0]]
  $region81: #{encoder_forward.1} parent=0
    _
  %s15 = ssub.s32 1, %s13
  %s16 = scalar_select 0, %s15, %s13
  $region1: #{encoder_forward.1} parent=0
    #allocation2 [shape = 'u8[32768]{0}', space=vmem, size = 0x8000, scoped, tag = 'output window, operand 0']
    #allocation3 [shape = 's32[2]{0}', space=sflag, size = 0x8, scoped, tag = 'scoped memory for encoder_forward.1']
    %17 = vsyncpa [#allocation3], 0
    %s18 = scalar_lea.sflag [#allocation3], 1
    %19 = vsyncpa %s18, 0
    loop: start=0, step=1, limit=4
    $region2: #{encoder_forward.1} parent=1 // loop_pre_header
      _
    $region3: #{encoder_forward.1} parent=1 // loop_header
      %s21 = sphi 0, %s25
      %p22 = scmp.ge.s32.totalorder %s21, 4
      %s28 = sphi 0, %s40
      %s29 = sphi 0, %s36
      %s30 = sphi 0, %s28
      %s31 = sphi 0, %s29
      %s32 = sphi 0, %s30
      %s33 = sphi 0, %s31
      %s45 = sphi 0, %s47
      %s48 = sphi 0, %s45
      %s49 = sphi 0, %s48
      %s65 = sphi 0, %s49
      %s69 = sphi 0, %s69
      %s71 = sphi 0, %s69
      %s72 = sphi 0, %s71
      %s86 = sphi 0, %s72
      %s90 = sphi 0, %s90
      %s92 = sphi 0, %s90
      %s93 = sphi 0, %s92
      %s107 = sphi 0, %s93
      %s111 = sphi 0, %s111
      %s113 = sphi 0, %s111
      %s114 = sphi 0, %s113
      %s128 = sphi 0, %s114
      %s132 = sphi 0, %s132
      %s134 = sphi 0, %s132
      %s135 = sphi 0, %s134
      %s149 = sphi 0, %s135
      %s153 = sphi 0, %s153
      %s155 = sphi 0, %s153
      %s156 = sphi 0, %s155
      %s170 = sphi 0, %s156
      %s174 = sphi 0, %s174
      %s176 = sphi 0, %s174
      %s177 = sphi 0, %s176
      %s191 = sphi 0, %s177
      %s195 = sphi 0, %s195
      %s197 = sphi 0, %s195
      %s198 = sphi 0, %s197
      %s212 = sphi 0, %s198
      %s216 = sphi 0, %s216
      %s218 = sphi 0, %s216
      %s219 = sphi 0, %s218
      %s233 = sphi 0, %s219
      %s237 = sphi 0, %s237
      %s239 = sphi 0, %s237
      %s240 = sphi 0, %s239
      %s254 = sphi 0, %s240
      %s258 = sphi 0, %s258
      %s260 = sphi 0, %s258
      %s261 = sphi 0, %s260
      %s275 = sphi 0, %s261
      %s279 = sphi 0, %s279
      %s281 = sphi 0, %s279
      %s282 = sphi 0, %s281
      %s296 = sphi 0, %s282
      %s304 = sphi 0, %s306
      %s307 = sphi 0, %s304
      %s308 = sphi 0, %s307
      %s324 = sphi 0, %s308
    $region4: #{encoder_forward.1} parent=1 // loop_header_branch
      %24 = sbr.rel (%p22) target = $region8
    $region5: #{encoder_forward.1} parent=1 // loop_body
      %s26 = ssub.s32 %s21, 1
      %s27 = ssub.s32 %s21, 2
      %s34 = sadd.s32 1, %s29
      %p35 = scmp.ge.s32.totalorder %s34, 1
      %s36 = scalar_select %p35, 0, %s34
      %s37 = sadd.s32 1, %s28
      %s38 = scalar_select %p35, %s37, %s28
      %p39 = scmp.ge.s32.totalorder %s38, 2
      %s40 = scalar_select %p39, 0, %s38
      %s41 = ssub.s32 %s28, %s40
      %s42 = ssub.s32 %s29, %s36
      %s43 = sor.u32 %s41, %s42
      %p44 = scmp.eq.s32.totalorder %s43, 0
      %s46 = sadd.s32 %s45, 1
      %s47 = scalar_select %p44, %s45, %s46
      %p50 = pneg %p44
      %p51 = scmp.eq.s32.totalorder %s21, 1
      %p52 = por %p50, %p51
      %p53 = scmp.ne.s32.totalorder %s45, %s48
      %p54 = scmp.eq.s32.totalorder %s21, 0
      %p55 = por %p53, %p54
      %p56 = scmp.ne.s32.totalorder %s45, %s48
      %p57 = scmp.eq.s32.totalorder %s26, 1
      %p58 = por %p56, %p57
      %p59 = scmp.ne.s32.totalorder %s48, %s49
      %p60 = scmp.eq.s32.totalorder %s26, 0
      %p61 = por %p59, %p60
      %p62 = scmp.ne.s32.totalorder %s48, %s49
      %p63 = scmp.eq.s32.totalorder %s27, 1
      %p64 = por %p62, %p63
      %p66 = scmp.ne.s32.totalorder %s49, %s65
      %p67 = scmp.eq.s32.totalorder %s27, 0
      %p68 = por %p66, %p67
      %s70 = sadd.s32 %s69, 1
      %p73 = scmp.eq.s32.totalorder %s21, 1
      %p74 = scmp.ne.s32.totalorder %s69, %s71
      %p75 = scmp.eq.s32.totalorder %s21, 0
      %p76 = por %p74, %p75
      %p77 = scmp.ne.s32.totalorder %s69, %s71
      %p78 = scmp.eq.s32.totalorder %s26, 1
      %p79 = por %p77, %p78
      %p80 = scmp.ne.s32.totalorder %s71, %s72
      %p81 = scmp.eq.s32.totalorder %s26, 0
      %p82 = por %p80, %p81
      %p83 = scmp.ne.s32.totalorder %s71, %s72
      %p84 = scmp.eq.s32.totalorder %s27, 1
      %p85 = por %p83, %p84
      %p87 = scmp.ne.s32.totalorder %s72, %s86
      %p88 = scmp.eq.s32.totalorder %s27, 0
      %p89 = por %p87, %p88
      %s91 = sadd.s32 %s90, 1
      %p94 = scmp.eq.s32.totalorder %s21, 1
      %p95 = scmp.ne.s32.totalorder %s90, %s92
      %p96 = scmp.eq.s32.totalorder %s21, 0
      %p97 = por %p95, %p96
      %p98 = scmp.ne.s32.totalorder %s90, %s92
      %p99 = scmp.eq.s32.totalorder %s26, 1
      %p100 = por %p98, %p99
      %p101 = scmp.ne.s32.totalorder %s92, %s93
      %p102 = scmp.eq.s32.totalorder %s26, 0
      %p103 = por %p101, %p102
      %p104 = scmp.ne.s32.totalorder %s92, %s93
      %p105 = scmp.eq.s32.totalorder %s27, 1
      %p106 = por %p104, %p105
      %p108 = scmp.ne.s32.totalorder %s93, %s107
      %p109 = scmp.eq.s32.totalorder %s27, 0
      %p110 = por %p108, %p109
      %s112 = sadd.s32 %s111, 1
      %p115 = scmp.eq.s32.totalorder %s21, 1
      %p116 = scmp.ne.s32.totalorder %s111, %s113
      %p117 = scmp.eq.s32.totalorder %s21, 0
      %p118 = por %p116, %p117
      %p119 = scmp.ne.s32.totalorder %s111, %s113
      %p120 = scmp.eq.s32.totalorder %s26, 1
      %p121 = por %p119, %p120
      %p122 = scmp.ne.s32.totalorder %s113, %s114
      %p123 = scmp.eq.s32.totalorder %s26, 0
      %p124 = por %p122, %p123
      %p125 = scmp.ne.s32.totalorder %s113, %s114
      %p126 = scmp.eq.s32.totalorder %s27, 1
      %p127 = por %p125, %p126
      %p129 = scmp.ne.s32.totalorder %s114, %s128
      %p130 = scmp.eq.s32.totalorder %s27, 0
      %p131 = por %p129, %p130
      %s133 = sadd.s32 %s132, 1
      %p136 = scmp.eq.s32.totalorder %s21, 1
      %p137 = scmp.ne.s32.totalorder %s132, %s134
      %p138 = scmp.eq.s32.totalorder %s21, 0
      %p139 = por %p137, %p138
      %p140 = scmp.ne.s32.totalorder %s132, %s134
      %p141 = scmp.eq.s32.totalorder %s26, 1
      %p142 = por %p140, %p141
      %p143 = scmp.ne.s32.totalorder %s134, %s135
      %p144 = scmp.eq.s32.totalorder %s26, 0
      %p145 = por %p143, %p144
      %p146 = scmp.ne.s32.totalorder %s134, %s135
      %p147 = scmp.eq.s32.totalorder %s27, 1
      %p148 = por %p146, %p147
      %p150 = scmp.ne.s32.totalorder %s135, %s149
      %p151 = scmp.eq.s32.totalorder %s27, 0
      %p152 = por %p150, %p151
      %s154 = sadd.s32 %s153, 1
      %p157 = scmp.eq.s32.totalorder %s21, 1
      %p158 = scmp.ne.s32.totalorder %s153, %s155
      %p159 = scmp.eq.s32.totalorder %s21, 0
      %p160 = por %p158, %p159
      %p161 = scmp.ne.s32.totalorder %s153, %s155
      %p162 = scmp.eq.s32.totalorder %s26, 1
      %p163 = por %p161, %p162
      %p164 = scmp.ne.s32.totalorder %s155, %s156
      %p165 = scmp.eq.s32.totalorder %s26, 0
      %p166 = por %p164, %p165
      %p167 = scmp.ne.s32.totalorder %s155, %s156
      %p168 = scmp.eq.s32.totalorder %s27, 1
      %p169 = por %p167, %p168
      %p171 = scmp.ne.s32.totalorder %s156, %s170
      %p172 = scmp.eq.s32.totalorder %s27, 0
      %p173 = por %p171, %p172
      %s175 = sadd.s32 %s174, 1
      %p178 = scmp.eq.s32.totalorder %s21, 1
      %p179 = scmp.ne.s32.totalorder %s174, %s176
      %p180 = scmp.eq.s32.totalorder %s21, 0
      %p181 = por %p179, %p180
      %p182 = scmp.ne.s32.totalorder %s174, %s176
      %p183 = scmp.eq.s32.totalorder %s26, 1
      %p184 = por %p182, %p183
      %p185 = scmp.ne.s32.totalorder %s176, %s177
      %p186 = scmp.eq.s32.totalorder %s26, 0
      %p187 = por %p185, %p186
      %p188 = scmp.ne.s32.totalorder %s176, %s177
      %p189 = scmp.eq.s32.totalorder %s27, 1
      %p190 = por %p188, %p189
      %p192 = scmp.ne.s32.totalorder %s177, %s191
      %p193 = scmp.eq.s32.totalorder %s27, 0
      %p194 = por %p192, %p193
      %s196 = sadd.s32 %s195, 1
      %p199 = scmp.eq.s32.totalorder %s21, 1
      %p200 = scmp.ne.s32.totalorder %s195, %s197
      %p201 = scmp.eq.s32.totalorder %s21, 0
      %p202 = por %p200, %p201
      %p203 = scmp.ne.s32.totalorder %s195, %s197
      %p204 = scmp.eq.s32.totalorder %s26, 1
      %p205 = por %p203, %p204
      %p206 = scmp.ne.s32.totalorder %s197, %s198
      %p207 = scmp.eq.s32.totalorder %s26, 0
      %p208 = por %p206, %p207
      %p209 = scmp.ne.s32.totalorder %s197, %s198
      %p210 = scmp.eq.s32.totalorder %s27, 1
      %p211 = por %p209, %p210
      %p213 = scmp.ne.s32.totalorder %s198, %s212
      %p214 = scmp.eq.s32.totalorder %s27, 0
      %p215 = por %p213, %p214
      %s217 = sadd.s32 %s216, 1
      %p220 = scmp.eq.s32.totalorder %s21, 1
      %p221 = scmp.ne.s32.totalorder %s216, %s218
      %p222 = scmp.eq.s32.totalorder %s21, 0
      %p223 = por %p221, %p222
      %p224 = scmp.ne.s32.totalorder %s216, %s218
      %p225 = scmp.eq.s32.totalorder %s26, 1
      %p226 = por %p224, %p225
      %p227 = scmp.ne.s32.totalorder %s218, %s219
      %p228 = scmp.eq.s32.totalorder %s26, 0
      %p229 = por %p227, %p228
      %p230 = scmp.ne.s32.totalorder %s218, %s219
      %p231 = scmp.eq.s32.totalorder %s27, 1
      %p232 = por %p230, %p231
      %p234 = scmp.ne.s32.totalorder %s219, %s233
      %p235 = scmp.eq.s32.totalorder %s27, 0
      %p236 = por %p234, %p235
      %s238 = sadd.s32 %s237, 1
      %p241 = scmp.eq.s32.totalorder %s21, 1
      %p242 = scmp.ne.s32.totalorder %s237, %s239
      %p243 = scmp.eq.s32.totalorder %s21, 0
      %p244 = por %p242, %p243
      %p245 = scmp.ne.s32.totalorder %s237, %s239
      %p246 = scmp.eq.s32.totalorder %s26, 1
      %p247 = por %p245, %p246
      %p248 = scmp.ne.s32.totalorder %s239, %s240
      %p249 = scmp.eq.s32.totalorder %s26, 0
      %p250 = por %p248, %p249
      %p251 = scmp.ne.s32.totalorder %s239, %s240
      %p252 = scmp.eq.s32.totalorder %s27, 1
      %p253 = por %p251, %p252
      %p255 = scmp.ne.s32.totalorder %s240, %s254
      %p256 = scmp.eq.s32.totalorder %s27, 0
      %p257 = por %p255, %p256
      %s259 = sadd.s32 %s258, 1
      %p262 = scmp.eq.s32.totalorder %s21, 1
      %p263 = scmp.ne.s32.totalorder %s258, %s260
      %p264 = scmp.eq.s32.totalorder %s21, 0
      %p265 = por %p263, %p264
      %p266 = scmp.ne.s32.totalorder %s258, %s260
      %p267 = scmp.eq.s32.totalorder %s26, 1
      %p268 = por %p266, %p267
      %p269 = scmp.ne.s32.totalorder %s260, %s261
      %p270 = scmp.eq.s32.totalorder %s26, 0
      %p271 = por %p269, %p270
      %p272 = scmp.ne.s32.totalorder %s260, %s261
      %p273 = scmp.eq.s32.totalorder %s27, 1
      %p274 = por %p272, %p273
      %p276 = scmp.ne.s32.totalorder %s261, %s275
      %p277 = scmp.eq.s32.totalorder %s27, 0
      %p278 = por %p276, %p277
      %s280 = sadd.s32 %s279, 1
      %p283 = scmp.eq.s32.totalorder %s21, 1
      %p284 = scmp.ne.s32.totalorder %s279, %s281
      %p285 = scmp.eq.s32.totalorder %s21, 0
      %p286 = por %p284, %p285
      %p287 = scmp.ne.s32.totalorder %s279, %s281
      %p288 = scmp.eq.s32.totalorder %s26, 1
      %p289 = por %p287, %p288
      %p290 = scmp.ne.s32.totalorder %s281, %s282
      %p291 = scmp.eq.s32.totalorder %s26, 0
      %p292 = por %p290, %p291
      %p293 = scmp.ne.s32.totalorder %s281, %s282
      %p294 = scmp.eq.s32.totalorder %s27, 1
      %p295 = por %p293, %p294
      %p297 = scmp.ne.s32.totalorder %s282, %s296
      %p298 = scmp.eq.s32.totalorder %s27, 0
      %p299 = por %p297, %p298
      %s300 = ssub.s32 %s28, %s40
      %s301 = ssub.s32 %s29, %s36
      %s302 = sor.u32 %s300, %s301
      %p303 = scmp.eq.s32.totalorder %s302, 0
      %s305 = sadd.s32 %s304, 1
      %s306 = scalar_select %p303, %s304, %s305
      %p309 = pneg %p303
      %p310 = scmp.eq.s32.totalorder %s21, 1
      %p311 = por %p309, %p310
      %p312 = scmp.ne.s32.totalorder %s304, %s307
      %p313 = scmp.eq.s32.totalorder %s21, 0
      %p314 = por %p312, %p313
      %p315 = scmp.ne.s32.totalorder %s304, %s307
      %p316 = scmp.eq.s32.totalorder %s26, 1
      %p317 = por %p315, %p316
      %p318 = scmp.ne.s32.totalorder %s307, %s308
      %p319 = scmp.eq.s32.totalorder %s26, 0
      %p320 = por %p318, %p319
      %p321 = scmp.ne.s32.totalorder %s307, %s308
      %p322 = scmp.eq.s32.totalorder %s27, 1
      %p323 = por %p321, %p322
      %p325 = scmp.ne.s32.totalorder %s308, %s324
      %p326 = scmp.eq.s32.totalorder %s27, 0
      %p327 = por %p325, %p326
      %p328 = scmp.le.s32.totalorder 1, %s21
      %p329 = scmp.lt.s32.totalorder %s21, 3
      %p330 = pnand %p328, %p329
      %p331 = pneg %p330
      // Predicated region
      $region9: #{encoder_forward.1} parent=5 // pred_check
        _
      $region10: #{encoder_forward.1} parent=5 // pred_check_branch
        %333 = sbr.rel (%p330) target = $region12
      $region11: #{encoder_forward.1} parent=5 // pred_region
        %s334 = ssub.s32 %s21, 1
        // Predicated region
        $region13: #{encoder_forward.1} parent=11 // pred_check
          %p335 = pneg %p82
        $region14: #{encoder_forward.1} parent=11 // pred_check_branch
          %337 = sbr.rel (%p335) target = $region16
        $region15: #{encoder_forward.1} parent=11 // pred_region
          _
        $region16: #{encoder_forward.1} parent=11 // pred_fallthru
          _
        // Predicated region
        $region17: #{encoder_forward.1} parent=11 // pred_check
          %p338 = pneg %p103
        $region18: #{encoder_forward.1} parent=11 // pred_check_branch
          %340 = sbr.rel (%p338) target = $region20
        $region19: #{encoder_forward.1} parent=11 // pred_region
          _
        $region20: #{encoder_forward.1} parent=11 // pred_fallthru
          _
        // Predicated region
        $region21: #{encoder_forward.1} parent=11 // pred_check
          %p341 = pneg %p124
        $region22: #{encoder_forward.1} parent=11 // pred_check_branch
          %343 = sbr.rel (%p341) target = $region24
        $region23: #{encoder_forward.1} parent=11 // pred_region
          _
        $region24: #{encoder_forward.1} parent=11 // pred_fallthru
          _
        // Predicated region
        $region25: #{encoder_forward.1} parent=11 // pred_check
          %p344 = pneg %p145
        $region26: #{encoder_forward.1} parent=11 // pred_check_branch
          %346 = sbr.rel (%p344) target = $region28
        $region27: #{encoder_forward.1} parent=11 // pred_region
          _
        $region28: #{encoder_forward.1} parent=11 // pred_fallthru
          _
        // Predicated region
        $region29: #{encoder_forward.1} parent=11 // pred_check
          %p347 = pneg %p166
        $region30: #{encoder_forward.1} parent=11 // pred_check_branch
          %349 = sbr.rel (%p347) target = $region32
        $region31: #{encoder_forward.1} parent=11 // pred_region
          _
        $region32: #{encoder_forward.1} parent=11 // pred_fallthru
          _
        // Predicated region
        $region33: #{encoder_forward.1} parent=11 // pred_check
          %p350 = pneg %p187
        $region34: #{encoder_forward.1} parent=11 // pred_check_branch
          %352 = sbr.rel (%p350) target = $region36
        $region35: #{encoder_forward.1} parent=11 // pred_region
          _
        $region36: #{encoder_forward.1} parent=11 // pred_fallthru
          _
        // Predicated region
        $region37: #{encoder_forward.1} parent=11 // pred_check
          %p353 = pneg %p208
        $region38: #{encoder_forward.1} parent=11 // pred_check_branch
          %355 = sbr.rel (%p353) target = $region40
        $region39: #{encoder_forward.1} parent=11 // pred_region
          _
        $region40: #{encoder_forward.1} parent=11 // pred_fallthru
          _
        // Predicated region
        $region41: #{encoder_forward.1} parent=11 // pred_check
          %p356 = pneg %p229
        $region42: #{encoder_forward.1} parent=11 // pred_check_branch
          %358 = sbr.rel (%p356) target = $region44
        $region43: #{encoder_forward.1} parent=11 // pred_region
          _
        $region44: #{encoder_forward.1} parent=11 // pred_fallthru
          _
        // Predicated region
        $region45: #{encoder_forward.1} parent=11 // pred_check
          %p359 = pneg %p250
        $region46: #{encoder_forward.1} parent=11 // pred_check_branch
          %361 = sbr.rel (%p359) target = $region48
        $region47: #{encoder_forward.1} parent=11 // pred_region
          _
        $region48: #{encoder_forward.1} parent=11 // pred_fallthru
          _
        // Predicated region
        $region49: #{encoder_forward.1} parent=11 // pred_check
          %p362 = pneg %p271
        $region50: #{encoder_forward.1} parent=11 // pred_check_branch
          %364 = sbr.rel (%p362) target = $region52
        $region51: #{encoder_forward.1} parent=11 // pred_region
          _
        $region52: #{encoder_forward.1} parent=11 // pred_fallthru
          _
        // Predicated region
        $region53: #{encoder_forward.1} parent=11 // pred_check
          %p365 = pneg %p292
        $region54: #{encoder_forward.1} parent=11 // pred_check_branch
          %367 = sbr.rel (%p365) target = $region56
        $region55: #{encoder_forward.1} parent=11 // pred_region
          _
        $region56: #{encoder_forward.1} parent=11 // pred_fallthru
          _
      $region12: #{encoder_forward.1} parent=5 // pred_fallthru
        _
      %p368 = scmp.lt.s32.totalorder %s21, 2
      // Predicated region
      $region57: #{encoder_forward.1} parent=5 // pred_check
        %p369 = pneg %p368
      $region58: #{encoder_forward.1} parent=5 // pred_check_branch
        %371 = sbr.rel (%p369) target = $region60
      $region59: #{encoder_forward.1} parent=5 // pred_region
        // Predicated region
        $region61: #{encoder_forward.1} parent=59 // pred_check
          %p372 = pneg %p55
        $region62: #{encoder_forward.1} parent=59 // pred_check_branch
          %374 = sbr.rel (%p372) target = $region64
        $region63: #{encoder_forward.1} parent=59 // pred_region
          %p375 = scmp.lt.s32.totalorder %s28, 1
          %s376 = scalar_select %p375, %s28, 1
          %p377 = scmp.lt.s32.totalorder %s29, 0
          %s378 = scalar_select %p377, %s29, 0
          %s379 = smul.addr %s378, 48
          %s380 = smul.addr %s376, 48
          %s381 = sadd.s32 %s379, %s380
          %s382 = smul.addr %s381, 4
          %s383 = scalar_lea.vmem %s0, %s382
        $region64: #{encoder_forward.1} parent=59 // pred_fallthru
          _
      $region60: #{encoder_forward.1} parent=5 // pred_fallthru
        _
      %p384 = scmp.le.s32.totalorder 1, %s21
      %p385 = scmp.lt.s32.totalorder %s21, 3
      %p386 = pnand %p384, %p385
      %p387 = pneg %p386
      // Predicated region
      $region65: #{encoder_forward.1} parent=5 // pred_check
        _
      $region66: #{encoder_forward.1} parent=5 // pred_check_branch
        %389 = sbr.rel (%p386) target = $region68
      $region67: #{encoder_forward.1} parent=5 // pred_region
        %s390 = ssub.s32 %s21, 1
        %p391 = scmp.lt.s32.totalorder %s30, 1
        %s392 = scalar_select %p391, %s30, 1
        %p393 = scmp.lt.s32.totalorder %s31, 0
        %s394 = scalar_select %p393, %s31, 0
        %s395 = smul.addr %s394, 48
        %s396 = smul.addr %s392, 48
        %s397 = sadd.s32 %s395, %s396
        %s398 = smul.addr %s397, 4
        %s399 = scalar_lea.vmem %s0, %s398
        %p400 = pneg %p61
        %p401 = pneg %p58
        %p402 = pneg %p82
        %p403 = pneg %p79
        %p404 = pneg %p103
        %p405 = pneg %p100
        %p406 = pneg %p124
        %p407 = pneg %p121
        %p408 = pneg %p145
        %p409 = pneg %p142
        %p410 = pneg %p166
        %p411 = pneg %p163
        %p412 = pneg %p187
        %p413 = pneg %p184
        %p414 = pneg %p208
        %p415 = pneg %p205
        %p416 = pneg %p229
        %p417 = pneg %p226
        %p418 = pneg %p250
        %p419 = pneg %p247
        %p420 = pneg %p271
        %p421 = pneg %p268
        %p422 = pneg %p292
        %p423 = pneg %p289
        %p424 = pneg %p320
        %p425 = pneg %p317
        %s426 = sand.u32 %s307, 1
        %s427 = scalar_lea.sflag [#allocation3], %s426
        %s428 = sand.u32 %s307, 1
        %s429 = smul.addr %s428, 32
        %s430 = scalar_lea.vmem [#allocation2], %s429
        %p431 = scmp.lt.s32.totalorder %s30, 1
        %s432 = scalar_select %p431, %s30, 1
        %p433 = scmp.lt.s32.totalorder %s31, 0
        %s434 = scalar_select %p433, %s31, 0
        %s435 = smul.addr %s434, 48
        %s436 = smul.addr %s432, 48
        %s437 = sadd.s32 %s435, %s436
        %s438 = smul.addr %s437, 4
        %s439 = scalar_lea.vmem %s0, %s438
        %s441 = smul.u32 %s31, 16
        %v442 = vld [vmem:[%s439] sm:$0xf]
        %v443 = vld [vmem:[%s439 + $0x4] sm:$0xf]
        %v444 = vld [vmem:[%s439 + $0x8] sm:$0xf]
        %v445 = vld [vmem:[%s439 + $0xc] sm:$0xf]
        %v446 = vld [vmem:[%s439 + $0x10] sm:$0xf]
        %v447 = vld [vmem:[%s439 + $0x14] sm:$0xf]
        %v448 = vld [vmem:[%s439 + $0x18] sm:$0xf]
        %v449 = vld [vmem:[%s439 + $0x1c] sm:$0xf]
        %v450 = vld [vmem:[%s439 + $0x20] sm:$0xf]
        %v451 = vld [vmem:[%s439 + $0x24] sm:$0xf]
        %v452 = vld [vmem:[%s439 + $0x28] sm:$0xf]
        %v453 = vld [vmem:[%s439 + $0x2c] sm:$0xf]
        %v454 = vld [vmem:[%s439 + $0x30] sm:$0xf]
        %v455 = vld [vmem:[%s439 + $0x34] sm:$0xf]
        %v456 = vld [vmem:[%s439 + $0x38] sm:$0xf]
        %v457 = vld [vmem:[%s439 + $0x3c] sm:$0xf]
        %v458 = vld [vmem:[%s439 + $0x40] sm:$0xf]
        %v459 = vld [vmem:[%s439 + $0x44] sm:$0xf]
        %v460 = vld [vmem:[%s439 + $0x48] sm:$0xf]
        %v461 = vld [vmem:[%s439 + $0x4c] sm:$0xf]
        %v462 = vld [vmem:[%s439 + $0x50] sm:$0xf]
        %v463 = vld [vmem:[%s439 + $0x54] sm:$0xf]
        %v464 = vld [vmem:[%s439 + $0x58] sm:$0xf]
        %v465 = vld [vmem:[%s439 + $0x5c] sm:$0xf]
        %v466 = vld [vmem:[%s439 + $0x60] sm:$0xf]
        %v467 = vld [vmem:[%s439 + $0x64] sm:$0xf]
        %v468 = vld [vmem:[%s439 + $0x68] sm:$0xf]
        %v469 = vld [vmem:[%s439 + $0x6c] sm:$0xf]
        %v470 = vld [vmem:[%s439 + $0x70] sm:$0xf]
        %v471 = vld [vmem:[%s439 + $0x74] sm:$0xf]
        %v472 = vld [vmem:[%s439 + $0x78] sm:$0xf]
        %v473 = vld [vmem:[%s439 + $0x7c] sm:$0xf]
        %v474 = vld [vmem:[%s439 + $0x80] sm:$0xf]
        %v475 = vld [vmem:[%s439 + $0x84] sm:$0xf]
        %v476 = vld [vmem:[%s439 + $0x88] sm:$0xf]
        %v477 = vld [vmem:[%s439 + $0x8c] sm:$0xf]
        %v478 = vld [vmem:[%s439 + $0x90] sm:$0xf]
        %v479 = vld [vmem:[%s439 + $0x94] sm:$0xf]
        %v480 = vld [vmem:[%s439 + $0x98] sm:$0xf]
        %v481 = vld [vmem:[%s439 + $0x9c] sm:$0xf]
        %v482 = vld [vmem:[%s439 + $0xa0] sm:$0xf]
        %v483 = vld [vmem:[%s439 + $0xa4] sm:$0xf]
        %v484 = vld [vmem:[%s439 + $0xa8] sm:$0xf]
        %v485 = vld [vmem:[%s439 + $0xac] sm:$0xf]
        %v486 = vld [vmem:[%s439 + $0xb0] sm:$0xf]
        %v487 = vld [vmem:[%s439 + $0xb4] sm:$0xf]
        %v488 = vld [vmem:[%s439 + $0xb8] sm:$0xf]
        %v489 = vld [vmem:[%s439 + $0xbc] sm:$0xf]
        %v490 = vld [vmem:[%s1] sm:$0xf]
        %v491 = vld [vmem:[%s1 + $0x4] sm:$0xf]
        %v492 = vld [vmem:[%s1 + $0x8] sm:$0xf]
        %v493 = vld [vmem:[%s1 + $0xc] sm:$0xf]
        %v494 = vld [vmem:[%s1 + $0x10] sm:$0xf]
        %v495 = vld [vmem:[%s1 + $0x14] sm:$0xf]
        %v496 = vld [vmem:[%s1 + $0x18] sm:$0xf]
        %v497 = vld [vmem:[%s1 + $0x1c] sm:$0xf]
        %v498 = vld [vmem:[%s2] sm:$0x1]
        %v500 = vlaneseq
        %v501 = vshrl.u32 %v500, 7
        %v502 = vsub.s32 0, %v501
        %v503 = vrot.slane %v498, %v502
        %v553 = vunpack.c.l.b16 %v442
        %v554 = vunpack.c.l.b16 %v443
        %v555 = vunpack.c.l.b16 %v444
        %v556 = vunpack.c.l.b16 %v445
        %v557 = vunpack.c.l.b16 %v446
        %v558 = vunpack.c.l.b16 %v447
        %v559 = vunpack.c.l.b16 %v448
        %v560 = vunpack.c.l.b16 %v449
        %v561 = vunpack.c.l.b16 %v450
        %v562 = vunpack.c.l.b16 %v451
        %v563 = vunpack.c.l.b16 %v452
        %v564 = vunpack.c.l.b16 %v453
        %v565 = vunpack.c.l.b16 %v454
        %v566 = vunpack.c.l.b16 %v455
        %v567 = vunpack.c.l.b16 %v456
        %v568 = vunpack.c.l.b16 %v457
        %v569 = vunpack.c.l.b16 %v458
        %v570 = vunpack.c.l.b16 %v459
        %v571 = vunpack.c.l.b16 %v460
        %v572 = vunpack.c.l.b16 %v461
        %v573 = vunpack.c.l.b16 %v462
        %v574 = vunpack.c.l.b16 %v463
        %v575 = vunpack.c.l.b16 %v464
        %v576 = vunpack.c.l.b16 %v465
        %v577 = vunpack.c.l.b16 %v466
        %v578 = vunpack.c.l.b16 %v467
        %v579 = vunpack.c.l.b16 %v468
        %v580 = vunpack.c.l.b16 %v469
        %v581 = vunpack.c.l.b16 %v470
        %v582 = vunpack.c.l.b16 %v471
        %v583 = vunpack.c.l.b16 %v472
        %v584 = vunpack.c.l.b16 %v473
        %v585 = vunpack.c.l.b16 %v474
        %v586 = vunpack.c.l.b16 %v475
        %v587 = vunpack.c.l.b16 %v476
        %v588 = vunpack.c.l.b16 %v477
        %v589 = vunpack.c.l.b16 %v478
        %v590 = vunpack.c.l.b16 %v479
        %v591 = vunpack.c.l.b16 %v480
        %v592 = vunpack.c.l.b16 %v481
        %v593 = vunpack.c.l.b16 %v482
        %v594 = vunpack.c.l.b16 %v483
        %v595 = vunpack.c.l.b16 %v484
        %v596 = vunpack.c.l.b16 %v485
        %v597 = vunpack.c.l.b16 %v486
        %v598 = vunpack.c.l.b16 %v487
        %v599 = vunpack.c.l.b16 %v488
        %v600 = vunpack.c.l.b16 %v489
        %v601 = vpack.c.b16 %v554, %v553
        %v602 = vpack.c.b16 %v556, %v555
        %v603 = vpack.c.b16 %v558, %v557
        %v604 = vpack.c.b16 %v560, %v559
        %v605 = vpack.c.b16 %v562, %v561
        %v606 = vpack.c.b16 %v564, %v563
        %v607 = vpack.c.b16 %v566, %v565
        %v608 = vpack.c.b16 %v568, %v567
        %v609 = vpack.c.b16 %v570, %v569
        %v610 = vpack.c.b16 %v572, %v571
        %v611 = vpack.c.b16 %v574, %v573
        %v612 = vpack.c.b16 %v576, %v575
        %v613 = vpack.c.b16 %v578, %v577
        %v614 = vpack.c.b16 %v580, %v579
        %v615 = vpack.c.b16 %v582, %v581
        %v616 = vpack.c.b16 %v584, %v583
        %v617 = vpack.c.b16 %v586, %v585
        %v618 = vpack.c.b16 %v588, %v587
        %v619 = vpack.c.b16 %v590, %v589
        %v620 = vpack.c.b16 %v592, %v591
        %v621 = vpack.c.b16 %v594, %v593
        %v622 = vpack.c.b16 %v596, %v595
        %v623 = vpack.c.b16 %v598, %v597
        %v624 = vpack.c.b16 %v600, %v599
        %v633 = vunpack.c.l.b16 %v490
        %v634 = vunpack.c.l.b16 %v491
        %v635 = vunpack.c.l.b16 %v492
        %v636 = vunpack.c.l.b16 %v493
        %v637 = vunpack.c.l.b16 %v494
        %v638 = vunpack.c.l.b16 %v495
        %v639 = vunpack.c.l.b16 %v496
        %v640 = vunpack.c.l.b16 %v497
        %v641 = vpack.c.b16 %v634, %v633
        %v642 = vpack.c.b16 %v636, %v635
        %v643 = vpack.c.b16 %v638, %v637
        %v644 = vpack.c.b16 %v640, %v639
        %vm649 = vcmask 523264
        %v651 = vsel %vm649, %v601, 0
        %v654 = vsel %vm649, %v602, 0
        %v657 = vsel %vm649, %v603, 0
        %v660 = vsel %vm649, %v604, 0
        %v663 = vsel %vm649, %v605, 0
        %v666 = vsel %vm649, %v606, 0
        %v669 = vsel %vm649, %v607, 0
        %v672 = vsel %vm649, %v608, 0
        %v675 = vsel %vm649, %v609, 0
        %v678 = vsel %vm649, %v610, 0
        %v681 = vsel %vm649, %v611, 0
        %v684 = vsel %vm649, %v612, 0
        %v687 = vsel %vm649, %v613, 0
        %v690 = vsel %vm649, %v614, 0
        %v693 = vsel %vm649, %v615, 0
        %v696 = vsel %vm649, %v616, 0
        %v699 = vsel %vm649, %v617, 0
        %v702 = vsel %vm649, %v618, 0
        %v705 = vsel %vm649, %v619, 0
        %v708 = vsel %vm649, %v620, 0
        %v711 = vsel %vm649, %v621, 0
        %v714 = vsel %vm649, %v622, 0
        %v717 = vsel %vm649, %v623, 0
        %v720 = vsel %vm649, %v624, 0
        %722 = vmatprep.subr.bf16.mxu0 0
        %723 = vmatpush1.bf16.msra.mxu0 0
        %724 = vmatprep.subr.bf16.mxu0 0
        %725 = vmatpush1.bf16.msra.mxu0 0
        %726 = vmatprep.subr.bf16.mxu0 0
        %727 = vmatpush1.bf16.msra.mxu0 0
        %728 = vmatprep.subr.bf16.mxu0 0
        %729 = vmatpush1.bf16.msra.mxu0 0
        %730 = vmatprep.subr.bf16.mxu0 0
        %731 = vmatpush1.bf16.msra.mxu0 %v644
        %732 = vmatprep.subr.bf16.mxu0 0
        %733 = vmatpush1.bf16.msra.mxu0 %v643
        %734 = vmatprep.subr.bf16.mxu0 0
        %735 = vmatpush1.bf16.msra.mxu0 %v642
        %736 = vmatprep.subr.bf16.mxu0 0
        %737 = vmatpush1.bf16.msra.mxu0 %v641
        %738 = vmatprep.subr.bf16.mxu0 0
        %739 = vmatpush2.bf16.msra.mxu0 0
        %740 = vmatprep.subr.bf16.mxu0 0
        %741 = vmatpush2.bf16.msra.mxu0 0
        %742 = vmatprep.subr.bf16.mxu0 0
        %743 = vmatpush2.bf16.msra.mxu0 0
        %744 = vmatprep.subr.bf16.mxu0 0
        %745 = vmatpush2.bf16.msra.mxu0 0
        %746 = vmatprep.subr.bf16.mxu0 0
        %747 = vmatpush2.bf16.msra.mxu0 0
        %748 = vmatprep.subr.bf16.mxu0 0
        %749 = vmatpush2.bf16.msra.mxu0 0
        %750 = vmatprep.subr.bf16.mxu0 0
        %751 = vmatpush2.bf16.msra.mxu0 0
        %752 = vmatprep.subr.bf16.mxu0 0
        %753 = vmatpush2.bf16.msra.mxu0 0
        %754 = vmatprep.mubr.bf16.mxu0 0
        %755 = vmatmul.mubr.bf16.gmra.mxu0 %v651
        %v756 = vpop.f32.mrf.mxu0
        %v757 = vadd.f32 %v503, %v756
        %v758 = vpop.f32.mrf.mxu0
        %v759 = vpop.f32.mrf.mxu0
        %v760 = vadd.f32 %v503, %v759
        %v761 = vpop.f32.mrf.mxu0
        %762 = vmatprep.mubr.bf16.mxu0 0
        %763 = vmatmul.mubr.bf16.gmra.mxu0 %v654
        %v764 = vpop.f32.mrf.mxu0
        %v765 = vadd.f32 %v503, %v764
        %v766 = vpop.f32.mrf.mxu0
        %v767 = vpop.f32.mrf.mxu0
        %v768 = vadd.f32 %v503, %v767
        %v769 = vpop.f32.mrf.mxu0
        %770 = vmatprep.mubr.bf16.mxu0 0
        %771 = vmatmul.mubr.bf16.gmra.mxu0 %v657
        %v772 = vpop.f32.mrf.mxu0
        %v773 = vadd.f32 %v503, %v772
        %v774 = vpop.f32.mrf.mxu0
        %v775 = vpop.f32.mrf.mxu0
        %v776 = vadd.f32 %v503, %v775
        %v777 = vpop.f32.mrf.mxu0
        %778 = vmatprep.mubr.bf16.mxu0 0
        %779 = vmatmul.mubr.bf16.gmra.mxu0 %v660
        %v780 = vpop.f32.mrf.mxu0
        %v781 = vadd.f32 %v503, %v780
        %v782 = vpop.f32.mrf.mxu0
        %v783 = vpop.f32.mrf.mxu0
        %v784 = vadd.f32 %v503, %v783
        %v785 = vpop.f32.mrf.mxu0
        %786 = vmatprep.mubr.bf16.mxu0 0
        %787 = vmatmul.mubr.bf16.gmra.mxu0 %v663
        %v788 = vpop.f32.mrf.mxu0
        %v789 = vadd.f32 %v503, %v788
        %v790 = vpop.f32.mrf.mxu0
        %v791 = vpop.f32.mrf.mxu0
        %v792 = vadd.f32 %v503, %v791
        %v793 = vpop.f32.mrf.mxu0
        %794 = vmatprep.mubr.bf16.mxu0 0
        %795 = vmatmul.mubr.bf16.gmra.mxu0 %v666
        %v796 = vpop.f32.mrf.mxu0
        %v797 = vadd.f32 %v503, %v796
        %v798 = vpop.f32.mrf.mxu0
        %v799 = vpop.f32.mrf.mxu0
        %v800 = vadd.f32 %v503, %v799
        %v801 = vpop.f32.mrf.mxu0
        %802 = vmatprep.mubr.bf16.mxu0 0
        %803 = vmatmul.mubr.bf16.gmra.mxu0 %v669
        %v804 = vpop.f32.mrf.mxu0
        %v805 = vadd.f32 %v503, %v804
        %v806 = vpop.f32.mrf.mxu0
        %v807 = vpop.f32.mrf.mxu0
        %v808 = vadd.f32 %v503, %v807
        %v809 = vpop.f32.mrf.mxu0
        %810 = vmatprep.mubr.bf16.mxu0 0
        %811 = vmatmul.mubr.bf16.gmra.mxu0 %v672
        %v812 = vpop.f32.mrf.mxu0
        %v813 = vadd.f32 %v503, %v812
        %v814 = vpop.f32.mrf.mxu0
        %v815 = vpop.f32.mrf.mxu0
        %v816 = vadd.f32 %v503, %v815
        %v817 = vpop.f32.mrf.mxu0
        %818 = vmatprep.mubr.bf16.mxu0 0
        %819 = vmatmul.mubr.bf16.gmra.mxu0 %v675
        %v820 = vpop.f32.mrf.mxu0
        %v821 = vadd.f32 %v503, %v820
        %v822 = vpop.f32.mrf.mxu0
        %v823 = vpop.f32.mrf.mxu0
        %v824 = vadd.f32 %v503, %v823
        %v825 = vpop.f32.mrf.mxu0
        %826 = vmatprep.mubr.bf16.mxu0 0
        %827 = vmatmul.mubr.bf16.gmra.mxu0 %v678
        %v828 = vpop.f32.mrf.mxu0
        %v829 = vadd.f32 %v503, %v828
        %v830 = vpop.f32.mrf.mxu0
        %v831 = vpop.f32.mrf.mxu0
        %v832 = vadd.f32 %v503, %v831
        %v833 = vpop.f32.mrf.mxu0
        %834 = vmatprep.mubr.bf16.mxu0 0
        %835 = vmatmul.mubr.bf16.gmra.mxu0 %v681
        %v836 = vpop.f32.mrf.mxu0
        %v837 = vadd.f32 %v503, %v836
        %v838 = vpop.f32.mrf.mxu0
        %v839 = vpop.f32.mrf.mxu0
        %v840 = vadd.f32 %v503, %v839
        %v841 = vpop.f32.mrf.mxu0
        %842 = vmatprep.mubr.bf16.mxu0 0
        %843 = vmatmul.mubr.bf16.gmra.mxu0 %v684
        %v844 = vpop.f32.mrf.mxu0
        %v845 = vadd.f32 %v503, %v844
        %v846 = vpop.f32.mrf.mxu0
        %v847 = vpop.f32.mrf.mxu0
        %v848 = vadd.f32 %v503, %v847
        %v849 = vpop.f32.mrf.mxu0
        %850 = vmatprep.mubr.bf16.mxu0 0
        %851 = vmatmul.mubr.bf16.gmra.mxu0 %v687
        %v852 = vpop.f32.mrf.mxu0
        %v853 = vadd.f32 %v503, %v852
        %v854 = vpop.f32.mrf.mxu0
        %v855 = vpop.f32.mrf.mxu0
        %v856 = vadd.f32 %v503, %v855
        %v857 = vpop.f32.mrf.mxu0
        %858 = vmatprep.mubr.bf16.mxu0 0
        %859 = vmatmul.mubr.bf16.gmra.mxu0 %v690
        %v860 = vpop.f32.mrf.mxu0
        %v861 = vadd.f32 %v503, %v860
        %v862 = vpop.f32.mrf.mxu0
        %v863 = vpop.f32.mrf.mxu0
        %v864 = vadd.f32 %v503, %v863
        %v865 = vpop.f32.mrf.mxu0
        %866 = vmatprep.mubr.bf16.mxu0 0
        %867 = vmatmul.mubr.bf16.gmra.mxu0 %v693
        %v868 = vpop.f32.mrf.mxu0
        %v869 = vadd.f32 %v503, %v868
        %v870 = vpop.f32.mrf.mxu0
        %v871 = vpop.f32.mrf.mxu0
        %v872 = vadd.f32 %v503, %v871
        %v873 = vpop.f32.mrf.mxu0
        %874 = vmatprep.mubr.bf16.mxu0 0
        %875 = vmatmul.mubr.bf16.gmra.mxu0 %v696
        %v876 = vpop.f32.mrf.mxu0
        %v877 = vadd.f32 %v503, %v876
        %v878 = vpop.f32.mrf.mxu0
        %v879 = vpop.f32.mrf.mxu0
        %v880 = vadd.f32 %v503, %v879
        %v881 = vpop.f32.mrf.mxu0
        %882 = vmatprep.mubr.bf16.mxu0 0
        %883 = vmatmul.mubr.bf16.gmra.mxu0 %v699
        %v884 = vpop.f32.mrf.mxu0
        %v885 = vadd.f32 %v503, %v884
        %v886 = vpop.f32.mrf.mxu0
        %v887 = vpop.f32.mrf.mxu0
        %v888 = vadd.f32 %v503, %v887
        %v889 = vpop.f32.mrf.mxu0
        %890 = vmatprep.mubr.bf16.mxu0 0
        %891 = vmatmul.mubr.bf16.gmra.mxu0 %v702
        %v892 = vpop.f32.mrf.mxu0
        %v893 = vadd.f32 %v503, %v892
        %v894 = vpop.f32.mrf.mxu0
        %v895 = vpop.f32.mrf.mxu0
        %v896 = vadd.f32 %v503, %v895
        %v897 = vpop.f32.mrf.mxu0
        %898 = vmatprep.mubr.bf16.mxu0 0
        %899 = vmatmul.mubr.bf16.gmra.mxu0 %v705
        %v900 = vpop.f32.mrf.mxu0
        %v901 = vadd.f32 %v503, %v900
        %v902 = vpop.f32.mrf.mxu0
        %v903 = vpop.f32.mrf.mxu0
        %v904 = vadd.f32 %v503, %v903
        %v905 = vpop.f32.mrf.mxu0
        %906 = vmatprep.mubr.bf16.mxu0 0
        %907 = vmatmul.mubr.bf16.gmra.mxu0 %v708
        %v908 = vpop.f32.mrf.mxu0
        %v909 = vadd.f32 %v503, %v908
        %v910 = vpop.f32.mrf.mxu0
        %v911 = vpop.f32.mrf.mxu0
        %v912 = vadd.f32 %v503, %v911
        %v913 = vpop.f32.mrf.mxu0
        %914 = vmatprep.mubr.bf16.mxu0 0
        %915 = vmatmul.mubr.bf16.gmra.mxu0 %v711
        %v916 = vpop.f32.mrf.mxu0
        %v917 = vadd.f32 %v503, %v916
        %v918 = vpop.f32.mrf.mxu0
        %v919 = vpop.f32.mrf.mxu0
        %v920 = vadd.f32 %v503, %v919
        %v921 = vpop.f32.mrf.mxu0
        %922 = vmatprep.mubr.bf16.mxu0 0
        %923 = vmatmul.mubr.bf16.gmra.mxu0 %v714
        %v924 = vpop.f32.mrf.mxu0
        %v925 = vadd.f32 %v503, %v924
        %v926 = vpop.f32.mrf.mxu0
        %v927 = vpop.f32.mrf.mxu0
        %v928 = vadd.f32 %v503, %v927
        %v929 = vpop.f32.mrf.mxu0
        %930 = vmatprep.mubr.bf16.mxu0 0
        %931 = vmatmul.mubr.bf16.gmra.mxu0 %v717
        %v932 = vpop.f32.mrf.mxu0
        %v933 = vadd.f32 %v503, %v932
        %v934 = vpop.f32.mrf.mxu0
        %v935 = vpop.f32.mrf.mxu0
        %v936 = vadd.f32 %v503, %v935
        %v937 = vpop.f32.mrf.mxu0
        %938 = vmatprep.mubr.bf16.mxu0 0
        %939 = vmatmul.mubr.bf16.gmra.mxu0 %v720
        %v940 = vpop.f32.mrf.mxu0
        %v941 = vadd.f32 %v503, %v940
        %v942 = vpop.f32.mrf.mxu0
        %v943 = vpop.f32.mrf.mxu0
        %v944 = vadd.f32 %v503, %v943
        %v945 = vpop.f32.mrf.mxu0
        %946 = vdwg.mxu0
        %v947 = vmul.f32 %v757, 0.2
        %v948 = vmul.f32 %v760, 0.2
        %v949 = vmul.f32 %v765, 0.2
        %v950 = vmul.f32 %v768, 0.2
        %v951 = vmul.f32 %v773, 0.2
        %v952 = vmul.f32 %v776, 0.2
        %v953 = vmul.f32 %v781, 0.2
        %v954 = vmul.f32 %v784, 0.2
        %v955 = vmul.f32 %v789, 0.2
        %v956 = vmul.f32 %v792, 0.2
        %v957 = vmul.f32 %v797, 0.2
        %v958 = vmul.f32 %v800, 0.2
        %v959 = vmul.f32 %v805, 0.2
        %v960 = vmul.f32 %v808, 0.2
        %v961 = vmul.f32 %v813, 0.2
        %v962 = vmul.f32 %v816, 0.2
        %v963 = vmul.f32 %v821, 0.2
        %v964 = vmul.f32 %v824, 0.2
        %v965 = vmul.f32 %v829, 0.2
        %v966 = vmul.f32 %v832, 0.2
        %v967 = vmul.f32 %v837, 0.2
        %v968 = vmul.f32 %v840, 0.2
        %v969 = vmul.f32 %v845, 0.2
        %v970 = vmul.f32 %v848, 0.2
        %v971 = vmul.f32 %v853, 0.2
        %v972 = vmul.f32 %v856, 0.2
        %v973 = vmul.f32 %v861, 0.2
        %v974 = vmul.f32 %v864, 0.2
        %v975 = vmul.f32 %v869, 0.2
        %v976 = vmul.f32 %v872, 0.2
        %v977 = vmul.f32 %v877, 0.2
        %v978 = vmul.f32 %v880, 0.2
        %v979 = vmul.f32 %v885, 0.2
        %v980 = vmul.f32 %v888, 0.2
        %v981 = vmul.f32 %v893, 0.2
        %v982 = vmul.f32 %v896, 0.2
        %v983 = vmul.f32 %v901, 0.2
        %v984 = vmul.f32 %v904, 0.2
        %v985 = vmul.f32 %v909, 0.2
        %v986 = vmul.f32 %v912, 0.2
        %v987 = vmul.f32 %v917, 0.2
        %v988 = vmul.f32 %v920, 0.2
        %v989 = vmul.f32 %v925, 0.2
        %v990 = vmul.f32 %v928, 0.2
        %v991 = vmul.f32 %v933, 0.2
        %v992 = vmul.f32 %v936, 0.2
        %v993 = vmul.f32 %v941, 0.2
        %v994 = vmul.f32 %v944, 0.2
        %v995 = vmax.f32 %v757, %v947
        %v996 = vmax.f32 %v760, %v948
        %v997 = vmax.f32 %v765, %v949
        %v998 = vmax.f32 %v768, %v950
        %v999 = vmax.f32 %v773, %v951
        %v1000 = vmax.f32 %v776, %v952
        %v1001 = vmax.f32 %v781, %v953
        %v1002 = vmax.f32 %v784, %v954
        %v1003 = vmax.f32 %v789, %v955
        %v1004 = vmax.f32 %v792, %v956
        %v1005 = vmax.f32 %v797, %v957
        %v1006 = vmax.f32 %v800, %v958
        %v1007 = vmax.f32 %v805, %v959
        %v1008 = vmax.f32 %v808, %v960
        %v1009 = vmax.f32 %v813, %v961
        %v1010 = vmax.f32 %v816, %v962
        %v1011 = vmax.f32 %v821, %v963
        %v1012 = vmax.f32 %v824, %v964
        %v1013 = vmax.f32 %v829, %v965
        %v1014 = vmax.f32 %v832, %v966
        %v1015 = vmax.f32 %v837, %v967
        %v1016 = vmax.f32 %v840, %v968
        %v1017 = vmax.f32 %v845, %v969
        %v1018 = vmax.f32 %v848, %v970
        %v1019 = vmax.f32 %v853, %v971
        %v1020 = vmax.f32 %v856, %v972
        %v1021 = vmax.f32 %v861, %v973
        %v1022 = vmax.f32 %v864, %v974
        %v1023 = vmax.f32 %v869, %v975
        %v1024 = vmax.f32 %v872, %v976
        %v1025 = vmax.f32 %v877, %v977
        %v1026 = vmax.f32 %v880, %v978
        %v1027 = vmax.f32 %v885, %v979
        %v1028 = vmax.f32 %v888, %v980
        %v1029 = vmax.f32 %v893, %v981
        %v1030 = vmax.f32 %v896, %v982
        %v1031 = vmax.f32 %v901, %v983
        %v1032 = vmax.f32 %v904, %v984
        %v1033 = vmax.f32 %v909, %v985
        %v1034 = vmax.f32 %v912, %v986
        %v1035 = vmax.f32 %v917, %v987
        %v1036 = vmax.f32 %v920, %v988
        %v1037 = vmax.f32 %v925, %v989
        %v1038 = vmax.f32 %v928, %v990
        %v1039 = vmax.f32 %v933, %v991
        %v1040 = vmax.f32 %v936, %v992
        %v1041 = vmax.f32 %v941, %v993
        %v1042 = vmax.f32 %v944, %v994
        %v1043 = vlaneseq
        %v1044 = vshrl.u32 %v1043, 7
        %v1045 = vadd.s32 %v1044, 8
        %v1046 = vadd.s32 %v1044, 16
        %s1047 = ssub.s32 %s441, 4
        %v1048 = vstv %s1047
        %v1049 = vadd.s32 %v1048, %v1044
        %v1050 = vadd.s32 %v1048, %v1045
        %v1051 = vadd.s32 %v1048, %v1046
        %vm1052 = vcmp.ge.s32.totalorder %v1049, 0
        %vm1053 = vcmp.ge.s32.totalorder %v1050, 0
        %vm1054 = vcmp.ge.s32.totalorder %v1051, 0
        %vm1055 = vcmp.lt.s32.totalorder %v1049, 16
        %vm1056 = vcmp.lt.s32.totalorder %v1050, 16
        %vm1057 = vcmp.lt.s32.totalorder %v1051, 16
        %vm1058 = vmand %vm1052, %vm1055
        %vm1059 = vmand %vm1053, %vm1056
        %vm1060 = vmand %vm1054, %vm1057
        %v1061 = vsel %vm1058, 1, 0
        %v1062 = vsel %vm1059, 1, 0
        %v1063 = vsel %vm1060, 1, 0
        %vm1064 = vcmp.eq.s32.totalorder %v1061, 1
        %vm1065 = vcmp.eq.s32.totalorder %v1062, 1
        %vm1066 = vcmp.eq.s32.totalorder %v1063, 1
        %v1067 = vsel %vm1064, %v995, 0.0
        %v1068 = vsel %vm1065, %v996, 0.0
        %v1069 = vsel %vm1066, %v997, 0.0
        %v1070 = vsel %vm1064, %v998, 0.0
        %v1071 = vsel %vm1065, %v999, 0.0
        %v1072 = vsel %vm1066, %v1000, 0.0
        %v1073 = vsel %vm1064, %v1001, 0.0
        %v1074 = vsel %vm1065, %v1002, 0.0
        %v1075 = vsel %vm1066, %v1003, 0.0
        %v1076 = vsel %vm1064, %v1004, 0.0
        %v1077 = vsel %vm1065, %v1005, 0.0
        %v1078 = vsel %vm1066, %v1006, 0.0
        %v1079 = vsel %vm1064, %v1007, 0.0
        %v1080 = vsel %vm1065, %v1008, 0.0
        %v1081 = vsel %vm1066, %v1009, 0.0
        %v1082 = vsel %vm1064, %v1010, 0.0
        %v1083 = vsel %vm1065, %v1011, 0.0
        %v1084 = vsel %vm1066, %v1012, 0.0
        %v1085 = vsel %vm1064, %v1013, 0.0
        %v1086 = vsel %vm1065, %v1014, 0.0
        %v1087 = vsel %vm1066, %v1015, 0.0
        %v1088 = vsel %vm1064, %v1016, 0.0
        %v1089 = vsel %vm1065, %v1017, 0.0
        %v1090 = vsel %vm1066, %v1018, 0.0
        %v1091 = vsel %vm1064, %v1019, 0.0
        %v1092 = vsel %vm1065, %v1020, 0.0
        %v1093 = vsel %vm1066, %v1021, 0.0
        %v1094 = vsel %vm1064, %v1022, 0.0
        %v1095 = vsel %vm1065, %v1023, 0.0
        %v1096 = vsel %vm1066, %v1024, 0.0
        %v1097 = vsel %vm1064, %v1025, 0.0
        %v1098 = vsel %vm1065, %v1026, 0.0
        %v1099 = vsel %vm1066, %v1027, 0.0
        %v1100 = vsel %vm1064, %v1028, 0.0
        %v1101 = vsel %vm1065, %v1029, 0.0
        %v1102 = vsel %vm1066, %v1030, 0.0
        %v1103 = vsel %vm1064, %v1031, 0.0
        %v1104 = vsel %vm1065, %v1032, 0.0
        %v1105 = vsel %vm1066, %v1033, 0.0
        %v1106 = vsel %vm1064, %v1034, 0.0
        %v1107 = vsel %vm1065, %v1035, 0.0
        %v1108 = vsel %vm1066, %v1036, 0.0
        %v1109 = vsel %vm1064, %v1037, 0.0
        %v1110 = vsel %vm1065, %v1038, 0.0
        %v1111 = vsel %vm1066, %v1039, 0.0
        %v1112 = vsel %vm1064, %v1040, 0.0
        %v1113 = vsel %vm1065, %v1041, 0.0
        %v1114 = vsel %vm1066, %v1042, 0.0
        %v1115 = vld [vmem:[%s3] sm:$0xff]
        %v1116 = vld [vmem:[%s3 + $0x8] sm:$0xff]
        %v1117 = vld [vmem:[%s3 + $0x10] sm:$0xff]
        %v1118 = vld [vmem:[%s3 + $0x18] sm:$0x1]
        %v1119 = vld [vmem:[%s4] sm:$0xf]
        %v1120 = vld [vmem:[%s4 + $0x4] sm:$0xf]
        %v1121 = vld [vmem:[%s4 + $0x8] sm:$0xf]
        %v1122 = vld [vmem:[%s4 + $0xc] sm:$0xf]
        %v1123 = vld [vmem:[%s4 + $0x10] sm:$0xf]
        %v1124 = vld [vmem:[%s4 + $0x14] sm:$0xf]
        %v1125 = vld [vmem:[%s4 + $0x18] sm:$0xf]
        %v1126 = vld [vmem:[%s4 + $0x1c] sm:$0xf]
        %v1127 = vld [vmem:[%s4 + $0x20] sm:$0xf]
        %v1128 = vld [vmem:[%s4 + $0x24] sm:$0xf]
        %v1129 = vld [vmem:[%s4 + $0x28] sm:$0xf]
        %v1130 = vld [vmem:[%s4 + $0x2c] sm:$0xf]
        %v1131 = vld [vmem:[%s4 + $0x30] sm:$0xf]
        %v1132 = vld [vmem:[%s4 + $0x34] sm:$0xf]
        %v1133 = vld [vmem:[%s4 + $0x38] sm:$0xf]
        %v1134 = vld [vmem:[%s4 + $0x3c] sm:$0xf]
        %v1135 = vld [vmem:[%s5] sm:$0x1]
        %s1136 = sadd.s32 %s441, 4294967293
        %v1137 = vstv %s1136
        %v1138 = vadd.s32 %v1137, %v1044
        %v1139 = vadd.s32 %v1137, %v1045
        %v1140 = vadd.s32 %v1137, %v1046
        %vm1141 = vcmp.ge.s32.totalorder %v1138, 0
        %vm1142 = vcmp.ge.s32.totalorder %v1139, 0
        %vm1143 = vcmp.ge.s32.totalorder %v1140, 0
        %vm1144 = vcmp.lt.s32.totalorder %v1138, 16
        %vm1145 = vcmp.lt.s32.totalorder %v1139, 16
        %vm1146 = vcmp.lt.s32.totalorder %v1140, 16
        %vm1147 = vmand %vm1141, %vm1144
        %vm1148 = vmand %vm1142, %vm1145
        %vm1149 = vmand %vm1143, %vm1146
        %v1150 = vlaneseq
        %v1151 = vshrl.u32 %v1150, 7
        %v1152 = vsub.s32 0, %v1151
        %v1153 = vrot.slane %v1115, %v1152
        %v1154 = vmul.f32 %v1079, %v1153
        %v1155 = vmul.f32 %v1080, %v1153
        %v1156 = vmul.f32 %v1081, %v1153
        %v1157 = vlaneseq
        %v1158 = vshrl.u32 %v1157, 7
        %v1159 = vsub.s32 1, %v1158
        %v1160 = vrot.slane %v1115, %v1159
        %v1161 = vmul.f32 %v1082, %v1160
        %v1162 = vmul.f32 %v1083, %v1160
        %v1163 = vmul.f32 %v1084, %v1160
        %v1164 = vadd.f32 %v1154, %v1161
        %v1165 = vadd.f32 %v1155, %v1162
        %v1166 = vadd.f32 %v1156, %v1163
        %v1167 = vlaneseq
        %v1168 = vshrl.u32 %v1167, 7
        %v1169 = vsub.s32 2, %v1168
        %v1170 = vrot.slane %v1115, %v1169
        %v1171 = vmul.f32 %v1085, %v1170
        %v1172 = vmul.f32 %v1086, %v1170
        %v1173 = vmul.f32 %v1087, %v1170
        %v1174 = vadd.f32 %v1164, %v1171
        %v1175 = vadd.f32 %v1165, %v1172
        %v1176 = vadd.f32 %v1166, %v1173
        %v1177 = vlaneseq
        %v1178 = vshrl.u32 %v1177, 7
        %v1179 = vsub.s32 3, %v1178
        %v1180 = vrot.slane %v1115, %v1179
        %v1181 = vmul.f32 %v1088, %v1180
        %v1182 = vmul.f32 %v1089, %v1180
        %v1183 = vmul.f32 %v1090, %v1180
        %v1184 = vadd.f32 %v1174, %v1181
        %v1185 = vadd.f32 %v1175, %v1182
        %v1186 = vadd.f32 %v1176, %v1183
        %v1187 = vlaneseq
        %v1188 = vshrl.u32 %v1187, 7
        %v1189 = vsub.s32 4, %v1188
        %v1190 = vrot.slane %v1115, %v1189
        %v1191 = vmul.f32 %v1091, %v1190
        %v1192 = vmul.f32 %v1092, %v1190
        %v1193 = vmul.f32 %v1093, %v1190
        %v1194 = vadd.f32 %v1184, %v1191
        %v1195 = vadd.f32 %v1185, %v1192
        %v1196 = vadd.f32 %v1186, %v1193
        %v1197 = vlaneseq
        %v1198 = vshrl.u32 %v1197, 7
        %v1199 = vsub.s32 5, %v1198
        %v1200 = vrot.slane %v1115, %v1199
        %v1201 = vmul.f32 %v1094, %v1200
        %v1202 = vmul.f32 %v1095, %v1200
        %v1203 = vmul.f32 %v1096, %v1200
        %v1204 = vadd.f32 %v1194, %v1201
        %v1205 = vadd.f32 %v1195, %v1202
        %v1206 = vadd.f32 %v1196, %v1203
        %v1207 = vlaneseq
        %v1208 = vshrl.u32 %v1207, 7
        %v1209 = vsub.s32 6, %v1208
        %v1210 = vrot.slane %v1115, %v1209
        %v1211 = vmul.f32 %v1097, %v1210
        %v1212 = vmul.f32 %v1098, %v1210
        %v1213 = vmul.f32 %v1099, %v1210
        %v1214 = vadd.f32 %v1204, %v1211
        %v1215 = vadd.f32 %v1205, %v1212
        %v1216 = vadd.f32 %v1206, %v1213
        %v1217 = vlaneseq
        %v1218 = vshrl.u32 %v1217, 7
        %v1219 = vsub.s32 7, %v1218
        %v1220 = vrot.slane %v1115, %v1219
        %v1221 = vmul.f32 %v1100, %v1220
        %v1222 = vmul.f32 %v1101, %v1220
        %v1223 = vmul.f32 %v1102, %v1220
        %v1224 = vadd.f32 %v1214, %v1221
        %v1225 = vadd.f32 %v1215, %v1222
        %v1226 = vadd.f32 %v1216, %v1223
        %v1227 = vlaneseq
        %v1228 = vshrl.u32 %v1227, 7
        %v1229 = vsub.s32 0, %v1228
        %v1230 = vrot.slane %v1116, %v1229
        %v1231 = vmul.f32 %v1103, %v1230
        %v1232 = vmul.f32 %v1104, %v1230
        %v1233 = vmul.f32 %v1105, %v1230
        %v1234 = vadd.f32 %v1224, %v1231
        %v1235 = vadd.f32 %v1225, %v1232
        %v1236 = vadd.f32 %v1226, %v1233
        %v1237 = vlaneseq
        %v1238 = vshrl.u32 %v1237, 7
        %v1239 = vsub.s32 1, %v1238
        %v1240 = vrot.slane %v1116, %v1239
        %v1241 = vmul.f32 %v1106, %v1240
        %v1242 = vmul.f32 %v1107, %v1240
        %v1243 = vmul.f32 %v1108, %v1240
        %v1244 = vadd.f32 %v1234, %v1241
        %v1245 = vadd.f32 %v1235, %v1242
        %v1246 = vadd.f32 %v1236, %v1243
        %v1247 = vlaneseq
        %v1248 = vshrl.u32 %v1247, 7
        %v1249 = vsub.s32 2, %v1248
        %v1250 = vrot.slane %v1116, %v1249
        %v1251 = vmul.f32 %v1109, %v1250
        %v1252 = vmul.f32 %v1110, %v1250
        %v1253 = vmul.f32 %v1111, %v1250
        %v1254 = vadd.f32 %v1244, %v1251
        %v1255 = vadd.f32 %v1245, %v1252
        %v1256 = vadd.f32 %v1246, %v1253
        %v1257 = vlaneseq
        %v1258 = vshrl.u32 %v1257, 7
        %v1259 = vsub.s32 3, %v1258
        %v1260 = vrot.slane %v1116, %v1259
        %v1261 = vmul.f32 %v1112, %v1260
        %v1262 = vmul.f32 %v1113, %v1260
        %v1263 = vmul.f32 %v1114, %v1260
        %v1264 = vadd.f32 %v1254, %v1261
        %v1265 = vadd.f32 %v1255, %v1262
        %v1266 = vadd.f32 %v1256, %v1263
        %v1267 = vlaneseq
        %v1268 = vshrl.u32 %v1267, 7
        %v1269 = vsub.s32 4, %v1268
        %v1270 = vrot.slane %v1116, %v1269
        %v1271 = vmul.f32 %v1067, %v1270
        %v1272 = vmul.f32 %v1068, %v1270
        %v1273 = vmul.f32 %v1069, %v1270
        %vm1277 = vcmask 1046528
        %v1278 = vrot.slane %v1271, 1
        %v1279 = vrot.slane %v1272, 1
        %v1280 = vsel %vm1277, %v1278, %v1279
        %v1281 = vrot.slane %v1273, 1
        %v1282 = vsel %vm1277, %v1279, %v1281
        %v1286 = vadd.f32 %v1264, %v1280
        %v1287 = vadd.f32 %v1265, %v1282
        %v1288 = vadd.f32 %v1266, %v1281
        %v1289 = vlaneseq
        %v1290 = vshrl.u32 %v1289, 7
        %v1291 = vsub.s32 5, %v1290
        %v1292 = vrot.slane %v1116, %v1291
        %v1293 = vmul.f32 %v1070, %v1292
        %v1294 = vmul.f32 %v1071, %v1292
        %v1295 = vmul.f32 %v1072, %v1292
        %v1299 = vrot.slane %v1293, 1
        %v1300 = vrot.slane %v1294, 1
        %v1301 = vsel %vm1277, %v1299, %v1300
        %v1302 = vrot.slane %v1295, 1
        %v1303 = vsel %vm1277, %v1300, %v1302
        %v1307 = vadd.f32 %v1286, %v1301
        %v1308 = vadd.f32 %v1287, %v1303
        %v1309 = vadd.f32 %v1288, %v1302
        %v1310 = vlaneseq
        %v1311 = vshrl.u32 %v1310, 7
        %v1312 = vsub.s32 6, %v1311
        %v1313 = vrot.slane %v1116, %v1312
        %v1314 = vmul.f32 %v1073, %v1313
        %v1315 = vmul.f32 %v1074, %v1313
        %v1316 = vmul.f32 %v1075, %v1313
        %v1320 = vrot.slane %v1314, 1
        %v1321 = vrot.slane %v1315, 1
        %v1322 = vsel %vm1277, %v1320, %v1321
        %v1323 = vrot.slane %v1316, 1
        %v1324 = vsel %vm1277, %v1321, %v1323
        %v1328 = vadd.f32 %v1307, %v1322
        %v1329 = vadd.f32 %v1308, %v1324
        %v1330 = vadd.f32 %v1309, %v1323
        %v1331 = vlaneseq
        %v1332 = vshrl.u32 %v1331, 7
        %v1333 = vsub.s32 7, %v1332
        %v1334 = vrot.slane %v1116, %v1333
        %v1335 = vmul.f32 %v1076, %v1334
        %v1336 = vmul.f32 %v1077, %v1334
        %v1337 = vmul.f32 %v1078, %v1334
        %v1341 = vrot.slane %v1335, 1
        %v1342 = vrot.slane %v1336, 1
        %v1343 = vsel %vm1277, %v1341, %v1342
        %v1344 = vrot.slane %v1337, 1
        %v1345 = vsel %vm1277, %v1342, %v1344
        %v1349 = vadd.f32 %v1328, %v1343
        %v1350 = vadd.f32 %v1329, %v1345
        %v1351 = vadd.f32 %v1330, %v1344
        %v1352 = vlaneseq
        %v1353 = vshrl.u32 %v1352, 7
        %v1354 = vsub.s32 0, %v1353
        %v1355 = vrot.slane %v1117, %v1354
        %v1356 = vmul.f32 %v1079, %v1355
        %v1357 = vmul.f32 %v1080, %v1355
        %v1358 = vmul.f32 %v1081, %v1355
        %v1362 = vrot.slane %v1356, 1
        %v1363 = vrot.slane %v1357, 1
        %v1364 = vsel %vm1277, %v1362, %v1363
        %v1365 = vrot.slane %v1358, 1
        %v1366 = vsel %vm1277, %v1363, %v1365
        %v1370 = vadd.f32 %v1349, %v1364
        %v1371 = vadd.f32 %v1350, %v1366
        %v1372 = vadd.f32 %v1351, %v1365
        %v1373 = vlaneseq
        %v1374 = vshrl.u32 %v1373, 7
        %v1375 = vsub.s32 1, %v1374
        %v1376 = vrot.slane %v1117, %v1375
        %v1377 = vmul.f32 %v1082, %v1376
        %v1378 = vmul.f32 %v1083, %v1376
        %v1379 = vmul.f32 %v1084, %v1376
        %v1383 = vrot.slane %v1377, 1
        %v1384 = vrot.slane %v1378, 1
        %v1385 = vsel %vm1277, %v1383, %v1384
        %v1386 = vrot.slane %v1379, 1
        %v1387 = vsel %vm1277, %v1384, %v1386
        %v1391 = vadd.f32 %v1370, %v1385
        %v1392 = vadd.f32 %v1371, %v1387
        %v1393 = vadd.f32 %v1372, %v1386
        %v1394 = vlaneseq
        %v1395 = vshrl.u32 %v1394, 7
        %v1396 = vsub.s32 2, %v1395
        %v1397 = vrot.slane %v1117, %v1396
        %v1398 = vmul.f32 %v1085, %v1397
        %v1399 = vmul.f32 %v1086, %v1397
        %v1400 = vmul.f32 %v1087, %v1397
        %v1404 = vrot.slane %v1398, 1
        %v1405 = vrot.slane %v1399, 1
        %v1406 = vsel %vm1277, %v1404, %v1405
        %v1407 = vrot.slane %v1400, 1
        %v1408 = vsel %vm1277, %v1405, %v1407
        %v1412 = vadd.f32 %v1391, %v1406
        %v1413 = vadd.f32 %v1392, %v1408
        %v1414 = vadd.f32 %v1393, %v1407
        %v1415 = vlaneseq
        %v1416 = vshrl.u32 %v1415, 7
        %v1417 = vsub.s32 3, %v1416
        %v1418 = vrot.slane %v1117, %v1417
        %v1419 = vmul.f32 %v1088, %v1418
        %v1420 = vmul.f32 %v1089, %v1418
        %v1421 = vmul.f32 %v1090, %v1418
        %v1425 = vrot.slane %v1419, 1
        %v1426 = vrot.slane %v1420, 1
        %v1427 = vsel %vm1277, %v1425, %v1426
        %v1428 = vrot.slane %v1421, 1
        %v1429 = vsel %vm1277, %v1426, %v1428
        %v1433 = vadd.f32 %v1412, %v1427
        %v1434 = vadd.f32 %v1413, %v1429
        %v1435 = vadd.f32 %v1414, %v1428
        %v1436 = vlaneseq
        %v1437 = vshrl.u32 %v1436, 7
        %v1438 = vsub.s32 4, %v1437
        %v1439 = vrot.slane %v1117, %v1438
        %v1440 = vmul.f32 %v1091, %v1439
        %v1441 = vmul.f32 %v1092, %v1439
        %v1442 = vmul.f32 %v1093, %v1439
        %v1446 = vrot.slane %v1440, 1
        %v1447 = vrot.slane %v1441, 1
        %v1448 = vsel %vm1277, %v1446, %v1447
        %v1449 = vrot.slane %v1442, 1
        %v1450 = vsel %vm1277, %v1447, %v1449
        %v1454 = vadd.f32 %v1433, %v1448
        %v1455 = vadd.f32 %v1434, %v1450
        %v1456 = vadd.f32 %v1435, %v1449
        %v1457 = vlaneseq
        %v1458 = vshrl.u32 %v1457, 7
        %v1459 = vsub.s32 5, %v1458
        %v1460 = vrot.slane %v1117, %v1459
        %v1461 = vmul.f32 %v1094, %v1460
        %v1462 = vmul.f32 %v1095, %v1460
        %v1463 = vmul.f32 %v1096, %v1460
        %v1467 = vrot.slane %v1461, 1
        %v1468 = vrot.slane %v1462, 1
        %v1469 = vsel %vm1277, %v1467, %v1468
        %v1470 = vrot.slane %v1463, 1
        %v1471 = vsel %vm1277, %v1468, %v1470
        %v1475 = vadd.f32 %v1454, %v1469
        %v1476 = vadd.f32 %v1455, %v1471
        %v1477 = vadd.f32 %v1456, %v1470
        %v1478 = vlaneseq
        %v1479 = vshrl.u32 %v1478, 7
        %v1480 = vsub.s32 6, %v1479
        %v1481 = vrot.slane %v1117, %v1480
        %v1482 = vmul.f32 %v1097, %v1481
        %v1483 = vmul.f32 %v1098, %v1481
        %v1484 = vmul.f32 %v1099, %v1481
        %v1488 = vrot.slane %v1482, 1
        %v1489 = vrot.slane %v1483, 1
        %v1490 = vsel %vm1277, %v1488, %v1489
        %v1491 = vrot.slane %v1484, 1
        %v1492 = vsel %vm1277, %v1489, %v1491
        %v1496 = vadd.f32 %v1475, %v1490
        %v1497 = vadd.f32 %v1476, %v1492
        %v1498 = vadd.f32 %v1477, %v1491
        %v1499 = vlaneseq
        %v1500 = vshrl.u32 %v1499, 7
        %v1501 = vsub.s32 7, %v1500
        %v1502 = vrot.slane %v1117, %v1501
        %v1503 = vmul.f32 %v1100, %v1502
        %v1504 = vmul.f32 %v1101, %v1502
        %v1505 = vmul.f32 %v1102, %v1502
        %v1509 = vrot.slane %v1503, 1
        %v1510 = vrot.slane %v1504, 1
        %v1511 = vsel %vm1277, %v1509, %v1510
        %v1512 = vrot.slane %v1505, 1
        %v1513 = vsel %vm1277, %v1510, %v1512
        %v1517 = vadd.f32 %v1496, %v1511
        %v1518 = vadd.f32 %v1497, %v1513
        %v1519 = vadd.f32 %v1498, %v1512
        %v1520 = vlaneseq
        %v1521 = vshrl.u32 %v1520, 7
        %v1522 = vsub.s32 0, %v1521
        %v1523 = vrot.slane %v1118, %v1522
        %v1524 = vmul.f32 %v1103, %v1523
        %v1525 = vmul.f32 %v1104, %v1523
        %v1526 = vmul.f32 %v1105, %v1523
        %v1530 = vrot.slane %v1524, 1
        %v1531 = vrot.slane %v1525, 1
        %v1532 = vsel %vm1277, %v1530, %v1531
        %v1533 = vrot.slane %v1526, 1
        %v1534 = vsel %vm1277, %v1531, %v1533
        %v1538 = vadd.f32 %v1517, %v1532
        %v1539 = vadd.f32 %v1518, %v1534
        %v1540 = vadd.f32 %v1519, %v1533
        %v1541 = vpack.c.bf16 %v1539, %v1538
        %v1542 = vpack.c.bf16 %v1540, %v1540
        %v1543 = vmul.f32 %v1085, %v1153
        %v1544 = vmul.f32 %v1086, %v1153
        %v1545 = vmul.f32 %v1087, %v1153
        %v1546 = vmul.f32 %v1088, %v1160
        %v1547 = vmul.f32 %v1089, %v1160
        %v1548 = vmul.f32 %v1090, %v1160
        %v1549 = vadd.f32 %v1543, %v1546
        %v1550 = vadd.f32 %v1544, %v1547
        %v1551 = vadd.f32 %v1545, %v1548
        %v1552 = vmul.f32 %v1091, %v1170
        %v1553 = vmul.f32 %v1092, %v1170
        %v1554 = vmul.f32 %v1093, %v1170
        %v1555 = vadd.f32 %v1549, %v1552
        %v1556 = vadd.f32 %v1550, %v1553
        %v1557 = vadd.f32 %v1551, %v1554
        %v1558 = vmul.f32 %v1094, %v1180
        %v1559 = vmul.f32 %v1095, %v1180
        %v1560 = vmul.f32 %v1096, %v1180
        %v1561 = vadd.f32 %v1555, %v1558
        %v1562 = vadd.f32 %v1556, %v1559
        %v1563 = vadd.f32 %v1557, %v1560
        %v1564 = vmul.f32 %v1097, %v1190
        %v1565 = vmul.f32 %v1098, %v1190
        %v1566 = vmul.f32 %v1099, %v1190
        %v1567 = vadd.f32 %v1561, %v1564
        %v1568 = vadd.f32 %v1562, %v1565
        %v1569 = vadd.f32 %v1563, %v1566
        %v1570 = vmul.f32 %v1100, %v1200
        %v1571 = vmul.f32 %v1101, %v1200
        %v1572 = vmul.f32 %v1102, %v1200
        %v1573 = vadd.f32 %v1567, %v1570
        %v1574 = vadd.f32 %v1568, %v1571
        %v1575 = vadd.f32 %v1569, %v1572
        %v1576 = vmul.f32 %v1103, %v1210
        %v1577 = vmul.f32 %v1104, %v1210
        %v1578 = vmul.f32 %v1105, %v1210
        %v1579 = vadd.f32 %v1573, %v1576
        %v1580 = vadd.f32 %v1574, %v1577
        %v1581 = vadd.f32 %v1575, %v1578
        %v1582 = vmul.f32 %v1106, %v1220
        %v1583 = vmul.f32 %v1107, %v1220
        %v1584 = vmul.f32 %v1108, %v1220
        %v1585 = vadd.f32 %v1579, %v1582
        %v1586 = vadd.f32 %v1580, %v1583
        %v1587 = vadd.f32 %v1581, %v1584
        %v1588 = vmul.f32 %v1109, %v1230
        %v1589 = vmul.f32 %v1110, %v1230
        %v1590 = vmul.f32 %v1111, %v1230
        %v1591 = vadd.f32 %v1585, %v1588
        %v1592 = vadd.f32 %v1586, %v1589
        %v1593 = vadd.f32 %v1587, %v1590
        %v1594 = vmul.f32 %v1112, %v1240
        %v1595 = vmul.f32 %v1113, %v1240
        %v1596 = vmul.f32 %v1114, %v1240
        %v1597 = vadd.f32 %v1591, %v1594
        %v1598 = vadd.f32 %v1592, %v1595
        %v1599 = vadd.f32 %v1593, %v1596
        %v1600 = vmul.f32 %v1067, %v1250
        %v1601 = vmul.f32 %v1068, %v1250
        %v1602 = vmul.f32 %v1069, %v1250
        %v1606 = vrot.slane %v1600, 1
        %v1607 = vrot.slane %v1601, 1
        %v1608 = vsel %vm1277, %v1606, %v1607
        %v1609 = vrot.slane %v1602, 1
        %v1610 = vsel %vm1277, %v1607, %v1609
        %v1614 = vadd.f32 %v1597, %v1608
        %v1615 = vadd.f32 %v1598, %v1610
        %v1616 = vadd.f32 %v1599, %v1609
        %v1617 = vmul.f32 %v1070, %v1260
        %v1618 = vmul.f32 %v1071, %v1260
        %v1619 = vmul.f32 %v1072, %v1260
        %v1623 = vrot.slane %v1617, 1
        %v1624 = vrot.slane %v1618, 1
        %v1625 = vsel %vm1277, %v1623, %v1624
        %v1626 = vrot.slane %v1619, 1
        %v1627 = vsel %vm1277, %v1624, %v1626
        %v1631 = vadd.f32 %v1614, %v1625
        %v1632 = vadd.f32 %v1615, %v1627
        %v1633 = vadd.f32 %v1616, %v1626
        %v1634 = vmul.f32 %v1073, %v1270
        %v1635 = vmul.f32 %v1074, %v1270
        %v1636 = vmul.f32 %v1075, %v1270
        %v1640 = vrot.slane %v1634, 1
        %v1641 = vrot.slane %v1635, 1
        %v1642 = vsel %vm1277, %v1640, %v1641
        %v1643 = vrot.slane %v1636, 1
        %v1644 = vsel %vm1277, %v1641, %v1643
        %v1648 = vadd.f32 %v1631, %v1642
        %v1649 = vadd.f32 %v1632, %v1644
        %v1650 = vadd.f32 %v1633, %v1643
        %v1651 = vmul.f32 %v1076, %v1292
        %v1652 = vmul.f32 %v1077, %v1292
        %v1653 = vmul.f32 %v1078, %v1292
        %v1657 = vrot.slane %v1651, 1
        %v1658 = vrot.slane %v1652, 1
        %v1659 = vsel %vm1277, %v1657, %v1658
        %v1660 = vrot.slane %v1653, 1
        %v1661 = vsel %vm1277, %v1658, %v1660
        %v1665 = vadd.f32 %v1648, %v1659
        %v1666 = vadd.f32 %v1649, %v1661
        %v1667 = vadd.f32 %v1650, %v1660
        %v1668 = vmul.f32 %v1079, %v1313
        %v1669 = vmul.f32 %v1080, %v1313
        %v1670 = vmul.f32 %v1081, %v1313
        %v1674 = vrot.slane %v1668, 1
        %v1675 = vrot.slane %v1669, 1
        %v1676 = vsel %vm1277, %v1674, %v1675
        %v1677 = vrot.slane %v1670, 1
        %v1678 = vsel %vm1277, %v1675, %v1677
        %v1682 = vadd.f32 %v1665, %v1676
        %v1683 = vadd.f32 %v1666, %v1678
        %v1684 = vadd.f32 %v1667, %v1677
        %v1685 = vmul.f32 %v1082, %v1334
        %v1686 = vmul.f32 %v1083, %v1334
        %v1687 = vmul.f32 %v1084, %v1334
        %v1691 = vrot.slane %v1685, 1
        %v1692 = vrot.slane %v1686, 1
        %v1693 = vsel %vm1277, %v1691, %v1692
        %v1694 = vrot.slane %v1687, 1
        %v1695 = vsel %vm1277, %v1692, %v1694
        %v1699 = vadd.f32 %v1682, %v1693
        %v1700 = vadd.f32 %v1683, %v1695
        %v1701 = vadd.f32 %v1684, %v1694
        %v1702 = vmul.f32 %v1085, %v1355
        %v1703 = vmul.f32 %v1086, %v1355
        %v1704 = vmul.f32 %v1087, %v1355
        %v1708 = vrot.slane %v1702, 1
        %v1709 = vrot.slane %v1703, 1
        %v1710 = vsel %vm1277, %v1708, %v1709
        %v1711 = vrot.slane %v1704, 1
        %v1712 = vsel %vm1277, %v1709, %v1711
        %v1716 = vadd.f32 %v1699, %v1710
        %v1717 = vadd.f32 %v1700, %v1712
        %v1718 = vadd.f32 %v1701, %v1711
        %v1719 = vmul.f32 %v1088, %v1376
        %v1720 = vmul.f32 %v1089, %v1376
        %v1721 = vmul.f32 %v1090, %v1376
        %v1725 = vrot.slane %v1719, 1
        %v1726 = vrot.slane %v1720, 1
        %v1727 = vsel %vm1277, %v1725, %v1726
        %v1728 = vrot.slane %v1721, 1
        %v1729 = vsel %vm1277, %v1726, %v1728
        %v1733 = vadd.f32 %v1716, %v1727
        %v1734 = vadd.f32 %v1717, %v1729
        %v1735 = vadd.f32 %v1718, %v1728
        %v1736 = vmul.f32 %v1091, %v1397
        %v1737 = vmul.f32 %v1092, %v1397
        %v1738 = vmul.f32 %v1093, %v1397
        %v1742 = vrot.slane %v1736, 1
        %v1743 = vrot.slane %v1737, 1
        %v1744 = vsel %vm1277, %v1742, %v1743
        %v1745 = vrot.slane %v1738, 1
        %v1746 = vsel %vm1277, %v1743, %v1745
        %v1750 = vadd.f32 %v1733, %v1744
        %v1751 = vadd.f32 %v1734, %v1746
        %v1752 = vadd.f32 %v1735, %v1745
        %v1753 = vmul.f32 %v1094, %v1418
        %v1754 = vmul.f32 %v1095, %v1418
        %v1755 = vmul.f32 %v1096, %v1418
        %v1759 = vrot.slane %v1753, 1
        %v1760 = vrot.slane %v1754, 1
        %v1761 = vsel %vm1277, %v1759, %v1760
        %v1762 = vrot.slane %v1755, 1
        %v1763 = vsel %vm1277, %v1760, %v1762
        %v1767 = vadd.f32 %v1750, %v1761
        %v1768 = vadd.f32 %v1751, %v1763
        %v1769 = vadd.f32 %v1752, %v1762
        %v1770 = vmul.f32 %v1097, %v1439
        %v1771 = vmul.f32 %v1098, %v1439
        %v1772 = vmul.f32 %v1099, %v1439
        %v1776 = vrot.slane %v1770, 1
        %v1777 = vrot.slane %v1771, 1
        %v1778 = vsel %vm1277, %v1776, %v1777
        %v1779 = vrot.slane %v1772, 1
        %v1780 = vsel %vm1277, %v1777, %v1779
        %v1784 = vadd.f32 %v1767, %v1778
        %v1785 = vadd.f32 %v1768, %v1780
        %v1786 = vadd.f32 %v1769, %v1779
        %v1787 = vmul.f32 %v1100, %v1460
        %v1788 = vmul.f32 %v1101, %v1460
        %v1789 = vmul.f32 %v1102, %v1460
        %v1793 = vrot.slane %v1787, 1
        %v1794 = vrot.slane %v1788, 1
        %v1795 = vsel %vm1277, %v1793, %v1794
        %v1796 = vrot.slane %v1789, 1
        %v1797 = vsel %vm1277, %v1794, %v1796
        %v1801 = vadd.f32 %v1784, %v1795
        %v1802 = vadd.f32 %v1785, %v1797
        %v1803 = vadd.f32 %v1786, %v1796
        %v1804 = vmul.f32 %v1103, %v1481
        %v1805 = vmul.f32 %v1104, %v1481
        %v1806 = vmul.f32 %v1105, %v1481
        %v1810 = vrot.slane %v1804, 1
        %v1811 = vrot.slane %v1805, 1
        %v1812 = vsel %vm1277, %v1810, %v1811
        %v1813 = vrot.slane %v1806, 1
        %v1814 = vsel %vm1277, %v1811, %v1813
        %v1818 = vadd.f32 %v1801, %v1812
        %v1819 = vadd.f32 %v1802, %v1814
        %v1820 = vadd.f32 %v1803, %v1813
        %v1821 = vmul.f32 %v1106, %v1502
        %v1822 = vmul.f32 %v1107, %v1502
        %v1823 = vmul.f32 %v1108, %v1502
        %v1827 = vrot.slane %v1821, 1
        %v1828 = vrot.slane %v1822, 1
        %v1829 = vsel %vm1277, %v1827, %v1828
        %v1830 = vrot.slane %v1823, 1
        %v1831 = vsel %vm1277, %v1828, %v1830
        %v1835 = vadd.f32 %v1818, %v1829
        %v1836 = vadd.f32 %v1819, %v1831
        %v1837 = vadd.f32 %v1820, %v1830
        %v1838 = vmul.f32 %v1109, %v1523
        %v1839 = vmul.f32 %v1110, %v1523
        %v1840 = vmul.f32 %v1111, %v1523
        %v1844 = vrot.slane %v1838, 1
        %v1845 = vrot.slane %v1839, 1
        %v1846 = vsel %vm1277, %v1844, %v1845
        %v1847 = vrot.slane %v1840, 1
        %v1848 = vsel %vm1277, %v1845, %v1847
        %v1852 = vadd.f32 %v1835, %v1846
        %v1853 = vadd.f32 %v1836, %v1848
        %v1854 = vadd.f32 %v1837, %v1847
        %v1855 = vpack.c.bf16 %v1853, %v1852
        %v1856 = vpack.c.bf16 %v1854, %v1854
        %v1873 = vunpack.c.l.b16 %v1119
        %v1874 = vunpack.c.l.b16 %v1120
        %v1875 = vunpack.c.l.b16 %v1121
        %v1876 = vunpack.c.l.b16 %v1122
        %v1877 = vunpack.c.l.b16 %v1123
        %v1878 = vunpack.c.l.b16 %v1124
        %v1879 = vunpack.c.l.b16 %v1125
        %v1880 = vunpack.c.l.b16 %v1126
        %v1881 = vunpack.c.l.b16 %v1127
        %v1882 = vunpack.c.l.b16 %v1128
        %v1883 = vunpack.c.l.b16 %v1129
        %v1884 = vunpack.c.l.b16 %v1130
        %v1885 = vunpack.c.l.b16 %v1131
        %v1886 = vunpack.c.l.b16 %v1132
        %v1887 = vunpack.c.l.b16 %v1133
        %v1888 = vunpack.c.l.b16 %v1134
        %v1889 = vpack.c.b16 %v1874, %v1873
        %v1890 = vpack.c.b16 %v1876, %v1875
        %v1891 = vpack.c.b16 %v1878, %v1877
        %v1892 = vpack.c.b16 %v1880, %v1879
        %v1893 = vpack.c.b16 %v1882, %v1881
        %v1894 = vpack.c.b16 %v1884, %v1883
        %v1895 = vpack.c.b16 %v1886, %v1885
        %v1896 = vpack.c.b16 %v1888, %v1887
        %1905 = vmatprep.subr.bf16.mxu0 0
        %1906 = vmatpush1.bf16.msra.mxu0 %v1896
        %1907 = vmatprep.subr.bf16.mxu0 0
        %1908 = vmatpush1.bf16.msra.mxu0 %v1895
        %1909 = vmatprep.subr.bf16.mxu0 0
        %1910 = vmatpush1.bf16.msra.mxu0 %v1894
        %1911 = vmatprep.subr.bf16.mxu0 0
        %1912 = vmatpush1.bf16.msra.mxu0 %v1893
        %1913 = vmatprep.subr.bf16.mxu0 0
        %1914 = vmatpush1.bf16.msra.mxu0 %v1892
        %1915 = vmatprep.subr.bf16.mxu0 0
        %1916 = vmatpush1.bf16.msra.mxu0 %v1891
        %1917 = vmatprep.subr.bf16.mxu0 0
        %1918 = vmatpush1.bf16.msra.mxu0 %v1890
        %1919 = vmatprep.subr.bf16.mxu0 0
        %1920 = vmatpush1.bf16.msra.mxu0 %v1889
        %1921 = vmatprep.subr.bf16.mxu0 0
        %1922 = vmatpush2.bf16.msra.mxu0 0
        %1923 = vmatprep.subr.bf16.mxu0 0
        %1924 = vmatpush2.bf16.msra.mxu0 0
        %1925 = vmatprep.subr.bf16.mxu0 0
        %1926 = vmatpush2.bf16.msra.mxu0 0
        %1927 = vmatprep.subr.bf16.mxu0 0
        %1928 = vmatpush2.bf16.msra.mxu0 0
        %1929 = vmatprep.subr.bf16.mxu0 0
        %1930 = vmatpush2.bf16.msra.mxu0 0
        %1931 = vmatprep.subr.bf16.mxu0 0
        %1932 = vmatpush2.bf16.msra.mxu0 0
        %1933 = vmatprep.subr.bf16.mxu0 0
        %1934 = vmatpush2.bf16.msra.mxu0 0
        %1935 = vmatprep.subr.bf16.mxu0 0
        %1936 = vmatpush2.bf16.msra.mxu0 0
        %1937 = vmatprep.mubr.bf16.mxu0 0
        %1938 = vmatmul.mubr.bf16.gmra.mxu0 %v1541
        %v1939 = vpop.f32.mrf.mxu0
        %v1940 = vadd.f32 0.0, %v1939
        %v1941 = vpop.f32.mrf.mxu0
        %v1942 = vpop.f32.mrf.mxu0
        %v1943 = vadd.f32 0.0, %v1942
        %v1944 = vpop.f32.mrf.mxu0
        %1945 = vmatprep.mubr.bf16.mxu0 0
        %1946 = vmatmul.mubr.bf16.gmra.mxu0 %v1542
        %v1947 = vpop.f32.mrf.mxu0
        %v1948 = vadd.f32 0.0, %v1947
        %v1949 = vpop.f32.mrf.mxu0
        %v1950 = vpop.f32.mrf.mxu0
        %v1951 = vpop.f32.mrf.mxu0
        %1952 = vdwg.mxu0
        %1953 = vmatprep.subr.bf16.mxu0 0
        %1954 = vmatpush1.bf16.msra.mxu0 %v1896
        %1955 = vmatprep.subr.bf16.mxu0 0
        %1956 = vmatpush1.bf16.msra.mxu0 %v1895
        %1957 = vmatprep.subr.bf16.mxu0 0
        %1958 = vmatpush1.bf16.msra.mxu0 %v1894
        %1959 = vmatprep.subr.bf16.mxu0 0
        %1960 = vmatpush1.bf16.msra.mxu0 %v1893
        %1961 = vmatprep.subr.bf16.mxu0 0
        %1962 = vmatpush1.bf16.msra.mxu0 %v1892
        %1963 = vmatprep.subr.bf16.mxu0 0
        %1964 = vmatpush1.bf16.msra.mxu0 %v1891
        %1965 = vmatprep.subr.bf16.mxu0 0
        %1966 = vmatpush1.bf16.msra.mxu0 %v1890
        %1967 = vmatprep.subr.bf16.mxu0 0
        %1968 = vmatpush1.bf16.msra.mxu0 %v1889
        %1969 = vmatprep.subr.bf16.mxu0 0
        %1970 = vmatpush2.bf16.msra.mxu0 0
        %1971 = vmatprep.subr.bf16.mxu0 0
        %1972 = vmatpush2.bf16.msra.mxu0 0
        %1973 = vmatprep.subr.bf16.mxu0 0
        %1974 = vmatpush2.bf16.msra.mxu0 0
        %1975 = vmatprep.subr.bf16.mxu0 0
        %1976 = vmatpush2.bf16.msra.mxu0 0
        %1977 = vmatprep.subr.bf16.mxu0 0
        %1978 = vmatpush2.bf16.msra.mxu0 0
        %1979 = vmatprep.subr.bf16.mxu0 0
        %1980 = vmatpush2.bf16.msra.mxu0 0
        %1981 = vmatprep.subr.bf16.mxu0 0
        %1982 = vmatpush2.bf16.msra.mxu0 0
        %1983 = vmatprep.subr.bf16.mxu0 0
        %1984 = vmatpush2.bf16.msra.mxu0 0
        %1985 = vmatprep.mubr.bf16.mxu0 0
        %1986 = vmatmul.mubr.bf16.gmra.mxu0 %v1855
        %v1987 = vpop.f32.mrf.mxu0
        %v1988 = vadd.f32 0.0, %v1987
        %v1989 = vpop.f32.mrf.mxu0
        %v1990 = vpop.f32.mrf.mxu0
        %v1991 = vadd.f32 0.0, %v1990
        %v1992 = vpop.f32.mrf.mxu0
        %1993 = vmatprep.mubr.bf16.mxu0 0
        %1994 = vmatmul.mubr.bf16.gmra.mxu0 %v1856
        %v1995 = vpop.f32.mrf.mxu0
        %v1996 = vadd.f32 0.0, %v1995
        %v1997 = vpop.f32.mrf.mxu0
        %v1998 = vpop.f32.mrf.mxu0
        %v1999 = vpop.f32.mrf.mxu0
        %2000 = vdwg.mxu0
        %v2001 = vmax.f32 %v1940, %v1988
        %v2002 = vmax.f32 %v1943, %v1991
        %v2003 = vmax.f32 %v1948, %v1996
        %v2005 = vlaneseq
        %v2006 = vshrl.u32 %v2005, 7
        %v2007 = vsub.s32 0, %v2006
        %v2008 = vrot.slane %v1135, %v2007
        %v2010 = vadd.f32 %v2001, %v2008
        %v2011 = vadd.f32 %v2002, %v2008
        %v2012 = vadd.f32 %v2003, %v2008
        %v2013 = vmul.f32 %v2010, 0.2
        %v2014 = vmul.f32 %v2011, 0.2
        %v2015 = vmul.f32 %v2012, 0.2
        %v2016 = vmax.f32 %v2010, %v2013
        %v2017 = vmax.f32 %v2011, %v2014
        %v2018 = vmax.f32 %v2012, %v2015
        %v2019 = vsel %vm1147, 1, 0
        %v2020 = vsel %vm1148, 1, 0
        %v2021 = vsel %vm1149, 1, 0
        %vm2022 = vcmp.eq.s32.totalorder %v2019, 1
        %vm2023 = vcmp.eq.s32.totalorder %v2020, 1
        %vm2024 = vcmp.eq.s32.totalorder %v2021, 1
        %v2025 = vsel %vm2022, %v2016, 0.0
        %v2026 = vsel %vm2023, %v2017, 0.0
        %v2027 = vsel %vm2024, %v2018, 0.0
        %v2028 = vmul.f32 %v1091, %v1153
        %v2029 = vmul.f32 %v1092, %v1153
        %v2030 = vmul.f32 %v1093, %v1153
        %v2031 = vmul.f32 %v1094, %v1160
        %v2032 = vmul.f32 %v1095, %v1160
        %v2033 = vmul.f32 %v1096, %v1160
        %v2034 = vadd.f32 %v2028, %v2031
        %v2035 = vadd.f32 %v2029, %v2032
        %v2036 = vadd.f32 %v2030, %v2033
        %v2037 = vmul.f32 %v1097, %v1170
        %v2038 = vmul.f32 %v1098, %v1170
        %v2039 = vmul.f32 %v1099, %v1170
        %v2040 = vadd.f32 %v2034, %v2037
        %v2041 = vadd.f32 %v2035, %v2038
        %v2042 = vadd.f32 %v2036, %v2039
        %v2043 = vmul.f32 %v1100, %v1180
        %v2044 = vmul.f32 %v1101, %v1180
        %v2045 = vmul.f32 %v1102, %v1180
        %v2046 = vadd.f32 %v2040, %v2043
        %v2047 = vadd.f32 %v2041, %v2044
        %v2048 = vadd.f32 %v2042, %v2045
        %v2049 = vmul.f32 %v1103, %v1190
        %v2050 = vmul.f32 %v1104, %v1190
        %v2051 = vmul.f32 %v1105, %v1190
        %v2052 = vadd.f32 %v2046, %v2049
        %v2053 = vadd.f32 %v2047, %v2050
        %v2054 = vadd.f32 %v2048, %v2051
        %v2055 = vmul.f32 %v1106, %v1200
        %v2056 = vmul.f32 %v1107, %v1200
        %v2057 = vmul.f32 %v1108, %v1200
        %v2058 = vadd.f32 %v2052, %v2055
        %v2059 = vadd.f32 %v2053, %v2056
        %v2060 = vadd.f32 %v2054, %v2057
        %v2061 = vmul.f32 %v1109, %v1210
        %v2062 = vmul.f32 %v1110, %v1210
        %v2063 = vmul.f32 %v1111, %v1210
        %v2064 = vadd.f32 %v2058, %v2061
        %v2065 = vadd.f32 %v2059, %v2062
        %v2066 = vadd.f32 %v2060, %v2063
        %v2067 = vmul.f32 %v1112, %v1220
        %v2068 = vmul.f32 %v1113, %v1220
        %v2069 = vmul.f32 %v1114, %v1220
        %v2070 = vadd.f32 %v2064, %v2067
        %v2071 = vadd.f32 %v2065, %v2068
        %v2072 = vadd.f32 %v2066, %v2069
        %v2073 = vmul.f32 %v1067, %v1230
        %v2074 = vmul.f32 %v1068, %v1230
        %v2075 = vmul.f32 %v1069, %v1230
        %v2079 = vrot.slane %v2073, 1
        %v2080 = vrot.slane %v2074, 1
        %v2081 = vsel %vm1277, %v2079, %v2080
        %v2082 = vrot.slane %v2075, 1
        %v2083 = vsel %vm1277, %v2080, %v2082
        %v2087 = vadd.f32 %v2070, %v2081
        %v2088 = vadd.f32 %v2071, %v2083
        %v2089 = vadd.f32 %v2072, %v2082
        %v2090 = vmul.f32 %v1070, %v1240
        %v2091 = vmul.f32 %v1071, %v1240
        %v2092 = vmul.f32 %v1072, %v1240
        %v2096 = vrot.slane %v2090, 1
        %v2097 = vrot.slane %v2091, 1
        %v2098 = vsel %vm1277, %v2096, %v2097
        %v2099 = vrot.slane %v2092, 1
        %v2100 = vsel %vm1277, %v2097, %v2099
        %v2104 = vadd.f32 %v2087, %v2098
        %v2105 = vadd.f32 %v2088, %v2100
        %v2106 = vadd.f32 %v2089, %v2099
        %v2107 = vmul.f32 %v1073, %v1250
        %v2108 = vmul.f32 %v1074, %v1250
        %v2109 = vmul.f32 %v1075, %v1250
        %v2113 = vrot.slane %v2107, 1
        %v2114 = vrot.slane %v2108, 1
        %v2115 = vsel %vm1277, %v2113, %v2114
        %v2116 = vrot.slane %v2109, 1
        %v2117 = vsel %vm1277, %v2114, %v2116
        %v2121 = vadd.f32 %v2104, %v2115
        %v2122 = vadd.f32 %v2105, %v2117
        %v2123 = vadd.f32 %v2106, %v2116
        %v2124 = vmul.f32 %v1076, %v1260
        %v2125 = vmul.f32 %v1077, %v1260
        %v2126 = vmul.f32 %v1078, %v1260
        %v2130 = vrot.slane %v2124, 1
        %v2131 = vrot.slane %v2125, 1
        %v2132 = vsel %vm1277, %v2130, %v2131
        %v2133 = vrot.slane %v2126, 1
        %v2134 = vsel %vm1277, %v2131, %v2133
        %v2138 = vadd.f32 %v2121, %v2132
        %v2139 = vadd.f32 %v2122, %v2134
        %v2140 = vadd.f32 %v2123, %v2133
        %v2141 = vmul.f32 %v1079, %v1270
        %v2142 = vmul.f32 %v1080, %v1270
        %v2143 = vmul.f32 %v1081, %v1270
        %v2147 = vrot.slane %v2141, 1
        %v2148 = vrot.slane %v2142, 1
        %v2149 = vsel %vm1277, %v2147, %v2148
        %v2150 = vrot.slane %v2143, 1
        %v2151 = vsel %vm1277, %v2148, %v2150
        %v2155 = vadd.f32 %v2138, %v2149
        %v2156 = vadd.f32 %v2139, %v2151
        %v2157 = vadd.f32 %v2140, %v2150
        %v2158 = vmul.f32 %v1082, %v1292
        %v2159 = vmul.f32 %v1083, %v1292
        %v2160 = vmul.f32 %v1084, %v1292
        %v2164 = vrot.slane %v2158, 1
        %v2165 = vrot.slane %v2159, 1
        %v2166 = vsel %vm1277, %v2164, %v2165
        %v2167 = vrot.slane %v2160, 1
        %v2168 = vsel %vm1277, %v2165, %v2167
        %v2172 = vadd.f32 %v2155, %v2166
        %v2173 = vadd.f32 %v2156, %v2168
        %v2174 = vadd.f32 %v2157, %v2167
        %v2175 = vmul.f32 %v1085, %v1313
        %v2176 = vmul.f32 %v1086, %v1313
        %v2177 = vmul.f32 %v1087, %v1313
        %v2181 = vrot.slane %v2175, 1
        %v2182 = vrot.slane %v2176, 1
        %v2183 = vsel %vm1277, %v2181, %v2182
        %v2184 = vrot.slane %v2177, 1
        %v2185 = vsel %vm1277, %v2182, %v2184
        %v2189 = vadd.f32 %v2172, %v2183
        %v2190 = vadd.f32 %v2173, %v2185
        %v2191 = vadd.f32 %v2174, %v2184
        %v2192 = vmul.f32 %v1088, %v1334
        %v2193 = vmul.f32 %v1089, %v1334
        %v2194 = vmul.f32 %v1090, %v1334
        %v2198 = vrot.slane %v2192, 1
        %v2199 = vrot.slane %v2193, 1
        %v2200 = vsel %vm1277, %v2198, %v2199
        %v2201 = vrot.slane %v2194, 1
        %v2202 = vsel %vm1277, %v2199, %v2201
        %v2206 = vadd.f32 %v2189, %v2200
        %v2207 = vadd.f32 %v2190, %v2202
        %v2208 = vadd.f32 %v2191, %v2201
        %v2209 = vmul.f32 %v1091, %v1355
        %v2210 = vmul.f32 %v1092, %v1355
        %v2211 = vmul.f32 %v1093, %v1355
        %v2215 = vrot.slane %v2209, 1
        %v2216 = vrot.slane %v2210, 1
        %v2217 = vsel %vm1277, %v2215, %v2216
        %v2218 = vrot.slane %v2211, 1
        %v2219 = vsel %vm1277, %v2216, %v2218
        %v2223 = vadd.f32 %v2206, %v2217
        %v2224 = vadd.f32 %v2207, %v2219
        %v2225 = vadd.f32 %v2208, %v2218
        %v2226 = vmul.f32 %v1094, %v1376
        %v2227 = vmul.f32 %v1095, %v1376
        %v2228 = vmul.f32 %v1096, %v1376
        %v2232 = vrot.slane %v2226, 1
        %v2233 = vrot.slane %v2227, 1
        %v2234 = vsel %vm1277, %v2232, %v2233
        %v2235 = vrot.slane %v2228, 1
        %v2236 = vsel %vm1277, %v2233, %v2235
        %v2240 = vadd.f32 %v2223, %v2234
        %v2241 = vadd.f32 %v2224, %v2236
        %v2242 = vadd.f32 %v2225, %v2235
        %v2243 = vmul.f32 %v1097, %v1397
        %v2244 = vmul.f32 %v1098, %v1397
        %v2245 = vmul.f32 %v1099, %v1397
        %v2249 = vrot.slane %v2243, 1
        %v2250 = vrot.slane %v2244, 1
        %v2251 = vsel %vm1277, %v2249, %v2250
        %v2252 = vrot.slane %v2245, 1
        %v2253 = vsel %vm1277, %v2250, %v2252
        %v2257 = vadd.f32 %v2240, %v2251
        %v2258 = vadd.f32 %v2241, %v2253
        %v2259 = vadd.f32 %v2242, %v2252
        %v2260 = vmul.f32 %v1100, %v1418
        %v2261 = vmul.f32 %v1101, %v1418
        %v2262 = vmul.f32 %v1102, %v1418
        %v2266 = vrot.slane %v2260, 1
        %v2267 = vrot.slane %v2261, 1
        %v2268 = vsel %vm1277, %v2266, %v2267
        %v2269 = vrot.slane %v2262, 1
        %v2270 = vsel %vm1277, %v2267, %v2269
        %v2274 = vadd.f32 %v2257, %v2268
        %v2275 = vadd.f32 %v2258, %v2270
        %v2276 = vadd.f32 %v2259, %v2269
        %v2277 = vmul.f32 %v1103, %v1439
        %v2278 = vmul.f32 %v1104, %v1439
        %v2279 = vmul.f32 %v1105, %v1439
        %v2283 = vrot.slane %v2277, 1
        %v2284 = vrot.slane %v2278, 1
        %v2285 = vsel %vm1277, %v2283, %v2284
        %v2286 = vrot.slane %v2279, 1
        %v2287 = vsel %vm1277, %v2284, %v2286
        %v2291 = vadd.f32 %v2274, %v2285
        %v2292 = vadd.f32 %v2275, %v2287
        %v2293 = vadd.f32 %v2276, %v2286
        %v2294 = vmul.f32 %v1106, %v1460
        %v2295 = vmul.f32 %v1107, %v1460
        %v2296 = vmul.f32 %v1108, %v1460
        %v2300 = vrot.slane %v2294, 1
        %v2301 = vrot.slane %v2295, 1
        %v2302 = vsel %vm1277, %v2300, %v2301
        %v2303 = vrot.slane %v2296, 1
        %v2304 = vsel %vm1277, %v2301, %v2303
        %v2308 = vadd.f32 %v2291, %v2302
        %v2309 = vadd.f32 %v2292, %v2304
        %v2310 = vadd.f32 %v2293, %v2303
        %v2311 = vmul.f32 %v1109, %v1481
        %v2312 = vmul.f32 %v1110, %v1481
        %v2313 = vmul.f32 %v1111, %v1481
        %v2317 = vrot.slane %v2311, 1
        %v2318 = vrot.slane %v2312, 1
        %v2319 = vsel %vm1277, %v2317, %v2318
        %v2320 = vrot.slane %v2313, 1
        %v2321 = vsel %vm1277, %v2318, %v2320
        %v2325 = vadd.f32 %v2308, %v2319
        %v2326 = vadd.f32 %v2309, %v2321
        %v2327 = vadd.f32 %v2310, %v2320
        %v2328 = vmul.f32 %v1112, %v1502
        %v2329 = vmul.f32 %v1113, %v1502
        %v2330 = vmul.f32 %v1114, %v1502
        %v2334 = vrot.slane %v2328, 1
        %v2335 = vrot.slane %v2329, 1
        %v2336 = vsel %vm1277, %v2334, %v2335
        %v2337 = vrot.slane %v2330, 1
        %v2338 = vsel %vm1277, %v2335, %v2337
        %v2342 = vadd.f32 %v2325, %v2336
        %v2343 = vadd.f32 %v2326, %v2338
        %v2344 = vadd.f32 %v2327, %v2337
        %v2345 = vmul.f32 %v1067, %v1523
        %v2346 = vmul.f32 %v1068, %v1523
        %v2347 = vmul.f32 %v1069, %v1523
        %vm2351 = vcmask 1045504
        %v2352 = vrot.slane %v2345, 2
        %v2353 = vrot.slane %v2346, 2
        %v2354 = vsel %vm2351, %v2352, %v2353
        %v2355 = vrot.slane %v2347, 2
        %v2356 = vsel %vm2351, %v2353, %v2355
        %v2360 = vadd.f32 %v2342, %v2354
        %v2361 = vadd.f32 %v2343, %v2356
        %v2362 = vadd.f32 %v2344, %v2355
        %v2363 = vpack.c.bf16 %v2361, %v2360
        %v2364 = vpack.c.bf16 %v2362, %v2362
        %v2365 = vmul.f32 %v1097, %v1153
        %v2366 = vmul.f32 %v1098, %v1153
        %v2367 = vmul.f32 %v1099, %v1153
        %v2368 = vmul.f32 %v1100, %v1160
        %v2369 = vmul.f32 %v1101, %v1160
        %v2370 = vmul.f32 %v1102, %v1160
        %v2371 = vadd.f32 %v2365, %v2368
        %v2372 = vadd.f32 %v2366, %v2369
        %v2373 = vadd.f32 %v2367, %v2370
        %v2374 = vmul.f32 %v1103, %v1170
        %v2375 = vmul.f32 %v1104, %v1170
        %v2376 = vmul.f32 %v1105, %v1170
        %v2377 = vadd.f32 %v2371, %v2374
        %v2378 = vadd.f32 %v2372, %v2375
        %v2379 = vadd.f32 %v2373, %v2376
        %v2380 = vmul.f32 %v1106, %v1180
        %v2381 = vmul.f32 %v1107, %v1180
        %v2382 = vmul.f32 %v1108, %v1180
        %v2383 = vadd.f32 %v2377, %v2380
        %v2384 = vadd.f32 %v2378, %v2381
        %v2385 = vadd.f32 %v2379, %v2382
        %v2386 = vmul.f32 %v1109, %v1190
        %v2387 = vmul.f32 %v1110, %v1190
        %v2388 = vmul.f32 %v1111, %v1190
        %v2389 = vadd.f32 %v2383, %v2386
        %v2390 = vadd.f32 %v2384, %v2387
        %v2391 = vadd.f32 %v2385, %v2388
        %v2392 = vmul.f32 %v1112, %v1200
        %v2393 = vmul.f32 %v1113, %v1200
        %v2394 = vmul.f32 %v1114, %v1200
        %v2395 = vadd.f32 %v2389, %v2392
        %v2396 = vadd.f32 %v2390, %v2393
        %v2397 = vadd.f32 %v2391, %v2394
        %v2398 = vmul.f32 %v1067, %v1210
        %v2399 = vmul.f32 %v1068, %v1210
        %v2400 = vmul.f32 %v1069, %v1210
        %v2404 = vrot.slane %v2398, 1
        %v2405 = vrot.slane %v2399, 1
        %v2406 = vsel %vm1277, %v2404, %v2405
        %v2407 = vrot.slane %v2400, 1
        %v2408 = vsel %vm1277, %v2405, %v2407
        %v2412 = vadd.f32 %v2395, %v2406
        %v2413 = vadd.f32 %v2396, %v2408
        %v2414 = vadd.f32 %v2397, %v2407
        %v2415 = vmul.f32 %v1070, %v1220
        %v2416 = vmul.f32 %v1071, %v1220
        %v2417 = vmul.f32 %v1072, %v1220
        %v2421 = vrot.slane %v2415, 1
        %v2422 = vrot.slane %v2416, 1
        %v2423 = vsel %vm1277, %v2421, %v2422
        %v2424 = vrot.slane %v2417, 1
        %v2425 = vsel %vm1277, %v2422, %v2424
        %v2429 = vadd.f32 %v2412, %v2423
        %v2430 = vadd.f32 %v2413, %v2425
        %v2431 = vadd.f32 %v2414, %v2424
        %v2432 = vmul.f32 %v1073, %v1230
        %v2433 = vmul.f32 %v1074, %v1230
        %v2434 = vmul.f32 %v1075, %v1230
        %v2438 = vrot.slane %v2432, 1
        %v2439 = vrot.slane %v2433, 1
        %v2440 = vsel %vm1277, %v2438, %v2439
        %v2441 = vrot.slane %v2434, 1
        %v2442 = vsel %vm1277, %v2439, %v2441
        %v2446 = vadd.f32 %v2429, %v2440
        %v2447 = vadd.f32 %v2430, %v2442
        %v2448 = vadd.f32 %v2431, %v2441
        %v2449 = vmul.f32 %v1076, %v1240
        %v2450 = vmul.f32 %v1077, %v1240
        %v2451 = vmul.f32 %v1078, %v1240
        %v2455 = vrot.slane %v2449, 1
        %v2456 = vrot.slane %v2450, 1
        %v2457 = vsel %vm1277, %v2455, %v2456
        %v2458 = vrot.slane %v2451, 1
        %v2459 = vsel %vm1277, %v2456, %v2458
        %v2463 = vadd.f32 %v2446, %v2457
        %v2464 = vadd.f32 %v2447, %v2459
        %v2465 = vadd.f32 %v2448, %v2458
        %v2466 = vmul.f32 %v1079, %v1250
        %v2467 = vmul.f32 %v1080, %v1250
        %v2468 = vmul.f32 %v1081, %v1250
        %v2472 = vrot.slane %v2466, 1
        %v2473 = vrot.slane %v2467, 1
        %v2474 = vsel %vm1277, %v2472, %v2473
        %v2475 = vrot.slane %v2468, 1
        %v2476 = vsel %vm1277, %v2473, %v2475
        %v2480 = vadd.f32 %v2463, %v2474
        %v2481 = vadd.f32 %v2464, %v2476
        %v2482 = vadd.f32 %v2465, %v2475
        %v2483 = vmul.f32 %v1082, %v1260
        %v2484 = vmul.f32 %v1083, %v1260
        %v2485 = vmul.f32 %v1084, %v1260
        %v2489 = vrot.slane %v2483, 1
        %v2490 = vrot.slane %v2484, 1
        %v2491 = vsel %vm1277, %v2489, %v2490
        %v2492 = vrot.slane %v2485, 1
        %v2493 = vsel %vm1277, %v2490, %v2492
        %v2497 = vadd.f32 %v2480, %v2491
        %v2498 = vadd.f32 %v2481, %v2493
        %v2499 = vadd.f32 %v2482, %v2492
        %v2500 = vmul.f32 %v1085, %v1270
        %v2501 = vmul.f32 %v1086, %v1270
        %v2502 = vmul.f32 %v1087, %v1270
        %v2506 = vrot.slane %v2500, 1
        %v2507 = vrot.slane %v2501, 1
        %v2508 = vsel %vm1277, %v2506, %v2507
        %v2509 = vrot.slane %v2502, 1
        %v2510 = vsel %vm1277, %v2507, %v2509
        %v2514 = vadd.f32 %v2497, %v2508
        %v2515 = vadd.f32 %v2498, %v2510
        %v2516 = vadd.f32 %v2499, %v2509
        %v2517 = vmul.f32 %v1088, %v1292
        %v2518 = vmul.f32 %v1089, %v1292
        %v2519 = vmul.f32 %v1090, %v1292
        %v2523 = vrot.slane %v2517, 1
        %v2524 = vrot.slane %v2518, 1
        %v2525 = vsel %vm1277, %v2523, %v2524
        %v2526 = vrot.slane %v2519, 1
        %v2527 = vsel %vm1277, %v2524, %v2526
        %v2531 = vadd.f32 %v2514, %v2525
        %v2532 = vadd.f32 %v2515, %v2527
        %v2533 = vadd.f32 %v2516, %v2526
        %v2534 = vmul.f32 %v1091, %v1313
        %v2535 = vmul.f32 %v1092, %v1313
        %v2536 = vmul.f32 %v1093, %v1313
        %v2540 = vrot.slane %v2534, 1
        %v2541 = vrot.slane %v2535, 1
        %v2542 = vsel %vm1277, %v2540, %v2541
        %v2543 = vrot.slane %v2536, 1
        %v2544 = vsel %vm1277, %v2541, %v2543
        %v2548 = vadd.f32 %v2531, %v2542
        %v2549 = vadd.f32 %v2532, %v2544
        %v2550 = vadd.f32 %v2533, %v2543
        %v2551 = vmul.f32 %v1094, %v1334
        %v2552 = vmul.f32 %v1095, %v1334
        %v2553 = vmul.f32 %v1096, %v1334
        %v2557 = vrot.slane %v2551, 1
        %v2558 = vrot.slane %v2552, 1
        %v2559 = vsel %vm1277, %v2557, %v2558
        %v2560 = vrot.slane %v2553, 1
        %v2561 = vsel %vm1277, %v2558, %v2560
        %v2565 = vadd.f32 %v2548, %v2559
        %v2566 = vadd.f32 %v2549, %v2561
        %v2567 = vadd.f32 %v2550, %v2560
        %v2568 = vmul.f32 %v1097, %v1355
        %v2569 = vmul.f32 %v1098, %v1355
        %v2570 = vmul.f32 %v1099, %v1355
        %v2574 = vrot.slane %v2568, 1
        %v2575 = vrot.slane %v2569, 1
        %v2576 = vsel %vm1277, %v2574, %v2575
        %v2577 = vrot.slane %v2570, 1
        %v2578 = vsel %vm1277, %v2575, %v2577
        %v2582 = vadd.f32 %v2565, %v2576
        %v2583 = vadd.f32 %v2566, %v2578
        %v2584 = vadd.f32 %v2567, %v2577
        %v2585 = vmul.f32 %v1100, %v1376
        %v2586 = vmul.f32 %v1101, %v1376
        %v2587 = vmul.f32 %v1102, %v1376
        %v2591 = vrot.slane %v2585, 1
        %v2592 = vrot.slane %v2586, 1
        %v2593 = vsel %vm1277, %v2591, %v2592
        %v2594 = vrot.slane %v2587, 1
        %v2595 = vsel %vm1277, %v2592, %v2594
        %v2599 = vadd.f32 %v2582, %v2593
        %v2600 = vadd.f32 %v2583, %v2595
        %v2601 = vadd.f32 %v2584, %v2594
        %v2602 = vmul.f32 %v1103, %v1397
        %v2603 = vmul.f32 %v1104, %v1397
        %v2604 = vmul.f32 %v1105, %v1397
        %v2608 = vrot.slane %v2602, 1
        %v2609 = vrot.slane %v2603, 1
        %v2610 = vsel %vm1277, %v2608, %v2609
        %v2611 = vrot.slane %v2604, 1
        %v2612 = vsel %vm1277, %v2609, %v2611
        %v2616 = vadd.f32 %v2599, %v2610
        %v2617 = vadd.f32 %v2600, %v2612
        %v2618 = vadd.f32 %v2601, %v2611
        %v2619 = vmul.f32 %v1106, %v1418
        %v2620 = vmul.f32 %v1107, %v1418
        %v2621 = vmul.f32 %v1108, %v1418
        %v2625 = vrot.slane %v2619, 1
        %v2626 = vrot.slane %v2620, 1
        %v2627 = vsel %vm1277, %v2625, %v2626
        %v2628 = vrot.slane %v2621, 1
        %v2629 = vsel %vm1277, %v2626, %v2628
        %v2633 = vadd.f32 %v2616, %v2627
        %v2634 = vadd.f32 %v2617, %v2629
        %v2635 = vadd.f32 %v2618, %v2628
        %v2636 = vmul.f32 %v1109, %v1439
        %v2637 = vmul.f32 %v1110, %v1439
        %v2638 = vmul.f32 %v1111, %v1439
        %v2642 = vrot.slane %v2636, 1
        %v2643 = vrot.slane %v2637, 1
        %v2644 = vsel %vm1277, %v2642, %v2643
        %v2645 = vrot.slane %v2638, 1
        %v2646 = vsel %vm1277, %v2643, %v2645
        %v2650 = vadd.f32 %v2633, %v2644
        %v2651 = vadd.f32 %v2634, %v2646
        %v2652 = vadd.f32 %v2635, %v2645
        %v2653 = vmul.f32 %v1112, %v1460
        %v2654 = vmul.f32 %v1113, %v1460
        %v2655 = vmul.f32 %v1114, %v1460
        %v2659 = vrot.slane %v2653, 1
        %v2660 = vrot.slane %v2654, 1
        %v2661 = vsel %vm1277, %v2659, %v2660
        %v2662 = vrot.slane %v2655, 1
        %v2663 = vsel %vm1277, %v2660, %v2662
        %v2667 = vadd.f32 %v2650, %v2661
        %v2668 = vadd.f32 %v2651, %v2663
        %v2669 = vadd.f32 %v2652, %v2662
        %v2670 = vmul.f32 %v1067, %v1481
        %v2671 = vmul.f32 %v1068, %v1481
        %v2672 = vmul.f32 %v1069, %v1481
        %v2676 = vrot.slane %v2670, 2
        %v2677 = vrot.slane %v2671, 2
        %v2678 = vsel %vm2351, %v2676, %v2677
        %v2679 = vrot.slane %v2672, 2
        %v2680 = vsel %vm2351, %v2677, %v2679
        %v2684 = vadd.f32 %v2667, %v2678
        %v2685 = vadd.f32 %v2668, %v2680
        %v2686 = vadd.f32 %v2669, %v2679
        %v2687 = vmul.f32 %v1070, %v1502
        %v2688 = vmul.f32 %v1071, %v1502
        %v2689 = vmul.f32 %v1072, %v1502
        %v2693 = vrot.slane %v2687, 2
        %v2694 = vrot.slane %v2688, 2
        %v2695 = vsel %vm2351, %v2693, %v2694
        %v2696 = vrot.slane %v2689, 2
        %v2697 = vsel %vm2351, %v2694, %v2696
        %v2701 = vadd.f32 %v2684, %v2695
        %v2702 = vadd.f32 %v2685, %v2697
        %v2703 = vadd.f32 %v2686, %v2696
        %v2704 = vmul.f32 %v1073, %v1523
        %v2705 = vmul.f32 %v1074, %v1523
        %v2706 = vmul.f32 %v1075, %v1523
        %v2710 = vrot.slane %v2704, 2
        %v2711 = vrot.slane %v2705, 2
        %v2712 = vsel %vm2351, %v2710, %v2711
        %v2713 = vrot.slane %v2706, 2
        %v2714 = vsel %vm2351, %v2711, %v2713
        %v2718 = vadd.f32 %v2701, %v2712
        %v2719 = vadd.f32 %v2702, %v2714
        %v2720 = vadd.f32 %v2703, %v2713
        %v2721 = vpack.c.bf16 %v2719, %v2718
        %v2722 = vpack.c.bf16 %v2720, %v2720
        %2723 = vmatprep.subr.bf16.mxu0 0
        %2724 = vmatpush1.bf16.msra.mxu0 %v1896
        %2725 = vmatprep.subr.bf16.mxu0 0
        %2726 = vmatpush1.bf16.msra.mxu0 %v1895
        %2727 = vmatprep.subr.bf16.mxu0 0
        %2728 = vmatpush1.bf16.msra.mxu0 %v1894
        %2729 = vmatprep.subr.bf16.mxu0 0
        %2730 = vmatpush1.bf16.msra.mxu0 %v1893
        %2731 = vmatprep.subr.bf16.mxu0 0
        %2732 = vmatpush1.bf16.msra.mxu0 %v1892
        %2733 = vmatprep.subr.bf16.mxu0 0
        %2734 = vmatpush1.bf16.msra.mxu0 %v1891
        %2735 = vmatprep.subr.bf16.mxu0 0
        %2736 = vmatpush1.bf16.msra.mxu0 %v1890
        %2737 = vmatprep.subr.bf16.mxu0 0
        %2738 = vmatpush1.bf16.msra.mxu0 %v1889
        %2739 = vmatprep.subr.bf16.mxu0 0
        %2740 = vmatpush2.bf16.msra.mxu0 0
        %2741 = vmatprep.subr.bf16.mxu0 0
        %2742 = vmatpush2.bf16.msra.mxu0 0
        %2743 = vmatprep.subr.bf16.mxu0 0
        %2744 = vmatpush2.bf16.msra.mxu0 0
        %2745 = vmatprep.subr.bf16.mxu0 0
        %2746 = vmatpush2.bf16.msra.mxu0 0
        %2747 = vmatprep.subr.bf16.mxu0 0
        %2748 = vmatpush2.bf16.msra.mxu0 0
        %2749 = vmatprep.subr.bf16.mxu0 0
        %2750 = vmatpush2.bf16.msra.mxu0 0
        %2751 = vmatprep.subr.bf16.mxu0 0
        %2752 = vmatpush2.bf16.msra.mxu0 0
        %2753 = vmatprep.subr.bf16.mxu0 0
        %2754 = vmatpush2.bf16.msra.mxu0 0
        %2755 = vmatprep.mubr.bf16.mxu0 0
        %2756 = vmatmul.mubr.bf16.gmra.mxu0 %v2363
        %v2757 = vpop.f32.mrf.mxu0
        %v2758 = vadd.f32 0.0, %v2757
        %v2759 = vpop.f32.mrf.mxu0
        %v2760 = vpop.f32.mrf.mxu0
        %v2761 = vadd.f32 0.0, %v2760
        %v2762 = vpop.f32.mrf.mxu0
        %2763 = vmatprep.mubr.bf16.mxu0 0
        %2764 = vmatmul.mubr.bf16.gmra.mxu0 %v2364
        %v2765 = vpop.f32.mrf.mxu0
        %v2766 = vadd.f32 0.0, %v2765
        %v2767 = vpop.f32.mrf.mxu0
        %v2768 = vpop.f32.mrf.mxu0
        %v2769 = vpop.f32.mrf.mxu0
        %2770 = vdwg.mxu0
        %2771 = vmatprep.subr.bf16.mxu0 0
        %2772 = vmatpush1.bf16.msra.mxu0 %v1896
        %2773 = vmatprep.subr.bf16.mxu0 0
        %2774 = vmatpush1.bf16.msra.mxu0 %v1895
        %2775 = vmatprep.subr.bf16.mxu0 0
        %2776 = vmatpush1.bf16.msra.mxu0 %v1894
        %2777 = vmatprep.subr.bf16.mxu0 0
        %2778 = vmatpush1.bf16.msra.mxu0 %v1893
        %2779 = vmatprep.subr.bf16.mxu0 0
        %2780 = vmatpush1.bf16.msra.mxu0 %v1892
        %2781 = vmatprep.subr.bf16.mxu0 0
        %2782 = vmatpush1.bf16.msra.mxu0 %v1891
        %2783 = vmatprep.subr.bf16.mxu0 0
        %2784 = vmatpush1.bf16.msra.mxu0 %v1890
        %2785 = vmatprep.subr.bf16.mxu0 0
        %2786 = vmatpush1.bf16.msra.mxu0 %v1889
        %2787 = vmatprep.subr.bf16.mxu0 0
        %2788 = vmatpush2.bf16.msra.mxu0 0
        %2789 = vmatprep.subr.bf16.mxu0 0
        %2790 = vmatpush2.bf16.msra.mxu0 0
        %2791 = vmatprep.subr.bf16.mxu0 0
        %2792 = vmatpush2.bf16.msra.mxu0 0
        %2793 = vmatprep.subr.bf16.mxu0 0
        %2794 = vmatpush2.bf16.msra.mxu0 0
        %2795 = vmatprep.subr.bf16.mxu0 0
        %2796 = vmatpush2.bf16.msra.mxu0 0
        %2797 = vmatprep.subr.bf16.mxu0 0
        %2798 = vmatpush2.bf16.msra.mxu0 0
        %2799 = vmatprep.subr.bf16.mxu0 0
        %2800 = vmatpush2.bf16.msra.mxu0 0
        %2801 = vmatprep.subr.bf16.mxu0 0
        %2802 = vmatpush2.bf16.msra.mxu0 0
        %2803 = vmatprep.mubr.bf16.mxu0 0
        %2804 = vmatmul.mubr.bf16.gmra.mxu0 %v2721
        %v2805 = vpop.f32.mrf.mxu0
        %v2806 = vadd.f32 0.0, %v2805
        %v2807 = vpop.f32.mrf.mxu0
        %v2808 = vpop.f32.mrf.mxu0
        %v2809 = vadd.f32 0.0, %v2808
        %v2810 = vpop.f32.mrf.mxu0
        %2811 = vmatprep.mubr.bf16.mxu0 0
        %2812 = vmatmul.mubr.bf16.gmra.mxu0 %v2722
        %v2813 = vpop.f32.mrf.mxu0
        %v2814 = vadd.f32 0.0, %v2813
        %v2815 = vpop.f32.mrf.mxu0
        %v2816 = vpop.f32.mrf.mxu0
        %v2817 = vpop.f32.mrf.mxu0
        %2818 = vdwg.mxu0
        %v2819 = vmax.f32 %v2758, %v2806
        %v2820 = vmax.f32 %v2761, %v2809
        %v2821 = vmax.f32 %v2766, %v2814
        %v2822 = vadd.f32 %v2819, %v2008
        %v2823 = vadd.f32 %v2820, %v2008
        %v2824 = vadd.f32 %v2821, %v2008
        %v2825 = vmul.f32 %v2822, 0.2
        %v2826 = vmul.f32 %v2823, 0.2
        %v2827 = vmul.f32 %v2824, 0.2
        %v2828 = vmax.f32 %v2822, %v2825
        %v2829 = vmax.f32 %v2823, %v2826
        %v2830 = vmax.f32 %v2824, %v2827
        %v2831 = vsel %vm2022, %v2828, 0.0
        %v2832 = vsel %vm2023, %v2829, 0.0
        %v2833 = vsel %vm2024, %v2830, 0.0
        %v2834 = vmul.f32 %v1103, %v1153
        %v2835 = vmul.f32 %v1104, %v1153
        %v2836 = vmul.f32 %v1105, %v1153
        %v2837 = vmul.f32 %v1106, %v1160
        %v2838 = vmul.f32 %v1107, %v1160
        %v2839 = vmul.f32 %v1108, %v1160
        %v2840 = vadd.f32 %v2834, %v2837
        %v2841 = vadd.f32 %v2835, %v2838
        %v2842 = vadd.f32 %v2836, %v2839
        %v2843 = vmul.f32 %v1109, %v1170
        %v2844 = vmul.f32 %v1110, %v1170
        %v2845 = vmul.f32 %v1111, %v1170
        %v2846 = vadd.f32 %v2840, %v2843
        %v2847 = vadd.f32 %v2841, %v2844
        %v2848 = vadd.f32 %v2842, %v2845
        %v2849 = vmul.f32 %v1112, %v1180
        %v2850 = vmul.f32 %v1113, %v1180
        %v2851 = vmul.f32 %v1114, %v1180
        %v2852 = vadd.f32 %v2846, %v2849
        %v2853 = vadd.f32 %v2847, %v2850
        %v2854 = vadd.f32 %v2848, %v2851
        %v2855 = vmul.f32 %v1067, %v1190
        %v2856 = vmul.f32 %v1068, %v1190
        %v2857 = vmul.f32 %v1069, %v1190
        %v2861 = vrot.slane %v2855, 1
        %v2862 = vrot.slane %v2856, 1
        %v2863 = vsel %vm1277, %v2861, %v2862
        %v2864 = vrot.slane %v2857, 1
        %v2865 = vsel %vm1277, %v2862, %v2864
        %v2869 = vadd.f32 %v2852, %v2863
        %v2870 = vadd.f32 %v2853, %v2865
        %v2871 = vadd.f32 %v2854, %v2864
        %v2872 = vmul.f32 %v1070, %v1200
        %v2873 = vmul.f32 %v1071, %v1200
        %v2874 = vmul.f32 %v1072, %v1200
        %v2878 = vrot.slane %v2872, 1
        %v2879 = vrot.slane %v2873, 1
        %v2880 = vsel %vm1277, %v2878, %v2879
        %v2881 = vrot.slane %v2874, 1
        %v2882 = vsel %vm1277, %v2879, %v2881
        %v2886 = vadd.f32 %v2869, %v2880
        %v2887 = vadd.f32 %v2870, %v2882
        %v2888 = vadd.f32 %v2871, %v2881
        %v2889 = vmul.f32 %v1073, %v1210
        %v2890 = vmul.f32 %v1074, %v1210
        %v2891 = vmul.f32 %v1075, %v1210
        %v2895 = vrot.slane %v2889, 1
        %v2896 = vrot.slane %v2890, 1
        %v2897 = vsel %vm1277, %v2895, %v2896
        %v2898 = vrot.slane %v2891, 1
        %v2899 = vsel %vm1277, %v2896, %v2898
        %v2903 = vadd.f32 %v2886, %v2897
        %v2904 = vadd.f32 %v2887, %v2899
        %v2905 = vadd.f32 %v2888, %v2898
        %v2906 = vmul.f32 %v1076, %v1220
        %v2907 = vmul.f32 %v1077, %v1220
        %v2908 = vmul.f32 %v1078, %v1220
        %v2912 = vrot.slane %v2906, 1
        %v2913 = vrot.slane %v2907, 1
        %v2914 = vsel %vm1277, %v2912, %v2913
        %v2915 = vrot.slane %v2908, 1
        %v2916 = vsel %vm1277, %v2913, %v2915
        %v2920 = vadd.f32 %v2903, %v2914
        %v2921 = vadd.f32 %v2904, %v2916
        %v2922 = vadd.f32 %v2905, %v2915
        %v2923 = vmul.f32 %v1079, %v1230
        %v2924 = vmul.f32 %v1080, %v1230
        %v2925 = vmul.f32 %v1081, %v1230
        %v2929 = vrot.slane %v2923, 1
        %v2930 = vrot.slane %v2924, 1
        %v2931 = vsel %vm1277, %v2929, %v2930
        %v2932 = vrot.slane %v2925, 1
        %v2933 = vsel %vm1277, %v2930, %v2932
        %v2937 = vadd.f32 %v2920, %v2931
        %v2938 = vadd.f32 %v2921, %v2933
        %v2939 = vadd.f32 %v2922, %v2932
        %v2940 = vmul.f32 %v1082, %v1240
        %v2941 = vmul.f32 %v1083, %v1240
        %v2942 = vmul.f32 %v1084, %v1240
        %v2946 = vrot.slane %v2940, 1
        %v2947 = vrot.slane %v2941, 1
        %v2948 = vsel %vm1277, %v2946, %v2947
        %v2949 = vrot.slane %v2942, 1
        %v2950 = vsel %vm1277, %v2947, %v2949
        %v2954 = vadd.f32 %v2937, %v2948
        %v2955 = vadd.f32 %v2938, %v2950
        %v2956 = vadd.f32 %v2939, %v2949
        %v2957 = vmul.f32 %v1085, %v1250
        %v2958 = vmul.f32 %v1086, %v1250
        %v2959 = vmul.f32 %v1087, %v1250
        %v2963 = vrot.slane %v2957, 1
        %v2964 = vrot.slane %v2958, 1
        %v2965 = vsel %vm1277, %v2963, %v2964
        %v2966 = vrot.slane %v2959, 1
        %v2967 = vsel %vm1277, %v2964, %v2966
        %v2971 = vadd.f32 %v2954, %v2965
        %v2972 = vadd.f32 %v2955, %v2967
        %v2973 = vadd.f32 %v2956, %v2966
        %v2974 = vmul.f32 %v1088, %v1260
        %v2975 = vmul.f32 %v1089, %v1260
        %v2976 = vmul.f32 %v1090, %v1260
        %v2980 = vrot.slane %v2974, 1
        %v2981 = vrot.slane %v2975, 1
        %v2982 = vsel %vm1277, %v2980, %v2981
        %v2983 = vrot.slane %v2976, 1
        %v2984 = vsel %vm1277, %v2981, %v2983
        %v2988 = vadd.f32 %v2971, %v2982
        %v2989 = vadd.f32 %v2972, %v2984
        %v2990 = vadd.f32 %v2973, %v2983
        %v2991 = vmul.f32 %v1091, %v1270
        %v2992 = vmul.f32 %v1092, %v1270
        %v2993 = vmul.f32 %v1093, %v1270
        %v2997 = vrot.slane %v2991, 1
        %v2998 = vrot.slane %v2992, 1
        %v2999 = vsel %vm1277, %v2997, %v2998
        %v3000 = vrot.slane %v2993, 1
        %v3001 = vsel %vm1277, %v2998, %v3000
        %v3005 = vadd.f32 %v2988, %v2999
        %v3006 = vadd.f32 %v2989, %v3001
        %v3007 = vadd.f32 %v2990, %v3000
        %v3008 = vmul.f32 %v1094, %v1292
        %v3009 = vmul.f32 %v1095, %v1292
        %v3010 = vmul.f32 %v1096, %v1292
        %v3014 = vrot.slane %v3008, 1
        %v3015 = vrot.slane %v3009, 1
        %v3016 = vsel %vm1277, %v3014, %v3015
        %v3017 = vrot.slane %v3010, 1
        %v3018 = vsel %vm1277, %v3015, %v3017
        %v3022 = vadd.f32 %v3005, %v3016
        %v3023 = vadd.f32 %v3006, %v3018
        %v3024 = vadd.f32 %v3007, %v3017
        %v3025 = vmul.f32 %v1097, %v1313
        %v3026 = vmul.f32 %v1098, %v1313
        %v3027 = vmul.f32 %v1099, %v1313
        %v3031 = vrot.slane %v3025, 1
        %v3032 = vrot.slane %v3026, 1
        %v3033 = vsel %vm1277, %v3031, %v3032
        %v3034 = vrot.slane %v3027, 1
        %v3035 = vsel %vm1277, %v3032, %v3034
        %v3039 = vadd.f32 %v3022, %v3033
        %v3040 = vadd.f32 %v3023, %v3035
        %v3041 = vadd.f32 %v3024, %v3034
        %v3042 = vmul.f32 %v1100, %v1334
        %v3043 = vmul.f32 %v1101, %v1334
        %v3044 = vmul.f32 %v1102, %v1334
        %v3048 = vrot.slane %v3042, 1
        %v3049 = vrot.slane %v3043, 1
        %v3050 = vsel %vm1277, %v3048, %v3049
        %v3051 = vrot.slane %v3044, 1
        %v3052 = vsel %vm1277, %v3049, %v3051
        %v3056 = vadd.f32 %v3039, %v3050
        %v3057 = vadd.f32 %v3040, %v3052
        %v3058 = vadd.f32 %v3041, %v3051
        %v3059 = vmul.f32 %v1103, %v1355
        %v3060 = vmul.f32 %v1104, %v1355
        %v3061 = vmul.f32 %v1105, %v1355
        %v3065 = vrot.slane %v3059, 1
        %v3066 = vrot.slane %v3060, 1
        %v3067 = vsel %vm1277, %v3065, %v3066
        %v3068 = vrot.slane %v3061, 1
        %v3069 = vsel %vm1277, %v3066, %v3068
        %v3073 = vadd.f32 %v3056, %v3067
        %v3074 = vadd.f32 %v3057, %v3069
        %v3075 = vadd.f32 %v3058, %v3068
        %v3076 = vmul.f32 %v1106, %v1376
        %v3077 = vmul.f32 %v1107, %v1376
        %v3078 = vmul.f32 %v1108, %v1376
        %v3082 = vrot.slane %v3076, 1
        %v3083 = vrot.slane %v3077, 1
        %v3084 = vsel %vm1277, %v3082, %v3083
        %v3085 = vrot.slane %v3078, 1
        %v3086 = vsel %vm1277, %v3083, %v3085
        %v3090 = vadd.f32 %v3073, %v3084
        %v3091 = vadd.f32 %v3074, %v3086
        %v3092 = vadd.f32 %v3075, %v3085
        %v3093 = vmul.f32 %v1109, %v1397
        %v3094 = vmul.f32 %v1110, %v1397
        %v3095 = vmul.f32 %v1111, %v1397
        %v3099 = vrot.slane %v3093, 1
        %v3100 = vrot.slane %v3094, 1
        %v3101 = vsel %vm1277, %v3099, %v3100
        %v3102 = vrot.slane %v3095, 1
        %v3103 = vsel %vm1277, %v3100, %v3102
        %v3107 = vadd.f32 %v3090, %v3101
        %v3108 = vadd.f32 %v3091, %v3103
        %v3109 = vadd.f32 %v3092, %v3102
        %v3110 = vmul.f32 %v1112, %v1418
        %v3111 = vmul.f32 %v1113, %v1418
        %v3112 = vmul.f32 %v1114, %v1418
        %v3116 = vrot.slane %v3110, 1
        %v3117 = vrot.slane %v3111, 1
        %v3118 = vsel %vm1277, %v3116, %v3117
        %v3119 = vrot.slane %v3112, 1
        %v3120 = vsel %vm1277, %v3117, %v3119
        %v3124 = vadd.f32 %v3107, %v3118
        %v3125 = vadd.f32 %v3108, %v3120
        %v3126 = vadd.f32 %v3109, %v3119
        %v3127 = vmul.f32 %v1067, %v1439
        %v3128 = vmul.f32 %v1068, %v1439
        %v3129 = vmul.f32 %v1069, %v1439
        %v3133 = vrot.slane %v3127, 2
        %v3134 = vrot.slane %v3128, 2
        %v3135 = vsel %vm2351, %v3133, %v3134
        %v3136 = vrot.slane %v3129, 2
        %v3137 = vsel %vm2351, %v3134, %v3136
        %v3141 = vadd.f32 %v3124, %v3135
        %v3142 = vadd.f32 %v3125, %v3137
        %v3143 = vadd.f32 %v3126, %v3136
        %v3144 = vmul.f32 %v1070, %v1460
        %v3145 = vmul.f32 %v1071, %v1460
        %v3146 = vmul.f32 %v1072, %v1460
        %v3150 = vrot.slane %v3144, 2
        %v3151 = vrot.slane %v3145, 2
        %v3152 = vsel %vm2351, %v3150, %v3151
        %v3153 = vrot.slane %v3146, 2
        %v3154 = vsel %vm2351, %v3151, %v3153
        %v3158 = vadd.f32 %v3141, %v3152
        %v3159 = vadd.f32 %v3142, %v3154
        %v3160 = vadd.f32 %v3143, %v3153
        %v3161 = vmul.f32 %v1073, %v1481
        %v3162 = vmul.f32 %v1074, %v1481
        %v3163 = vmul.f32 %v1075, %v1481
        %v3167 = vrot.slane %v3161, 2
        %v3168 = vrot.slane %v3162, 2
        %v3169 = vsel %vm2351, %v3167, %v3168
        %v3170 = vrot.slane %v3163, 2
        %v3171 = vsel %vm2351, %v3168, %v3170
        %v3175 = vadd.f32 %v3158, %v3169
        %v3176 = vadd.f32 %v3159, %v3171
        %v3177 = vadd.f32 %v3160, %v3170
        %v3178 = vmul.f32 %v1076, %v1502
        %v3179 = vmul.f32 %v1077, %v1502
        %v3180 = vmul.f32 %v1078, %v1502
        %v3184 = vrot.slane %v3178, 2
        %v3185 = vrot.slane %v3179, 2
        %v3186 = vsel %vm2351, %v3184, %v3185
        %v3187 = vrot.slane %v3180, 2
        %v3188 = vsel %vm2351, %v3185, %v3187
        %v3192 = vadd.f32 %v3175, %v3186
        %v3193 = vadd.f32 %v3176, %v3188
        %v3194 = vadd.f32 %v3177, %v3187
        %v3195 = vmul.f32 %v1079, %v1523
        %v3196 = vmul.f32 %v1080, %v1523
        %v3197 = vmul.f32 %v1081, %v1523
        %v3201 = vrot.slane %v3195, 2
        %v3202 = vrot.slane %v3196, 2
        %v3203 = vsel %vm2351, %v3201, %v3202
        %v3204 = vrot.slane %v3197, 2
        %v3205 = vsel %vm2351, %v3202, %v3204
        %v3209 = vadd.f32 %v3192, %v3203
        %v3210 = vadd.f32 %v3193, %v3205
        %v3211 = vadd.f32 %v3194, %v3204
        %v3212 = vpack.c.bf16 %v3210, %v3209
        %v3213 = vpack.c.bf16 %v3211, %v3211
        %v3214 = vmul.f32 %v1109, %v1153
        %v3215 = vmul.f32 %v1110, %v1153
        %v3216 = vmul.f32 %v1111, %v1153
        %v3217 = vmul.f32 %v1112, %v1160
        %v3218 = vmul.f32 %v1113, %v1160
        %v3219 = vmul.f32 %v1114, %v1160
        %v3220 = vadd.f32 %v3214, %v3217
        %v3221 = vadd.f32 %v3215, %v3218
        %v3222 = vadd.f32 %v3216, %v3219
        %v3223 = vmul.f32 %v1067, %v1170
        %v3224 = vmul.f32 %v1068, %v1170
        %v3225 = vmul.f32 %v1069, %v1170
        %v3229 = vrot.slane %v3223, 1
        %v3230 = vrot.slane %v3224, 1
        %v3231 = vsel %vm1277, %v3229, %v3230
        %v3232 = vrot.slane %v3225, 1
        %v3233 = vsel %vm1277, %v3230, %v3232
        %v3237 = vadd.f32 %v3220, %v3231
        %v3238 = vadd.f32 %v3221, %v3233
        %v3239 = vadd.f32 %v3222, %v3232
        %v3240 = vmul.f32 %v1070, %v1180
        %v3241 = vmul.f32 %v1071, %v1180
        %v3242 = vmul.f32 %v1072, %v1180
        %v3246 = vrot.slane %v3240, 1
        %v3247 = vrot.slane %v3241, 1
        %v3248 = vsel %vm1277, %v3246, %v3247
        %v3249 = vrot.slane %v3242, 1
        %v3250 = vsel %vm1277, %v3247, %v3249
        %v3254 = vadd.f32 %v3237, %v3248
        %v3255 = vadd.f32 %v3238, %v3250
        %v3256 = vadd.f32 %v3239, %v3249
        %v3257 = vmul.f32 %v1073, %v1190
        %v3258 = vmul.f32 %v1074, %v1190
        %v3259 = vmul.f32 %v1075, %v1190
        %v3263 = vrot.slane %v3257, 1
        %v3264 = vrot.slane %v3258, 1
        %v3265 = vsel %vm1277, %v3263, %v3264
        %v3266 = vrot.slane %v3259, 1
        %v3267 = vsel %vm1277, %v3264, %v3266
        %v3271 = vadd.f32 %v3254, %v3265
        %v3272 = vadd.f32 %v3255, %v3267
        %v3273 = vadd.f32 %v3256, %v3266
        %v3274 = vmul.f32 %v1076, %v1200
        %v3275 = vmul.f32 %v1077, %v1200
        %v3276 = vmul.f32 %v1078, %v1200
        %v3280 = vrot.slane %v3274, 1
        %v3281 = vrot.slane %v3275, 1
        %v3282 = vsel %vm1277, %v3280, %v3281
        %v3283 = vrot.slane %v3276, 1
        %v3284 = vsel %vm1277, %v3281, %v3283
        %v3288 = vadd.f32 %v3271, %v3282
        %v3289 = vadd.f32 %v3272, %v3284
        %v3290 = vadd.f32 %v3273, %v3283
        %v3291 = vmul.f32 %v1079, %v1210
        %v3292 = vmul.f32 %v1080, %v1210
        %v3293 = vmul.f32 %v1081, %v1210
        %v3297 = vrot.slane %v3291, 1
        %v3298 = vrot.slane %v3292, 1
        %v3299 = vsel %vm1277, %v3297, %v3298
        %v3300 = vrot.slane %v3293, 1
        %v3301 = vsel %vm1277, %v3298, %v3300
        %v3305 = vadd.f32 %v3288, %v3299
        %v3306 = vadd.f32 %v3289, %v3301
        %v3307 = vadd.f32 %v3290, %v3300
        %v3308 = vmul.f32 %v1082, %v1220
        %v3309 = vmul.f32 %v1083, %v1220
        %v3310 = vmul.f32 %v1084, %v1220
        %v3314 = vrot.slane %v3308, 1
        %v3315 = vrot.slane %v3309, 1
        %v3316 = vsel %vm1277, %v3314, %v3315
        %v3317 = vrot.slane %v3310, 1
        %v3318 = vsel %vm1277, %v3315, %v3317
        %v3322 = vadd.f32 %v3305, %v3316
        %v3323 = vadd.f32 %v3306, %v3318
        %v3324 = vadd.f32 %v3307, %v3317
        %v3325 = vmul.f32 %v1085, %v1230
        %v3326 = vmul.f32 %v1086, %v1230
        %v3327 = vmul.f32 %v1087, %v1230
        %v3331 = vrot.slane %v3325, 1
        %v3332 = vrot.slane %v3326, 1
        %v3333 = vsel %vm1277, %v3331, %v3332
        %v3334 = vrot.slane %v3327, 1
        %v3335 = vsel %vm1277, %v3332, %v3334
        %v3339 = vadd.f32 %v3322, %v3333
        %v3340 = vadd.f32 %v3323, %v3335
        %v3341 = vadd.f32 %v3324, %v3334
        %v3342 = vmul.f32 %v1088, %v1240
        %v3343 = vmul.f32 %v1089, %v1240
        %v3344 = vmul.f32 %v1090, %v1240
        %v3348 = vrot.slane %v3342, 1
        %v3349 = vrot.slane %v3343, 1
        %v3350 = vsel %vm1277, %v3348, %v3349
        %v3351 = vrot.slane %v3344, 1
        %v3352 = vsel %vm1277, %v3349, %v3351
        %v3356 = vadd.f32 %v3339, %v3350
        %v3357 = vadd.f32 %v3340, %v3352
        %v3358 = vadd.f32 %v3341, %v3351
        %v3359 = vmul.f32 %v1091, %v1250
        %v3360 = vmul.f32 %v1092, %v1250
        %v3361 = vmul.f32 %v1093, %v1250
        %v3365 = vrot.slane %v3359, 1
        %v3366 = vrot.slane %v3360, 1
        %v3367 = vsel %vm1277, %v3365, %v3366
        %v3368 = vrot.slane %v3361, 1
        %v3369 = vsel %vm1277, %v3366, %v3368
        %v3373 = vadd.f32 %v3356, %v3367
        %v3374 = vadd.f32 %v3357, %v3369
        %v3375 = vadd.f32 %v3358, %v3368
        %v3376 = vmul.f32 %v1094, %v1260
        %v3377 = vmul.f32 %v1095, %v1260
        %v3378 = vmul.f32 %v1096, %v1260
        %v3382 = vrot.slane %v3376, 1
        %v3383 = vrot.slane %v3377, 1
        %v3384 = vsel %vm1277, %v3382, %v3383
        %v3385 = vrot.slane %v3378, 1
        %v3386 = vsel %vm1277, %v3383, %v3385
        %v3390 = vadd.f32 %v3373, %v3384
        %v3391 = vadd.f32 %v3374, %v3386
        %v3392 = vadd.f32 %v3375, %v3385
        %v3393 = vmul.f32 %v1097, %v1270
        %v3394 = vmul.f32 %v1098, %v1270
        %v3395 = vmul.f32 %v1099, %v1270
        %v3399 = vrot.slane %v3393, 1
        %v3400 = vrot.slane %v3394, 1
        %v3401 = vsel %vm1277, %v3399, %v3400
        %v3402 = vrot.slane %v3395, 1
        %v3403 = vsel %vm1277, %v3400, %v3402
        %v3407 = vadd.f32 %v3390, %v3401
        %v3408 = vadd.f32 %v3391, %v3403
        %v3409 = vadd.f32 %v3392, %v3402
        %v3410 = vmul.f32 %v1100, %v1292
        %v3411 = vmul.f32 %v1101, %v1292
        %v3412 = vmul.f32 %v1102, %v1292
        %v3416 = vrot.slane %v3410, 1
        %v3417 = vrot.slane %v3411, 1
        %v3418 = vsel %vm1277, %v3416, %v3417
        %v3419 = vrot.slane %v3412, 1
        %v3420 = vsel %vm1277, %v3417, %v3419
        %v3424 = vadd.f32 %v3407, %v3418
        %v3425 = vadd.f32 %v3408, %v3420
        %v3426 = vadd.f32 %v3409, %v3419
        %v3427 = vmul.f32 %v1103, %v1313
        %v3428 = vmul.f32 %v1104, %v1313
        %v3429 = vmul.f32 %v1105, %v1313
        %v3433 = vrot.slane %v3427, 1
        %v3434 = vrot.slane %v3428, 1
        %v3435 = vsel %vm1277, %v3433, %v3434
        %v3436 = vrot.slane %v3429, 1
        %v3437 = vsel %vm1277, %v3434, %v3436
        %v3441 = vadd.f32 %v3424, %v3435
        %v3442 = vadd.f32 %v3425, %v3437
        %v3443 = vadd.f32 %v3426, %v3436
        %v3444 = vmul.f32 %v1106, %v1334
        %v3445 = vmul.f32 %v1107, %v1334
        %v3446 = vmul.f32 %v1108, %v1334
        %v3450 = vrot.slane %v3444, 1
        %v3451 = vrot.slane %v3445, 1
        %v3452 = vsel %vm1277, %v3450, %v3451
        %v3453 = vrot.slane %v3446, 1
        %v3454 = vsel %vm1277, %v3451, %v3453
        %v3458 = vadd.f32 %v3441, %v3452
        %v3459 = vadd.f32 %v3442, %v3454
        %v3460 = vadd.f32 %v3443, %v3453
        %v3461 = vmul.f32 %v1109, %v1355
        %v3462 = vmul.f32 %v1110, %v1355
        %v3463 = vmul.f32 %v1111, %v1355
        %v3467 = vrot.slane %v3461, 1
        %v3468 = vrot.slane %v3462, 1
        %v3469 = vsel %vm1277, %v3467, %v3468
        %v3470 = vrot.slane %v3463, 1
        %v3471 = vsel %vm1277, %v3468, %v3470
        %v3475 = vadd.f32 %v3458, %v3469
        %v3476 = vadd.f32 %v3459, %v3471
        %v3477 = vadd.f32 %v3460, %v3470
        %v3478 = vmul.f32 %v1112, %v1376
        %v3479 = vmul.f32 %v1113, %v1376
        %v3480 = vmul.f32 %v1114, %v1376
        %v3484 = vrot.slane %v3478, 1
        %v3485 = vrot.slane %v3479, 1
        %v3486 = vsel %vm1277, %v3484, %v3485
        %v3487 = vrot.slane %v3480, 1
        %v3488 = vsel %vm1277, %v3485, %v3487
        %v3492 = vadd.f32 %v3475, %v3486
        %v3493 = vadd.f32 %v3476, %v3488
        %v3494 = vadd.f32 %v3477, %v3487
        %v3495 = vmul.f32 %v1067, %v1397
        %v3496 = vmul.f32 %v1068, %v1397
        %v3497 = vmul.f32 %v1069, %v1397
        %v3501 = vrot.slane %v3495, 2
        %v3502 = vrot.slane %v3496, 2
        %v3503 = vsel %vm2351, %v3501, %v3502
        %v3504 = vrot.slane %v3497, 2
        %v3505 = vsel %vm2351, %v3502, %v3504
        %v3509 = vadd.f32 %v3492, %v3503
        %v3510 = vadd.f32 %v3493, %v3505
        %v3511 = vadd.f32 %v3494, %v3504
        %v3512 = vmul.f32 %v1070, %v1418
        %v3513 = vmul.f32 %v1071, %v1418
        %v3514 = vmul.f32 %v1072, %v1418
        %v3518 = vrot.slane %v3512, 2
        %v3519 = vrot.slane %v3513, 2
        %v3520 = vsel %vm2351, %v3518, %v3519
        %v3521 = vrot.slane %v3514, 2
        %v3522 = vsel %vm2351, %v3519, %v3521
        %v3526 = vadd.f32 %v3509, %v3520
        %v3527 = vadd.f32 %v3510, %v3522
        %v3528 = vadd.f32 %v3511, %v3521
        %v3529 = vmul.f32 %v1073, %v1439
        %v3530 = vmul.f32 %v1074, %v1439
        %v3531 = vmul.f32 %v1075, %v1439
        %v3535 = vrot.slane %v3529, 2
        %v3536 = vrot.slane %v3530, 2
        %v3537 = vsel %vm2351, %v3535, %v3536
        %v3538 = vrot.slane %v3531, 2
        %v3539 = vsel %vm2351, %v3536, %v3538
        %v3543 = vadd.f32 %v3526, %v3537
        %v3544 = vadd.f32 %v3527, %v3539
        %v3545 = vadd.f32 %v3528, %v3538
        %v3546 = vmul.f32 %v1076, %v1460
        %v3547 = vmul.f32 %v1077, %v1460
        %v3548 = vmul.f32 %v1078, %v1460
        %v3552 = vrot.slane %v3546, 2
        %v3553 = vrot.slane %v3547, 2
        %v3554 = vsel %vm2351, %v3552, %v3553
        %v3555 = vrot.slane %v3548, 2
        %v3556 = vsel %vm2351, %v3553, %v3555
        %v3560 = vadd.f32 %v3543, %v3554
        %v3561 = vadd.f32 %v3544, %v3556
        %v3562 = vadd.f32 %v3545, %v3555
        %v3563 = vmul.f32 %v1079, %v1481
        %v3564 = vmul.f32 %v1080, %v1481
        %v3565 = vmul.f32 %v1081, %v1481
        %v3569 = vrot.slane %v3563, 2
        %v3570 = vrot.slane %v3564, 2
        %v3571 = vsel %vm2351, %v3569, %v3570
        %v3572 = vrot.slane %v3565, 2
        %v3573 = vsel %vm2351, %v3570, %v3572
        %v3577 = vadd.f32 %v3560, %v3571
        %v3578 = vadd.f32 %v3561, %v3573
        %v3579 = vadd.f32 %v3562, %v3572
        %v3580 = vmul.f32 %v1082, %v1502
        %v3581 = vmul.f32 %v1083, %v1502
        %v3582 = vmul.f32 %v1084, %v1502
        %v3586 = vrot.slane %v3580, 2
        %v3587 = vrot.slane %v3581, 2
        %v3588 = vsel %vm2351, %v3586, %v3587
        %v3589 = vrot.slane %v3582, 2
        %v3590 = vsel %vm2351, %v3587, %v3589
        %v3594 = vadd.f32 %v3577, %v3588
        %v3595 = vadd.f32 %v3578, %v3590
        %v3596 = vadd.f32 %v3579, %v3589
        %v3597 = vmul.f32 %v1085, %v1523
        %v3598 = vmul.f32 %v1086, %v1523
        %v3599 = vmul.f32 %v1087, %v1523
        %v3603 = vrot.slane %v3597, 2
        %v3604 = vrot.slane %v3598, 2
        %v3605 = vsel %vm2351, %v3603, %v3604
        %v3606 = vrot.slane %v3599, 2
        %v3607 = vsel %vm2351, %v3604, %v3606
        %v3611 = vadd.f32 %v3594, %v3605
        %v3612 = vadd.f32 %v3595, %v3607
        %v3613 = vadd.f32 %v3596, %v3606
        %v3614 = vpack.c.bf16 %v3612, %v3611
        %v3615 = vpack.c.bf16 %v3613, %v3613
        %3616 = vmatprep.subr.bf16.mxu0 0
        %3617 = vmatpush1.bf16.msra.mxu0 %v1896
        %3618 = vmatprep.subr.bf16.mxu0 0
        %3619 = vmatpush1.bf16.msra.mxu0 %v1895
        %3620 = vmatprep.subr.bf16.mxu0 0
        %3621 = vmatpush1.bf16.msra.mxu0 %v1894
        %3622 = vmatprep.subr.bf16.mxu0 0
        %3623 = vmatpush1.bf16.msra.mxu0 %v1893
        %3624 = vmatprep.subr.bf16.mxu0 0
        %3625 = vmatpush1.bf16.msra.mxu0 %v1892
        %3626 = vmatprep.subr.bf16.mxu0 0
        %3627 = vmatpush1.bf16.msra.mxu0 %v1891
        %3628 = vmatprep.subr.bf16.mxu0 0
        %3629 = vmatpush1.bf16.msra.mxu0 %v1890
        %3630 = vmatprep.subr.bf16.mxu0 0
        %3631 = vmatpush1.bf16.msra.mxu0 %v1889
        %3632 = vmatprep.subr.bf16.mxu0 0
        %3633 = vmatpush2.bf16.msra.mxu0 0
        %3634 = vmatprep.subr.bf16.mxu0 0
        %3635 = vmatpush2.bf16.msra.mxu0 0
        %3636 = vmatprep.subr.bf16.mxu0 0
        %3637 = vmatpush2.bf16.msra.mxu0 0
        %3638 = vmatprep.subr.bf16.mxu0 0
        %3639 = vmatpush2.bf16.msra.mxu0 0
        %3640 = vmatprep.subr.bf16.mxu0 0
        %3641 = vmatpush2.bf16.msra.mxu0 0
        %3642 = vmatprep.subr.bf16.mxu0 0
        %3643 = vmatpush2.bf16.msra.mxu0 0
        %3644 = vmatprep.subr.bf16.mxu0 0
        %3645 = vmatpush2.bf16.msra.mxu0 0
        %3646 = vmatprep.subr.bf16.mxu0 0
        %3647 = vmatpush2.bf16.msra.mxu0 0
        %3648 = vmatprep.mubr.bf16.mxu0 0
        %3649 = vmatmul.mubr.bf16.gmra.mxu0 %v3212
        %v3650 = vpop.f32.mrf.mxu0
        %v3651 = vadd.f32 0.0, %v3650
        %v3652 = vpop.f32.mrf.mxu0
        %v3653 = vpop.f32.mrf.mxu0
        %v3654 = vadd.f32 0.0, %v3653
        %v3655 = vpop.f32.mrf.mxu0
        %3656 = vmatprep.mubr.bf16.mxu0 0
        %3657 = vmatmul.mubr.bf16.gmra.mxu0 %v3213
        %v3658 = vpop.f32.mrf.mxu0
        %v3659 = vadd.f32 0.0, %v3658
        %v3660 = vpop.f32.mrf.mxu0
        %v3661 = vpop.f32.mrf.mxu0
        %v3662 = vpop.f32.mrf.mxu0
        %3663 = vdwg.mxu0
        %3664 = vmatprep.subr.bf16.mxu0 0
        %3665 = vmatpush1.bf16.msra.mxu0 %v1896
        %3666 = vmatprep.subr.bf16.mxu0 0
        %3667 = vmatpush1.bf16.msra.mxu0 %v1895
        %3668 = vmatprep.subr.bf16.mxu0 0
        %3669 = vmatpush1.bf16.msra.mxu0 %v1894
        %3670 = vmatprep.subr.bf16.mxu0 0
        %3671 = vmatpush1.bf16.msra.mxu0 %v1893
        %3672 = vmatprep.subr.bf16.mxu0 0
        %3673 = vmatpush1.bf16.msra.mxu0 %v1892
        %3674 = vmatprep.subr.bf16.mxu0 0
        %3675 = vmatpush1.bf16.msra.mxu0 %v1891
        %3676 = vmatprep.subr.bf16.mxu0 0
        %3677 = vmatpush1.bf16.msra.mxu0 %v1890
        %3678 = vmatprep.subr.bf16.mxu0 0
        %3679 = vmatpush1.bf16.msra.mxu0 %v1889
        %3680 = vmatprep.subr.bf16.mxu0 0
        %3681 = vmatpush2.bf16.msra.mxu0 0
        %3682 = vmatprep.subr.bf16.mxu0 0
        %3683 = vmatpush2.bf16.msra.mxu0 0
        %3684 = vmatprep.subr.bf16.mxu0 0
        %3685 = vmatpush2.bf16.msra.mxu0 0
        %3686 = vmatprep.subr.bf16.mxu0 0
        %3687 = vmatpush2.bf16.msra.mxu0 0
        %3688 = vmatprep.subr.bf16.mxu0 0
        %3689 = vmatpush2.bf16.msra.mxu0 0
        %3690 = vmatprep.subr.bf16.mxu0 0
        %3691 = vmatpush2.bf16.msra.mxu0 0
        %3692 = vmatprep.subr.bf16.mxu0 0
        %3693 = vmatpush2.bf16.msra.mxu0 0
        %3694 = vmatprep.subr.bf16.mxu0 0
        %3695 = vmatpush2.bf16.msra.mxu0 0
        %3696 = vmatprep.mubr.bf16.mxu0 0
        %3697 = vmatmul.mubr.bf16.gmra.mxu0 %v3614
        %v3698 = vpop.f32.mrf.mxu0
        %v3699 = vadd.f32 0.0, %v3698
        %v3700 = vpop.f32.mrf.mxu0
        %v3701 = vpop.f32.mrf.mxu0
        %v3702 = vadd.f32 0.0, %v3701
        %v3703 = vpop.f32.mrf.mxu0
        %3704 = vmatprep.mubr.bf16.mxu0 0
        %3705 = vmatmul.mubr.bf16.gmra.mxu0 %v3615
        %v3706 = vpop.f32.mrf.mxu0
        %v3707 = vadd.f32 0.0, %v3706
        %v3708 = vpop.f32.mrf.mxu0
        %v3709 = vpop.f32.mrf.mxu0
        %v3710 = vpop.f32.mrf.mxu0
        %3711 = vdwg.mxu0
        %v3712 = vmax.f32 %v3651, %v3699
        %v3713 = vmax.f32 %v3654, %v3702
        %v3714 = vmax.f32 %v3659, %v3707
        %v3715 = vadd.f32 %v3712, %v2008
        %v3716 = vadd.f32 %v3713, %v2008
        %v3717 = vadd.f32 %v3714, %v2008
        %v3718 = vmul.f32 %v3715, 0.2
        %v3719 = vmul.f32 %v3716, 0.2
        %v3720 = vmul.f32 %v3717, 0.2
        %v3721 = vmax.f32 %v3715, %v3718
        %v3722 = vmax.f32 %v3716, %v3719
        %v3723 = vmax.f32 %v3717, %v3720
        %v3724 = vsel %vm2022, %v3721, 0.0
        %v3725 = vsel %vm2023, %v3722, 0.0
        %v3726 = vsel %vm2024, %v3723, 0.0
        %v3727 = vmul.f32 %v1067, %v1153
        %v3728 = vmul.f32 %v1068, %v1153
        %v3729 = vmul.f32 %v1069, %v1153
        %v3730 = vmul.f32 %v1070, %v1160
        %v3731 = vmul.f32 %v1071, %v1160
        %v3732 = vmul.f32 %v1072, %v1160
        %v3733 = vadd.f32 %v3727, %v3730
        %v3734 = vadd.f32 %v3728, %v3731
        %v3735 = vadd.f32 %v3729, %v3732
        %v3736 = vmul.f32 %v1073, %v1170
        %v3737 = vmul.f32 %v1074, %v1170
        %v3738 = vmul.f32 %v1075, %v1170
        %v3739 = vadd.f32 %v3733, %v3736
        %v3740 = vadd.f32 %v3734, %v3737
        %v3741 = vadd.f32 %v3735, %v3738
        %v3742 = vmul.f32 %v1076, %v1180
        %v3743 = vmul.f32 %v1077, %v1180
        %v3744 = vmul.f32 %v1078, %v1180
        %v3745 = vadd.f32 %v3739, %v3742
        %v3746 = vadd.f32 %v3740, %v3743
        %v3747 = vadd.f32 %v3741, %v3744
        %v3748 = vmul.f32 %v1079, %v1190
        %v3749 = vmul.f32 %v1080, %v1190
        %v3750 = vmul.f32 %v1081, %v1190
        %v3751 = vadd.f32 %v3745, %v3748
        %v3752 = vadd.f32 %v3746, %v3749
        %v3753 = vadd.f32 %v3747, %v3750
        %v3754 = vmul.f32 %v1082, %v1200
        %v3755 = vmul.f32 %v1083, %v1200
        %v3756 = vmul.f32 %v1084, %v1200
        %v3757 = vadd.f32 %v3751, %v3754
        %v3758 = vadd.f32 %v3752, %v3755
        %v3759 = vadd.f32 %v3753, %v3756
        %v3760 = vmul.f32 %v1085, %v1210
        %v3761 = vmul.f32 %v1086, %v1210
        %v3762 = vmul.f32 %v1087, %v1210
        %v3763 = vadd.f32 %v3757, %v3760
        %v3764 = vadd.f32 %v3758, %v3761
        %v3765 = vadd.f32 %v3759, %v3762
        %v3766 = vmul.f32 %v1088, %v1220
        %v3767 = vmul.f32 %v1089, %v1220
        %v3768 = vmul.f32 %v1090, %v1220
        %v3769 = vadd.f32 %v3763, %v3766
        %v3770 = vadd.f32 %v3764, %v3767
        %v3771 = vadd.f32 %v3765, %v3768
        %v3772 = vmul.f32 %v1091, %v1230
        %v3773 = vmul.f32 %v1092, %v1230
        %v3774 = vmul.f32 %v1093, %v1230
        %v3775 = vadd.f32 %v3769, %v3772
        %v3776 = vadd.f32 %v3770, %v3773
        %v3777 = vadd.f32 %v3771, %v3774
        %v3778 = vmul.f32 %v1094, %v1240
        %v3779 = vmul.f32 %v1095, %v1240
        %v3780 = vmul.f32 %v1096, %v1240
        %v3781 = vadd.f32 %v3775, %v3778
        %v3782 = vadd.f32 %v3776, %v3779
        %v3783 = vadd.f32 %v3777, %v3780
        %v3784 = vmul.f32 %v1097, %v1250
        %v3785 = vmul.f32 %v1098, %v1250
        %v3786 = vmul.f32 %v1099, %v1250
        %v3787 = vadd.f32 %v3781, %v3784
        %v3788 = vadd.f32 %v3782, %v3785
        %v3789 = vadd.f32 %v3783, %v3786
        %v3790 = vmul.f32 %v1100, %v1260
        %v3791 = vmul.f32 %v1101, %v1260
        %v3792 = vmul.f32 %v1102, %v1260
        %v3793 = vadd.f32 %v3787, %v3790
        %v3794 = vadd.f32 %v3788, %v3791
        %v3795 = vadd.f32 %v3789, %v3792
        %v3796 = vmul.f32 %v1103, %v1270
        %v3797 = vmul.f32 %v1104, %v1270
        %v3798 = vmul.f32 %v1105, %v1270
        %v3799 = vadd.f32 %v3793, %v3796
        %v3800 = vadd.f32 %v3794, %v3797
        %v3801 = vadd.f32 %v3795, %v3798
        %v3802 = vmul.f32 %v1106, %v1292
        %v3803 = vmul.f32 %v1107, %v1292
        %v3804 = vmul.f32 %v1108, %v1292
        %v3805 = vadd.f32 %v3799, %v3802
        %v3806 = vadd.f32 %v3800, %v3803
        %v3807 = vadd.f32 %v3801, %v3804
        %v3808 = vmul.f32 %v1109, %v1313
        %v3809 = vmul.f32 %v1110, %v1313
        %v3810 = vmul.f32 %v1111, %v1313
        %v3811 = vadd.f32 %v3805, %v3808
        %v3812 = vadd.f32 %v3806, %v3809
        %v3813 = vadd.f32 %v3807, %v3810
        %v3814 = vmul.f32 %v1112, %v1334
        %v3815 = vmul.f32 %v1113, %v1334
        %v3816 = vmul.f32 %v1114, %v1334
        %v3817 = vadd.f32 %v3811, %v3814
        %v3818 = vadd.f32 %v3812, %v3815
        %v3819 = vadd.f32 %v3813, %v3816
        %v3820 = vmul.f32 %v1067, %v1355
        %v3821 = vmul.f32 %v1068, %v1355
        %v3822 = vmul.f32 %v1069, %v1355
        %v3826 = vrot.slane %v3820, 1
        %v3827 = vrot.slane %v3821, 1
        %v3828 = vsel %vm1277, %v3826, %v3827
        %v3829 = vrot.slane %v3822, 1
        %v3830 = vsel %vm1277, %v3827, %v3829
        %v3834 = vadd.f32 %v3817, %v3828
        %v3835 = vadd.f32 %v3818, %v3830
        %v3836 = vadd.f32 %v3819, %v3829
        %v3837 = vmul.f32 %v1070, %v1376
        %v3838 = vmul.f32 %v1071, %v1376
        %v3839 = vmul.f32 %v1072, %v1376
        %v3843 = vrot.slane %v3837, 1
        %v3844 = vrot.slane %v3838, 1
        %v3845 = vsel %vm1277, %v3843, %v3844
        %v3846 = vrot.slane %v3839, 1
        %v3847 = vsel %vm1277, %v3844, %v3846
        %v3851 = vadd.f32 %v3834, %v3845
        %v3852 = vadd.f32 %v3835, %v3847
        %v3853 = vadd.f32 %v3836, %v3846
        %v3854 = vmul.f32 %v1073, %v1397
        %v3855 = vmul.f32 %v1074, %v1397
        %v3856 = vmul.f32 %v1075, %v1397
        %v3860 = vrot.slane %v3854, 1
        %v3861 = vrot.slane %v3855, 1
        %v3862 = vsel %vm1277, %v3860, %v3861
        %v3863 = vrot.slane %v3856, 1
        %v3864 = vsel %vm1277, %v3861, %v3863
        %v3868 = vadd.f32 %v3851, %v3862
        %v3869 = vadd.f32 %v3852, %v3864
        %v3870 = vadd.f32 %v3853, %v3863
        %v3871 = vmul.f32 %v1076, %v1418
        %v3872 = vmul.f32 %v1077, %v1418
        %v3873 = vmul.f32 %v1078, %v1418
        %v3877 = vrot.slane %v3871, 1
        %v3878 = vrot.slane %v3872, 1
        %v3879 = vsel %vm1277, %v3877, %v3878
        %v3880 = vrot.slane %v3873, 1
        %v3881 = vsel %vm1277, %v3878, %v3880
        %v3885 = vadd.f32 %v3868, %v3879
        %v3886 = vadd.f32 %v3869, %v3881
        %v3887 = vadd.f32 %v3870, %v3880
        %v3888 = vmul.f32 %v1079, %v1439
        %v3889 = vmul.f32 %v1080, %v1439
        %v3890 = vmul.f32 %v1081, %v1439
        %v3894 = vrot.slane %v3888, 1
        %v3895 = vrot.slane %v3889, 1
        %v3896 = vsel %vm1277, %v3894, %v3895
        %v3897 = vrot.slane %v3890, 1
        %v3898 = vsel %vm1277, %v3895, %v3897
        %v3902 = vadd.f32 %v3885, %v3896
        %v3903 = vadd.f32 %v3886, %v3898
        %v3904 = vadd.f32 %v3887, %v3897
        %v3905 = vmul.f32 %v1082, %v1460
        %v3906 = vmul.f32 %v1083, %v1460
        %v3907 = vmul.f32 %v1084, %v1460
        %v3911 = vrot.slane %v3905, 1
        %v3912 = vrot.slane %v3906, 1
        %v3913 = vsel %vm1277, %v3911, %v3912
        %v3914 = vrot.slane %v3907, 1
        %v3915 = vsel %vm1277, %v3912, %v3914
        %v3919 = vadd.f32 %v3902, %v3913
        %v3920 = vadd.f32 %v3903, %v3915
        %v3921 = vadd.f32 %v3904, %v3914
        %v3922 = vmul.f32 %v1085, %v1481
        %v3923 = vmul.f32 %v1086, %v1481
        %v3924 = vmul.f32 %v1087, %v1481
        %v3928 = vrot.slane %v3922, 1
        %v3929 = vrot.slane %v3923, 1
        %v3930 = vsel %vm1277, %v3928, %v3929
        %v3931 = vrot.slane %v3924, 1
        %v3932 = vsel %vm1277, %v3929, %v3931
        %v3936 = vadd.f32 %v3919, %v3930
        %v3937 = vadd.f32 %v3920, %v3932
        %v3938 = vadd.f32 %v3921, %v3931
        %v3939 = vmul.f32 %v1088, %v1502
        %v3940 = vmul.f32 %v1089, %v1502
        %v3941 = vmul.f32 %v1090, %v1502
        %v3945 = vrot.slane %v3939, 1
        %v3946 = vrot.slane %v3940, 1
        %v3947 = vsel %vm1277, %v3945, %v3946
        %v3948 = vrot.slane %v3941, 1
        %v3949 = vsel %vm1277, %v3946, %v3948
        %v3953 = vadd.f32 %v3936, %v3947
        %v3954 = vadd.f32 %v3937, %v3949
        %v3955 = vadd.f32 %v3938, %v3948
        %v3956 = vmul.f32 %v1091, %v1523
        %v3957 = vmul.f32 %v1092, %v1523
        %v3958 = vmul.f32 %v1093, %v1523
        %v3962 = vrot.slane %v3956, 1
        %v3963 = vrot.slane %v3957, 1
        %v3964 = vsel %vm1277, %v3962, %v3963
        %v3965 = vrot.slane %v3958, 1
        %v3966 = vsel %vm1277, %v3963, %v3965
        %v3970 = vadd.f32 %v3953, %v3964
        %v3971 = vadd.f32 %v3954, %v3966
        %v3972 = vadd.f32 %v3955, %v3965
        %v3973 = vpack.c.bf16 %v3971, %v3970
        %v3974 = vpack.c.bf16 %v3972, %v3972
        %v3975 = vmul.f32 %v1073, %v1153
        %v3976 = vmul.f32 %v1074, %v1153
        %v3977 = vmul.f32 %v1075, %v1153
        %v3978 = vmul.f32 %v1076, %v1160
        %v3979 = vmul.f32 %v1077, %v1160
        %v3980 = vmul.f32 %v1078, %v1160
        %v3981 = vadd.f32 %v3975, %v3978
        %v3982 = vadd.f32 %v3976, %v3979
        %v3983 = vadd.f32 %v3977, %v3980
        %v3984 = vmul.f32 %v1079, %v1170
        %v3985 = vmul.f32 %v1080, %v1170
        %v3986 = vmul.f32 %v1081, %v1170
        %v3987 = vadd.f32 %v3981, %v3984
        %v3988 = vadd.f32 %v3982, %v3985
        %v3989 = vadd.f32 %v3983, %v3986
        %v3990 = vmul.f32 %v1082, %v1180
        %v3991 = vmul.f32 %v1083, %v1180
        %v3992 = vmul.f32 %v1084, %v1180
        %v3993 = vadd.f32 %v3987, %v3990
        %v3994 = vadd.f32 %v3988, %v3991
        %v3995 = vadd.f32 %v3989, %v3992
        %v3996 = vmul.f32 %v1085, %v1190
        %v3997 = vmul.f32 %v1086, %v1190
        %v3998 = vmul.f32 %v1087, %v1190
        %v3999 = vadd.f32 %v3993, %v3996
        %v4000 = vadd.f32 %v3994, %v3997
        %v4001 = vadd.f32 %v3995, %v3998
        %v4002 = vmul.f32 %v1088, %v1200
        %v4003 = vmul.f32 %v1089, %v1200
        %v4004 = vmul.f32 %v1090, %v1200
        %v4005 = vadd.f32 %v3999, %v4002
        %v4006 = vadd.f32 %v4000, %v4003
        %v4007 = vadd.f32 %v4001, %v4004
        %v4008 = vmul.f32 %v1091, %v1210
        %v4009 = vmul.f32 %v1092, %v1210
        %v4010 = vmul.f32 %v1093, %v1210
        %v4011 = vadd.f32 %v4005, %v4008
        %v4012 = vadd.f32 %v4006, %v4009
        %v4013 = vadd.f32 %v4007, %v4010
        %v4014 = vmul.f32 %v1094, %v1220
        %v4015 = vmul.f32 %v1095, %v1220
        %v4016 = vmul.f32 %v1096, %v1220
        %v4017 = vadd.f32 %v4011, %v4014
        %v4018 = vadd.f32 %v4012, %v4015
        %v4019 = vadd.f32 %v4013, %v4016
        %v4020 = vmul.f32 %v1097, %v1230
        %v4021 = vmul.f32 %v1098, %v1230
        %v4022 = vmul.f32 %v1099, %v1230
        %v4023 = vadd.f32 %v4017, %v4020
        %v4024 = vadd.f32 %v4018, %v4021
        %v4025 = vadd.f32 %v4019, %v4022
        %v4026 = vmul.f32 %v1100, %v1240
        %v4027 = vmul.f32 %v1101, %v1240
        %v4028 = vmul.f32 %v1102, %v1240
        %v4029 = vadd.f32 %v4023, %v4026
        %v4030 = vadd.f32 %v4024, %v4027
        %v4031 = vadd.f32 %v4025, %v4028
        %v4032 = vmul.f32 %v1103, %v1250
        %v4033 = vmul.f32 %v1104, %v1250
        %v4034 = vmul.f32 %v1105, %v1250
        %v4035 = vadd.f32 %v4029, %v4032
        %v4036 = vadd.f32 %v4030, %v4033
        %v4037 = vadd.f32 %v4031, %v4034
        %v4038 = vmul.f32 %v1106, %v1260
        %v4039 = vmul.f32 %v1107, %v1260
        %v4040 = vmul.f32 %v1108, %v1260
        %v4041 = vadd.f32 %v4035, %v4038
        %v4042 = vadd.f32 %v4036, %v4039
        %v4043 = vadd.f32 %v4037, %v4040
        %v4044 = vmul.f32 %v1109, %v1270
        %v4045 = vmul.f32 %v1110, %v1270
        %v4046 = vmul.f32 %v1111, %v1270
        %v4047 = vadd.f32 %v4041, %v4044
        %v4048 = vadd.f32 %v4042, %v4045
        %v4049 = vadd.f32 %v4043, %v4046
        %v4050 = vmul.f32 %v1112, %v1292
        %v4051 = vmul.f32 %v1113, %v1292
        %v4052 = vmul.f32 %v1114, %v1292
        %v4053 = vadd.f32 %v4047, %v4050
        %v4054 = vadd.f32 %v4048, %v4051
        %v4055 = vadd.f32 %v4049, %v4052
        %v4056 = vmul.f32 %v1067, %v1313
        %v4057 = vmul.f32 %v1068, %v1313
        %v4058 = vmul.f32 %v1069, %v1313
        %v4062 = vrot.slane %v4056, 1
        %v4063 = vrot.slane %v4057, 1
        %v4064 = vsel %vm1277, %v4062, %v4063
        %v4065 = vrot.slane %v4058, 1
        %v4066 = vsel %vm1277, %v4063, %v4065
        %v4070 = vadd.f32 %v4053, %v4064
        %v4071 = vadd.f32 %v4054, %v4066
        %v4072 = vadd.f32 %v4055, %v4065
        %v4073 = vmul.f32 %v1070, %v1334
        %v4074 = vmul.f32 %v1071, %v1334
        %v4075 = vmul.f32 %v1072, %v1334
        %v4079 = vrot.slane %v4073, 1
        %v4080 = vrot.slane %v4074, 1
        %v4081 = vsel %vm1277, %v4079, %v4080
        %v4082 = vrot.slane %v4075, 1
        %v4083 = vsel %vm1277, %v4080, %v4082
        %v4087 = vadd.f32 %v4070, %v4081
        %v4088 = vadd.f32 %v4071, %v4083
        %v4089 = vadd.f32 %v4072, %v4082
        %v4090 = vmul.f32 %v1073, %v1355
        %v4091 = vmul.f32 %v1074, %v1355
        %v4092 = vmul.f32 %v1075, %v1355
        %v4096 = vrot.slane %v4090, 1
        %v4097 = vrot.slane %v4091, 1
        %v4098 = vsel %vm1277, %v4096, %v4097
        %v4099 = vrot.slane %v4092, 1
        %v4100 = vsel %vm1277, %v4097, %v4099
        %v4104 = vadd.f32 %v4087, %v4098
        %v4105 = vadd.f32 %v4088, %v4100
        %v4106 = vadd.f32 %v4089, %v4099
        %v4107 = vmul.f32 %v1076, %v1376
        %v4108 = vmul.f32 %v1077, %v1376
        %v4109 = vmul.f32 %v1078, %v1376
        %v4113 = vrot.slane %v4107, 1
        %v4114 = vrot.slane %v4108, 1
        %v4115 = vsel %vm1277, %v4113, %v4114
        %v4116 = vrot.slane %v4109, 1
        %v4117 = vsel %vm1277, %v4114, %v4116
        %v4121 = vadd.f32 %v4104, %v4115
        %v4122 = vadd.f32 %v4105, %v4117
        %v4123 = vadd.f32 %v4106, %v4116
        %v4124 = vmul.f32 %v1079, %v1397
        %v4125 = vmul.f32 %v1080, %v1397
        %v4126 = vmul.f32 %v1081, %v1397
        %v4130 = vrot.slane %v4124, 1
        %v4131 = vrot.slane %v4125, 1
        %v4132 = vsel %vm1277, %v4130, %v4131
        %v4133 = vrot.slane %v4126, 1
        %v4134 = vsel %vm1277, %v4131, %v4133
        %v4138 = vadd.f32 %v4121, %v4132
        %v4139 = vadd.f32 %v4122, %v4134
        %v4140 = vadd.f32 %v4123, %v4133
        %v4141 = vmul.f32 %v1082, %v1418
        %v4142 = vmul.f32 %v1083, %v1418
        %v4143 = vmul.f32 %v1084, %v1418
        %v4147 = vrot.slane %v4141, 1
        %v4148 = vrot.slane %v4142, 1
        %v4149 = vsel %vm1277, %v4147, %v4148
        %v4150 = vrot.slane %v4143, 1
        %v4151 = vsel %vm1277, %v4148, %v4150
        %v4155 = vadd.f32 %v4138, %v4149
        %v4156 = vadd.f32 %v4139, %v4151
        %v4157 = vadd.f32 %v4140, %v4150
        %v4158 = vmul.f32 %v1085, %v1439
        %v4159 = vmul.f32 %v1086, %v1439
        %v4160 = vmul.f32 %v1087, %v1439
        %v4164 = vrot.slane %v4158, 1
        %v4165 = vrot.slane %v4159, 1
        %v4166 = vsel %vm1277, %v4164, %v4165
        %v4167 = vrot.slane %v4160, 1
        %v4168 = vsel %vm1277, %v4165, %v4167
        %v4172 = vadd.f32 %v4155, %v4166
        %v4173 = vadd.f32 %v4156, %v4168
        %v4174 = vadd.f32 %v4157, %v4167
        %v4175 = vmul.f32 %v1088, %v1460
        %v4176 = vmul.f32 %v1089, %v1460
        %v4177 = vmul.f32 %v1090, %v1460
        %v4181 = vrot.slane %v4175, 1
        %v4182 = vrot.slane %v4176, 1
        %v4183 = vsel %vm1277, %v4181, %v4182
        %v4184 = vrot.slane %v4177, 1
        %v4185 = vsel %vm1277, %v4182, %v4184
        %v4189 = vadd.f32 %v4172, %v4183
        %v4190 = vadd.f32 %v4173, %v4185
        %v4191 = vadd.f32 %v4174, %v4184
        %v4192 = vmul.f32 %v1091, %v1481
        %v4193 = vmul.f32 %v1092, %v1481
        %v4194 = vmul.f32 %v1093, %v1481
        %v4198 = vrot.slane %v4192, 1
        %v4199 = vrot.slane %v4193, 1
        %v4200 = vsel %vm1277, %v4198, %v4199
        %v4201 = vrot.slane %v4194, 1
        %v4202 = vsel %vm1277, %v4199, %v4201
        %v4206 = vadd.f32 %v4189, %v4200
        %v4207 = vadd.f32 %v4190, %v4202
        %v4208 = vadd.f32 %v4191, %v4201
        %v4209 = vmul.f32 %v1094, %v1502
        %v4210 = vmul.f32 %v1095, %v1502
        %v4211 = vmul.f32 %v1096, %v1502
        %v4215 = vrot.slane %v4209, 1
        %v4216 = vrot.slane %v4210, 1
        %v4217 = vsel %vm1277, %v4215, %v4216
        %v4218 = vrot.slane %v4211, 1
        %v4219 = vsel %vm1277, %v4216, %v4218
        %v4223 = vadd.f32 %v4206, %v4217
        %v4224 = vadd.f32 %v4207, %v4219
        %v4225 = vadd.f32 %v4208, %v4218
        %v4226 = vmul.f32 %v1097, %v1523
        %v4227 = vmul.f32 %v1098, %v1523
        %v4228 = vmul.f32 %v1099, %v1523
        %v4232 = vrot.slane %v4226, 1
        %v4233 = vrot.slane %v4227, 1
        %v4234 = vsel %vm1277, %v4232, %v4233
        %v4235 = vrot.slane %v4228, 1
        %v4236 = vsel %vm1277, %v4233, %v4235
        %v4240 = vadd.f32 %v4223, %v4234
        %v4241 = vadd.f32 %v4224, %v4236
        %v4242 = vadd.f32 %v4225, %v4235
        %v4243 = vpack.c.bf16 %v4241, %v4240
        %v4244 = vpack.c.bf16 %v4242, %v4242
        %vm4245 = vsmask.f32 7424
        %v4247 = vshrl.u32 %v3973, 16
        %v4249 = vshll.u32 %v3973, 16
        %v4251 = vrot.slane %v4249, 1
        %v4252 = vor.u32 %v4247, %v4251
        %v4254 = vshll.u32 %v3974, 16
        %v4256 = vrot.slane %v4254, 1
        %v4257 = vsel %vm4245, %v4252, %v4256
        %v4258 = vshrl.u32 %v3974, 16
        %v4260 = vor.u32 %v4258, %v4256
        %4263 = vmatprep.subr.bf16.mxu0 0
        %4264 = vmatpush1.bf16.msra.mxu0 %v1896
        %4265 = vmatprep.subr.bf16.mxu0 0
        %4266 = vmatpush1.bf16.msra.mxu0 %v1895
        %4267 = vmatprep.subr.bf16.mxu0 0
        %4268 = vmatpush1.bf16.msra.mxu0 %v1894
        %4269 = vmatprep.subr.bf16.mxu0 0
        %4270 = vmatpush1.bf16.msra.mxu0 %v1893
        %4271 = vmatprep.subr.bf16.mxu0 0
        %4272 = vmatpush1.bf16.msra.mxu0 %v1892
        %4273 = vmatprep.subr.bf16.mxu0 0
        %4274 = vmatpush1.bf16.msra.mxu0 %v1891
        %4275 = vmatprep.subr.bf16.mxu0 0
        %4276 = vmatpush1.bf16.msra.mxu0 %v1890
        %4277 = vmatprep.subr.bf16.mxu0 0
        %4278 = vmatpush1.bf16.msra.mxu0 %v1889
        %4279 = vmatprep.subr.bf16.mxu0 0
        %4280 = vmatpush2.bf16.msra.mxu0 0
        %4281 = vmatprep.subr.bf16.mxu0 0
        %4282 = vmatpush2.bf16.msra.mxu0 0
        %4283 = vmatprep.subr.bf16.mxu0 0
        %4284 = vmatpush2.bf16.msra.mxu0 0
        %4285 = vmatprep.subr.bf16.mxu0 0
        %4286 = vmatpush2.bf16.msra.mxu0 0
        %4287 = vmatprep.subr.bf16.mxu0 0
        %4288 = vmatpush2.bf16.msra.mxu0 0
        %4289 = vmatprep.subr.bf16.mxu0 0
        %4290 = vmatpush2.bf16.msra.mxu0 0
        %4291 = vmatprep.subr.bf16.mxu0 0
        %4292 = vmatpush2.bf16.msra.mxu0 0
        %4293 = vmatprep.subr.bf16.mxu0 0
        %4294 = vmatpush2.bf16.msra.mxu0 0
        %4295 = vmatprep.mubr.bf16.mxu0 0
        %4296 = vmatmul.mubr.bf16.gmra.mxu0 %v4257
        %v4297 = vpop.f32.mrf.mxu0
        %v4298 = vadd.f32 0.0, %v4297
        %v4299 = vpop.f32.mrf.mxu0
        %v4300 = vpop.f32.mrf.mxu0
        %v4301 = vadd.f32 0.0, %v4300
        %v4302 = vpop.f32.mrf.mxu0
        %4303 = vmatprep.mubr.bf16.mxu0 0
        %4304 = vmatmul.mubr.bf16.gmra.mxu0 %v4260
        %v4305 = vpop.f32.mrf.mxu0
        %v4306 = vadd.f32 0.0, %v4305
        %v4307 = vpop.f32.mrf.mxu0
        %v4308 = vpop.f32.mrf.mxu0
        %v4309 = vpop.f32.mrf.mxu0
        %4310 = vdwg.mxu0
        %v4312 = vshrl.u32 %v4243, 16
        %v4314 = vshll.u32 %v4243, 16
        %v4316 = vrot.slane %v4314, 1
        %v4317 = vor.u32 %v4312, %v4316
        %v4319 = vshll.u32 %v4244, 16
        %v4321 = vrot.slane %v4319, 1
        %v4322 = vsel %vm4245, %v4317, %v4321
        %v4323 = vshrl.u32 %v4244, 16
        %v4325 = vor.u32 %v4323, %v4321
        %4328 = vmatprep.subr.bf16.mxu0 0
        %4329 = vmatpush1.bf16.msra.mxu0 %v1896
        %4330 = vmatprep.subr.bf16.mxu0 0
        %4331 = vmatpush1.bf16.msra.mxu0 %v1895
        %4332 = vmatprep.subr.bf16.mxu0 0
        %4333 = vmatpush1.bf16.msra.mxu0 %v1894
        %4334 = vmatprep.subr.bf16.mxu0 0
        %4335 = vmatpush1.bf16.msra.mxu0 %v1893
        %4336 = vmatprep.subr.bf16.mxu0 0
        %4337 = vmatpush1.bf16.msra.mxu0 %v1892
        %4338 = vmatprep.subr.bf16.mxu0 0
        %4339 = vmatpush1.bf16.msra.mxu0 %v1891
        %4340 = vmatprep.subr.bf16.mxu0 0
        %4341 = vmatpush1.bf16.msra.mxu0 %v1890
        %4342 = vmatprep.subr.bf16.mxu0 0
        %4343 = vmatpush1.bf16.msra.mxu0 %v1889
        %4344 = vmatprep.subr.bf16.mxu0 0
        %4345 = vmatpush2.bf16.msra.mxu0 0
        %4346 = vmatprep.subr.bf16.mxu0 0
        %4347 = vmatpush2.bf16.msra.mxu0 0
        %4348 = vmatprep.subr.bf16.mxu0 0
        %4349 = vmatpush2.bf16.msra.mxu0 0
        %4350 = vmatprep.subr.bf16.mxu0 0
        %4351 = vmatpush2.bf16.msra.mxu0 0
        %4352 = vmatprep.subr.bf16.mxu0 0
        %4353 = vmatpush2.bf16.msra.mxu0 0
        %4354 = vmatprep.subr.bf16.mxu0 0
        %4355 = vmatpush2.bf16.msra.mxu0 0
        %4356 = vmatprep.subr.bf16.mxu0 0
        %4357 = vmatpush2.bf16.msra.mxu0 0
        %4358 = vmatprep.subr.bf16.mxu0 0
        %4359 = vmatpush2.bf16.msra.mxu0 0
        %4360 = vmatprep.mubr.bf16.mxu0 0
        %4361 = vmatmul.mubr.bf16.gmra.mxu0 %v4322
        %v4362 = vpop.f32.mrf.mxu0
        %v4363 = vadd.f32 0.0, %v4362
        %v4364 = vpop.f32.mrf.mxu0
        %v4365 = vpop.f32.mrf.mxu0
        %v4366 = vadd.f32 0.0, %v4365
        %v4367 = vpop.f32.mrf.mxu0
        %4368 = vmatprep.mubr.bf16.mxu0 0
        %4369 = vmatmul.mubr.bf16.gmra.mxu0 %v4325
        %v4370 = vpop.f32.mrf.mxu0
        %v4371 = vadd.f32 0.0, %v4370
        %v4372 = vpop.f32.mrf.mxu0
        %v4373 = vpop.f32.mrf.mxu0
        %v4374 = vpop.f32.mrf.mxu0
        %4375 = vdwg.mxu0
        %v4376 = vmax.f32 %v4298, %v4363
        %v4377 = vmax.f32 %v4301, %v4366
        %v4378 = vmax.f32 %v4306, %v4371
        %v4379 = vadd.f32 %v4376, %v2008
        %v4380 = vadd.f32 %v4377, %v2008
        %v4381 = vadd.f32 %v4378, %v2008
        %v4382 = vmul.f32 %v4379, 0.2
        %v4383 = vmul.f32 %v4380, 0.2
        %v4384 = vmul.f32 %v4381, 0.2
        %v4385 = vmax.f32 %v4379, %v4382
        %v4386 = vmax.f32 %v4380, %v4383
        %v4387 = vmax.f32 %v4381, %v4384
        %v4388 = vsel %vm2022, %v4385, 0.0
        %v4389 = vsel %vm2023, %v4386, 0.0
        %v4390 = vsel %vm2024, %v4387, 0.0
        %v4391 = vld [vmem:[%s6] sm:$0xff]
        %v4392 = vld [vmem:[%s6 + $0x8] sm:$0x1]
        %v4393 = vld [vmem:[%s7] sm:$0xff]
        %v4394 = vld [vmem:[%s7 + $0x8] sm:$0xff]
        %v4395 = vld [vmem:[%s7 + $0x10] sm:$0xff]
        %v4396 = vld [vmem:[%s7 + $0x18] sm:$0xff]
        %v4397 = vld [vmem:[%s7 + $0x20] sm:$0xff]
        %v4398 = vld [vmem:[%s7 + $0x28] sm:$0xff]
        %v4399 = vld [vmem:[%s7 + $0x30] sm:$0xff]
        %v4400 = vld [vmem:[%s7 + $0x38] sm:$0xff]
        %v4401 = vld [vmem:[%s7 + $0x40] sm:$0xff]
        %v4402 = vld [vmem:[%s7 + $0x48] sm:$0xff]
        %v4403 = vld [vmem:[%s7 + $0x50] sm:$0xff]
        %v4404 = vld [vmem:[%s7 + $0x58] sm:$0xff]
        %v4405 = vld [vmem:[%s7 + $0x60] sm:$0xff]
        %v4406 = vld [vmem:[%s7 + $0x68] sm:$0xff]
        %v4407 = vld [vmem:[%s7 + $0x70] sm:$0xff]
        %v4408 = vld [vmem:[%s7 + $0x78] sm:$0xff]
        %v4409 = vld [vmem:[%s8] sm:$0x3]
        %s4410 = sadd.s32 %s441, 4294967294
        %v4411 = vstv %s4410
        %v4412 = vadd.s32 %v4411, %v1044
        %v4413 = vadd.s32 %v4411, %v1045
        %v4414 = vadd.s32 %v4411, %v1046
        %vm4415 = vcmp.ge.s32.totalorder %v4412, 0
        %vm4416 = vcmp.ge.s32.totalorder %v4413, 0
        %vm4417 = vcmp.ge.s32.totalorder %v4414, 0
        %vm4418 = vcmp.lt.s32.totalorder %v4412, 16
        %vm4419 = vcmp.lt.s32.totalorder %v4413, 16
        %vm4420 = vcmp.lt.s32.totalorder %v4414, 16
        %vm4421 = vmand %vm4415, %vm4418
        %vm4422 = vmand %vm4416, %vm4419
        %vm4423 = vmand %vm4417, %vm4420
        %v4424 = vlaneseq
        %v4425 = vshrl.u32 %v4424, 7
        %v4426 = vsub.s32 0, %v4425
        %v4427 = vrot.slane %v4391, %v4426
        %v4428 = vmul.f32 %v2025, %v4427
        %v4429 = vmul.f32 %v2026, %v4427
        %v4430 = vmul.f32 %v2027, %v4427
        %v4431 = vlaneseq
        %v4432 = vshrl.u32 %v4431, 7
        %v4433 = vsub.s32 1, %v4432
        %v4434 = vrot.slane %v4391, %v4433
        %v4435 = vmul.f32 %v2831, %v4434
        %v4436 = vmul.f32 %v2832, %v4434
        %v4437 = vmul.f32 %v2833, %v4434
        %v4438 = vadd.f32 %v4428, %v4435
        %v4439 = vadd.f32 %v4429, %v4436
        %v4440 = vadd.f32 %v4430, %v4437
        %v4441 = vlaneseq
        %v4442 = vshrl.u32 %v4441, 7
        %v4443 = vsub.s32 2, %v4442
        %v4444 = vrot.slane %v4391, %v4443
        %v4445 = vmul.f32 %v3724, %v4444
        %v4446 = vmul.f32 %v3725, %v4444
        %v4447 = vmul.f32 %v3726, %v4444
        %v4448 = vadd.f32 %v4438, %v4445
        %v4449 = vadd.f32 %v4439, %v4446
        %v4450 = vadd.f32 %v4440, %v4447
        %v4451 = vlaneseq
        %v4452 = vshrl.u32 %v4451, 7
        %v4453 = vsub.s32 3, %v4452
        %v4454 = vrot.slane %v4391, %v4453
        %v4455 = vmul.f32 %v4388, %v4454
        %v4456 = vmul.f32 %v4389, %v4454
        %v4457 = vmul.f32 %v4390, %v4454
        %v4458 = vadd.f32 %v4448, %v4455
        %v4459 = vadd.f32 %v4449, %v4456
        %v4460 = vadd.f32 %v4450, %v4457
        %v4461 = vlaneseq
        %v4462 = vshrl.u32 %v4461, 7
        %v4463 = vsub.s32 4, %v4462
        %v4464 = vrot.slane %v4391, %v4463
        %v4465 = vmul.f32 %v2025, %v4464
        %v4466 = vmul.f32 %v2026, %v4464
        %v4467 = vmul.f32 %v2027, %v4464
        %v4471 = vrot.slane %v4465, 1
        %v4472 = vrot.slane %v4466, 1
        %v4473 = vsel %vm1277, %v4471, %v4472
        %v4474 = vrot.slane %v4467, 1
        %v4475 = vsel %vm1277, %v4472, %v4474
        %v4479 = vadd.f32 %v4458, %v4473
        %v4480 = vadd.f32 %v4459, %v4475
        %v4481 = vadd.f32 %v4460, %v4474
        %v4482 = vlaneseq
        %v4483 = vshrl.u32 %v4482, 7
        %v4484 = vsub.s32 5, %v4483
        %v4485 = vrot.slane %v4391, %v4484
        %v4486 = vmul.f32 %v2831, %v4485
        %v4487 = vmul.f32 %v2832, %v4485
        %v4488 = vmul.f32 %v2833, %v4485
        %v4492 = vrot.slane %v4486, 1
        %v4493 = vrot.slane %v4487, 1
        %v4494 = vsel %vm1277, %v4492, %v4493
        %v4495 = vrot.slane %v4488, 1
        %v4496 = vsel %vm1277, %v4493, %v4495
        %v4500 = vadd.f32 %v4479, %v4494
        %v4501 = vadd.f32 %v4480, %v4496
        %v4502 = vadd.f32 %v4481, %v4495
        %v4503 = vlaneseq
        %v4504 = vshrl.u32 %v4503, 7
        %v4505 = vsub.s32 6, %v4504
        %v4506 = vrot.slane %v4391, %v4505
        %v4507 = vmul.f32 %v3724, %v4506
        %v4508 = vmul.f32 %v3725, %v4506
        %v4509 = vmul.f32 %v3726, %v4506
        %v4513 = vrot.slane %v4507, 1
        %v4514 = vrot.slane %v4508, 1
        %v4515 = vsel %vm1277, %v4513, %v4514
        %v4516 = vrot.slane %v4509, 1
        %v4517 = vsel %vm1277, %v4514, %v4516
        %v4521 = vadd.f32 %v4500, %v4515
        %v4522 = vadd.f32 %v4501, %v4517
        %v4523 = vadd.f32 %v4502, %v4516
        %v4524 = vlaneseq
        %v4525 = vshrl.u32 %v4524, 7
        %v4526 = vsub.s32 7, %v4525
        %v4527 = vrot.slane %v4391, %v4526
        %v4528 = vmul.f32 %v4388, %v4527
        %v4529 = vmul.f32 %v4389, %v4527
        %v4530 = vmul.f32 %v4390, %v4527
        %v4534 = vrot.slane %v4528, 1
        %v4535 = vrot.slane %v4529, 1
        %v4536 = vsel %vm1277, %v4534, %v4535
        %v4537 = vrot.slane %v4530, 1
        %v4538 = vsel %vm1277, %v4535, %v4537
        %v4542 = vadd.f32 %v4521, %v4536
        %v4543 = vadd.f32 %v4522, %v4538
        %v4544 = vadd.f32 %v4523, %v4537
        %v4545 = vlaneseq
        %v4546 = vshrl.u32 %v4545, 7
        %v4547 = vsub.s32 0, %v4546
        %v4548 = vrot.slane %v4392, %v4547
        %v4549 = vmul.f32 %v2025, %v4548
        %v4550 = vmul.f32 %v2026, %v4548
        %v4551 = vmul.f32 %v2027, %v4548
        %v4555 = vrot.slane %v4549, 2
        %v4556 = vrot.slane %v4550, 2
        %v4557 = vsel %vm2351, %v4555, %v4556
        %v4558 = vrot.slane %v4551, 2
        %v4559 = vsel %vm2351, %v4556, %v4558
        %v4563 = vadd.f32 %v4542, %v4557
        %v4564 = vadd.f32 %v4543, %v4559
        %v4565 = vadd.f32 %v4544, %v4558
        %v4566 = vpack.c.bf16 %v4564, %v4563
        %v4567 = vpack.c.bf16 %v4565, %v4565
        %v4568 = vmul.f32 %v2831, %v4427
        %v4569 = vmul.f32 %v2832, %v4427
        %v4570 = vmul.f32 %v2833, %v4427
        %v4571 = vmul.f32 %v3724, %v4434
        %v4572 = vmul.f32 %v3725, %v4434
        %v4573 = vmul.f32 %v3726, %v4434
        %v4574 = vadd.f32 %v4568, %v4571
        %v4575 = vadd.f32 %v4569, %v4572
        %v4576 = vadd.f32 %v4570, %v4573
        %v4577 = vmul.f32 %v4388, %v4444
        %v4578 = vmul.f32 %v4389, %v4444
        %v4579 = vmul.f32 %v4390, %v4444
        %v4580 = vadd.f32 %v4574, %v4577
        %v4581 = vadd.f32 %v4575, %v4578
        %v4582 = vadd.f32 %v4576, %v4579
        %v4583 = vmul.f32 %v2025, %v4454
        %v4584 = vmul.f32 %v2026, %v4454
        %v4585 = vmul.f32 %v2027, %v4454
        %v4589 = vrot.slane %v4583, 1
        %v4590 = vrot.slane %v4584, 1
        %v4591 = vsel %vm1277, %v4589, %v4590
        %v4592 = vrot.slane %v4585, 1
        %v4593 = vsel %vm1277, %v4590, %v4592
        %v4597 = vadd.f32 %v4580, %v4591
        %v4598 = vadd.f32 %v4581, %v4593
        %v4599 = vadd.f32 %v4582, %v4592
        %v4600 = vmul.f32 %v2831, %v4464
        %v4601 = vmul.f32 %v2832, %v4464
        %v4602 = vmul.f32 %v2833, %v4464
        %v4606 = vrot.slane %v4600, 1
        %v4607 = vrot.slane %v4601, 1
        %v4608 = vsel %vm1277, %v4606, %v4607
        %v4609 = vrot.slane %v4602, 1
        %v4610 = vsel %vm1277, %v4607, %v4609
        %v4614 = vadd.f32 %v4597, %v4608
        %v4615 = vadd.f32 %v4598, %v4610
        %v4616 = vadd.f32 %v4599, %v4609
        %v4617 = vmul.f32 %v3724, %v4485
        %v4618 = vmul.f32 %v3725, %v4485
        %v4619 = vmul.f32 %v3726, %v4485
        %v4623 = vrot.slane %v4617, 1
        %v4624 = vrot.slane %v4618, 1
        %v4625 = vsel %vm1277, %v4623, %v4624
        %v4626 = vrot.slane %v4619, 1
        %v4627 = vsel %vm1277, %v4624, %v4626
        %v4631 = vadd.f32 %v4614, %v4625
        %v4632 = vadd.f32 %v4615, %v4627
        %v4633 = vadd.f32 %v4616, %v4626
        %v4634 = vmul.f32 %v4388, %v4506
        %v4635 = vmul.f32 %v4389, %v4506
        %v4636 = vmul.f32 %v4390, %v4506
        %v4640 = vrot.slane %v4634, 1
        %v4641 = vrot.slane %v4635, 1
        %v4642 = vsel %vm1277, %v4640, %v4641
        %v4643 = vrot.slane %v4636, 1
        %v4644 = vsel %vm1277, %v4641, %v4643
        %v4648 = vadd.f32 %v4631, %v4642
        %v4649 = vadd.f32 %v4632, %v4644
        %v4650 = vadd.f32 %v4633, %v4643
        %v4651 = vmul.f32 %v2025, %v4527
        %v4652 = vmul.f32 %v2026, %v4527
        %v4653 = vmul.f32 %v2027, %v4527
        %v4657 = vrot.slane %v4651, 2
        %v4658 = vrot.slane %v4652, 2
        %v4659 = vsel %vm2351, %v4657, %v4658
        %v4660 = vrot.slane %v4653, 2
        %v4661 = vsel %vm2351, %v4658, %v4660
        %v4665 = vadd.f32 %v4648, %v4659
        %v4666 = vadd.f32 %v4649, %v4661
        %v4667 = vadd.f32 %v4650, %v4660
        %v4668 = vmul.f32 %v2831, %v4548
        %v4669 = vmul.f32 %v2832, %v4548
        %v4670 = vmul.f32 %v2833, %v4548
        %v4674 = vrot.slane %v4668, 2
        %v4675 = vrot.slane %v4669, 2
        %v4676 = vsel %vm2351, %v4674, %v4675
        %v4677 = vrot.slane %v4670, 2
        %v4678 = vsel %vm2351, %v4675, %v4677
        %v4682 = vadd.f32 %v4665, %v4676
        %v4683 = vadd.f32 %v4666, %v4678
        %v4684 = vadd.f32 %v4667, %v4677
        %v4685 = vpack.c.bf16 %v4683, %v4682
        %v4686 = vpack.c.bf16 %v4684, %v4684
        %v4703 = vunpack.c.l.b16 %v4393
        %v4704 = vunpack.c.h.b16 %v4393
        %v4705 = vunpack.c.l.b16 %v4394
        %v4706 = vunpack.c.h.b16 %v4394
        %v4707 = vunpack.c.l.b16 %v4395
        %v4708 = vunpack.c.h.b16 %v4395
        %v4709 = vunpack.c.l.b16 %v4396
        %v4710 = vunpack.c.h.b16 %v4396
        %v4711 = vunpack.c.l.b16 %v4397
        %v4712 = vunpack.c.h.b16 %v4397
        %v4713 = vunpack.c.l.b16 %v4398
        %v4714 = vunpack.c.h.b16 %v4398
        %v4715 = vunpack.c.l.b16 %v4399
        %v4716 = vunpack.c.h.b16 %v4399
        %v4717 = vunpack.c.l.b16 %v4400
        %v4718 = vunpack.c.h.b16 %v4400
        %v4719 = vunpack.c.l.b16 %v4401
        %v4720 = vunpack.c.h.b16 %v4401
        %v4721 = vunpack.c.l.b16 %v4402
        %v4722 = vunpack.c.h.b16 %v4402
        %v4723 = vunpack.c.l.b16 %v4403
        %v4724 = vunpack.c.h.b16 %v4403
        %v4725 = vunpack.c.l.b16 %v4404
        %v4726 = vunpack.c.h.b16 %v4404
        %v4727 = vunpack.c.l.b16 %v4405
        %v4728 = vunpack.c.h.b16 %v4405
        %v4729 = vunpack.c.l.b16 %v4406
        %v4730 = vunpack.c.h.b16 %v4406
        %v4731 = vunpack.c.l.b16 %v4407
        %v4732 = vunpack.c.h.b16 %v4407
        %v4733 = vunpack.c.l.b16 %v4408
        %v4734 = vunpack.c.h.b16 %v4408
        %v4735 = vpack.c.b16 %v4705, %v4703
        %v4736 = vpack.c.b16 %v4706, %v4704
        %v4737 = vpack.c.b16 %v4709, %v4707
        %v4738 = vpack.c.b16 %v4710, %v4708
        %v4739 = vpack.c.b16 %v4713, %v4711
        %v4740 = vpack.c.b16 %v4714, %v4712
        %v4741 = vpack.c.b16 %v4717, %v4715
        %v4742 = vpack.c.b16 %v4718, %v4716
        %v4743 = vpack.c.b16 %v4721, %v4719
        %v4744 = vpack.c.b16 %v4722, %v4720
        %v4745 = vpack.c.b16 %v4725, %v4723
        %v4746 = vpack.c.b16 %v4726, %v4724
        %v4747 = vpack.c.b16 %v4729, %v4727
        %v4748 = vpack.c.b16 %v4730, %v4728
        %v4749 = vpack.c.b16 %v4733, %v4731
        %v4750 = vpack.c.b16 %v4734, %v4732
        %4767 = vmatprep.subr.bf16.mxu0 %v4750
        %4768 = vmatpush1.bf16.msra.mxu0 %v4749
        %4769 = vmatprep.subr.bf16.mxu0 %v4748
        %4770 = vmatpush1.bf16.msra.mxu0 %v4747
        %4771 = vmatprep.subr.bf16.mxu0 %v4746
        %4772 = vmatpush1.bf16.msra.mxu0 %v4745
        %4773 = vmatprep.subr.bf16.mxu0 %v4744
        %4774 = vmatpush1.bf16.msra.mxu0 %v4743
        %4775 = vmatprep.subr.bf16.mxu0 %v4742
        %4776 = vmatpush1.bf16.msra.mxu0 %v4741
        %4777 = vmatprep.subr.bf16.mxu0 %v4740
        %4778 = vmatpush1.bf16.msra.mxu0 %v4739
        %4779 = vmatprep.subr.bf16.mxu0 %v4738
        %4780 = vmatpush1.bf16.msra.mxu0 %v4737
        %4781 = vmatprep.subr.bf16.mxu0 %v4736
        %4782 = vmatpush1.bf16.msra.mxu0 %v4735
        %4783 = vmatprep.subr.bf16.mxu0 0
        %4784 = vmatpush2.bf16.msra.mxu0 0
        %4785 = vmatprep.subr.bf16.mxu0 0
        %4786 = vmatpush2.bf16.msra.mxu0 0
        %4787 = vmatprep.subr.bf16.mxu0 0
        %4788 = vmatpush2.bf16.msra.mxu0 0
        %4789 = vmatprep.subr.bf16.mxu0 0
        %4790 = vmatpush2.bf16.msra.mxu0 0
        %4791 = vmatprep.subr.bf16.mxu0 0
        %4792 = vmatpush2.bf16.msra.mxu0 0
        %4793 = vmatprep.subr.bf16.mxu0 0
        %4794 = vmatpush2.bf16.msra.mxu0 0
        %4795 = vmatprep.subr.bf16.mxu0 0
        %4796 = vmatpush2.bf16.msra.mxu0 0
        %4797 = vmatprep.subr.bf16.mxu0 0
        %4798 = vmatpush2.bf16.msra.mxu0 0
        %4799 = vmatprep.mubr.bf16.mxu0 0
        %4800 = vmatmul.mubr.bf16.gmra.mxu0 %v4566
        %v4801 = vpop.f32.mrf.mxu0
        %v4802 = vadd.f32 0.0, %v4801
        %v4803 = vpop.f32.mrf.mxu0
        %v4804 = vadd.f32 0.0, %v4803
        %v4805 = vpop.f32.mrf.mxu0
        %v4806 = vadd.f32 0.0, %v4805
        %v4807 = vpop.f32.mrf.mxu0
        %v4808 = vadd.f32 0.0, %v4807
        %4809 = vmatprep.mubr.bf16.mxu0 0
        %4810 = vmatmul.mubr.bf16.gmra.mxu0 %v4567
        %v4811 = vpop.f32.mrf.mxu0
        %v4812 = vadd.f32 0.0, %v4811
        %v4813 = vpop.f32.mrf.mxu0
        %v4814 = vadd.f32 0.0, %v4813
        %v4815 = vpop.f32.mrf.mxu0
        %v4816 = vpop.f32.mrf.mxu0
        %4817 = vdwg.mxu0
        %4818 = vmatprep.subr.bf16.mxu0 %v4750
        %4819 = vmatpush1.bf16.msra.mxu0 %v4749
        %4820 = vmatprep.subr.bf16.mxu0 %v4748
        %4821 = vmatpush1.bf16.msra.mxu0 %v4747
        %4822 = vmatprep.subr.bf16.mxu0 %v4746
        %4823 = vmatpush1.bf16.msra.mxu0 %v4745
        %4824 = vmatprep.subr.bf16.mxu0 %v4744
        %4825 = vmatpush1.bf16.msra.mxu0 %v4743
        %4826 = vmatprep.subr.bf16.mxu0 %v4742
        %4827 = vmatpush1.bf16.msra.mxu0 %v4741
        %4828 = vmatprep.subr.bf16.mxu0 %v4740
        %4829 = vmatpush1.bf16.msra.mxu0 %v4739
        %4830 = vmatprep.subr.bf16.mxu0 %v4738
        %4831 = vmatpush1.bf16.msra.mxu0 %v4737
        %4832 = vmatprep.subr.bf16.mxu0 %v4736
        %4833 = vmatpush1.bf16.msra.mxu0 %v4735
        %4834 = vmatprep.subr.bf16.mxu0 0
        %4835 = vmatpush2.bf16.msra.mxu0 0
        %4836 = vmatprep.subr.bf16.mxu0 0
        %4837 = vmatpush2.bf16.msra.mxu0 0
        %4838 = vmatprep.subr.bf16.mxu0 0
        %4839 = vmatpush2.bf16.msra.mxu0 0
        %4840 = vmatprep.subr.bf16.mxu0 0
        %4841 = vmatpush2.bf16.msra.mxu0 0
        %4842 = vmatprep.subr.bf16.mxu0 0
        %4843 = vmatpush2.bf16.msra.mxu0 0
        %4844 = vmatprep.subr.bf16.mxu0 0
        %4845 = vmatpush2.bf16.msra.mxu0 0
        %4846 = vmatprep.subr.bf16.mxu0 0
        %4847 = vmatpush2.bf16.msra.mxu0 0
        %4848 = vmatprep.subr.bf16.mxu0 0
        %4849 = vmatpush2.bf16.msra.mxu0 0
        %4850 = vmatprep.mubr.bf16.mxu0 0
        %4851 = vmatmul.mubr.bf16.gmra.mxu0 %v4685
        %v4852 = vpop.f32.mrf.mxu0
        %v4853 = vadd.f32 0.0, %v4852
        %v4854 = vpop.f32.mrf.mxu0
        %v4855 = vadd.f32 0.0, %v4854
        %v4856 = vpop.f32.mrf.mxu0
        %v4857 = vadd.f32 0.0, %v4856
        %v4858 = vpop.f32.mrf.mxu0
        %v4859 = vadd.f32 0.0, %v4858
        %4860 = vmatprep.mubr.bf16.mxu0 0
        %4861 = vmatmul.mubr.bf16.gmra.mxu0 %v4686
        %v4862 = vpop.f32.mrf.mxu0
        %v4863 = vadd.f32 0.0, %v4862
        %v4864 = vpop.f32.mrf.mxu0
        %v4865 = vadd.f32 0.0, %v4864
        %v4866 = vpop.f32.mrf.mxu0
        %v4867 = vpop.f32.mrf.mxu0
        %4868 = vdwg.mxu0
        %v4869 = vmax.f32 %v4802, %v4853
        %v4870 = vmax.f32 %v4804, %v4855
        %v4871 = vmax.f32 %v4806, %v4857
        %v4872 = vmax.f32 %v4808, %v4859
        %v4873 = vmax.f32 %v4812, %v4863
        %v4874 = vmax.f32 %v4814, %v4865
        %v4876 = vlaneseq
        %v4877 = vshrl.u32 %v4876, 7
        %v4878 = vsub.s32 0, %v4877
        %v4879 = vrot.slane %v4409, %v4878
        %v4880 = vlaneseq
        %v4881 = vshrl.u32 %v4880, 7
        %v4882 = vsub.s32 1, %v4881
        %v4883 = vrot.slane %v4409, %v4882
        %v4886 = vadd.f32 %v4869, %v4879
        %v4887 = vadd.f32 %v4870, %v4883
        %v4888 = vadd.f32 %v4871, %v4879
        %v4889 = vadd.f32 %v4872, %v4883
        %v4890 = vadd.f32 %v4873, %v4879
        %v4891 = vadd.f32 %v4874, %v4883
        %v4892 = vmul.f32 %v4886, 0.2
        %v4893 = vmul.f32 %v4887, 0.2
        %v4894 = vmul.f32 %v4888, 0.2
        %v4895 = vmul.f32 %v4889, 0.2
        %v4896 = vmul.f32 %v4890, 0.2
        %v4897 = vmul.f32 %v4891, 0.2
        %v4898 = vmax.f32 %v4886, %v4892
        %v4899 = vmax.f32 %v4887, %v4893
        %v4900 = vmax.f32 %v4888, %v4894
        %v4901 = vmax.f32 %v4889, %v4895
        %v4902 = vmax.f32 %v4890, %v4896
        %v4903 = vmax.f32 %v4891, %v4897
        %v4904 = vsel %vm4421, 1, 0
        %v4905 = vsel %vm4422, 1, 0
        %v4906 = vsel %vm4423, 1, 0
        %vm4907 = vcmp.eq.s32.totalorder %v4904, 1
        %vm4908 = vcmp.eq.s32.totalorder %v4905, 1
        %vm4909 = vcmp.eq.s32.totalorder %v4906, 1
        %v4910 = vsel %vm4907, %v4898, 0.0
        %v4911 = vsel %vm4907, %v4899, 0.0
        %v4912 = vsel %vm4908, %v4900, 0.0
        %v4913 = vsel %vm4908, %v4901, 0.0
        %v4914 = vsel %vm4909, %v4902, 0.0
        %v4915 = vsel %vm4909, %v4903, 0.0
        %v4916 = vmul.f32 %v3724, %v4427
        %v4917 = vmul.f32 %v3725, %v4427
        %v4918 = vmul.f32 %v3726, %v4427
        %v4919 = vmul.f32 %v4388, %v4434
        %v4920 = vmul.f32 %v4389, %v4434
        %v4921 = vmul.f32 %v4390, %v4434
        %v4922 = vadd.f32 %v4916, %v4919
        %v4923 = vadd.f32 %v4917, %v4920
        %v4924 = vadd.f32 %v4918, %v4921
        %v4925 = vmul.f32 %v2025, %v4444
        %v4926 = vmul.f32 %v2026, %v4444
        %v4927 = vmul.f32 %v2027, %v4444
        %v4931 = vrot.slane %v4925, 1
        %v4932 = vrot.slane %v4926, 1
        %v4933 = vsel %vm1277, %v4931, %v4932
        %v4934 = vrot.slane %v4927, 1
        %v4935 = vsel %vm1277, %v4932, %v4934
        %v4939 = vadd.f32 %v4922, %v4933
        %v4940 = vadd.f32 %v4923, %v4935
        %v4941 = vadd.f32 %v4924, %v4934
        %v4942 = vmul.f32 %v2831, %v4454
        %v4943 = vmul.f32 %v2832, %v4454
        %v4944 = vmul.f32 %v2833, %v4454
        %v4948 = vrot.slane %v4942, 1
        %v4949 = vrot.slane %v4943, 1
        %v4950 = vsel %vm1277, %v4948, %v4949
        %v4951 = vrot.slane %v4944, 1
        %v4952 = vsel %vm1277, %v4949, %v4951
        %v4956 = vadd.f32 %v4939, %v4950
        %v4957 = vadd.f32 %v4940, %v4952
        %v4958 = vadd.f32 %v4941, %v4951
        %v4959 = vmul.f32 %v3724, %v4464
        %v4960 = vmul.f32 %v3725, %v4464
        %v4961 = vmul.f32 %v3726, %v4464
        %v4965 = vrot.slane %v4959, 1
        %v4966 = vrot.slane %v4960, 1
        %v4967 = vsel %vm1277, %v4965, %v4966
        %v4968 = vrot.slane %v4961, 1
        %v4969 = vsel %vm1277, %v4966, %v4968
        %v4973 = vadd.f32 %v4956, %v4967
        %v4974 = vadd.f32 %v4957, %v4969
        %v4975 = vadd.f32 %v4958, %v4968
        %v4976 = vmul.f32 %v4388, %v4485
        %v4977 = vmul.f32 %v4389, %v4485
        %v4978 = vmul.f32 %v4390, %v4485
        %v4982 = vrot.slane %v4976, 1
        %v4983 = vrot.slane %v4977, 1
        %v4984 = vsel %vm1277, %v4982, %v4983
        %v4985 = vrot.slane %v4978, 1
        %v4986 = vsel %vm1277, %v4983, %v4985
        %v4990 = vadd.f32 %v4973, %v4984
        %v4991 = vadd.f32 %v4974, %v4986
        %v4992 = vadd.f32 %v4975, %v4985
        %v4993 = vmul.f32 %v2025, %v4506
        %v4994 = vmul.f32 %v2026, %v4506
        %v4995 = vmul.f32 %v2027, %v4506
        %v4999 = vrot.slane %v4993, 2
        %v5000 = vrot.slane %v4994, 2
        %v5001 = vsel %vm2351, %v4999, %v5000
        %v5002 = vrot.slane %v4995, 2
        %v5003 = vsel %vm2351, %v5000, %v5002
        %v5007 = vadd.f32 %v4990, %v5001
        %v5008 = vadd.f32 %v4991, %v5003
        %v5009 = vadd.f32 %v4992, %v5002
        %v5010 = vmul.f32 %v2831, %v4527
        %v5011 = vmul.f32 %v2832, %v4527
        %v5012 = vmul.f32 %v2833, %v4527
        %v5016 = vrot.slane %v5010, 2
        %v5017 = vrot.slane %v5011, 2
        %v5018 = vsel %vm2351, %v5016, %v5017
        %v5019 = vrot.slane %v5012, 2
        %v5020 = vsel %vm2351, %v5017, %v5019
        %v5024 = vadd.f32 %v5007, %v5018
        %v5025 = vadd.f32 %v5008, %v5020
        %v5026 = vadd.f32 %v5009, %v5019
        %v5027 = vmul.f32 %v3724, %v4548
        %v5028 = vmul.f32 %v3725, %v4548
        %v5029 = vmul.f32 %v3726, %v4548
        %v5033 = vrot.slane %v5027, 2
        %v5034 = vrot.slane %v5028, 2
        %v5035 = vsel %vm2351, %v5033, %v5034
        %v5036 = vrot.slane %v5029, 2
        %v5037 = vsel %vm2351, %v5034, %v5036
        %v5041 = vadd.f32 %v5024, %v5035
        %v5042 = vadd.f32 %v5025, %v5037
        %v5043 = vadd.f32 %v5026, %v5036
        %v5044 = vpack.c.bf16 %v5042, %v5041
        %v5045 = vpack.c.bf16 %v5043, %v5043
        %v5046 = vmul.f32 %v4388, %v4427
        %v5047 = vmul.f32 %v4389, %v4427
        %v5048 = vmul.f32 %v4390, %v4427
        %v5049 = vmul.f32 %v2025, %v4434
        %v5050 = vmul.f32 %v2026, %v4434
        %v5051 = vmul.f32 %v2027, %v4434
        %v5055 = vrot.slane %v5049, 1
        %v5056 = vrot.slane %v5050, 1
        %v5057 = vsel %vm1277, %v5055, %v5056
        %v5058 = vrot.slane %v5051, 1
        %v5059 = vsel %vm1277, %v5056, %v5058
        %v5063 = vadd.f32 %v5046, %v5057
        %v5064 = vadd.f32 %v5047, %v5059
        %v5065 = vadd.f32 %v5048, %v5058
        %v5066 = vmul.f32 %v2831, %v4444
        %v5067 = vmul.f32 %v2832, %v4444
        %v5068 = vmul.f32 %v2833, %v4444
        %v5072 = vrot.slane %v5066, 1
        %v5073 = vrot.slane %v5067, 1
        %v5074 = vsel %vm1277, %v5072, %v5073
        %v5075 = vrot.slane %v5068, 1
        %v5076 = vsel %vm1277, %v5073, %v5075
        %v5080 = vadd.f32 %v5063, %v5074
        %v5081 = vadd.f32 %v5064, %v5076
        %v5082 = vadd.f32 %v5065, %v5075
        %v5083 = vmul.f32 %v3724, %v4454
        %v5084 = vmul.f32 %v3725, %v4454
        %v5085 = vmul.f32 %v3726, %v4454
        %v5089 = vrot.slane %v5083, 1
        %v5090 = vrot.slane %v5084, 1
        %v5091 = vsel %vm1277, %v5089, %v5090
        %v5092 = vrot.slane %v5085, 1
        %v5093 = vsel %vm1277, %v5090, %v5092
        %v5097 = vadd.f32 %v5080, %v5091
        %v5098 = vadd.f32 %v5081, %v5093
        %v5099 = vadd.f32 %v5082, %v5092
        %v5100 = vmul.f32 %v4388, %v4464
        %v5101 = vmul.f32 %v4389, %v4464
        %v5102 = vmul.f32 %v4390, %v4464
        %v5106 = vrot.slane %v5100, 1
        %v5107 = vrot.slane %v5101, 1
        %v5108 = vsel %vm1277, %v5106, %v5107
        %v5109 = vrot.slane %v5102, 1
        %v5110 = vsel %vm1277, %v5107, %v5109
        %v5114 = vadd.f32 %v5097, %v5108
        %v5115 = vadd.f32 %v5098, %v5110
        %v5116 = vadd.f32 %v5099, %v5109
        %v5117 = vmul.f32 %v2025, %v4485
        %v5118 = vmul.f32 %v2026, %v4485
        %v5119 = vmul.f32 %v2027, %v4485
        %v5123 = vrot.slane %v5117, 2
        %v5124 = vrot.slane %v5118, 2
        %v5125 = vsel %vm2351, %v5123, %v5124
        %v5126 = vrot.slane %v5119, 2
        %v5127 = vsel %vm2351, %v5124, %v5126
        %v5131 = vadd.f32 %v5114, %v5125
        %v5132 = vadd.f32 %v5115, %v5127
        %v5133 = vadd.f32 %v5116, %v5126
        %v5134 = vmul.f32 %v2831, %v4506
        %v5135 = vmul.f32 %v2832, %v4506
        %v5136 = vmul.f32 %v2833, %v4506
        %v5140 = vrot.slane %v5134, 2
        %v5141 = vrot.slane %v5135, 2
        %v5142 = vsel %vm2351, %v5140, %v5141
        %v5143 = vrot.slane %v5136, 2
        %v5144 = vsel %vm2351, %v5141, %v5143
        %v5148 = vadd.f32 %v5131, %v5142
        %v5149 = vadd.f32 %v5132, %v5144
        %v5150 = vadd.f32 %v5133, %v5143
        %v5151 = vmul.f32 %v3724, %v4527
        %v5152 = vmul.f32 %v3725, %v4527
        %v5153 = vmul.f32 %v3726, %v4527
        %v5157 = vrot.slane %v5151, 2
        %v5158 = vrot.slane %v5152, 2
        %v5159 = vsel %vm2351, %v5157, %v5158
        %v5160 = vrot.slane %v5153, 2
        %v5161 = vsel %vm2351, %v5158, %v5160
        %v5165 = vadd.f32 %v5148, %v5159
        %v5166 = vadd.f32 %v5149, %v5161
        %v5167 = vadd.f32 %v5150, %v5160
        %v5168 = vmul.f32 %v4388, %v4548
        %v5169 = vmul.f32 %v4389, %v4548
        %v5170 = vmul.f32 %v4390, %v4548
        %v5174 = vrot.slane %v5168, 2
        %v5175 = vrot.slane %v5169, 2
        %v5176 = vsel %vm2351, %v5174, %v5175
        %v5177 = vrot.slane %v5170, 2
        %v5178 = vsel %vm2351, %v5175, %v5177
        %v5182 = vadd.f32 %v5165, %v5176
        %v5183 = vadd.f32 %v5166, %v5178
        %v5184 = vadd.f32 %v5167, %v5177
        %v5185 = vpack.c.bf16 %v5183, %v5182
        %v5186 = vpack.c.bf16 %v5184, %v5184
        %5187 = vmatprep.subr.bf16.mxu0 %v4750
        %5188 = vmatpush1.bf16.msra.mxu0 %v4749
        %5189 = vmatprep.subr.bf16.mxu0 %v4748
        %5190 = vmatpush1.bf16.msra.mxu0 %v4747
        %5191 = vmatprep.subr.bf16.mxu0 %v4746
        %5192 = vmatpush1.bf16.msra.mxu0 %v4745
        %5193 = vmatprep.subr.bf16.mxu0 %v4744
        %5194 = vmatpush1.bf16.msra.mxu0 %v4743
        %5195 = vmatprep.subr.bf16.mxu0 %v4742
        %5196 = vmatpush1.bf16.msra.mxu0 %v4741
        %5197 = vmatprep.subr.bf16.mxu0 %v4740
        %5198 = vmatpush1.bf16.msra.mxu0 %v4739
        %5199 = vmatprep.subr.bf16.mxu0 %v4738
        %5200 = vmatpush1.bf16.msra.mxu0 %v4737
        %5201 = vmatprep.subr.bf16.mxu0 %v4736
        %5202 = vmatpush1.bf16.msra.mxu0 %v4735
        %5203 = vmatprep.subr.bf16.mxu0 0
        %5204 = vmatpush2.bf16.msra.mxu0 0
        %5205 = vmatprep.subr.bf16.mxu0 0
        %5206 = vmatpush2.bf16.msra.mxu0 0
        %5207 = vmatprep.subr.bf16.mxu0 0
        %5208 = vmatpush2.bf16.msra.mxu0 0
        %5209 = vmatprep.subr.bf16.mxu0 0
        %5210 = vmatpush2.bf16.msra.mxu0 0
        %5211 = vmatprep.subr.bf16.mxu0 0
        %5212 = vmatpush2.bf16.msra.mxu0 0
        %5213 = vmatprep.subr.bf16.mxu0 0
        %5214 = vmatpush2.bf16.msra.mxu0 0
        %5215 = vmatprep.subr.bf16.mxu0 0
        %5216 = vmatpush2.bf16.msra.mxu0 0
        %5217 = vmatprep.subr.bf16.mxu0 0
        %5218 = vmatpush2.bf16.msra.mxu0 0
        %5219 = vmatprep.mubr.bf16.mxu0 0
        %5220 = vmatmul.mubr.bf16.gmra.mxu0 %v5044
        %v5221 = vpop.f32.mrf.mxu0
        %v5222 = vadd.f32 0.0, %v5221
        %v5223 = vpop.f32.mrf.mxu0
        %v5224 = vadd.f32 0.0, %v5223
        %v5225 = vpop.f32.mrf.mxu0
        %v5226 = vadd.f32 0.0, %v5225
        %v5227 = vpop.f32.mrf.mxu0
        %v5228 = vadd.f32 0.0, %v5227
        %5229 = vmatprep.mubr.bf16.mxu0 0
        %5230 = vmatmul.mubr.bf16.gmra.mxu0 %v5045
        %v5231 = vpop.f32.mrf.mxu0
        %v5232 = vadd.f32 0.0, %v5231
        %v5233 = vpop.f32.mrf.mxu0
        %v5234 = vadd.f32 0.0, %v5233
        %v5235 = vpop.f32.mrf.mxu0
        %v5236 = vpop.f32.mrf.mxu0
        %5237 = vdwg.mxu0
        %5238 = vmatprep.subr.bf16.mxu0 %v4750
        %5239 = vmatpush1.bf16.msra.mxu0 %v4749
        %5240 = vmatprep.subr.bf16.mxu0 %v4748
        %5241 = vmatpush1.bf16.msra.mxu0 %v4747
        %5242 = vmatprep.subr.bf16.mxu0 %v4746
        %5243 = vmatpush1.bf16.msra.mxu0 %v4745
        %5244 = vmatprep.subr.bf16.mxu0 %v4744
        %5245 = vmatpush1.bf16.msra.mxu0 %v4743
        %5246 = vmatprep.subr.bf16.mxu0 %v4742
        %5247 = vmatpush1.bf16.msra.mxu0 %v4741
        %5248 = vmatprep.subr.bf16.mxu0 %v4740
        %5249 = vmatpush1.bf16.msra.mxu0 %v4739
        %5250 = vmatprep.subr.bf16.mxu0 %v4738
        %5251 = vmatpush1.bf16.msra.mxu0 %v4737
        %5252 = vmatprep.subr.bf16.mxu0 %v4736
        %5253 = vmatpush1.bf16.msra.mxu0 %v4735
        %5254 = vmatprep.subr.bf16.mxu0 0
        %5255 = vmatpush2.bf16.msra.mxu0 0
        %5256 = vmatprep.subr.bf16.mxu0 0
        %5257 = vmatpush2.bf16.msra.mxu0 0
        %5258 = vmatprep.subr.bf16.mxu0 0
        %5259 = vmatpush2.bf16.msra.mxu0 0
        %5260 = vmatprep.subr.bf16.mxu0 0
        %5261 = vmatpush2.bf16.msra.mxu0 0
        %5262 = vmatprep.subr.bf16.mxu0 0
        %5263 = vmatpush2.bf16.msra.mxu0 0
        %5264 = vmatprep.subr.bf16.mxu0 0
        %5265 = vmatpush2.bf16.msra.mxu0 0
        %5266 = vmatprep.subr.bf16.mxu0 0
        %5267 = vmatpush2.bf16.msra.mxu0 0
        %5268 = vmatprep.subr.bf16.mxu0 0
        %5269 = vmatpush2.bf16.msra.mxu0 0
        %5270 = vmatprep.mubr.bf16.mxu0 0
        %5271 = vmatmul.mubr.bf16.gmra.mxu0 %v5185
        %v5272 = vpop.f32.mrf.mxu0
        %v5273 = vadd.f32 0.0, %v5272
        %v5274 = vpop.f32.mrf.mxu0
        %v5275 = vadd.f32 0.0, %v5274
        %v5276 = vpop.f32.mrf.mxu0
        %v5277 = vadd.f32 0.0, %v5276
        %v5278 = vpop.f32.mrf.mxu0
        %v5279 = vadd.f32 0.0, %v5278
        %5280 = vmatprep.mubr.bf16.mxu0 0
        %5281 = vmatmul.mubr.bf16.gmra.mxu0 %v5186
        %v5282 = vpop.f32.mrf.mxu0
        %v5283 = vadd.f32 0.0, %v5282
        %v5284 = vpop.f32.mrf.mxu0
        %v5285 = vadd.f32 0.0, %v5284
        %v5286 = vpop.f32.mrf.mxu0
        %v5287 = vpop.f32.mrf.mxu0
        %5288 = vdwg.mxu0
        %v5289 = vmax.f32 %v5222, %v5273
        %v5290 = vmax.f32 %v5224, %v5275
        %v5291 = vmax.f32 %v5226, %v5277
        %v5292 = vmax.f32 %v5228, %v5279
        %v5293 = vmax.f32 %v5232, %v5283
        %v5294 = vmax.f32 %v5234, %v5285
        %v5295 = vadd.f32 %v5289, %v4879
        %v5296 = vadd.f32 %v5290, %v4883
        %v5297 = vadd.f32 %v5291, %v4879
        %v5298 = vadd.f32 %v5292, %v4883
        %v5299 = vadd.f32 %v5293, %v4879
        %v5300 = vadd.f32 %v5294, %v4883
        %v5301 = vmul.f32 %v5295, 0.2
        %v5302 = vmul.f32 %v5296, 0.2
        %v5303 = vmul.f32 %v5297, 0.2
        %v5304 = vmul.f32 %v5298, 0.2
        %v5305 = vmul.f32 %v5299, 0.2
        %v5306 = vmul.f32 %v5300, 0.2
        %v5307 = vmax.f32 %v5295, %v5301
        %v5308 = vmax.f32 %v5296, %v5302
        %v5309 = vmax.f32 %v5297, %v5303
        %v5310 = vmax.f32 %v5298, %v5304
        %v5311 = vmax.f32 %v5299, %v5305
        %v5312 = vmax.f32 %v5300, %v5306
        %v5313 = vsel %vm4907, %v5307, 0.0
        %v5314 = vsel %vm4907, %v5308, 0.0
        %v5315 = vsel %vm4908, %v5309, 0.0
        %v5316 = vsel %vm4908, %v5310, 0.0
        %v5317 = vsel %vm4909, %v5311, 0.0
        %v5318 = vsel %vm4909, %v5312, 0.0
        %v5319 = vld [vmem:[%s9] sm:$0xff]
        %v5320 = vld [vmem:[%s9 + $0x8] sm:$0xff]
        %v5321 = vld [vmem:[%s9 + $0x10] sm:$0x1]
        %v5322 = vld [vmem:[%s9 + $0x18] sm:$0x1]
        %v5323 = vld [vmem:[%s10] sm:$0xff]
        %v5324 = vld [vmem:[%s10 + $0x8] sm:$0xff]
        %v5325 = vld [vmem:[%s10 + $0x10] sm:$0xff]
        %v5326 = vld [vmem:[%s10 + $0x18] sm:$0xff]
        %v5327 = vld [vmem:[%s10 + $0x20] sm:$0xff]
        %v5328 = vld [vmem:[%s10 + $0x28] sm:$0xff]
        %v5329 = vld [vmem:[%s10 + $0x30] sm:$0xff]
        %v5330 = vld [vmem:[%s10 + $0x38] sm:$0xff]
        %v5331 = vld [vmem:[%s10 + $0x40] sm:$0xff]
        %v5332 = vld [vmem:[%s10 + $0x48] sm:$0xff]
        %v5333 = vld [vmem:[%s10 + $0x50] sm:$0xff]
        %v5334 = vld [vmem:[%s10 + $0x58] sm:$0xff]
        %v5335 = vld [vmem:[%s10 + $0x60] sm:$0xff]
        %v5336 = vld [vmem:[%s10 + $0x68] sm:$0xff]
        %v5337 = vld [vmem:[%s10 + $0x70] sm:$0xff]
        %v5338 = vld [vmem:[%s10 + $0x78] sm:$0xff]
        %v5339 = vld [vmem:[%s10 + $0x80] sm:$0xff]
        %v5340 = vld [vmem:[%s10 + $0x88] sm:$0xff]
        %v5341 = vld [vmem:[%s10 + $0x90] sm:$0xff]
        %v5342 = vld [vmem:[%s10 + $0x98] sm:$0xff]
        %v5343 = vld [vmem:[%s10 + $0xa0] sm:$0xff]
        %v5344 = vld [vmem:[%s10 + $0xa8] sm:$0xff]
        %v5345 = vld [vmem:[%s10 + $0xb0] sm:$0xff]
        %v5346 = vld [vmem:[%s10 + $0xb8] sm:$0xff]
        %v5347 = vld [vmem:[%s10 + $0xc0] sm:$0xff]
        %v5348 = vld [vmem:[%s10 + $0xc8] sm:$0xff]
        %v5349 = vld [vmem:[%s10 + $0xd0] sm:$0xff]
        %v5350 = vld [vmem:[%s10 + $0xd8] sm:$0xff]
        %v5351 = vld [vmem:[%s10 + $0xe0] sm:$0xff]
        %v5352 = vld [vmem:[%s10 + $0xe8] sm:$0xff]
        %v5353 = vld [vmem:[%s10 + $0xf0] sm:$0xff]
        %v5354 = vld [vmem:[%s10 + $0xf8] sm:$0xff]
        %v5355 = vld [vmem:[%s11] sm:$0x3]
        %v5356 = vlaneseq
        %v5357 = vshrl.u32 %v5356, 7
        %v5358 = vsub.s32 0, %v5357
        %v5359 = vrot.slane %v5319, %v5358
        %v5360 = vlaneseq
        %v5361 = vshrl.u32 %v5360, 7
        %v5362 = vsub.s32 0, %v5361
        %v5363 = vrot.slane %v5320, %v5362
        %v5364 = vmul.f32 %v4910, %v5359
        %v5365 = vmul.f32 %v4911, %v5363
        %v5366 = vmul.f32 %v4912, %v5359
        %v5367 = vmul.f32 %v4913, %v5363
        %v5368 = vlaneseq
        %v5369 = vshrl.u32 %v5368, 7
        %v5370 = vsub.s32 1, %v5369
        %v5371 = vrot.slane %v5319, %v5370
        %v5372 = vlaneseq
        %v5373 = vshrl.u32 %v5372, 7
        %v5374 = vsub.s32 1, %v5373
        %v5375 = vrot.slane %v5320, %v5374
        %v5376 = vmul.f32 %v5313, %v5371
        %v5377 = vmul.f32 %v5314, %v5375
        %v5378 = vmul.f32 %v5315, %v5371
        %v5379 = vmul.f32 %v5316, %v5375
        %v5380 = vadd.f32 %v5364, %v5376
        %v5381 = vadd.f32 %v5365, %v5377
        %v5382 = vadd.f32 %v5366, %v5378
        %v5383 = vadd.f32 %v5367, %v5379
        %v5384 = vlaneseq
        %v5385 = vshrl.u32 %v5384, 7
        %v5386 = vsub.s32 2, %v5385
        %v5387 = vrot.slane %v5319, %v5386
        %v5388 = vlaneseq
        %v5389 = vshrl.u32 %v5388, 7
        %v5390 = vsub.s32 2, %v5389
        %v5391 = vrot.slane %v5320, %v5390
        %v5392 = vmul.f32 %v4910, %v5387
        %v5393 = vmul.f32 %v4911, %v5391
        %v5394 = vmul.f32 %v4912, %v5387
        %v5395 = vmul.f32 %v4913, %v5391
        %v5396 = vmul.f32 %v4914, %v5387
        %v5397 = vmul.f32 %v4915, %v5391
        %v5404 = vrot.slane %v5392, 1
        %v5405 = vrot.slane %v5394, 1
        %v5406 = vsel %vm1277, %v5404, %v5405
        %v5407 = vrot.slane %v5393, 1
        %v5408 = vrot.slane %v5395, 1
        %v5409 = vsel %vm1277, %v5407, %v5408
        %v5410 = vrot.slane %v5396, 1
        %v5411 = vsel %vm1277, %v5405, %v5410
        %v5412 = vrot.slane %v5397, 1
        %v5413 = vsel %vm1277, %v5408, %v5412
        %v5418 = vadd.f32 %v5380, %v5406
        %v5419 = vadd.f32 %v5381, %v5409
        %v5420 = vadd.f32 %v5382, %v5411
        %v5421 = vadd.f32 %v5383, %v5413
        %v5422 = vlaneseq
        %v5423 = vshrl.u32 %v5422, 7
        %v5424 = vsub.s32 3, %v5423
        %v5425 = vrot.slane %v5319, %v5424
        %v5426 = vlaneseq
        %v5427 = vshrl.u32 %v5426, 7
        %v5428 = vsub.s32 3, %v5427
        %v5429 = vrot.slane %v5320, %v5428
        %v5430 = vmul.f32 %v5313, %v5425
        %v5431 = vmul.f32 %v5314, %v5429
        %v5432 = vmul.f32 %v5315, %v5425
        %v5433 = vmul.f32 %v5316, %v5429
        %v5434 = vmul.f32 %v5317, %v5425
        %v5435 = vmul.f32 %v5318, %v5429
        %v5442 = vrot.slane %v5430, 1
        %v5443 = vrot.slane %v5432, 1
        %v5444 = vsel %vm1277, %v5442, %v5443
        %v5445 = vrot.slane %v5431, 1
        %v5446 = vrot.slane %v5433, 1
        %v5447 = vsel %vm1277, %v5445, %v5446
        %v5448 = vrot.slane %v5434, 1
        %v5449 = vsel %vm1277, %v5443, %v5448
        %v5450 = vrot.slane %v5435, 1
        %v5451 = vsel %vm1277, %v5446, %v5450
        %v5456 = vadd.f32 %v5418, %v5444
        %v5457 = vadd.f32 %v5419, %v5447
        %v5458 = vadd.f32 %v5420, %v5449
        %v5459 = vadd.f32 %v5421, %v5451
        %v5460 = vlaneseq
        %v5461 = vshrl.u32 %v5460, 7
        %v5462 = vsub.s32 4, %v5461
        %v5463 = vrot.slane %v5319, %v5462
        %v5464 = vlaneseq
        %v5465 = vshrl.u32 %v5464, 7
        %v5466 = vsub.s32 4, %v5465
        %v5467 = vrot.slane %v5320, %v5466
        %v5468 = vmul.f32 %v4910, %v5463
        %v5469 = vmul.f32 %v4911, %v5467
        %v5470 = vmul.f32 %v4912, %v5463
        %v5471 = vmul.f32 %v4913, %v5467
        %v5472 = vmul.f32 %v4914, %v5463
        %v5473 = vmul.f32 %v4915, %v5467
        %v5480 = vrot.slane %v5468, 2
        %v5481 = vrot.slane %v5470, 2
        %v5482 = vsel %vm2351, %v5480, %v5481
        %v5483 = vrot.slane %v5469, 2
        %v5484 = vrot.slane %v5471, 2
        %v5485 = vsel %vm2351, %v5483, %v5484
        %v5486 = vrot.slane %v5472, 2
        %v5487 = vsel %vm2351, %v5481, %v5486
        %v5488 = vrot.slane %v5473, 2
        %v5489 = vsel %vm2351, %v5484, %v5488
        %v5494 = vadd.f32 %v5456, %v5482
        %v5495 = vadd.f32 %v5457, %v5485
        %v5496 = vadd.f32 %v5458, %v5487
        %v5497 = vadd.f32 %v5459, %v5489
        %v5498 = vlaneseq
        %v5499 = vshrl.u32 %v5498, 7
        %v5500 = vsub.s32 5, %v5499
        %v5501 = vrot.slane %v5319, %v5500
        %v5502 = vlaneseq
        %v5503 = vshrl.u32 %v5502, 7
        %v5504 = vsub.s32 5, %v5503
        %v5505 = vrot.slane %v5320, %v5504
        %v5506 = vmul.f32 %v5313, %v5501
        %v5507 = vmul.f32 %v5314, %v5505
        %v5508 = vmul.f32 %v5315, %v5501
        %v5509 = vmul.f32 %v5316, %v5505
        %v5510 = vmul.f32 %v5317, %v5501
        %v5511 = vmul.f32 %v5318, %v5505
        %v5518 = vrot.slane %v5506, 2
        %v5519 = vrot.slane %v5508, 2
        %v5520 = vsel %vm2351, %v5518, %v5519
        %v5521 = vrot.slane %v5507, 2
        %v5522 = vrot.slane %v5509, 2
        %v5523 = vsel %vm2351, %v5521, %v5522
        %v5524 = vrot.slane %v5510, 2
        %v5525 = vsel %vm2351, %v5519, %v5524
        %v5526 = vrot.slane %v5511, 2
        %v5527 = vsel %vm2351, %v5522, %v5526
        %v5532 = vadd.f32 %v5494, %v5520
        %v5533 = vadd.f32 %v5495, %v5523
        %v5534 = vadd.f32 %v5496, %v5525
        %v5535 = vadd.f32 %v5497, %v5527
        %v5536 = vlaneseq
        %v5537 = vshrl.u32 %v5536, 7
        %v5538 = vsub.s32 6, %v5537
        %v5539 = vrot.slane %v5319, %v5538
        %v5540 = vlaneseq
        %v5541 = vshrl.u32 %v5540, 7
        %v5542 = vsub.s32 6, %v5541
        %v5543 = vrot.slane %v5320, %v5542
        %v5544 = vmul.f32 %v4910, %v5539
        %v5545 = vmul.f32 %v4911, %v5543
        %v5546 = vmul.f32 %v4912, %v5539
        %v5547 = vmul.f32 %v4913, %v5543
        %v5548 = vmul.f32 %v4914, %v5539
        %v5549 = vmul.f32 %v4915, %v5543
        %vm5556 = vcmask 1044480
        %v5557 = vrot.slane %v5544, 3
        %v5558 = vrot.slane %v5546, 3
        %v5559 = vsel %vm5556, %v5557, %v5558
        %v5560 = vrot.slane %v5545, 3
        %v5561 = vrot.slane %v5547, 3
        %v5562 = vsel %vm5556, %v5560, %v5561
        %v5563 = vrot.slane %v5548, 3
        %v5564 = vsel %vm5556, %v5558, %v5563
        %v5565 = vrot.slane %v5549, 3
        %v5566 = vsel %vm5556, %v5561, %v5565
        %v5571 = vadd.f32 %v5532, %v5559
        %v5572 = vadd.f32 %v5533, %v5562
        %v5573 = vadd.f32 %v5534, %v5564
        %v5574 = vadd.f32 %v5535, %v5566
        %v5575 = vlaneseq
        %v5576 = vshrl.u32 %v5575, 7
        %v5577 = vsub.s32 7, %v5576
        %v5578 = vrot.slane %v5319, %v5577
        %v5579 = vlaneseq
        %v5580 = vshrl.u32 %v5579, 7
        %v5581 = vsub.s32 7, %v5580
        %v5582 = vrot.slane %v5320, %v5581
        %v5583 = vmul.f32 %v5313, %v5578
        %v5584 = vmul.f32 %v5314, %v5582
        %v5585 = vmul.f32 %v5315, %v5578
        %v5586 = vmul.f32 %v5316, %v5582
        %v5587 = vmul.f32 %v5317, %v5578
        %v5588 = vmul.f32 %v5318, %v5582
        %v5595 = vrot.slane %v5583, 3
        %v5596 = vrot.slane %v5585, 3
        %v5597 = vsel %vm5556, %v5595, %v5596
        %v5598 = vrot.slane %v5584, 3
        %v5599 = vrot.slane %v5586, 3
        %v5600 = vsel %vm5556, %v5598, %v5599
        %v5601 = vrot.slane %v5587, 3
        %v5602 = vsel %vm5556, %v5596, %v5601
        %v5603 = vrot.slane %v5588, 3
        %v5604 = vsel %vm5556, %v5599, %v5603
        %v5609 = vadd.f32 %v5571, %v5597
        %v5610 = vadd.f32 %v5572, %v5600
        %v5611 = vadd.f32 %v5573, %v5602
        %v5612 = vadd.f32 %v5574, %v5604
        %v5613 = vlaneseq
        %v5614 = vshrl.u32 %v5613, 7
        %v5615 = vsub.s32 0, %v5614
        %v5616 = vrot.slane %v5321, %v5615
        %v5617 = vlaneseq
        %v5618 = vshrl.u32 %v5617, 7
        %v5619 = vsub.s32 0, %v5618
        %v5620 = vrot.slane %v5322, %v5619
        %v5621 = vmul.f32 %v4910, %v5616
        %v5622 = vmul.f32 %v4911, %v5620
        %v5623 = vmul.f32 %v4912, %v5616
        %v5624 = vmul.f32 %v4913, %v5620
        %v5625 = vmul.f32 %v4914, %v5616
        %v5626 = vmul.f32 %v4915, %v5620
        %vm5633 = vcmask 1043456
        %v5634 = vrot.slane %v5621, 4
        %v5635 = vrot.slane %v5623, 4
        %v5636 = vsel %vm5633, %v5634, %v5635
        %v5637 = vrot.slane %v5622, 4
        %v5638 = vrot.slane %v5624, 4
        %v5639 = vsel %vm5633, %v5637, %v5638
        %v5640 = vrot.slane %v5625, 4
        %v5641 = vsel %vm5633, %v5635, %v5640
        %v5642 = vrot.slane %v5626, 4
        %v5643 = vsel %vm5633, %v5638, %v5642
        %v5648 = vadd.f32 %v5609, %v5636
        %v5649 = vadd.f32 %v5610, %v5639
        %v5650 = vadd.f32 %v5611, %v5641
        %v5651 = vadd.f32 %v5612, %v5643
        %v5652 = vpack.c.bf16 %v5650, %v5648
        %v5653 = vpack.c.bf16 %v5651, %v5649
        %v5654 = vmul.f32 %v5313, %v5359
        %v5655 = vmul.f32 %v5314, %v5363
        %v5656 = vmul.f32 %v5315, %v5359
        %v5657 = vmul.f32 %v5316, %v5363
        %v5658 = vmul.f32 %v4910, %v5371
        %v5659 = vmul.f32 %v4911, %v5375
        %v5660 = vmul.f32 %v4912, %v5371
        %v5661 = vmul.f32 %v4913, %v5375
        %v5662 = vmul.f32 %v4914, %v5371
        %v5663 = vmul.f32 %v4915, %v5375
        %v5670 = vrot.slane %v5658, 1
        %v5671 = vrot.slane %v5660, 1
        %v5672 = vsel %vm1277, %v5670, %v5671
        %v5673 = vrot.slane %v5659, 1
        %v5674 = vrot.slane %v5661, 1
        %v5675 = vsel %vm1277, %v5673, %v5674
        %v5676 = vrot.slane %v5662, 1
        %v5677 = vsel %vm1277, %v5671, %v5676
        %v5678 = vrot.slane %v5663, 1
        %v5679 = vsel %vm1277, %v5674, %v5678
        %v5684 = vadd.f32 %v5654, %v5672
        %v5685 = vadd.f32 %v5655, %v5675
        %v5686 = vadd.f32 %v5656, %v5677
        %v5687 = vadd.f32 %v5657, %v5679
        %v5688 = vmul.f32 %v5313, %v5387
        %v5689 = vmul.f32 %v5314, %v5391
        %v5690 = vmul.f32 %v5315, %v5387
        %v5691 = vmul.f32 %v5316, %v5391
        %v5692 = vmul.f32 %v5317, %v5387
        %v5693 = vmul.f32 %v5318, %v5391
        %v5700 = vrot.slane %v5688, 1
        %v5701 = vrot.slane %v5690, 1
        %v5702 = vsel %vm1277, %v5700, %v5701
        %v5703 = vrot.slane %v5689, 1
        %v5704 = vrot.slane %v5691, 1
        %v5705 = vsel %vm1277, %v5703, %v5704
        %v5706 = vrot.slane %v5692, 1
        %v5707 = vsel %vm1277, %v5701, %v5706
        %v5708 = vrot.slane %v5693, 1
        %v5709 = vsel %vm1277, %v5704, %v5708
        %v5714 = vadd.f32 %v5684, %v5702
        %v5715 = vadd.f32 %v5685, %v5705
        %v5716 = vadd.f32 %v5686, %v5707
        %v5717 = vadd.f32 %v5687, %v5709
        %v5718 = vmul.f32 %v4910, %v5425
        %v5719 = vmul.f32 %v4911, %v5429
        %v5720 = vmul.f32 %v4912, %v5425
        %v5721 = vmul.f32 %v4913, %v5429
        %v5722 = vmul.f32 %v4914, %v5425
        %v5723 = vmul.f32 %v4915, %v5429
        %v5730 = vrot.slane %v5718, 2
        %v5731 = vrot.slane %v5720, 2
        %v5732 = vsel %vm2351, %v5730, %v5731
        %v5733 = vrot.slane %v5719, 2
        %v5734 = vrot.slane %v5721, 2
        %v5735 = vsel %vm2351, %v5733, %v5734
        %v5736 = vrot.slane %v5722, 2
        %v5737 = vsel %vm2351, %v5731, %v5736
        %v5738 = vrot.slane %v5723, 2
        %v5739 = vsel %vm2351, %v5734, %v5738
        %v5744 = vadd.f32 %v5714, %v5732
        %v5745 = vadd.f32 %v5715, %v5735
        %v5746 = vadd.f32 %v5716, %v5737
        %v5747 = vadd.f32 %v5717, %v5739
        %v5748 = vmul.f32 %v5313, %v5463
        %v5749 = vmul.f32 %v5314, %v5467
        %v5750 = vmul.f32 %v5315, %v5463
        %v5751 = vmul.f32 %v5316, %v5467
        %v5752 = vmul.f32 %v5317, %v5463
        %v5753 = vmul.f32 %v5318, %v5467
        %v5760 = vrot.slane %v5748, 2
        %v5761 = vrot.slane %v5750, 2
        %v5762 = vsel %vm2351, %v5760, %v5761
        %v5763 = vrot.slane %v5749, 2
        %v5764 = vrot.slane %v5751, 2
        %v5765 = vsel %vm2351, %v5763, %v5764
        %v5766 = vrot.slane %v5752, 2
        %v5767 = vsel %vm2351, %v5761, %v5766
        %v5768 = vrot.slane %v5753, 2
        %v5769 = vsel %vm2351, %v5764, %v5768
        %v5774 = vadd.f32 %v5744, %v5762
        %v5775 = vadd.f32 %v5745, %v5765
        %v5776 = vadd.f32 %v5746, %v5767
        %v5777 = vadd.f32 %v5747, %v5769
        %v5778 = vmul.f32 %v4910, %v5501
        %v5779 = vmul.f32 %v4911, %v5505
        %v5780 = vmul.f32 %v4912, %v5501
        %v5781 = vmul.f32 %v4913, %v5505
        %v5782 = vmul.f32 %v4914, %v5501
        %v5783 = vmul.f32 %v4915, %v5505
        %v5790 = vrot.slane %v5778, 3
        %v5791 = vrot.slane %v5780, 3
        %v5792 = vsel %vm5556, %v5790, %v5791
        %v5793 = vrot.slane %v5779, 3
        %v5794 = vrot.slane %v5781, 3
        %v5795 = vsel %vm5556, %v5793, %v5794
        %v5796 = vrot.slane %v5782, 3
        %v5797 = vsel %vm5556, %v5791, %v5796
        %v5798 = vrot.slane %v5783, 3
        %v5799 = vsel %vm5556, %v5794, %v5798
        %v5804 = vadd.f32 %v5774, %v5792
        %v5805 = vadd.f32 %v5775, %v5795
        %v5806 = vadd.f32 %v5776, %v5797
        %v5807 = vadd.f32 %v5777, %v5799
        %v5808 = vmul.f32 %v5313, %v5539
        %v5809 = vmul.f32 %v5314, %v5543
        %v5810 = vmul.f32 %v5315, %v5539
        %v5811 = vmul.f32 %v5316, %v5543
        %v5812 = vmul.f32 %v5317, %v5539
        %v5813 = vmul.f32 %v5318, %v5543
        %v5820 = vrot.slane %v5808, 3
        %v5821 = vrot.slane %v5810, 3
        %v5822 = vsel %vm5556, %v5820, %v5821
        %v5823 = vrot.slane %v5809, 3
        %v5824 = vrot.slane %v5811, 3
        %v5825 = vsel %vm5556, %v5823, %v5824
        %v5826 = vrot.slane %v5812, 3
        %v5827 = vsel %vm5556, %v5821, %v5826
        %v5828 = vrot.slane %v5813, 3
        %v5829 = vsel %vm5556, %v5824, %v5828
        %v5834 = vadd.f32 %v5804, %v5822
        %v5835 = vadd.f32 %v5805, %v5825
        %v5836 = vadd.f32 %v5806, %v5827
        %v5837 = vadd.f32 %v5807, %v5829
        %v5838 = vmul.f32 %v4910, %v5578
        %v5839 = vmul.f32 %v4911, %v5582
        %v5840 = vmul.f32 %v4912, %v5578
        %v5841 = vmul.f32 %v4913, %v5582
        %v5842 = vmul.f32 %v4914, %v5578
        %v5843 = vmul.f32 %v4915, %v5582
        %v5850 = vrot.slane %v5838, 4
        %v5851 = vrot.slane %v5840, 4
        %v5852 = vsel %vm5633, %v5850, %v5851
        %v5853 = vrot.slane %v5839, 4
        %v5854 = vrot.slane %v5841, 4
        %v5855 = vsel %vm5633, %v5853, %v5854
        %v5856 = vrot.slane %v5842, 4
        %v5857 = vsel %vm5633, %v5851, %v5856
        %v5858 = vrot.slane %v5843, 4
        %v5859 = vsel %vm5633, %v5854, %v5858
        %v5864 = vadd.f32 %v5834, %v5852
        %v5865 = vadd.f32 %v5835, %v5855
        %v5866 = vadd.f32 %v5836, %v5857
        %v5867 = vadd.f32 %v5837, %v5859
        %v5868 = vmul.f32 %v5313, %v5616
        %v5869 = vmul.f32 %v5314, %v5620
        %v5870 = vmul.f32 %v5315, %v5616
        %v5871 = vmul.f32 %v5316, %v5620
        %v5872 = vmul.f32 %v5317, %v5616
        %v5873 = vmul.f32 %v5318, %v5620
        %v5880 = vrot.slane %v5868, 4
        %v5881 = vrot.slane %v5870, 4
        %v5882 = vsel %vm5633, %v5880, %v5881
        %v5883 = vrot.slane %v5869, 4
        %v5884 = vrot.slane %v5871, 4
        %v5885 = vsel %vm5633, %v5883, %v5884
        %v5886 = vrot.slane %v5872, 4
        %v5887 = vsel %vm5633, %v5881, %v5886
        %v5888 = vrot.slane %v5873, 4
        %v5889 = vsel %vm5633, %v5884, %v5888
        %v5894 = vadd.f32 %v5864, %v5882
        %v5895 = vadd.f32 %v5865, %v5885
        %v5896 = vadd.f32 %v5866, %v5887
        %v5897 = vadd.f32 %v5867, %v5889
        %v5898 = vpack.c.bf16 %v5896, %v5894
        %v5899 = vpack.c.bf16 %v5897, %v5895
        %v5932 = vunpack.c.l.b16 %v5323
        %v5933 = vunpack.c.h.b16 %v5323
        %v5934 = vunpack.c.l.b16 %v5324
        %v5935 = vunpack.c.h.b16 %v5324
        %v5936 = vunpack.c.l.b16 %v5325
        %v5937 = vunpack.c.h.b16 %v5325
        %v5938 = vunpack.c.l.b16 %v5326
        %v5939 = vunpack.c.h.b16 %v5326
        %v5940 = vunpack.c.l.b16 %v5327
        %v5941 = vunpack.c.h.b16 %v5327
        %v5942 = vunpack.c.l.b16 %v5328
        %v5943 = vunpack.c.h.b16 %v5328
        %v5944 = vunpack.c.l.b16 %v5329
        %v5945 = vunpack.c.h.b16 %v5329
        %v5946 = vunpack.c.l.b16 %v5330
        %v5947 = vunpack.c.h.b16 %v5330
        %v5948 = vunpack.c.l.b16 %v5331
        %v5949 = vunpack.c.h.b16 %v5331
        %v5950 = vunpack.c.l.b16 %v5332
        %v5951 = vunpack.c.h.b16 %v5332
        %v5952 = vunpack.c.l.b16 %v5333
        %v5953 = vunpack.c.h.b16 %v5333
        %v5954 = vunpack.c.l.b16 %v5334
        %v5955 = vunpack.c.h.b16 %v5334
        %v5956 = vunpack.c.l.b16 %v5335
        %v5957 = vunpack.c.h.b16 %v5335
        %v5958 = vunpack.c.l.b16 %v5336
        %v5959 = vunpack.c.h.b16 %v5336
        %v5960 = vunpack.c.l.b16 %v5337
        %v5961 = vunpack.c.h.b16 %v5337
        %v5962 = vunpack.c.l.b16 %v5338
        %v5963 = vunpack.c.h.b16 %v5338
        %v5964 = vunpack.c.l.b16 %v5339
        %v5965 = vunpack.c.h.b16 %v5339
        %v5966 = vunpack.c.l.b16 %v5340
        %v5967 = vunpack.c.h.b16 %v5340
        %v5968 = vunpack.c.l.b16 %v5341
        %v5969 = vunpack.c.h.b16 %v5341
        %v5970 = vunpack.c.l.b16 %v5342
        %v5971 = vunpack.c.h.b16 %v5342
        %v5972 = vunpack.c.l.b16 %v5343
        %v5973 = vunpack.c.h.b16 %v5343
        %v5974 = vunpack.c.l.b16 %v5344
        %v5975 = vunpack.c.h.b16 %v5344
        %v5976 = vunpack.c.l.b16 %v5345
        %v5977 = vunpack.c.h.b16 %v5345
        %v5978 = vunpack.c.l.b16 %v5346
        %v5979 = vunpack.c.h.b16 %v5346
        %v5980 = vunpack.c.l.b16 %v5347
        %v5981 = vunpack.c.h.b16 %v5347
        %v5982 = vunpack.c.l.b16 %v5348
        %v5983 = vunpack.c.h.b16 %v5348
        %v5984 = vunpack.c.l.b16 %v5349
        %v5985 = vunpack.c.h.b16 %v5349
        %v5986 = vunpack.c.l.b16 %v5350
        %v5987 = vunpack.c.h.b16 %v5350
        %v5988 = vunpack.c.l.b16 %v5351
        %v5989 = vunpack.c.h.b16 %v5351
        %v5990 = vunpack.c.l.b16 %v5352
        %v5991 = vunpack.c.h.b16 %v5352
        %v5992 = vunpack.c.l.b16 %v5353
        %v5993 = vunpack.c.h.b16 %v5353
        %v5994 = vunpack.c.l.b16 %v5354
        %v5995 = vunpack.c.h.b16 %v5354
        %v5996 = vpack.c.b16 %v5934, %v5932
        %v5997 = vpack.c.b16 %v5935, %v5933
        %v5998 = vpack.c.b16 %v5938, %v5936
        %v5999 = vpack.c.b16 %v5939, %v5937
        %v6000 = vpack.c.b16 %v5942, %v5940
        %v6001 = vpack.c.b16 %v5943, %v5941
        %v6002 = vpack.c.b16 %v5946, %v5944
        %v6003 = vpack.c.b16 %v5947, %v5945
        %v6004 = vpack.c.b16 %v5950, %v5948
        %v6005 = vpack.c.b16 %v5951, %v5949
        %v6006 = vpack.c.b16 %v5954, %v5952
        %v6007 = vpack.c.b16 %v5955, %v5953
        %v6008 = vpack.c.b16 %v5958, %v5956
        %v6009 = vpack.c.b16 %v5959, %v5957
        %v6010 = vpack.c.b16 %v5962, %v5960
        %v6011 = vpack.c.b16 %v5963, %v5961
        %v6012 = vpack.c.b16 %v5966, %v5964
        %v6013 = vpack.c.b16 %v5967, %v5965
        %v6014 = vpack.c.b16 %v5970, %v5968
        %v6015 = vpack.c.b16 %v5971, %v5969
        %v6016 = vpack.c.b16 %v5974, %v5972
        %v6017 = vpack.c.b16 %v5975, %v5973
        %v6018 = vpack.c.b16 %v5978, %v5976
        %v6019 = vpack.c.b16 %v5979, %v5977
        %v6020 = vpack.c.b16 %v5982, %v5980
        %v6021 = vpack.c.b16 %v5983, %v5981
        %v6022 = vpack.c.b16 %v5986, %v5984
        %v6023 = vpack.c.b16 %v5987, %v5985
        %v6024 = vpack.c.b16 %v5990, %v5988
        %v6025 = vpack.c.b16 %v5991, %v5989
        %v6026 = vpack.c.b16 %v5994, %v5992
        %v6027 = vpack.c.b16 %v5995, %v5993
        %6060 = vmatprep.subr.bf16.mxu0 %v6011
        %6061 = vmatpush1.bf16.msra.mxu0 %v6010
        %6062 = vmatprep.subr.bf16.mxu0 %v6009
        %6063 = vmatpush1.bf16.msra.mxu0 %v6008
        %6064 = vmatprep.subr.bf16.mxu0 %v6007
        %6065 = vmatpush1.bf16.msra.mxu0 %v6006
        %6066 = vmatprep.subr.bf16.mxu0 %v6005
        %6067 = vmatpush1.bf16.msra.mxu0 %v6004
        %6068 = vmatprep.subr.bf16.mxu0 %v6003
        %6069 = vmatpush1.bf16.msra.mxu0 %v6002
        %6070 = vmatprep.subr.bf16.mxu0 %v6001
        %6071 = vmatpush1.bf16.msra.mxu0 %v6000
        %6072 = vmatprep.subr.bf16.mxu0 %v5999
        %6073 = vmatpush1.bf16.msra.mxu0 %v5998
        %6074 = vmatprep.subr.bf16.mxu0 %v5997
        %6075 = vmatpush1.bf16.msra.mxu0 %v5996
        %6076 = vmatprep.subr.bf16.mxu0 %v6027
        %6077 = vmatpush2.bf16.msra.mxu0 %v6026
        %6078 = vmatprep.subr.bf16.mxu0 %v6025
        %6079 = vmatpush2.bf16.msra.mxu0 %v6024
        %6080 = vmatprep.subr.bf16.mxu0 %v6023
        %6081 = vmatpush2.bf16.msra.mxu0 %v6022
        %6082 = vmatprep.subr.bf16.mxu0 %v6021
        %6083 = vmatpush2.bf16.msra.mxu0 %v6020
        %6084 = vmatprep.subr.bf16.mxu0 %v6019
        %6085 = vmatpush2.bf16.msra.mxu0 %v6018
        %6086 = vmatprep.subr.bf16.mxu0 %v6017
        %6087 = vmatpush2.bf16.msra.mxu0 %v6016
        %6088 = vmatprep.subr.bf16.mxu0 %v6015
        %6089 = vmatpush2.bf16.msra.mxu0 %v6014
        %6090 = vmatprep.subr.bf16.mxu0 %v6013
        %6091 = vmatpush2.bf16.msra.mxu0 %v6012
        %6092 = vmatprep.mubr.bf16.mxu0 %v5653
        %6093 = vmatmul.mubr.bf16.gmra.mxu0 %v5652
        %v6094 = vpop.f32.mrf.mxu0
        %v6095 = vadd.f32 0.0, %v6094
        %v6096 = vpop.f32.mrf.mxu0
        %v6097 = vadd.f32 0.0, %v6096
        %v6098 = vpop.f32.mrf.mxu0
        %v6099 = vadd.f32 0.0, %v6098
        %v6100 = vpop.f32.mrf.mxu0
        %v6101 = vadd.f32 0.0, %v6100
        %6102 = vdwg.mxu0
        %6103 = vmatprep.subr.bf16.mxu0 %v6011
        %6104 = vmatpush1.bf16.msra.mxu0 %v6010
        %6105 = vmatprep.subr.bf16.mxu0 %v6009
        %6106 = vmatpush1.bf16.msra.mxu0 %v6008
        %6107 = vmatprep.subr.bf16.mxu0 %v6007
        %6108 = vmatpush1.bf16.msra.mxu0 %v6006
        %6109 = vmatprep.subr.bf16.mxu0 %v6005
        %6110 = vmatpush1.bf16.msra.mxu0 %v6004
        %6111 = vmatprep.subr.bf16.mxu0 %v6003
        %6112 = vmatpush1.bf16.msra.mxu0 %v6002
        %6113 = vmatprep.subr.bf16.mxu0 %v6001
        %6114 = vmatpush1.bf16.msra.mxu0 %v6000
        %6115 = vmatprep.subr.bf16.mxu0 %v5999
        %6116 = vmatpush1.bf16.msra.mxu0 %v5998
        %6117 = vmatprep.subr.bf16.mxu0 %v5997
        %6118 = vmatpush1.bf16.msra.mxu0 %v5996
        %6119 = vmatprep.subr.bf16.mxu0 %v6027
        %6120 = vmatpush2.bf16.msra.mxu0 %v6026
        %6121 = vmatprep.subr.bf16.mxu0 %v6025
        %6122 = vmatpush2.bf16.msra.mxu0 %v6024
        %6123 = vmatprep.subr.bf16.mxu0 %v6023
        %6124 = vmatpush2.bf16.msra.mxu0 %v6022
        %6125 = vmatprep.subr.bf16.mxu0 %v6021
        %6126 = vmatpush2.bf16.msra.mxu0 %v6020
        %6127 = vmatprep.subr.bf16.mxu0 %v6019
        %6128 = vmatpush2.bf16.msra.mxu0 %v6018
        %6129 = vmatprep.subr.bf16.mxu0 %v6017
        %6130 = vmatpush2.bf16.msra.mxu0 %v6016
        %6131 = vmatprep.subr.bf16.mxu0 %v6015
        %6132 = vmatpush2.bf16.msra.mxu0 %v6014
        %6133 = vmatprep.subr.bf16.mxu0 %v6013
        %6134 = vmatpush2.bf16.msra.mxu0 %v6012
        %6135 = vmatprep.mubr.bf16.mxu0 %v5899
        %6136 = vmatmul.mubr.bf16.gmra.mxu0 %v5898
        %v6137 = vpop.f32.mrf.mxu0
        %v6138 = vadd.f32 0.0, %v6137
        %v6139 = vpop.f32.mrf.mxu0
        %v6140 = vadd.f32 0.0, %v6139
        %v6141 = vpop.f32.mrf.mxu0
        %v6142 = vadd.f32 0.0, %v6141
        %v6143 = vpop.f32.mrf.mxu0
        %v6144 = vadd.f32 0.0, %v6143
        %6145 = vdwg.mxu0
        %v6146 = vmax.f32 %v6095, %v6138
        %v6147 = vmax.f32 %v6097, %v6140
        %v6148 = vmax.f32 %v6099, %v6142
        %v6149 = vmax.f32 %v6101, %v6144
        %v6151 = vlaneseq
        %v6152 = vshrl.u32 %v6151, 7
        %v6153 = vsub.s32 0, %v6152
        %v6154 = vrot.slane %v5355, %v6153
        %v6155 = vlaneseq
        %v6156 = vshrl.u32 %v6155, 7
        %v6157 = vsub.s32 1, %v6156
        %v6158 = vrot.slane %v5355, %v6157
        %v6161 = vadd.f32 %v6146, %v6154
        %v6162 = vadd.f32 %v6147, %v6158
        %v6163 = vadd.f32 %v6148, %v6154
        %v6164 = vadd.f32 %v6149, %v6158
        %v6165 = vmul.f32 %v6161, 0.2
        %v6166 = vmul.f32 %v6162, 0.2
        %v6167 = vmul.f32 %v6163, 0.2
        %v6168 = vmul.f32 %v6164, 0.2
        %v6169 = vmax.f32 %v6161, %v6165
        %v6170 = vmax.f32 %v6162, %v6166
        %v6171 = vmax.f32 %v6163, %v6167
        %v6172 = vmax.f32 %v6164, %v6168
        %6173 = vst [vmem:[%s430] sm:$0xff] %v6169
        %6174 = vst [vmem:[%s430 + $0x8] sm:$0xff] %v6170
        %6175 = vst [vmem:[%s430 + $0x10] sm:$0xff] %v6171
        %6176 = vst [vmem:[%s430 + $0x18] sm:$0xff] %v6172
        %s6177 = sand.u32 %s307, 1
        %s6178 = scalar_lea.sflag [#allocation3], %s6177
        %s6179 = sand.u32 %s307, 1
        %s6180 = smul.addr %s6179, 32
        %s6181 = scalar_lea.vmem [#allocation2], %s6180
        // Predicated region
        $region69: #{encoder_forward.1} parent=67 // pred_check
          %p6182 = pneg %p317
        $region70: #{encoder_forward.1} parent=67 // pred_check_branch
          %6184 = sbr.rel (%p6182) target = $region72
        $region71: #{encoder_forward.1} parent=67 // pred_region
          %s6186 = ssub.s32 512, 512
          %6187 = vsyncadd %s6178, %s6186
          %s6188 = smul.addr %s31, 4
          %s6189 = smul.addr %s30, 4
          %s6190 = sadd.s32 %s6188, %s6189
          %s6191 = smul.addr %s6190, 128
          %s6192 = scalar_lea.hbm %s12, %s6191
          %s6193 = sshll.u32 %s6181, 4
          %s6194 = int_to_ptr.vmem [resolvable:$true] %s6193
          %6199 = dma.vmem_to_hbm [thread:$0]  %s6194, 512, %s6192, %s6178, 256, 256, 16
        $region72: #{encoder_forward.1} parent=67 // pred_fallthru
          _
      $region68: #{encoder_forward.1} parent=5 // pred_fallthru
        _
      %p6200 = scmp.le.s32.totalorder 2, %s21
      // Predicated region
      $region73: #{encoder_forward.1} parent=5 // pred_check
        %p6201 = pneg %p6200
      $region74: #{encoder_forward.1} parent=5 // pred_check_branch
        %6203 = sbr.rel (%p6201) target = $region76
      $region75: #{encoder_forward.1} parent=5 // pred_region
        %s6204 = ssub.s32 %s21, 2
        // Predicated region
        $region77: #{encoder_forward.1} parent=75 // pred_check
          %p6205 = pneg %p323
        $region78: #{encoder_forward.1} parent=75 // pred_check_branch
          %6207 = sbr.rel (%p6205) target = $region80
        $region79: #{encoder_forward.1} parent=75 // pred_region
          %s6208 = sand.u32 %s308, 1
          %s6209 = scalar_lea.sflag [#allocation3], %s6208
          %s6210 = sand.u32 %s308, 1
          %s6211 = smul.addr %s6210, 32
          %s6212 = scalar_lea.vmem [#allocation2], %s6211
          %6213 = dma.done %s6209, 512
        $region80: #{encoder_forward.1} parent=75 // pred_fallthru
          _
      $region76: #{encoder_forward.1} parent=5 // pred_fallthru
        _
    $region6: #{encoder_forward.1} parent=1 // loop_footer
      %s25 = sadd.s32 1, %s21
    $region7: #{encoder_forward.1} parent=1 // loop_footer_branch
      %20 = sbr.rel target = $region3
    $region8: #{encoder_forward.1} parent=1 // loop_exit
      _
    %6214 = vsyncpa [#allocation3], 1
    %s6215 = scalar_lea.sflag [#allocation3], 1
    %6216 = vsyncpa %s6215, 1

</llo_original>
